<compile_context>
chip_gen: v6e
topology: v6e:2x2x1
jax: 0.10.0
libtpu: 0.0.40
codegen_flags: <defaults>
</compile_context>

<pallas_src>
import functools

import jax
import jax.numpy as jnp
from jax.experimental import pallas as pl
from jax.experimental.pallas import tpu as pltpu

# ----------------------------- model hyper-params -----------------------------
D = 8
W = 256
IN_XYZ = 63
IN_DIR = 27
OUT_CH = 1

# lane-padded sizes used by the kernel
PAD_XYZ = 128
PAD_DIR = 128
OUT_PAD = 128


def _relu(x):
    return jnp.maximum(x, 0.0)


def _softplus(x):
    # numerically stable softplus (matches torch.nn.Softplus up to its threshold)
    return jnp.maximum(x, 0.0) + jnp.log1p(jnp.exp(-jnp.abs(x)))


def _sigmoid(x):
    # logistic sigmoid via tanh (EUP op; same formulation used in the reference)
    return 0.5 * (jnp.tanh(0.5 * x) + 1.0)


# --------------------------------- kernel ------------------------------------
def depth_mlp_kernel(
    xyz_ref, dir_ref,          # (tile_b, 128) bf16, zero-padded features
    w1_ref, b1_ref,            # (128, W) bf16, (1, W) f32
    wstk_ref, bstk_ref,        # (7, W, W) bf16, (7, 1, W) f32:
                               #   [w2, w3, w4, w5h, w6, w7, wxyz]
    w5x_ref,                   # (128, W) bf16  (skip layer, xyz part)
    wdx_ref, wdd_ref, bdir_ref,  # (W, W//2), (128, W//2) bf16, (1, W//2) f32
    wdep_ref, bdep_ref,        # (W//2, 128) bf16, (1, 128) f32 (col 0 meaningful)
    out_ref,                   # (tile_b, 128) f32  (col 0 = depth)
):
    bf16 = jnp.bfloat16
    dot = functools.partial(jnp.dot, preferred_element_type=jnp.float32)

    xyz = xyz_ref[...]         # bf16
    dirs = dir_ref[...]        # bf16

    # xyz_encoding_1 (Linear + ReLU)
    h = _relu(dot(xyz, w1_ref[...]) + b1_ref[...])

    # xyz_encoding_2 .. xyz_encoding_4
    for j in range(3):
        h = _relu(dot(h.astype(bf16), wstk_ref[j]) + bstk_ref[j])

    # xyz_encoding_5 (skip): cat([xyz, h]) @ W5 == xyz @ W5x + h @ W5h
    h = _relu(dot(xyz, w5x_ref[...]) + dot(h.astype(bf16), wstk_ref[3])
              + bstk_ref[3])

    # xyz_encoding_6, xyz_encoding_7
    for j in (4, 5):
        h = _relu(dot(h.astype(bf16), wstk_ref[j]) + bstk_ref[j])

    # xyz_encoding head: Linear + Softplus
    xyz_enc = _softplus(dot(h.astype(bf16), wstk_ref[6]) + bstk_ref[6])

    # dir_encoding: Linear(cat([xyz_enc, dir])) + ReLU  (split weights)
    dir_enc = _relu(dot(xyz_enc.astype(bf16), wdx_ref[...])
                    + dot(dirs, wdd_ref[...]) + bdir_ref[...])

    # depth head (padded to 128 lanes): Linear + Sigmoid
    depth = _sigmoid(dot(dir_enc.astype(bf16), wdep_ref[...]) + bdep_ref[...])

    out_ref[...] = depth.astype(out_ref.dtype)


# -------------------------------- wrapper -------------------------------------
def depth_estimator_pallas(xyz, dirs, packed, *, tile_b=512):
    B = xyz.shape[0]
    n_tiles = (B + tile_b - 1) // tile_b
    B_pad = n_tiles * tile_b

    # zero-pad batch + feature lanes, cast activations to bf16 (matmul inputs)
    xyz_p = jnp.zeros((B_pad, PAD_XYZ), jnp.bfloat16)
    xyz_p = xyz_p.at[:B, :IN_XYZ].set(xyz.astype(jnp.bfloat16))
    dir_p = jnp.zeros((B_pad, PAD_DIR), jnp.bfloat16)
    dir_p = dir_p.at[:B, :IN_DIR].set(dirs.astype(jnp.bfloat16))

    in_specs = [
        pl.BlockSpec((tile_b, PAD_XYZ), lambda i: (i, 0)),
        pl.BlockSpec((tile_b, PAD_DIR), lambda i: (i, 0)),
        pl.BlockSpec((PAD_XYZ, W), lambda i: (0, 0)),        # w1
        pl.BlockSpec((1, W), lambda i: (0, 0)),              # b1
        pl.BlockSpec((7, W, W), lambda i: (0, 0, 0)),        # wstk
        pl.BlockSpec((7, 1, W), lambda i: (0, 0, 0)),        # bstk
        pl.BlockSpec((PAD_XYZ, W), lambda i: (0, 0)),        # w5x
        pl.BlockSpec((W, W // 2), lambda i: (0, 0)),         # wdx
        pl.BlockSpec((PAD_DIR, W // 2), lambda i: (0, 0)),   # wdd
        pl.BlockSpec((1, W // 2), lambda i: (0, 0)),         # bdir
        pl.BlockSpec((W // 2, OUT_PAD), lambda i: (0, 0)),   # wdep (padded)
        pl.BlockSpec((1, OUT_PAD), lambda i: (0, 0)),        # bdep (padded)
    ]
    out_spec = pl.BlockSpec((tile_b, OUT_PAD), lambda i: (i, 0))

    out = pl.pallas_call(
        depth_mlp_kernel,
        out_shape=jax.ShapeDtypeStruct((B_pad, OUT_PAD), jnp.float32),
        grid=(n_tiles,),
        in_specs=in_specs,
        out_specs=out_spec,
        compiler_params=pltpu.CompilerParams(
            dimension_semantics=("parallel",),
            vmem_limit_bytes=48 * 1024 * 1024,
        ),
    )(
        xyz_p, dir_p,
        packed["w1"], packed["b1"],
        packed["wstk"], packed["bstk"],
        packed["w5x"],
        packed["wdx"], packed["wdd"], packed["bdir"],
        packed["wdep"], packed["bdep"],
    )
    return out[:B, :OUT_CH]


# ------------------------ deterministic parameter init ------------------------
def init_params(key):
    def linear(key, fan_in, fan_out):
        kw, kb = jax.random.split(key)
        scale = 1.0 / jnp.sqrt(fan_in)
        w = jax.random.uniform(kw, (fan_in, fan_out), jnp.float32, -scale, scale)
        b = jax.random.uniform(kb, (1, fan_out), jnp.float32, -scale, scale)
        return w, b

    keys = jax.random.split(key, 11)
    p = {}
    p["w1"], p["b1"] = linear(keys[0], IN_XYZ, W)
    p["w2"], p["b2"] = linear(keys[1], W, W)
    p["w3"], p["b3"] = linear(keys[2], W, W)
    p["w4"], p["b4"] = linear(keys[3], W, W)
    w5, p["b5"] = linear(keys[4], IN_XYZ + W, W)          # skip layer, cat([xyz, h])
    p["w5x"], p["w5h"] = w5[:IN_XYZ], w5[IN_XYZ:]
    p["w6"], p["b6"] = linear(keys[5], W, W)
    p["w7"], p["b7"] = linear(keys[6], W, W)
    p["wxyz"], p["bxyz"] = linear(keys[7], W, W)
    wd, p["bdir"] = linear(keys[8], W + IN_DIR, W // 2)   # cat([xyz_enc, dir])
    p["wdx"], p["wdd"] = wd[:W], wd[W:]
    p["wdep"], p["bdep"] = linear(keys[9], W // 2, OUT_CH)
    return p


# ------------------- pack / pad / cast params for the kernel ------------------
def pack_params(p):
    bf16 = jnp.bfloat16
    f32 = jnp.float32

    def pad_rows(w, rows):
        return jnp.zeros((rows, w.shape[1]), w.dtype).at[: w.shape[0]].set(w)

    packed = {}
    packed["w1"] = pad_rows(p["w1"], PAD_XYZ).astype(bf16)
    packed["b1"] = p["b1"].astype(f32)
    packed["wstk"] = jnp.stack(
        [p["w2"], p["w3"], p["w4"], p["w5h"], p["w6"], p["w7"], p["wxyz"]]
    ).astype(bf16)                                                   # (7, W, W)
    packed["bstk"] = jnp.stack(
        [p["b2"], p["b3"], p["b4"], p["b5"], p["b6"], p["b7"], p["bxyz"]]
    ).astype(f32)                                                    # (7, 1, W)
    packed["w5x"] = pad_rows(p["w5x"], PAD_XYZ).astype(bf16)
    packed["wdx"] = p["wdx"].astype(bf16)
    packed["wdd"] = pad_rows(p["wdd"], PAD_DIR).astype(bf16)
    packed["bdir"] = p["bdir"].astype(f32)
    packed["wdep"] = (jnp.zeros((W // 2, OUT_PAD), f32)
                      .at[:, :OUT_CH].set(p["wdep"]).astype(bf16))
    packed["bdep"] = (jnp.zeros((1, OUT_PAD), f32)
                      .at[:, :OUT_CH].set(p["bdep"]))
    return packed


# ------------------------------ pure-JAX reference -----------------------------
def depth_estimator_ref(xyz, dirs, p, matmul_dtype=jnp.float32):
    def mm(a, b):
        return jnp.dot(a.astype(matmul_dtype), b.astype(matmul_dtype),
                       preferred_element_type=jnp.float32)

    h = _relu(mm(xyz, p["w1"]) + p["b1"])
    h = _relu(mm(h, p["w2"]) + p["b2"])
    h = _relu(mm(h, p["w3"]) + p["b3"])
    h = _relu(mm(h, p["w4"]) + p["b4"])
    h = _relu(mm(xyz, p["w5x"]) + mm(h, p["w5h"]) + p["b5"])   # cat([xyz, h]) @ W5
    h = _relu(mm(h, p["w6"]) + p["b6"])
    h = _relu(mm(h, p["w7"]) + p["b7"])
    xyz_enc = _softplus(mm(h, p["wxyz"]) + p["bxyz"])
    dir_enc = _relu(mm(xyz_enc, p["wdx"]) + mm(dirs, p["wdd"]) + p["bdir"])
    return _sigmoid(mm(dir_enc, p["wdep"]) + p["bdep"])


# ----------------------------------- main --------------------------------------
if __name__ == "__main__":
    key = jax.random.PRNGKey(0)
    k_xyz, k_dir, k_par = jax.random.split(key, 3)

    B = 512
    xyz = jax.random.normal(k_xyz, (B, IN_XYZ), jnp.float32)
    dirs = jax.random.normal(k_dir, (B, IN_DIR), jnp.float32)

    params = init_params(k_par)
    packed = pack_params(params)

    out = depth_estimator_pallas(xyz, dirs, packed, tile_b=256)
    out = jax.block_until_ready(out)
    assert out.shape == (B, OUT_CH)

    # tight check against a reference using the same bf16 matmul inputs
    ref_bf16 = depth_estimator_ref(xyz, dirs, params, jnp.bfloat16)
    assert jnp.allclose(out, ref_bf16, atol=2e-3, rtol=2e-3), \
        "mismatch vs bf16-matched reference"

    # loose check against the full-fp32 semantic reference
    ref_f32 = depth_estimator_ref(xyz, dirs, params, jnp.float32)
    assert jnp.allclose(out, ref_f32, atol=5e-2, rtol=5e-2), \
        "mismatch vs fp32 reference"

    print("KERNEL_OK")
</pallas_src>

<mosaic_0001>
module attributes {stable_mosaic.version = 11 : i64} {
  func.func @depth_mlp_kernel(%arg0: i32, %arg1: memref<256x128xbf16, #tpu.memory_space<vmem>>, %arg2: memref<256x128xbf16, #tpu.memory_space<vmem>>, %arg3: memref<128x256xbf16, #tpu.memory_space<vmem>>, %arg4: memref<1x256xf32, #tpu.memory_space<vmem>>, %arg5: memref<7x256x256xbf16, #tpu.memory_space<vmem>>, %arg6: memref<7x1x256xf32, #tpu.memory_space<vmem>>, %arg7: memref<128x256xbf16, #tpu.memory_space<vmem>>, %arg8: memref<256x128xbf16, #tpu.memory_space<vmem>>, %arg9: memref<128x128xbf16, #tpu.memory_space<vmem>>, %arg10: memref<1x128xf32, #tpu.memory_space<vmem>>, %arg11: memref<128x128xbf16, #tpu.memory_space<vmem>>, %arg12: memref<1x128xf32, #tpu.memory_space<vmem>>, %arg13: memref<256x128xf32, #tpu.memory_space<vmem>>) attributes {dimension_semantics = [#tpu.dimension_semantics<parallel>], iteration_bounds = array<i64: 2>, scalar_prefetch = 0 : i64, scratch_operands = 0 : i64, tpu.core_type = #tpu.core_type<tc>, window_params = [{transform_indices = @transform_0, window_bounds = array<i64: 256, 128>}, {transform_indices = @transform_1, window_bounds = array<i64: 256, 128>}, {pipeline_mode = #tpu.pipeline_mode<synchronous>, transform_indices = @transform_2, window_bounds = array<i64: 128, 256>}, {pipeline_mode = #tpu.pipeline_mode<synchronous>, transform_indices = @transform_3, window_bounds = array<i64: 1, 256>}, {pipeline_mode = #tpu.pipeline_mode<synchronous>, transform_indices = @transform_4, window_bounds = array<i64: 7, 256, 256>}, {pipeline_mode = #tpu.pipeline_mode<synchronous>, transform_indices = @transform_5, window_bounds = array<i64: 7, 1, 256>}, {pipeline_mode = #tpu.pipeline_mode<synchronous>, transform_indices = @transform_6, window_bounds = array<i64: 128, 256>}, {pipeline_mode = #tpu.pipeline_mode<synchronous>, transform_indices = @transform_7, window_bounds = array<i64: 256, 128>}, {pipeline_mode = #tpu.pipeline_mode<synchronous>, transform_indices = @transform_8, window_bounds = array<i64: 128, 128>}, {pipeline_mode = #tpu.pipeline_mode<synchronous>, transform_indices = @transform_9, window_bounds = array<i64: 1, 128>}, {pipeline_mode = #tpu.pipeline_mode<synchronous>, transform_indices = @transform_10, window_bounds = array<i64: 128, 128>}, {pipeline_mode = #tpu.pipeline_mode<synchronous>, transform_indices = @transform_11, window_bounds = array<i64: 1, 128>}, {transform_indices = @transform_12, window_bounds = array<i64: 256, 128>}]} {
    %c0 = arith.constant 0 : index
    %c0_0 = arith.constant 0 : index
    %0 = vector.load %arg1[%c0, %c0_0] : memref<256x128xbf16, #tpu.memory_space<vmem>>, vector<256x128xbf16>
    %c0_1 = arith.constant 0 : index
    %c0_2 = arith.constant 0 : index
    %1 = vector.load %arg2[%c0_1, %c0_2] : memref<256x128xbf16, #tpu.memory_space<vmem>>, vector<256x128xbf16>
    %c0_3 = arith.constant 0 : index
    %c0_4 = arith.constant 0 : index
    %2 = vector.load %arg3[%c0_3, %c0_4] : memref<128x256xbf16, #tpu.memory_space<vmem>>, vector<128x256xbf16>
    %cst = arith.constant dense<0.000000e+00> : vector<256x256xf32>
    %3 = tpu.matmul %0, %2, %cst {dimension_numbers = #tpu.dot_dimension_numbers<[1], [0], [0], [1], [0, 0, 1, 1], [], []>} : vector<256x128xbf16>, vector<128x256xbf16>, vector<256x256xf32> -> vector<256x256xf32>
    %c0_5 = arith.constant 0 : index
    %c0_6 = arith.constant 0 : index
    %4 = vector.load %arg4[%c0_5, %c0_6] : memref<1x256xf32, #tpu.memory_space<vmem>>, vector<1x256xf32>
    %5 = vector.broadcast %4 : vector<1x256xf32> to vector<256x256xf32>
    %6 = arith.addf %3, %5 : vector<256x256xf32>
    %cst_7 = arith.constant 0.000000e+00 : f32
    %7 = vector.broadcast %cst_7 : f32 to vector<256x256xf32>
    %8 = arith.maximumf %6, %7 : vector<256x256xf32>
    %9 = arith.truncf %8 : vector<256x256xf32> to vector<256x256xbf16>
    %c0_8 = arith.constant 0 : index
    %c0_9 = arith.constant 0 : index
    %c0_10 = arith.constant 0 : index
    %10 = vector.load %arg5[%c0_8, %c0_9, %c0_10] : memref<7x256x256xbf16, #tpu.memory_space<vmem>>, vector<1x256x256xbf16>
    %11 = vector.shape_cast %10 : vector<1x256x256xbf16> to vector<256x256xbf16>
    %cst_11 = arith.constant dense<0.000000e+00> : vector<256x256xf32>
    %12 = tpu.matmul %9, %11, %cst_11 {dimension_numbers = #tpu.dot_dimension_numbers<[1], [0], [0], [1], [0, 0, 1, 1], [], []>} : vector<256x256xbf16>, vector<256x256xbf16>, vector<256x256xf32> -> vector<256x256xf32>
    %c0_12 = arith.constant 0 : index
    %c0_13 = arith.constant 0 : index
    %c0_14 = arith.constant 0 : index
    %13 = vector.load %arg6[%c0_12, %c0_13, %c0_14] : memref<7x1x256xf32, #tpu.memory_space<vmem>>, vector<1x1x256xf32>
    %14 = vector.shape_cast %13 : vector<1x1x256xf32> to vector<1x256xf32>
    %15 = vector.broadcast %14 : vector<1x256xf32> to vector<256x256xf32>
    %16 = arith.addf %12, %15 : vector<256x256xf32>
    %cst_15 = arith.constant 0.000000e+00 : f32
    %17 = vector.broadcast %cst_15 : f32 to vector<256x256xf32>
    %18 = arith.maximumf %16, %17 : vector<256x256xf32>
    %19 = arith.truncf %18 : vector<256x256xf32> to vector<256x256xbf16>
    %c1 = arith.constant 1 : index
    %c0_16 = arith.constant 0 : index
    %c0_17 = arith.constant 0 : index
    %20 = vector.load %arg5[%c1, %c0_16, %c0_17] : memref<7x256x256xbf16, #tpu.memory_space<vmem>>, vector<1x256x256xbf16>
    %21 = vector.shape_cast %20 : vector<1x256x256xbf16> to vector<256x256xbf16>
    %cst_18 = arith.constant dense<0.000000e+00> : vector<256x256xf32>
    %22 = tpu.matmul %19, %21, %cst_18 {dimension_numbers = #tpu.dot_dimension_numbers<[1], [0], [0], [1], [0, 0, 1, 1], [], []>} : vector<256x256xbf16>, vector<256x256xbf16>, vector<256x256xf32> -> vector<256x256xf32>
    %c1_19 = arith.constant 1 : index
    %c0_20 = arith.constant 0 : index
    %c0_21 = arith.constant 0 : index
    %23 = vector.load %arg6[%c1_19, %c0_20, %c0_21] : memref<7x1x256xf32, #tpu.memory_space<vmem>>, vector<1x1x256xf32>
    %24 = vector.shape_cast %23 : vector<1x1x256xf32> to vector<1x256xf32>
    %25 = vector.broadcast %24 : vector<1x256xf32> to vector<256x256xf32>
    %26 = arith.addf %22, %25 : vector<256x256xf32>
    %cst_22 = arith.constant 0.000000e+00 : f32
    %27 = vector.broadcast %cst_22 : f32 to vector<256x256xf32>
    %28 = arith.maximumf %26, %27 : vector<256x256xf32>
    %29 = arith.truncf %28 : vector<256x256xf32> to vector<256x256xbf16>
    %c2 = arith.constant 2 : index
    %c0_23 = arith.constant 0 : index
    %c0_24 = arith.constant 0 : index
    %30 = vector.load %arg5[%c2, %c0_23, %c0_24] : memref<7x256x256xbf16, #tpu.memory_space<vmem>>, vector<1x256x256xbf16>
    %31 = vector.shape_cast %30 : vector<1x256x256xbf16> to vector<256x256xbf16>
    %cst_25 = arith.constant dense<0.000000e+00> : vector<256x256xf32>
    %32 = tpu.matmul %29, %31, %cst_25 {dimension_numbers = #tpu.dot_dimension_numbers<[1], [0], [0], [1], [0, 0, 1, 1], [], []>} : vector<256x256xbf16>, vector<256x256xbf16>, vector<256x256xf32> -> vector<256x256xf32>
    %c2_26 = arith.constant 2 : index
    %c0_27 = arith.constant 0 : index
    %c0_28 = arith.constant 0 : index
    %33 = vector.load %arg6[%c2_26, %c0_27, %c0_28] : memref<7x1x256xf32, #tpu.memory_space<vmem>>, vector<1x1x256xf32>
    %34 = vector.shape_cast %33 : vector<1x1x256xf32> to vector<1x256xf32>
    %35 = vector.broadcast %34 : vector<1x256xf32> to vector<256x256xf32>
    %36 = arith.addf %32, %35 : vector<256x256xf32>
    %cst_29 = arith.constant 0.000000e+00 : f32
    %37 = vector.broadcast %cst_29 : f32 to vector<256x256xf32>
    %38 = arith.maximumf %36, %37 : vector<256x256xf32>
    %c0_30 = arith.constant 0 : index
    %c0_31 = arith.constant 0 : index
    %39 = vector.load %arg7[%c0_30, %c0_31] : memref<128x256xbf16, #tpu.memory_space<vmem>>, vector<128x256xbf16>
    %cst_32 = arith.constant dense<0.000000e+00> : vector<256x256xf32>
    %40 = tpu.matmul %0, %39, %cst_32 {dimension_numbers = #tpu.dot_dimension_numbers<[1], [0], [0], [1], [0, 0, 1, 1], [], []>} : vector<256x128xbf16>, vector<128x256xbf16>, vector<256x256xf32> -> vector<256x256xf32>
    %41 = arith.truncf %38 : vector<256x256xf32> to vector<256x256xbf16>
    %c3 = arith.constant 3 : index
    %c0_33 = arith.constant 0 : index
    %c0_34 = arith.constant 0 : index
    %42 = vector.load %arg5[%c3, %c0_33, %c0_34] : memref<7x256x256xbf16, #tpu.memory_space<vmem>>, vector<1x256x256xbf16>
    %43 = vector.shape_cast %42 : vector<1x256x256xbf16> to vector<256x256xbf16>
    %cst_35 = arith.constant dense<0.000000e+00> : vector<256x256xf32>
    %44 = tpu.matmul %41, %43, %cst_35 {dimension_numbers = #tpu.dot_dimension_numbers<[1], [0], [0], [1], [0, 0, 1, 1], [], []>} : vector<256x256xbf16>, vector<256x256xbf16>, vector<256x256xf32> -> vector<256x256xf32>
    %45 = arith.addf %40, %44 : vector<256x256xf32>
    %c3_36 = arith.constant 3 : index
    %c0_37 = arith.constant 0 : index
    %c0_38 = arith.constant 0 : index
    %46 = vector.load %arg6[%c3_36, %c0_37, %c0_38] : memref<7x1x256xf32, #tpu.memory_space<vmem>>, vector<1x1x256xf32>
    %47 = vector.shape_cast %46 : vector<1x1x256xf32> to vector<1x256xf32>
    %48 = vector.broadcast %47 : vector<1x256xf32> to vector<256x256xf32>
    %49 = arith.addf %45, %48 : vector<256x256xf32>
    %cst_39 = arith.constant 0.000000e+00 : f32
    %50 = vector.broadcast %cst_39 : f32 to vector<256x256xf32>
    %51 = arith.maximumf %49, %50 : vector<256x256xf32>
    %52 = arith.truncf %51 : vector<256x256xf32> to vector<256x256xbf16>
    %c4 = arith.constant 4 : index
    %c0_40 = arith.constant 0 : index
    %c0_41 = arith.constant 0 : index
    %53 = vector.load %arg5[%c4, %c0_40, %c0_41] : memref<7x256x256xbf16, #tpu.memory_space<vmem>>, vector<1x256x256xbf16>
    %54 = vector.shape_cast %53 : vector<1x256x256xbf16> to vector<256x256xbf16>
    %cst_42 = arith.constant dense<0.000000e+00> : vector<256x256xf32>
    %55 = tpu.matmul %52, %54, %cst_42 {dimension_numbers = #tpu.dot_dimension_numbers<[1], [0], [0], [1], [0, 0, 1, 1], [], []>} : vector<256x256xbf16>, vector<256x256xbf16>, vector<256x256xf32> -> vector<256x256xf32>
    %c4_43 = arith.constant 4 : index
    %c0_44 = arith.constant 0 : index
    %c0_45 = arith.constant 0 : index
    %56 = vector.load %arg6[%c4_43, %c0_44, %c0_45] : memref<7x1x256xf32, #tpu.memory_space<vmem>>, vector<1x1x256xf32>
    %57 = vector.shape_cast %56 : vector<1x1x256xf32> to vector<1x256xf32>
    %58 = vector.broadcast %57 : vector<1x256xf32> to vector<256x256xf32>
    %59 = arith.addf %55, %58 : vector<256x256xf32>
    %cst_46 = arith.constant 0.000000e+00 : f32
    %60 = vector.broadcast %cst_46 : f32 to vector<256x256xf32>
    %61 = arith.maximumf %59, %60 : vector<256x256xf32>
    %62 = arith.truncf %61 : vector<256x256xf32> to vector<256x256xbf16>
    %c5 = arith.constant 5 : index
    %c0_47 = arith.constant 0 : index
    %c0_48 = arith.constant 0 : index
    %63 = vector.load %arg5[%c5, %c0_47, %c0_48] : memref<7x256x256xbf16, #tpu.memory_space<vmem>>, vector<1x256x256xbf16>
    %64 = vector.shape_cast %63 : vector<1x256x256xbf16> to vector<256x256xbf16>
    %cst_49 = arith.constant dense<0.000000e+00> : vector<256x256xf32>
    %65 = tpu.matmul %62, %64, %cst_49 {dimension_numbers = #tpu.dot_dimension_numbers<[1], [0], [0], [1], [0, 0, 1, 1], [], []>} : vector<256x256xbf16>, vector<256x256xbf16>, vector<256x256xf32> -> vector<256x256xf32>
    %c5_50 = arith.constant 5 : index
    %c0_51 = arith.constant 0 : index
    %c0_52 = arith.constant 0 : index
    %66 = vector.load %arg6[%c5_50, %c0_51, %c0_52] : memref<7x1x256xf32, #tpu.memory_space<vmem>>, vector<1x1x256xf32>
    %67 = vector.shape_cast %66 : vector<1x1x256xf32> to vector<1x256xf32>
    %68 = vector.broadcast %67 : vector<1x256xf32> to vector<256x256xf32>
    %69 = arith.addf %65, %68 : vector<256x256xf32>
    %cst_53 = arith.constant 0.000000e+00 : f32
    %70 = vector.broadcast %cst_53 : f32 to vector<256x256xf32>
    %71 = arith.maximumf %69, %70 : vector<256x256xf32>
    %72 = arith.truncf %71 : vector<256x256xf32> to vector<256x256xbf16>
    %c6 = arith.constant 6 : index
    %c0_54 = arith.constant 0 : index
    %c0_55 = arith.constant 0 : index
    %73 = vector.load %arg5[%c6, %c0_54, %c0_55] : memref<7x256x256xbf16, #tpu.memory_space<vmem>>, vector<1x256x256xbf16>
    %74 = vector.shape_cast %73 : vector<1x256x256xbf16> to vector<256x256xbf16>
    %cst_56 = arith.constant dense<0.000000e+00> : vector<256x256xf32>
    %75 = tpu.matmul %72, %74, %cst_56 {dimension_numbers = #tpu.dot_dimension_numbers<[1], [0], [0], [1], [0, 0, 1, 1], [], []>} : vector<256x256xbf16>, vector<256x256xbf16>, vector<256x256xf32> -> vector<256x256xf32>
    %c6_57 = arith.constant 6 : index
    %c0_58 = arith.constant 0 : index
    %c0_59 = arith.constant 0 : index
    %76 = vector.load %arg6[%c6_57, %c0_58, %c0_59] : memref<7x1x256xf32, #tpu.memory_space<vmem>>, vector<1x1x256xf32>
    %77 = vector.shape_cast %76 : vector<1x1x256xf32> to vector<1x256xf32>
    %78 = vector.broadcast %77 : vector<1x256xf32> to vector<256x256xf32>
    %79 = arith.addf %75, %78 : vector<256x256xf32>
    %cst_60 = arith.constant 0.000000e+00 : f32
    %80 = vector.broadcast %cst_60 : f32 to vector<256x256xf32>
    %81 = arith.maximumf %79, %80 : vector<256x256xf32>
    %82 = math.absf %79 : vector<256x256xf32>
    %cst_61 = arith.constant 0.000000e+00 : f32
    %83 = vector.broadcast %cst_61 : f32 to vector<256x256xf32>
    %84 = arith.subf %83, %82 : vector<256x256xf32>
    %85 = math.exp %84 : vector<256x256xf32>
    %86 = math.log1p %85 : vector<256x256xf32>
    %87 = arith.addf %81, %86 : vector<256x256xf32>
    %88 = arith.truncf %87 : vector<256x256xf32> to vector<256x256xbf16>
    %c0_62 = arith.constant 0 : index
    %c0_63 = arith.constant 0 : index
    %89 = vector.load %arg8[%c0_62, %c0_63] : memref<256x128xbf16, #tpu.memory_space<vmem>>, vector<256x128xbf16>
    %cst_64 = arith.constant dense<0.000000e+00> : vector<256x128xf32>
    %90 = tpu.matmul %88, %89, %cst_64 {dimension_numbers = #tpu.dot_dimension_numbers<[1], [0], [0], [1], [0, 0, 1, 1], [], []>} : vector<256x256xbf16>, vector<256x128xbf16>, vector<256x128xf32> -> vector<256x128xf32>
    %c0_65 = arith.constant 0 : index
    %c0_66 = arith.constant 0 : index
    %91 = vector.load %arg9[%c0_65, %c0_66] : memref<128x128xbf16, #tpu.memory_space<vmem>>, vector<128x128xbf16>
    %cst_67 = arith.constant dense<0.000000e+00> : vector<256x128xf32>
    %92 = tpu.matmul %1, %91, %cst_67 {dimension_numbers = #tpu.dot_dimension_numbers<[1], [0], [0], [1], [0, 0, 1, 1], [], []>} : vector<256x128xbf16>, vector<128x128xbf16>, vector<256x128xf32> -> vector<256x128xf32>
    %93 = arith.addf %90, %92 : vector<256x128xf32>
    %c0_68 = arith.constant 0 : index
    %c0_69 = arith.constant 0 : index
    %94 = vector.load %arg10[%c0_68, %c0_69] : memref<1x128xf32, #tpu.memory_space<vmem>>, vector<1x128xf32>
    %95 = vector.broadcast %94 : vector<1x128xf32> to vector<256x128xf32>
    %96 = arith.addf %93, %95 : vector<256x128xf32>
    %cst_70 = arith.constant 0.000000e+00 : f32
    %97 = vector.broadcast %cst_70 : f32 to vector<256x128xf32>
    %98 = arith.maximumf %96, %97 : vector<256x128xf32>
    %99 = arith.truncf %98 : vector<256x128xf32> to vector<256x128xbf16>
    %c0_71 = arith.constant 0 : index
    %c0_72 = arith.constant 0 : index
    %100 = vector.load %arg11[%c0_71, %c0_72] : memref<128x128xbf16, #tpu.memory_space<vmem>>, vector<128x128xbf16>
    %cst_73 = arith.constant dense<0.000000e+00> : vector<256x128xf32>
    %101 = tpu.matmul %99, %100, %cst_73 {dimension_numbers = #tpu.dot_dimension_numbers<[1], [0], [0], [1], [0, 0, 1, 1], [], []>} : vector<256x128xbf16>, vector<128x128xbf16>, vector<256x128xf32> -> vector<256x128xf32>
    %c0_74 = arith.constant 0 : index
    %c0_75 = arith.constant 0 : index
    %102 = vector.load %arg12[%c0_74, %c0_75] : memref<1x128xf32, #tpu.memory_space<vmem>>, vector<1x128xf32>
    %103 = vector.broadcast %102 : vector<1x128xf32> to vector<256x128xf32>
    %104 = arith.addf %101, %103 : vector<256x128xf32>
    %cst_76 = arith.constant 5.000000e-01 : f32
    %105 = vector.broadcast %cst_76 : f32 to vector<256x128xf32>
    %106 = arith.mulf %105, %104 : vector<256x128xf32>
    %107 = math.tanh %106 : vector<256x128xf32>
    %cst_77 = arith.constant 1.000000e+00 : f32
    %108 = vector.broadcast %cst_77 : f32 to vector<256x128xf32>
    %109 = arith.addf %107, %108 : vector<256x128xf32>
    %cst_78 = arith.constant 5.000000e-01 : f32
    %110 = vector.broadcast %cst_78 : f32 to vector<256x128xf32>
    %111 = arith.mulf %110, %109 : vector<256x128xf32>
    %c0_79 = arith.constant 0 : index
    %c0_80 = arith.constant 0 : index
    %112 = vector.load %arg13[%c0_79, %c0_80] : memref<256x128xf32, #tpu.memory_space<vmem>>, vector<256x128xf32>
    tpu.vector_store %arg13[%c0_79, %c0_80], %111 {strides = array<i32>} : memref<256x128xf32, #tpu.memory_space<vmem>>, vector<256x128xf32>,
    return
  }
  func.func @transform_0(%arg0: i32) -> (i32, i32) {
    %c0_i32 = arith.constant 0 : i32
    %c0_i32_0 = arith.constant 0 : i32
    return %arg0, %c0_i32 : i32, i32
  }
  func.func @transform_1(%arg0: i32) -> (i32, i32) {
    %c0_i32 = arith.constant 0 : i32
    %c0_i32_0 = arith.constant 0 : i32
    return %arg0, %c0_i32 : i32, i32
  }
  func.func @transform_2(%arg0: i32) -> (i32, i32) {
    %c0_i32 = arith.constant 0 : i32
    %c0_i32_0 = arith.constant 0 : i32
    %c0_i32_1 = arith.constant 0 : i32
    return %c0_i32, %c0_i32_0 : i32, i32
  }
  func.func @transform_3(%arg0: i32) -> (i32, i32) {
    %c0_i32 = arith.constant 0 : i32
    %c0_i32_0 = arith.constant 0 : i32
    %c0_i32_1 = arith.constant 0 : i32
    return %c0_i32, %c0_i32_0 : i32, i32
  }
  func.func @transform_4(%arg0: i32) -> (i32, i32, i32) {
    %c0_i32 = arith.constant 0 : i32
    %c0_i32_0 = arith.constant 0 : i32
    %c0_i32_1 = arith.constant 0 : i32
    %c0_i32_2 = arith.constant 0 : i32
    return %c0_i32, %c0_i32_0, %c0_i32_1 : i32, i32, i32
  }
  func.func @transform_5(%arg0: i32) -> (i32, i32, i32) {
    %c0_i32 = arith.constant 0 : i32
    %c0_i32_0 = arith.constant 0 : i32
    %c0_i32_1 = arith.constant 0 : i32
    %c0_i32_2 = arith.constant 0 : i32
    return %c0_i32, %c0_i32_0, %c0_i32_1 : i32, i32, i32
  }
  func.func @transform_6(%arg0: i32) -> (i32, i32) {
    %c0_i32 = arith.constant 0 : i32
    %c0_i32_0 = arith.constant 0 : i32
    %c0_i32_1 = arith.constant 0 : i32
    return %c0_i32, %c0_i32_0 : i32, i32
  }
  func.func @transform_7(%arg0: i32) -> (i32, i32) {
    %c0_i32 = arith.constant 0 : i32
    %c0_i32_0 = arith.constant 0 : i32
    %c0_i32_1 = arith.constant 0 : i32
    return %c0_i32, %c0_i32_0 : i32, i32
  }
  func.func @transform_8(%arg0: i32) -> (i32, i32) {
    %c0_i32 = arith.constant 0 : i32
    %c0_i32_0 = arith.constant 0 : i32
    %c0_i32_1 = arith.constant 0 : i32
    return %c0_i32, %c0_i32_0 : i32, i32
  }
  func.func @transform_9(%arg0: i32) -> (i32, i32) {
    %c0_i32 = arith.constant 0 : i32
    %c0_i32_0 = arith.constant 0 : i32
    %c0_i32_1 = arith.constant 0 : i32
    return %c0_i32, %c0_i32_0 : i32, i32
  }
  func.func @transform_10(%arg0: i32) -> (i32, i32) {
    %c0_i32 = arith.constant 0 : i32
    %c0_i32_0 = arith.constant 0 : i32
    %c0_i32_1 = arith.constant 0 : i32
    return %c0_i32, %c0_i32_0 : i32, i32
  }
  func.func @transform_11(%arg0: i32) -> (i32, i32) {
    %c0_i32 = arith.constant 0 : i32
    %c0_i32_0 = arith.constant 0 : i32
    %c0_i32_1 = arith.constant 0 : i32
    return %c0_i32, %c0_i32_0 : i32, i32
  }
  func.func @transform_12(%arg0: i32) -> (i32, i32) {
    %c0_i32 = arith.constant 0 : i32
    %c0_i32_0 = arith.constant 0 : i32
    return %arg0, %c0_i32 : i32, i32
  }
}

</mosaic_0001>

<llo_original>
// kernel: tpu_custom_call.1
$region0: #{tpu_custom_call.1}
  #allocation0 [shape = 'u32[]', space=smem, size = 0x4, offset = 0x4, fixed_abs, tag = 'smem constant byte address 0x4 - core index']
  #allocation1 [shape = 'u32[144,128]{1,0:T(1,128)}', space=vmem, size = 0x12000, scoped, tag = 'internal scratch']
  %s0 = inlined_call_operand.hbm [shape: bf16[512,128], index: 0, kind: input, shape index: {}]
  %s1 = inlined_call_operand.hbm [shape: bf16[512,128], index: 1, kind: input, shape index: {}]
  %s2 = inlined_call_operand.hbm [shape: bf16[128,256], index: 2, kind: input, shape index: {}]
  %s3 = inlined_call_operand.vmem [shape: f32[1,256], index: 3, kind: input, shape index: {}]
  %s4 = inlined_call_operand.hbm [shape: bf16[7,256,256], index: 4, kind: input, shape index: {}]
  %s5 = inlined_call_operand.hbm [shape: f32[7,1,256], index: 5, kind: input, shape index: {}]
  %s6 = inlined_call_operand.hbm [shape: bf16[128,256], index: 6, kind: input, shape index: {}]
  %s7 = inlined_call_operand.hbm [shape: bf16[256,128], index: 7, kind: input, shape index: {}]
  %s8 = inlined_call_operand.hbm [shape: bf16[128,128], index: 8, kind: input, shape index: {}]
  %s9 = inlined_call_operand.vmem [shape: f32[1,128], index: 9, kind: input, shape index: {}]
  %s10 = inlined_call_operand.hbm [shape: bf16[128,128], index: 10, kind: input, shape index: {}]
  %s11 = inlined_call_operand.vmem [shape: f32[1,128], index: 11, kind: input, shape index: {}]
  %s12 = inlined_call_operand.hbm [shape: f32[512,128], index: 12, kind: output, shape index: {}]
  %s13 = sld [smem:[#allocation0]]
  $region117: #{tpu_custom_call.1} parent=0
    _
  %s15 = ssub.s32 1, %s13
  %s16 = scalar_select 0, %s15, %s13
  $region1: #{tpu_custom_call.1} parent=0
    #allocation2 [shape = 'u8[131072]{0}', space=vmem, size = 0x20000, scoped, tag = 'input window, operand 0']
    #allocation3 [shape = 's32[2]{0}', space=sflag, size = 0x8, scoped, tag = 'scoped memory for tpu_custom_call.1']
    #allocation4 [shape = 's32[2]{0}', space=sflag, size = 0x8, scoped, tag = 'scoped memory for tpu_custom_call.1']
    #allocation5 [shape = 'u8[131072]{0}', space=vmem, size = 0x20000, scoped, tag = 'input window, operand 1']
    #allocation6 [shape = 's32[2]{0}', space=sflag, size = 0x8, scoped, tag = 'scoped memory for tpu_custom_call.1']
    #allocation7 [shape = 'u8[65536]{0}', space=vmem, size = 0x10000, scoped, tag = 'input window, operand 2, single buffered']
    #allocation8 [shape = 'u8[917504]{0}', space=vmem, size = 0xe0000, scoped, tag = 'input window, operand 4, single buffered']
    #allocation9 [shape = 's32[1]{0}', space=sflag, size = 0x4, scoped, tag = 'scoped memory for tpu_custom_call.1']
    #allocation10 [shape = 'u8[7168]{0}', space=vmem, size = 0x1c00, scoped, tag = 'input window, operand 5, single buffered']
    #allocation11 [shape = 'u8[65536]{0}', space=vmem, size = 0x10000, scoped, tag = 'input window, operand 6, single buffered']
    #allocation12 [shape = 's32[1]{0}', space=sflag, size = 0x4, scoped, tag = 'scoped memory for tpu_custom_call.1']
    #allocation13 [shape = 'u8[65536]{0}', space=vmem, size = 0x10000, scoped, tag = 'input window, operand 7, single buffered']
    #allocation14 [shape = 'u8[32768]{0}', space=vmem, size = 0x8000, scoped, tag = 'input window, operand 8, single buffered']
    #allocation15 [shape = 's32[1]{0}', space=sflag, size = 0x4, scoped, tag = 'scoped memory for tpu_custom_call.1']
    #allocation16 [shape = 'u8[32768]{0}', space=vmem, size = 0x8000, scoped, tag = 'input window, operand 10, single buffered']
    #allocation17 [shape = 'u8[262144]{0}', space=vmem, size = 0x40000, scoped, tag = 'output window, operand 0']
    %17 = vsyncpa [#allocation3], 0
    %s18 = scalar_lea.sflag [#allocation3], 1
    %19 = vsyncpa %s18, 0
    %20 = vsyncpa [#allocation6], 0
    %s21 = scalar_lea.sflag [#allocation6], 1
    %22 = vsyncpa %s21, 0
    %23 = vsyncpa [#allocation9], 0
    %24 = vsyncpa [#allocation12], 0
    %25 = vsyncpa [#allocation15], 0
    %26 = vsyncpa [#allocation4], 0
    %s27 = scalar_lea.sflag [#allocation4], 1
    %28 = vsyncpa %s27, 0
    loop: start=0, step=1, limit=4
    $region2: #{tpu_custom_call.1} parent=1 // loop_pre_header
      _
    $region3: #{tpu_custom_call.1} parent=1 // loop_header
      %s30 = sphi 0, %s34
      %p31 = scmp.ge.s32.totalorder %s30, 4
      %s40 = sphi 0, %s42
      %s43 = sphi 0, %s40
      %s44 = sphi 0, %s43
      %s60 = sphi 0, %s44
      %s66 = sphi 0, %s68
      %s69 = sphi 0, %s66
      %s70 = sphi 0, %s69
      %s86 = sphi 0, %s70
      %s90 = sphi 0, %s90
      %s92 = sphi 0, %s90
      %s93 = sphi 0, %s92
      %s107 = sphi 0, %s93
      %s111 = sphi 0, %s111
      %s113 = sphi 0, %s111
      %s114 = sphi 0, %s113
      %s128 = sphi 0, %s114
      %s132 = sphi 0, %s132
      %s134 = sphi 0, %s132
      %s135 = sphi 0, %s134
      %s149 = sphi 0, %s135
      %s153 = sphi 0, %s153
      %s155 = sphi 0, %s153
      %s156 = sphi 0, %s155
      %s170 = sphi 0, %s156
      %s174 = sphi 0, %s174
      %s176 = sphi 0, %s174
      %s177 = sphi 0, %s176
      %s191 = sphi 0, %s177
      %s195 = sphi 0, %s195
      %s197 = sphi 0, %s195
      %s198 = sphi 0, %s197
      %s212 = sphi 0, %s198
      %s216 = sphi 0, %s216
      %s218 = sphi 0, %s216
      %s219 = sphi 0, %s218
      %s233 = sphi 0, %s219
      %s237 = sphi 0, %s237
      %s239 = sphi 0, %s237
      %s240 = sphi 0, %s239
      %s254 = sphi 0, %s240
      %s258 = sphi 0, %s258
      %s260 = sphi 0, %s258
      %s261 = sphi 0, %s260
      %s275 = sphi 0, %s261
      %s279 = sphi 0, %s279
      %s281 = sphi 0, %s279
      %s282 = sphi 0, %s281
      %s296 = sphi 0, %s282
      %s302 = sphi 0, %s304
      %s305 = sphi 0, %s302
      %s306 = sphi 0, %s305
      %s322 = sphi 0, %s306
    $region4: #{tpu_custom_call.1} parent=1 // loop_header_branch
      %33 = sbr.rel (%p31) target = $region8
    $region5: #{tpu_custom_call.1} parent=1 // loop_body
      %s35 = ssub.s32 %s30, 1
      %s36 = ssub.s32 %s30, 2
      %s37 = sadd.s32 %s30, 1
      %s38 = ssub.s32 %s30, %s37
      %p39 = scmp.eq.s32.totalorder %s38, 0
      %s41 = sadd.s32 %s40, 1
      %s42 = scalar_select %p39, %s40, %s41
      %p45 = pneg %p39
      %p46 = scmp.eq.s32.totalorder %s30, 1
      %p47 = por %p45, %p46
      %p48 = scmp.ne.s32.totalorder %s40, %s43
      %p49 = scmp.eq.s32.totalorder %s30, 0
      %p50 = por %p48, %p49
      %p51 = scmp.ne.s32.totalorder %s40, %s43
      %p52 = scmp.eq.s32.totalorder %s35, 1
      %p53 = por %p51, %p52
      %p54 = scmp.ne.s32.totalorder %s43, %s44
      %p55 = scmp.eq.s32.totalorder %s35, 0
      %p56 = por %p54, %p55
      %p57 = scmp.ne.s32.totalorder %s43, %s44
      %p58 = scmp.eq.s32.totalorder %s36, 1
      %p59 = por %p57, %p58
      %p61 = scmp.ne.s32.totalorder %s44, %s60
      %p62 = scmp.eq.s32.totalorder %s36, 0
      %p63 = por %p61, %p62
      %s64 = ssub.s32 %s30, %s37
      %p65 = scmp.eq.s32.totalorder %s64, 0
      %s67 = sadd.s32 %s66, 1
      %s68 = scalar_select %p65, %s66, %s67
      %p71 = pneg %p65
      %p72 = scmp.eq.s32.totalorder %s30, 1
      %p73 = por %p71, %p72
      %p74 = scmp.ne.s32.totalorder %s66, %s69
      %p75 = scmp.eq.s32.totalorder %s30, 0
      %p76 = por %p74, %p75
      %p77 = scmp.ne.s32.totalorder %s66, %s69
      %p78 = scmp.eq.s32.totalorder %s35, 1
      %p79 = por %p77, %p78
      %p80 = scmp.ne.s32.totalorder %s69, %s70
      %p81 = scmp.eq.s32.totalorder %s35, 0
      %p82 = por %p80, %p81
      %p83 = scmp.ne.s32.totalorder %s69, %s70
      %p84 = scmp.eq.s32.totalorder %s36, 1
      %p85 = por %p83, %p84
      %p87 = scmp.ne.s32.totalorder %s70, %s86
      %p88 = scmp.eq.s32.totalorder %s36, 0
      %p89 = por %p87, %p88
      %s91 = sadd.s32 %s90, 1
      %p94 = scmp.eq.s32.totalorder %s30, 1
      %p95 = scmp.ne.s32.totalorder %s90, %s92
      %p96 = scmp.eq.s32.totalorder %s30, 0
      %p97 = por %p95, %p96
      %p98 = scmp.ne.s32.totalorder %s90, %s92
      %p99 = scmp.eq.s32.totalorder %s35, 1
      %p100 = por %p98, %p99
      %p101 = scmp.ne.s32.totalorder %s92, %s93
      %p102 = scmp.eq.s32.totalorder %s35, 0
      %p103 = por %p101, %p102
      %p104 = scmp.ne.s32.totalorder %s92, %s93
      %p105 = scmp.eq.s32.totalorder %s36, 1
      %p106 = por %p104, %p105
      %p108 = scmp.ne.s32.totalorder %s93, %s107
      %p109 = scmp.eq.s32.totalorder %s36, 0
      %p110 = por %p108, %p109
      %s112 = sadd.s32 %s111, 1
      %p115 = scmp.eq.s32.totalorder %s30, 1
      %p116 = scmp.ne.s32.totalorder %s111, %s113
      %p117 = scmp.eq.s32.totalorder %s30, 0
      %p118 = por %p116, %p117
      %p119 = scmp.ne.s32.totalorder %s111, %s113
      %p120 = scmp.eq.s32.totalorder %s35, 1
      %p121 = por %p119, %p120
      %p122 = scmp.ne.s32.totalorder %s113, %s114
      %p123 = scmp.eq.s32.totalorder %s35, 0
      %p124 = por %p122, %p123
      %p125 = scmp.ne.s32.totalorder %s113, %s114
      %p126 = scmp.eq.s32.totalorder %s36, 1
      %p127 = por %p125, %p126
      %p129 = scmp.ne.s32.totalorder %s114, %s128
      %p130 = scmp.eq.s32.totalorder %s36, 0
      %p131 = por %p129, %p130
      %s133 = sadd.s32 %s132, 1
      %p136 = scmp.eq.s32.totalorder %s30, 1
      %p137 = scmp.ne.s32.totalorder %s132, %s134
      %p138 = scmp.eq.s32.totalorder %s30, 0
      %p139 = por %p137, %p138
      %p140 = scmp.ne.s32.totalorder %s132, %s134
      %p141 = scmp.eq.s32.totalorder %s35, 1
      %p142 = por %p140, %p141
      %p143 = scmp.ne.s32.totalorder %s134, %s135
      %p144 = scmp.eq.s32.totalorder %s35, 0
      %p145 = por %p143, %p144
      %p146 = scmp.ne.s32.totalorder %s134, %s135
      %p147 = scmp.eq.s32.totalorder %s36, 1
      %p148 = por %p146, %p147
      %p150 = scmp.ne.s32.totalorder %s135, %s149
      %p151 = scmp.eq.s32.totalorder %s36, 0
      %p152 = por %p150, %p151
      %s154 = sadd.s32 %s153, 1
      %p157 = scmp.eq.s32.totalorder %s30, 1
      %p158 = scmp.ne.s32.totalorder %s153, %s155
      %p159 = scmp.eq.s32.totalorder %s30, 0
      %p160 = por %p158, %p159
      %p161 = scmp.ne.s32.totalorder %s153, %s155
      %p162 = scmp.eq.s32.totalorder %s35, 1
      %p163 = por %p161, %p162
      %p164 = scmp.ne.s32.totalorder %s155, %s156
      %p165 = scmp.eq.s32.totalorder %s35, 0
      %p166 = por %p164, %p165
      %p167 = scmp.ne.s32.totalorder %s155, %s156
      %p168 = scmp.eq.s32.totalorder %s36, 1
      %p169 = por %p167, %p168
      %p171 = scmp.ne.s32.totalorder %s156, %s170
      %p172 = scmp.eq.s32.totalorder %s36, 0
      %p173 = por %p171, %p172
      %s175 = sadd.s32 %s174, 1
      %p178 = scmp.eq.s32.totalorder %s30, 1
      %p179 = scmp.ne.s32.totalorder %s174, %s176
      %p180 = scmp.eq.s32.totalorder %s30, 0
      %p181 = por %p179, %p180
      %p182 = scmp.ne.s32.totalorder %s174, %s176
      %p183 = scmp.eq.s32.totalorder %s35, 1
      %p184 = por %p182, %p183
      %p185 = scmp.ne.s32.totalorder %s176, %s177
      %p186 = scmp.eq.s32.totalorder %s35, 0
      %p187 = por %p185, %p186
      %p188 = scmp.ne.s32.totalorder %s176, %s177
      %p189 = scmp.eq.s32.totalorder %s36, 1
      %p190 = por %p188, %p189
      %p192 = scmp.ne.s32.totalorder %s177, %s191
      %p193 = scmp.eq.s32.totalorder %s36, 0
      %p194 = por %p192, %p193
      %s196 = sadd.s32 %s195, 1
      %p199 = scmp.eq.s32.totalorder %s30, 1
      %p200 = scmp.ne.s32.totalorder %s195, %s197
      %p201 = scmp.eq.s32.totalorder %s30, 0
      %p202 = por %p200, %p201
      %p203 = scmp.ne.s32.totalorder %s195, %s197
      %p204 = scmp.eq.s32.totalorder %s35, 1
      %p205 = por %p203, %p204
      %p206 = scmp.ne.s32.totalorder %s197, %s198
      %p207 = scmp.eq.s32.totalorder %s35, 0
      %p208 = por %p206, %p207
      %p209 = scmp.ne.s32.totalorder %s197, %s198
      %p210 = scmp.eq.s32.totalorder %s36, 1
      %p211 = por %p209, %p210
      %p213 = scmp.ne.s32.totalorder %s198, %s212
      %p214 = scmp.eq.s32.totalorder %s36, 0
      %p215 = por %p213, %p214
      %s217 = sadd.s32 %s216, 1
      %p220 = scmp.eq.s32.totalorder %s30, 1
      %p221 = scmp.ne.s32.totalorder %s216, %s218
      %p222 = scmp.eq.s32.totalorder %s30, 0
      %p223 = por %p221, %p222
      %p224 = scmp.ne.s32.totalorder %s216, %s218
      %p225 = scmp.eq.s32.totalorder %s35, 1
      %p226 = por %p224, %p225
      %p227 = scmp.ne.s32.totalorder %s218, %s219
      %p228 = scmp.eq.s32.totalorder %s35, 0
      %p229 = por %p227, %p228
      %p230 = scmp.ne.s32.totalorder %s218, %s219
      %p231 = scmp.eq.s32.totalorder %s36, 1
      %p232 = por %p230, %p231
      %p234 = scmp.ne.s32.totalorder %s219, %s233
      %p235 = scmp.eq.s32.totalorder %s36, 0
      %p236 = por %p234, %p235
      %s238 = sadd.s32 %s237, 1
      %p241 = scmp.eq.s32.totalorder %s30, 1
      %p242 = scmp.ne.s32.totalorder %s237, %s239
      %p243 = scmp.eq.s32.totalorder %s30, 0
      %p244 = por %p242, %p243
      %p245 = scmp.ne.s32.totalorder %s237, %s239
      %p246 = scmp.eq.s32.totalorder %s35, 1
      %p247 = por %p245, %p246
      %p248 = scmp.ne.s32.totalorder %s239, %s240
      %p249 = scmp.eq.s32.totalorder %s35, 0
      %p250 = por %p248, %p249
      %p251 = scmp.ne.s32.totalorder %s239, %s240
      %p252 = scmp.eq.s32.totalorder %s36, 1
      %p253 = por %p251, %p252
      %p255 = scmp.ne.s32.totalorder %s240, %s254
      %p256 = scmp.eq.s32.totalorder %s36, 0
      %p257 = por %p255, %p256
      %s259 = sadd.s32 %s258, 1
      %p262 = scmp.eq.s32.totalorder %s30, 1
      %p263 = scmp.ne.s32.totalorder %s258, %s260
      %p264 = scmp.eq.s32.totalorder %s30, 0
      %p265 = por %p263, %p264
      %p266 = scmp.ne.s32.totalorder %s258, %s260
      %p267 = scmp.eq.s32.totalorder %s35, 1
      %p268 = por %p266, %p267
      %p269 = scmp.ne.s32.totalorder %s260, %s261
      %p270 = scmp.eq.s32.totalorder %s35, 0
      %p271 = por %p269, %p270
      %p272 = scmp.ne.s32.totalorder %s260, %s261
      %p273 = scmp.eq.s32.totalorder %s36, 1
      %p274 = por %p272, %p273
      %p276 = scmp.ne.s32.totalorder %s261, %s275
      %p277 = scmp.eq.s32.totalorder %s36, 0
      %p278 = por %p276, %p277
      %s280 = sadd.s32 %s279, 1
      %p283 = scmp.eq.s32.totalorder %s30, 1
      %p284 = scmp.ne.s32.totalorder %s279, %s281
      %p285 = scmp.eq.s32.totalorder %s30, 0
      %p286 = por %p284, %p285
      %p287 = scmp.ne.s32.totalorder %s279, %s281
      %p288 = scmp.eq.s32.totalorder %s35, 1
      %p289 = por %p287, %p288
      %p290 = scmp.ne.s32.totalorder %s281, %s282
      %p291 = scmp.eq.s32.totalorder %s35, 0
      %p292 = por %p290, %p291
      %p293 = scmp.ne.s32.totalorder %s281, %s282
      %p294 = scmp.eq.s32.totalorder %s36, 1
      %p295 = por %p293, %p294
      %p297 = scmp.ne.s32.totalorder %s282, %s296
      %p298 = scmp.eq.s32.totalorder %s36, 0
      %p299 = por %p297, %p298
      %s300 = ssub.s32 %s30, %s37
      %p301 = scmp.eq.s32.totalorder %s300, 0
      %s303 = sadd.s32 %s302, 1
      %s304 = scalar_select %p301, %s302, %s303
      %p307 = pneg %p301
      %p308 = scmp.eq.s32.totalorder %s30, 1
      %p309 = por %p307, %p308
      %p310 = scmp.ne.s32.totalorder %s302, %s305
      %p311 = scmp.eq.s32.totalorder %s30, 0
      %p312 = por %p310, %p311
      %p313 = scmp.ne.s32.totalorder %s302, %s305
      %p314 = scmp.eq.s32.totalorder %s35, 1
      %p315 = por %p313, %p314
      %p316 = scmp.ne.s32.totalorder %s305, %s306
      %p317 = scmp.eq.s32.totalorder %s35, 0
      %p318 = por %p316, %p317
      %p319 = scmp.ne.s32.totalorder %s305, %s306
      %p320 = scmp.eq.s32.totalorder %s36, 1
      %p321 = por %p319, %p320
      %p323 = scmp.ne.s32.totalorder %s306, %s322
      %p324 = scmp.eq.s32.totalorder %s36, 0
      %p325 = por %p323, %p324
      %p326 = scmp.le.s32.totalorder 1, %s30
      %p327 = scmp.lt.s32.totalorder %s30, 3
      %p328 = pnand %p326, %p327
      %p329 = pneg %p328
      // Predicated region
      $region9: #{tpu_custom_call.1} parent=5 // pred_check
        _
      $region10: #{tpu_custom_call.1} parent=5 // pred_check_branch
        %331 = sbr.rel (%p328) target = $region12
      $region11: #{tpu_custom_call.1} parent=5 // pred_region
        %s332 = ssub.s32 %s30, 1
        // Predicated region
        $region13: #{tpu_custom_call.1} parent=11 // pred_check
          %p333 = pneg %p103
        $region14: #{tpu_custom_call.1} parent=11 // pred_check_branch
          %335 = sbr.rel (%p333) target = $region16
        $region15: #{tpu_custom_call.1} parent=11 // pred_region
          %s337 = ssub.s32 2048, 2048
          %338 = vsyncadd [#allocation6], %s337
          %s339 = sshll.u32 [#allocation7], 4
          %s340 = int_to_ptr.vmem [resolvable:$true] %s339
          %345 = dma.hbm_to_vmem [thread:$0]  %s2, 2048, %s340, [#allocation6], 128, 128, 8
        $region16: #{tpu_custom_call.1} parent=11 // pred_fallthru
          _
        // Predicated region
        $region17: #{tpu_custom_call.1} parent=11 // pred_check
          %p346 = pneg %p124
        $region18: #{tpu_custom_call.1} parent=11 // pred_check_branch
          %348 = sbr.rel (%p346) target = $region20
        $region19: #{tpu_custom_call.1} parent=11 // pred_region
          _
        $region20: #{tpu_custom_call.1} parent=11 // pred_fallthru
          _
        // Predicated region
        $region21: #{tpu_custom_call.1} parent=11 // pred_check
          %p349 = pneg %p145
        $region22: #{tpu_custom_call.1} parent=11 // pred_check_branch
          %351 = sbr.rel (%p349) target = $region24
        $region23: #{tpu_custom_call.1} parent=11 // pred_region
          %s353 = ssub.s32 28672, 28672
          %354 = vsyncadd [#allocation9], %s353
          %s355 = sshll.u32 [#allocation8], 4
          %s356 = int_to_ptr.vmem [resolvable:$true] %s355
          %361 = dma.hbm_to_vmem [thread:$0]  %s4, 28672, %s356, [#allocation9], 128, 128, 8
        $region24: #{tpu_custom_call.1} parent=11 // pred_fallthru
          _
        // Predicated region
        $region25: #{tpu_custom_call.1} parent=11 // pred_check
          %p362 = pneg %p166
        $region26: #{tpu_custom_call.1} parent=11 // pred_check_branch
          %364 = sbr.rel (%p362) target = $region28
        $region27: #{tpu_custom_call.1} parent=11 // pred_region
          %s366 = ssub.s32 224, 224
          %367 = vsyncadd [#allocation9], %s366
          %s368 = sshll.u32 [#allocation10], 4
          %s369 = int_to_ptr.vmem [resolvable:$true] %s368
          %374 = dma.hbm_to_vmem [thread:$0]  %s5, 224, %s369, [#allocation9], 32, 32, 2
        $region28: #{tpu_custom_call.1} parent=11 // pred_fallthru
          _
        // Predicated region
        $region29: #{tpu_custom_call.1} parent=11 // pred_check
          %p375 = pneg %p187
        $region30: #{tpu_custom_call.1} parent=11 // pred_check_branch
          %377 = sbr.rel (%p375) target = $region32
        $region31: #{tpu_custom_call.1} parent=11 // pred_region
          %s379 = ssub.s32 2048, 2048
          %380 = vsyncadd [#allocation12], %s379
          %s381 = sshll.u32 [#allocation11], 4
          %s382 = int_to_ptr.vmem [resolvable:$true] %s381
          %387 = dma.hbm_to_vmem [thread:$0]  %s6, 2048, %s382, [#allocation12], 128, 128, 8
        $region32: #{tpu_custom_call.1} parent=11 // pred_fallthru
          _
        // Predicated region
        $region33: #{tpu_custom_call.1} parent=11 // pred_check
          %p388 = pneg %p208
        $region34: #{tpu_custom_call.1} parent=11 // pred_check_branch
          %390 = sbr.rel (%p388) target = $region36
        $region35: #{tpu_custom_call.1} parent=11 // pred_region
          %s392 = ssub.s32 2048, 2048
          %393 = vsyncadd [#allocation12], %s392
          %s394 = sshll.u32 [#allocation13], 4
          %s395 = int_to_ptr.vmem [resolvable:$true] %s394
          %400 = dma.hbm_to_vmem [thread:$0]  %s7, 2048, %s395, [#allocation12], 64, 64, 4
        $region36: #{tpu_custom_call.1} parent=11 // pred_fallthru
          _
        // Predicated region
        $region37: #{tpu_custom_call.1} parent=11 // pred_check
          %p401 = pneg %p229
        $region38: #{tpu_custom_call.1} parent=11 // pred_check_branch
          %403 = sbr.rel (%p401) target = $region40
        $region39: #{tpu_custom_call.1} parent=11 // pred_region
          %s405 = ssub.s32 1024, 1024
          %406 = vsyncadd [#allocation15], %s405
          %s407 = sshll.u32 [#allocation14], 4
          %s408 = int_to_ptr.vmem [resolvable:$true] %s407
          %413 = dma.hbm_to_vmem [thread:$0]  %s8, 1024, %s408, [#allocation15], 64, 64, 4
        $region40: #{tpu_custom_call.1} parent=11 // pred_fallthru
          _
        // Predicated region
        $region41: #{tpu_custom_call.1} parent=11 // pred_check
          %p414 = pneg %p250
        $region42: #{tpu_custom_call.1} parent=11 // pred_check_branch
          %416 = sbr.rel (%p414) target = $region44
        $region43: #{tpu_custom_call.1} parent=11 // pred_region
          _
        $region44: #{tpu_custom_call.1} parent=11 // pred_fallthru
          _
        // Predicated region
        $region45: #{tpu_custom_call.1} parent=11 // pred_check
          %p417 = pneg %p271
        $region46: #{tpu_custom_call.1} parent=11 // pred_check_branch
          %419 = sbr.rel (%p417) target = $region48
        $region47: #{tpu_custom_call.1} parent=11 // pred_region
          %s421 = ssub.s32 1024, 1024
          %422 = vsyncadd [#allocation15], %s421
          %s423 = sshll.u32 [#allocation16], 4
          %s424 = int_to_ptr.vmem [resolvable:$true] %s423
          %429 = dma.hbm_to_vmem [thread:$0]  %s10, 1024, %s424, [#allocation15], 64, 64, 4
        $region48: #{tpu_custom_call.1} parent=11 // pred_fallthru
          _
        // Predicated region
        $region49: #{tpu_custom_call.1} parent=11 // pred_check
          %p430 = pneg %p292
        $region50: #{tpu_custom_call.1} parent=11 // pred_check_branch
          %432 = sbr.rel (%p430) target = $region52
        $region51: #{tpu_custom_call.1} parent=11 // pred_region
          _
        $region52: #{tpu_custom_call.1} parent=11 // pred_fallthru
          _
      $region12: #{tpu_custom_call.1} parent=5 // pred_fallthru
        _
      %p433 = scmp.lt.s32.totalorder %s30, 2
      // Predicated region
      $region53: #{tpu_custom_call.1} parent=5 // pred_check
        %p434 = pneg %p433
      $region54: #{tpu_custom_call.1} parent=5 // pred_check_branch
        %436 = sbr.rel (%p434) target = $region56
      $region55: #{tpu_custom_call.1} parent=5 // pred_region
        // Predicated region
        $region57: #{tpu_custom_call.1} parent=55 // pred_check
          %p437 = pneg %p50
        $region58: #{tpu_custom_call.1} parent=55 // pred_check_branch
          %439 = sbr.rel (%p437) target = $region60
        $region59: #{tpu_custom_call.1} parent=55 // pred_region
          %s440 = sand.u32 %s40, 1
          %s441 = scalar_lea.sflag [#allocation3], %s440
          %s442 = sand.u32 %s40, 1
          %s443 = smul.addr %s442, 128
          %s444 = scalar_lea.vmem [#allocation2], %s443
          %s445 = smul.u32 32, %s30
          %s447 = ssub.s32 2048, 2048
          %448 = vsyncadd %s441, %s447
          %s449 = smul.addr %s445, 64
          %s450 = scalar_lea.hbm %s0, %s449
          %s451 = sshll.u32 %s444, 4
          %s452 = int_to_ptr.vmem [resolvable:$true] %s451
          %457 = dma.hbm_to_vmem [thread:$0]  %s450, 2048, %s452, %s441, 64, 64, 4
        $region60: #{tpu_custom_call.1} parent=55 // pred_fallthru
          _
        // Predicated region
        $region61: #{tpu_custom_call.1} parent=55 // pred_check
          %p458 = pneg %p76
        $region62: #{tpu_custom_call.1} parent=55 // pred_check_branch
          %460 = sbr.rel (%p458) target = $region64
        $region63: #{tpu_custom_call.1} parent=55 // pred_region
          %s461 = sand.u32 %s30, 1
          %s462 = scalar_lea.sflag [#allocation6], %s461
          %s463 = sand.u32 %s66, 1
          %s464 = smul.addr %s463, 128
          %s465 = scalar_lea.vmem [#allocation5], %s464
          %s466 = smul.u32 32, %s30
          %s468 = ssub.s32 2048, 2048
          %469 = vsyncadd %s462, %s468
          %s470 = smul.addr %s466, 64
          %s471 = scalar_lea.hbm %s1, %s470
          %s472 = sshll.u32 %s465, 4
          %s473 = int_to_ptr.vmem [resolvable:$true] %s472
          %478 = dma.hbm_to_vmem [thread:$0]  %s471, 2048, %s473, %s462, 64, 64, 4
        $region64: #{tpu_custom_call.1} parent=55 // pred_fallthru
          _
      $region56: #{tpu_custom_call.1} parent=5 // pred_fallthru
        _
      %p479 = scmp.le.s32.totalorder 1, %s30
      %p480 = scmp.lt.s32.totalorder %s30, 3
      %p481 = pnand %p479, %p480
      %p482 = pneg %p481
      // Predicated region
      $region65: #{tpu_custom_call.1} parent=5 // pred_check
        _
      $region66: #{tpu_custom_call.1} parent=5 // pred_check_branch
        %484 = sbr.rel (%p481) target = $region68
      $region67: #{tpu_custom_call.1} parent=5 // pred_region
        %s485 = ssub.s32 %s30, 1
        %s486 = sand.u32 %s43, 1
        %s487 = scalar_lea.sflag [#allocation3], %s486
        %s488 = sand.u32 %s43, 1
        %s489 = smul.addr %s488, 128
        %s490 = scalar_lea.vmem [#allocation2], %s489
        // Predicated region
        $region69: #{tpu_custom_call.1} parent=67 // pred_check
          %p491 = pneg %p56
        $region70: #{tpu_custom_call.1} parent=67 // pred_check_branch
          %493 = sbr.rel (%p491) target = $region72
        $region71: #{tpu_custom_call.1} parent=67 // pred_region
          %494 = dma.done %s487, 2048
        $region72: #{tpu_custom_call.1} parent=67 // pred_fallthru
          _
        %s495 = sand.u32 %s35, 1
        %s496 = scalar_lea.sflag [#allocation6], %s495
        %s497 = sand.u32 %s69, 1
        %s498 = smul.addr %s497, 128
        %s499 = scalar_lea.vmem [#allocation5], %s498
        // Predicated region
        $region73: #{tpu_custom_call.1} parent=67 // pred_check
          %p500 = pneg %p82
        $region74: #{tpu_custom_call.1} parent=67 // pred_check_branch
          %502 = sbr.rel (%p500) target = $region76
        $region75: #{tpu_custom_call.1} parent=67 // pred_region
          %503 = dma.done %s496, 2048
        $region76: #{tpu_custom_call.1} parent=67 // pred_fallthru
          _
        // Predicated region
        $region77: #{tpu_custom_call.1} parent=67 // pred_check
          %p504 = pneg %p103
        $region78: #{tpu_custom_call.1} parent=67 // pred_check_branch
          %506 = sbr.rel (%p504) target = $region80
        $region79: #{tpu_custom_call.1} parent=67 // pred_region
          %507 = dma.done [#allocation6], 2048
        $region80: #{tpu_custom_call.1} parent=67 // pred_fallthru
          _
        // Predicated region
        $region81: #{tpu_custom_call.1} parent=67 // pred_check
          %p508 = pneg %p145
        $region82: #{tpu_custom_call.1} parent=67 // pred_check_branch
          %510 = sbr.rel (%p508) target = $region84
        $region83: #{tpu_custom_call.1} parent=67 // pred_region
          %511 = dma.done [#allocation9], 28672
        $region84: #{tpu_custom_call.1} parent=67 // pred_fallthru
          _
        // Predicated region
        $region85: #{tpu_custom_call.1} parent=67 // pred_check
          %p512 = pneg %p166
        $region86: #{tpu_custom_call.1} parent=67 // pred_check_branch
          %514 = sbr.rel (%p512) target = $region88
        $region87: #{tpu_custom_call.1} parent=67 // pred_region
          %515 = dma.done [#allocation9], 224
        $region88: #{tpu_custom_call.1} parent=67 // pred_fallthru
          _
        // Predicated region
        $region89: #{tpu_custom_call.1} parent=67 // pred_check
          %p516 = pneg %p187
        $region90: #{tpu_custom_call.1} parent=67 // pred_check_branch
          %518 = sbr.rel (%p516) target = $region92
        $region91: #{tpu_custom_call.1} parent=67 // pred_region
          %519 = dma.done [#allocation12], 2048
        $region92: #{tpu_custom_call.1} parent=67 // pred_fallthru
          _
        // Predicated region
        $region93: #{tpu_custom_call.1} parent=67 // pred_check
          %p520 = pneg %p208
        $region94: #{tpu_custom_call.1} parent=67 // pred_check_branch
          %522 = sbr.rel (%p520) target = $region96
        $region95: #{tpu_custom_call.1} parent=67 // pred_region
          %523 = dma.done [#allocation12], 2048
        $region96: #{tpu_custom_call.1} parent=67 // pred_fallthru
          _
        // Predicated region
        $region97: #{tpu_custom_call.1} parent=67 // pred_check
          %p524 = pneg %p229
        $region98: #{tpu_custom_call.1} parent=67 // pred_check_branch
          %526 = sbr.rel (%p524) target = $region100
        $region99: #{tpu_custom_call.1} parent=67 // pred_region
          %527 = dma.done [#allocation15], 1024
        $region100: #{tpu_custom_call.1} parent=67 // pred_fallthru
          _
        // Predicated region
        $region101: #{tpu_custom_call.1} parent=67 // pred_check
          %p528 = pneg %p271
        $region102: #{tpu_custom_call.1} parent=67 // pred_check_branch
          %530 = sbr.rel (%p528) target = $region104
        $region103: #{tpu_custom_call.1} parent=67 // pred_region
          %531 = dma.done [#allocation15], 1024
        $region104: #{tpu_custom_call.1} parent=67 // pred_fallthru
          _
        %s532 = sand.u32 %s43, 1
        %s533 = scalar_lea.sflag [#allocation3], %s532
        %s534 = sand.u32 %s43, 1
        %s535 = smul.addr %s534, 128
        %s536 = scalar_lea.vmem [#allocation2], %s535
        %p537 = pneg %p56
        %p538 = pneg %p53
        %s539 = sand.u32 %s35, 1
        %s540 = scalar_lea.sflag [#allocation6], %s539
        %s541 = sand.u32 %s69, 1
        %s542 = smul.addr %s541, 128
        %s543 = scalar_lea.vmem [#allocation5], %s542
        %p544 = pneg %p82
        %p545 = pneg %p79
        %p546 = pneg %p103
        %p547 = pneg %p100
        %p548 = pneg %p124
        %p549 = pneg %p121
        %p550 = pneg %p145
        %p551 = pneg %p142
        %p552 = pneg %p166
        %p553 = pneg %p163
        %p554 = pneg %p187
        %p555 = pneg %p184
        %p556 = pneg %p208
        %p557 = pneg %p205
        %p558 = pneg %p229
        %p559 = pneg %p226
        %p560 = pneg %p250
        %p561 = pneg %p247
        %p562 = pneg %p271
        %p563 = pneg %p268
        %p564 = pneg %p292
        %p565 = pneg %p289
        %p566 = pneg %p318
        %p567 = pneg %p315
        %s568 = sand.u32 %s305, 1
        %s569 = scalar_lea.sflag [#allocation4], %s568
        %s570 = sand.u32 %s305, 1
        %s571 = smul.addr %s570, 256
        %s572 = scalar_lea.vmem [#allocation17], %s571
        %s573 = smul.u32 32, %s35
        %s574 = smul.u32 32, %s35
        %s575 = smul.u32 32, %s35
        %v577 = vld [vmem:[%s490] sm:$0xf]
        %v578 = vld [vmem:[%s490 + $0x4] sm:$0xf]
        %v579 = vld [vmem:[%s490 + $0x8] sm:$0xf]
        %v580 = vld [vmem:[%s490 + $0xc] sm:$0xf]
        %v581 = vld [vmem:[%s490 + $0x10] sm:$0xf]
        %v582 = vld [vmem:[%s490 + $0x14] sm:$0xf]
        %v583 = vld [vmem:[%s490 + $0x18] sm:$0xf]
        %v584 = vld [vmem:[%s490 + $0x1c] sm:$0xf]
        %v585 = vld [vmem:[%s490 + $0x20] sm:$0xf]
        %v586 = vld [vmem:[%s490 + $0x24] sm:$0xf]
        %v587 = vld [vmem:[%s490 + $0x28] sm:$0xf]
        %v588 = vld [vmem:[%s490 + $0x2c] sm:$0xf]
        %v589 = vld [vmem:[%s490 + $0x30] sm:$0xf]
        %v590 = vld [vmem:[%s490 + $0x34] sm:$0xf]
        %v591 = vld [vmem:[%s490 + $0x38] sm:$0xf]
        %v592 = vld [vmem:[%s490 + $0x3c] sm:$0xf]
        %v593 = vld [vmem:[%s490 + $0x40] sm:$0xf]
        %v594 = vld [vmem:[%s490 + $0x44] sm:$0xf]
        %v595 = vld [vmem:[%s490 + $0x48] sm:$0xf]
        %v596 = vld [vmem:[%s490 + $0x4c] sm:$0xf]
        %v597 = vld [vmem:[%s490 + $0x50] sm:$0xf]
        %v598 = vld [vmem:[%s490 + $0x54] sm:$0xf]
        %v599 = vld [vmem:[%s490 + $0x58] sm:$0xf]
        %v600 = vld [vmem:[%s490 + $0x5c] sm:$0xf]
        %v601 = vld [vmem:[%s490 + $0x60] sm:$0xf]
        %v602 = vld [vmem:[%s490 + $0x64] sm:$0xf]
        %v603 = vld [vmem:[%s490 + $0x68] sm:$0xf]
        %v604 = vld [vmem:[%s490 + $0x6c] sm:$0xf]
        %v605 = vld [vmem:[%s490 + $0x70] sm:$0xf]
        %v606 = vld [vmem:[%s490 + $0x74] sm:$0xf]
        %v607 = vld [vmem:[%s490 + $0x78] sm:$0xf]
        %v608 = vld [vmem:[%s490 + $0x7c] sm:$0xf]
        %v609 = vld [vmem:[%s499] sm:$0xf]
        %v610 = vld [vmem:[%s499 + $0x4] sm:$0xf]
        %v611 = vld [vmem:[%s499 + $0x8] sm:$0xf]
        %v612 = vld [vmem:[%s499 + $0xc] sm:$0xf]
        %v613 = vld [vmem:[%s499 + $0x10] sm:$0xf]
        %v614 = vld [vmem:[%s499 + $0x14] sm:$0xf]
        %v615 = vld [vmem:[%s499 + $0x18] sm:$0xf]
        %v616 = vld [vmem:[%s499 + $0x1c] sm:$0xf]
        %v617 = vld [vmem:[%s499 + $0x20] sm:$0xf]
        %v618 = vld [vmem:[%s499 + $0x24] sm:$0xf]
        %v619 = vld [vmem:[%s499 + $0x28] sm:$0xf]
        %v620 = vld [vmem:[%s499 + $0x2c] sm:$0xf]
        %v621 = vld [vmem:[%s499 + $0x30] sm:$0xf]
        %v622 = vld [vmem:[%s499 + $0x34] sm:$0xf]
        %v623 = vld [vmem:[%s499 + $0x38] sm:$0xf]
        %v624 = vld [vmem:[%s499 + $0x3c] sm:$0xf]
        %v625 = vld [vmem:[%s499 + $0x40] sm:$0xf]
        %v626 = vld [vmem:[%s499 + $0x44] sm:$0xf]
        %v627 = vld [vmem:[%s499 + $0x48] sm:$0xf]
        %v628 = vld [vmem:[%s499 + $0x4c] sm:$0xf]
        %v629 = vld [vmem:[%s499 + $0x50] sm:$0xf]
        %v630 = vld [vmem:[%s499 + $0x54] sm:$0xf]
        %v631 = vld [vmem:[%s499 + $0x58] sm:$0xf]
        %v632 = vld [vmem:[%s499 + $0x5c] sm:$0xf]
        %v633 = vld [vmem:[%s499 + $0x60] sm:$0xf]
        %v634 = vld [vmem:[%s499 + $0x64] sm:$0xf]
        %v635 = vld [vmem:[%s499 + $0x68] sm:$0xf]
        %v636 = vld [vmem:[%s499 + $0x6c] sm:$0xf]
        %v637 = vld [vmem:[%s499 + $0x70] sm:$0xf]
        %v638 = vld [vmem:[%s499 + $0x74] sm:$0xf]
        %v639 = vld [vmem:[%s499 + $0x78] sm:$0xf]
        %v640 = vld [vmem:[%s499 + $0x7c] sm:$0xf]
        %v641 = vld [vmem:[#allocation7] sm:$0xff]
        %v642 = vld [vmem:[#allocation7 + $0x8] sm:$0xff]
        %v643 = vld [vmem:[#allocation7 + $0x10] sm:$0xff]
        %v644 = vld [vmem:[#allocation7 + $0x18] sm:$0xff]
        %v645 = vld [vmem:[#allocation7 + $0x20] sm:$0xff]
        %v646 = vld [vmem:[#allocation7 + $0x28] sm:$0xff]
        %v647 = vld [vmem:[#allocation7 + $0x30] sm:$0xff]
        %v648 = vld [vmem:[#allocation7 + $0x38] sm:$0xff]
        %v649 = vld [vmem:[#allocation7 + $0x40] sm:$0xff]
        %v650 = vld [vmem:[#allocation7 + $0x48] sm:$0xff]
        %v651 = vld [vmem:[#allocation7 + $0x50] sm:$0xff]
        %v652 = vld [vmem:[#allocation7 + $0x58] sm:$0xff]
        %v653 = vld [vmem:[#allocation7 + $0x60] sm:$0xff]
        %v654 = vld [vmem:[#allocation7 + $0x68] sm:$0xff]
        %v655 = vld [vmem:[#allocation7 + $0x70] sm:$0xff]
        %v656 = vld [vmem:[#allocation7 + $0x78] sm:$0xff]
        %v657 = vld [vmem:[%s3] sm:$0x3]
        %v659 = vlaneseq
        %v660 = vshrl.u32 %v659, 7
        %v661 = vsub.s32 0, %v660
        %v662 = vrot.slane %v657, %v661
        %v663 = vlaneseq
        %v664 = vshrl.u32 %v663, 7
        %v665 = vsub.s32 1, %v664
        %v666 = vrot.slane %v657, %v665
        %v701 = vunpack.c.l.b16 %v577
        %v702 = vunpack.c.l.b16 %v578
        %v703 = vunpack.c.l.b16 %v579
        %v704 = vunpack.c.l.b16 %v580
        %v705 = vunpack.c.l.b16 %v581
        %v706 = vunpack.c.l.b16 %v582
        %v707 = vunpack.c.l.b16 %v583
        %v708 = vunpack.c.l.b16 %v584
        %v709 = vunpack.c.l.b16 %v585
        %v710 = vunpack.c.l.b16 %v586
        %v711 = vunpack.c.l.b16 %v587
        %v712 = vunpack.c.l.b16 %v588
        %v713 = vunpack.c.l.b16 %v589
        %v714 = vunpack.c.l.b16 %v590
        %v715 = vunpack.c.l.b16 %v591
        %v716 = vunpack.c.l.b16 %v592
        %v717 = vunpack.c.l.b16 %v593
        %v718 = vunpack.c.l.b16 %v594
        %v719 = vunpack.c.l.b16 %v595
        %v720 = vunpack.c.l.b16 %v596
        %v721 = vunpack.c.l.b16 %v597
        %v722 = vunpack.c.l.b16 %v598
        %v723 = vunpack.c.l.b16 %v599
        %v724 = vunpack.c.l.b16 %v600
        %v725 = vunpack.c.l.b16 %v601
        %v726 = vunpack.c.l.b16 %v602
        %v727 = vunpack.c.l.b16 %v603
        %v728 = vunpack.c.l.b16 %v604
        %v729 = vunpack.c.l.b16 %v605
        %v730 = vunpack.c.l.b16 %v606
        %v731 = vunpack.c.l.b16 %v607
        %v732 = vunpack.c.l.b16 %v608
        %v733 = vpack.c.b16 %v702, %v701
        %v734 = vpack.c.b16 %v704, %v703
        %v735 = vpack.c.b16 %v706, %v705
        %v736 = vpack.c.b16 %v708, %v707
        %v737 = vpack.c.b16 %v710, %v709
        %v738 = vpack.c.b16 %v712, %v711
        %v739 = vpack.c.b16 %v714, %v713
        %v740 = vpack.c.b16 %v716, %v715
        %v741 = vpack.c.b16 %v718, %v717
        %v742 = vpack.c.b16 %v720, %v719
        %v743 = vpack.c.b16 %v722, %v721
        %v744 = vpack.c.b16 %v724, %v723
        %v745 = vpack.c.b16 %v726, %v725
        %v746 = vpack.c.b16 %v728, %v727
        %v747 = vpack.c.b16 %v730, %v729
        %v748 = vpack.c.b16 %v732, %v731
        %v781 = vunpack.c.l.b16 %v641
        %v782 = vunpack.c.h.b16 %v641
        %v783 = vunpack.c.l.b16 %v642
        %v784 = vunpack.c.h.b16 %v642
        %v785 = vunpack.c.l.b16 %v643
        %v786 = vunpack.c.h.b16 %v643
        %v787 = vunpack.c.l.b16 %v644
        %v788 = vunpack.c.h.b16 %v644
        %v789 = vunpack.c.l.b16 %v645
        %v790 = vunpack.c.h.b16 %v645
        %v791 = vunpack.c.l.b16 %v646
        %v792 = vunpack.c.h.b16 %v646
        %v793 = vunpack.c.l.b16 %v647
        %v794 = vunpack.c.h.b16 %v647
        %v795 = vunpack.c.l.b16 %v648
        %v796 = vunpack.c.h.b16 %v648
        %v797 = vunpack.c.l.b16 %v649
        %v798 = vunpack.c.h.b16 %v649
        %v799 = vunpack.c.l.b16 %v650
        %v800 = vunpack.c.h.b16 %v650
        %v801 = vunpack.c.l.b16 %v651
        %v802 = vunpack.c.h.b16 %v651
        %v803 = vunpack.c.l.b16 %v652
        %v804 = vunpack.c.h.b16 %v652
        %v805 = vunpack.c.l.b16 %v653
        %v806 = vunpack.c.h.b16 %v653
        %v807 = vunpack.c.l.b16 %v654
        %v808 = vunpack.c.h.b16 %v654
        %v809 = vunpack.c.l.b16 %v655
        %v810 = vunpack.c.h.b16 %v655
        %v811 = vunpack.c.l.b16 %v656
        %v812 = vunpack.c.h.b16 %v656
        %v813 = vpack.c.b16 %v783, %v781
        %v814 = vpack.c.b16 %v784, %v782
        %v815 = vpack.c.b16 %v787, %v785
        %v816 = vpack.c.b16 %v788, %v786
        %v817 = vpack.c.b16 %v791, %v789
        %v818 = vpack.c.b16 %v792, %v790
        %v819 = vpack.c.b16 %v795, %v793
        %v820 = vpack.c.b16 %v796, %v794
        %v821 = vpack.c.b16 %v799, %v797
        %v822 = vpack.c.b16 %v800, %v798
        %v823 = vpack.c.b16 %v803, %v801
        %v824 = vpack.c.b16 %v804, %v802
        %v825 = vpack.c.b16 %v807, %v805
        %v826 = vpack.c.b16 %v808, %v806
        %v827 = vpack.c.b16 %v811, %v809
        %v828 = vpack.c.b16 %v812, %v810
        %845 = vmatprep.subr.bf16.mxu0 %v828
        %846 = vmatpush1.bf16.msra.mxu0 %v827
        %847 = vmatprep.subr.bf16.mxu0 %v826
        %848 = vmatpush1.bf16.msra.mxu0 %v825
        %849 = vmatprep.subr.bf16.mxu0 %v824
        %850 = vmatpush1.bf16.msra.mxu0 %v823
        %851 = vmatprep.subr.bf16.mxu0 %v822
        %852 = vmatpush1.bf16.msra.mxu0 %v821
        %853 = vmatprep.subr.bf16.mxu0 %v820
        %854 = vmatpush1.bf16.msra.mxu0 %v819
        %855 = vmatprep.subr.bf16.mxu0 %v818
        %856 = vmatpush1.bf16.msra.mxu0 %v817
        %857 = vmatprep.subr.bf16.mxu0 %v816
        %858 = vmatpush1.bf16.msra.mxu0 %v815
        %859 = vmatprep.subr.bf16.mxu0 %v814
        %860 = vmatpush1.bf16.msra.mxu0 %v813
        %861 = vmatprep.subr.bf16.mxu0 0
        %862 = vmatpush2.bf16.msra.mxu0 0
        %863 = vmatprep.subr.bf16.mxu0 0
        %864 = vmatpush2.bf16.msra.mxu0 0
        %865 = vmatprep.subr.bf16.mxu0 0
        %866 = vmatpush2.bf16.msra.mxu0 0
        %867 = vmatprep.subr.bf16.mxu0 0
        %868 = vmatpush2.bf16.msra.mxu0 0
        %869 = vmatprep.subr.bf16.mxu0 0
        %870 = vmatpush2.bf16.msra.mxu0 0
        %871 = vmatprep.subr.bf16.mxu0 0
        %872 = vmatpush2.bf16.msra.mxu0 0
        %873 = vmatprep.subr.bf16.mxu0 0
        %874 = vmatpush2.bf16.msra.mxu0 0
        %875 = vmatprep.subr.bf16.mxu0 0
        %876 = vmatpush2.bf16.msra.mxu0 0
        %877 = vmatprep.mubr.bf16.mxu0 0
        %878 = vmatmul.mubr.bf16.gmra.mxu0 %v733
        %v879 = vpop.f32.mrf.mxu0
        %v880 = vadd.f32 %v662, %v879
        %v881 = vpop.f32.mrf.mxu0
        %v882 = vadd.f32 %v666, %v881
        %v883 = vpop.f32.mrf.mxu0
        %v884 = vadd.f32 %v662, %v883
        %v885 = vpop.f32.mrf.mxu0
        %v886 = vadd.f32 %v666, %v885
        %887 = vmatprep.mubr.bf16.mxu0 0
        %888 = vmatmul.mubr.bf16.gmra.mxu0 %v734
        %v889 = vpop.f32.mrf.mxu0
        %v890 = vadd.f32 %v662, %v889
        %v891 = vpop.f32.mrf.mxu0
        %v892 = vadd.f32 %v666, %v891
        %v893 = vpop.f32.mrf.mxu0
        %v894 = vadd.f32 %v662, %v893
        %v895 = vpop.f32.mrf.mxu0
        %v896 = vadd.f32 %v666, %v895
        %897 = vmatprep.mubr.bf16.mxu0 0
        %898 = vmatmul.mubr.bf16.gmra.mxu0 %v735
        %v899 = vpop.f32.mrf.mxu0
        %v900 = vadd.f32 %v662, %v899
        %v901 = vpop.f32.mrf.mxu0
        %v902 = vadd.f32 %v666, %v901
        %v903 = vpop.f32.mrf.mxu0
        %v904 = vadd.f32 %v662, %v903
        %v905 = vpop.f32.mrf.mxu0
        %v906 = vadd.f32 %v666, %v905
        %907 = vmatprep.mubr.bf16.mxu0 0
        %908 = vmatmul.mubr.bf16.gmra.mxu0 %v736
        %v909 = vpop.f32.mrf.mxu0
        %v910 = vadd.f32 %v662, %v909
        %v911 = vpop.f32.mrf.mxu0
        %v912 = vadd.f32 %v666, %v911
        %v913 = vpop.f32.mrf.mxu0
        %v914 = vadd.f32 %v662, %v913
        %v915 = vpop.f32.mrf.mxu0
        %v916 = vadd.f32 %v666, %v915
        %917 = vmatprep.mubr.bf16.mxu0 0
        %918 = vmatmul.mubr.bf16.gmra.mxu0 %v737
        %v919 = vpop.f32.mrf.mxu0
        %v920 = vadd.f32 %v662, %v919
        %v921 = vpop.f32.mrf.mxu0
        %v922 = vadd.f32 %v666, %v921
        %v923 = vpop.f32.mrf.mxu0
        %v924 = vadd.f32 %v662, %v923
        %v925 = vpop.f32.mrf.mxu0
        %v926 = vadd.f32 %v666, %v925
        %927 = vmatprep.mubr.bf16.mxu0 0
        %928 = vmatmul.mubr.bf16.gmra.mxu0 %v738
        %v929 = vpop.f32.mrf.mxu0
        %v930 = vadd.f32 %v662, %v929
        %v931 = vpop.f32.mrf.mxu0
        %v932 = vadd.f32 %v666, %v931
        %v933 = vpop.f32.mrf.mxu0
        %v934 = vadd.f32 %v662, %v933
        %v935 = vpop.f32.mrf.mxu0
        %v936 = vadd.f32 %v666, %v935
        %937 = vmatprep.mubr.bf16.mxu0 0
        %938 = vmatmul.mubr.bf16.gmra.mxu0 %v739
        %v939 = vpop.f32.mrf.mxu0
        %v940 = vadd.f32 %v662, %v939
        %v941 = vpop.f32.mrf.mxu0
        %v942 = vadd.f32 %v666, %v941
        %v943 = vpop.f32.mrf.mxu0
        %v944 = vadd.f32 %v662, %v943
        %v945 = vpop.f32.mrf.mxu0
        %v946 = vadd.f32 %v666, %v945
        %947 = vmatprep.mubr.bf16.mxu0 0
        %948 = vmatmul.mubr.bf16.gmra.mxu0 %v740
        %v949 = vpop.f32.mrf.mxu0
        %v950 = vadd.f32 %v662, %v949
        %v951 = vpop.f32.mrf.mxu0
        %v952 = vadd.f32 %v666, %v951
        %v953 = vpop.f32.mrf.mxu0
        %v954 = vadd.f32 %v662, %v953
        %v955 = vpop.f32.mrf.mxu0
        %v956 = vadd.f32 %v666, %v955
        %957 = vmatprep.mubr.bf16.mxu0 0
        %958 = vmatmul.mubr.bf16.gmra.mxu0 %v741
        %v959 = vpop.f32.mrf.mxu0
        %v960 = vadd.f32 %v662, %v959
        %v961 = vpop.f32.mrf.mxu0
        %v962 = vadd.f32 %v666, %v961
        %v963 = vpop.f32.mrf.mxu0
        %v964 = vadd.f32 %v662, %v963
        %v965 = vpop.f32.mrf.mxu0
        %v966 = vadd.f32 %v666, %v965
        %967 = vmatprep.mubr.bf16.mxu0 0
        %968 = vmatmul.mubr.bf16.gmra.mxu0 %v742
        %v969 = vpop.f32.mrf.mxu0
        %v970 = vadd.f32 %v662, %v969
        %v971 = vpop.f32.mrf.mxu0
        %v972 = vadd.f32 %v666, %v971
        %v973 = vpop.f32.mrf.mxu0
        %v974 = vadd.f32 %v662, %v973
        %v975 = vpop.f32.mrf.mxu0
        %v976 = vadd.f32 %v666, %v975
        %977 = vmatprep.mubr.bf16.mxu0 0
        %978 = vmatmul.mubr.bf16.gmra.mxu0 %v743
        %v979 = vpop.f32.mrf.mxu0
        %v980 = vadd.f32 %v662, %v979
        %v981 = vpop.f32.mrf.mxu0
        %v982 = vadd.f32 %v666, %v981
        %v983 = vpop.f32.mrf.mxu0
        %v984 = vadd.f32 %v662, %v983
        %v985 = vpop.f32.mrf.mxu0
        %v986 = vadd.f32 %v666, %v985
        %987 = vmatprep.mubr.bf16.mxu0 0
        %988 = vmatmul.mubr.bf16.gmra.mxu0 %v744
        %v989 = vpop.f32.mrf.mxu0
        %v990 = vadd.f32 %v662, %v989
        %v991 = vpop.f32.mrf.mxu0
        %v992 = vadd.f32 %v666, %v991
        %v993 = vpop.f32.mrf.mxu0
        %v994 = vadd.f32 %v662, %v993
        %v995 = vpop.f32.mrf.mxu0
        %v996 = vadd.f32 %v666, %v995
        %997 = vmatprep.mubr.bf16.mxu0 0
        %998 = vmatmul.mubr.bf16.gmra.mxu0 %v745
        %v999 = vpop.f32.mrf.mxu0
        %v1000 = vadd.f32 %v662, %v999
        %v1001 = vpop.f32.mrf.mxu0
        %v1002 = vadd.f32 %v666, %v1001
        %v1003 = vpop.f32.mrf.mxu0
        %v1004 = vadd.f32 %v662, %v1003
        %v1005 = vpop.f32.mrf.mxu0
        %v1006 = vadd.f32 %v666, %v1005
        %1007 = vmatprep.mubr.bf16.mxu0 0
        %1008 = vmatmul.mubr.bf16.gmra.mxu0 %v746
        %v1009 = vpop.f32.mrf.mxu0
        %v1010 = vadd.f32 %v662, %v1009
        %v1011 = vpop.f32.mrf.mxu0
        %v1012 = vadd.f32 %v666, %v1011
        %v1013 = vpop.f32.mrf.mxu0
        %v1014 = vadd.f32 %v662, %v1013
        %v1015 = vpop.f32.mrf.mxu0
        %v1016 = vadd.f32 %v666, %v1015
        %1017 = vmatprep.mubr.bf16.mxu0 0
        %1018 = vmatmul.mubr.bf16.gmra.mxu0 %v747
        %v1019 = vpop.f32.mrf.mxu0
        %v1020 = vadd.f32 %v662, %v1019
        %v1021 = vpop.f32.mrf.mxu0
        %v1022 = vadd.f32 %v666, %v1021
        %v1023 = vpop.f32.mrf.mxu0
        %v1024 = vadd.f32 %v662, %v1023
        %v1025 = vpop.f32.mrf.mxu0
        %v1026 = vadd.f32 %v666, %v1025
        %1027 = vmatprep.mubr.bf16.mxu0 0
        %1028 = vmatmul.mubr.bf16.gmra.mxu0 %v748
        %v1029 = vpop.f32.mrf.mxu0
        %v1030 = vadd.f32 %v662, %v1029
        %v1031 = vpop.f32.mrf.mxu0
        %v1032 = vadd.f32 %v666, %v1031
        %v1033 = vpop.f32.mrf.mxu0
        %v1034 = vadd.f32 %v662, %v1033
        %v1035 = vpop.f32.mrf.mxu0
        %v1036 = vadd.f32 %v666, %v1035
        %1037 = vdwg.mxu0
        %v1038 = vmax.f32 %v880, 0.0
        %v1039 = vmax.f32 %v882, 0.0
        %v1040 = vmax.f32 %v884, 0.0
        %v1041 = vmax.f32 %v886, 0.0
        %v1042 = vmax.f32 %v890, 0.0
        %v1043 = vmax.f32 %v892, 0.0
        %v1044 = vmax.f32 %v894, 0.0
        %v1045 = vmax.f32 %v896, 0.0
        %v1046 = vmax.f32 %v900, 0.0
        %v1047 = vmax.f32 %v902, 0.0
        %v1048 = vmax.f32 %v904, 0.0
        %v1049 = vmax.f32 %v906, 0.0
        %v1050 = vmax.f32 %v910, 0.0
        %v1051 = vmax.f32 %v912, 0.0
        %v1052 = vmax.f32 %v914, 0.0
        %v1053 = vmax.f32 %v916, 0.0
        %v1054 = vmax.f32 %v920, 0.0
        %v1055 = vmax.f32 %v922, 0.0
        %v1056 = vmax.f32 %v924, 0.0
        %v1057 = vmax.f32 %v926, 0.0
        %v1058 = vmax.f32 %v930, 0.0
        %v1059 = vmax.f32 %v932, 0.0
        %v1060 = vmax.f32 %v934, 0.0
        %v1061 = vmax.f32 %v936, 0.0
        %v1062 = vmax.f32 %v940, 0.0
        %v1063 = vmax.f32 %v942, 0.0
        %v1064 = vmax.f32 %v944, 0.0
        %v1065 = vmax.f32 %v946, 0.0
        %v1066 = vmax.f32 %v950, 0.0
        %v1067 = vmax.f32 %v952, 0.0
        %v1068 = vmax.f32 %v954, 0.0
        %v1069 = vmax.f32 %v956, 0.0
        %v1070 = vmax.f32 %v960, 0.0
        %v1071 = vmax.f32 %v962, 0.0
        %v1072 = vmax.f32 %v964, 0.0
        %v1073 = vmax.f32 %v966, 0.0
        %v1074 = vmax.f32 %v970, 0.0
        %v1075 = vmax.f32 %v972, 0.0
        %v1076 = vmax.f32 %v974, 0.0
        %v1077 = vmax.f32 %v976, 0.0
        %v1078 = vmax.f32 %v980, 0.0
        %v1079 = vmax.f32 %v982, 0.0
        %v1080 = vmax.f32 %v984, 0.0
        %v1081 = vmax.f32 %v986, 0.0
        %v1082 = vmax.f32 %v990, 0.0
        %v1083 = vmax.f32 %v992, 0.0
        %v1084 = vmax.f32 %v994, 0.0
        %v1085 = vmax.f32 %v996, 0.0
        %v1086 = vmax.f32 %v1000, 0.0
        %v1087 = vmax.f32 %v1002, 0.0
        %v1088 = vmax.f32 %v1004, 0.0
        %v1089 = vmax.f32 %v1006, 0.0
        %v1090 = vmax.f32 %v1010, 0.0
        %v1091 = vmax.f32 %v1012, 0.0
        %v1092 = vmax.f32 %v1014, 0.0
        %v1093 = vmax.f32 %v1016, 0.0
        %v1094 = vmax.f32 %v1020, 0.0
        %v1095 = vmax.f32 %v1022, 0.0
        %v1096 = vmax.f32 %v1024, 0.0
        %v1097 = vmax.f32 %v1026, 0.0
        %v1098 = vmax.f32 %v1030, 0.0
        %v1099 = vmax.f32 %v1032, 0.0
        %v1100 = vmax.f32 %v1034, 0.0
        %v1101 = vmax.f32 %v1036, 0.0
        %v1102 = vpack.c.bf16 %v1040, %v1038
        %v1103 = vpack.c.bf16 %v1041, %v1039
        %v1104 = vpack.c.bf16 %v1044, %v1042
        %v1105 = vpack.c.bf16 %v1045, %v1043
        %v1106 = vpack.c.bf16 %v1048, %v1046
        %v1107 = vpack.c.bf16 %v1049, %v1047
        %v1108 = vpack.c.bf16 %v1052, %v1050
        %v1109 = vpack.c.bf16 %v1053, %v1051
        %v1110 = vpack.c.bf16 %v1056, %v1054
        %v1111 = vpack.c.bf16 %v1057, %v1055
        %v1112 = vpack.c.bf16 %v1060, %v1058
        %v1113 = vpack.c.bf16 %v1061, %v1059
        %v1114 = vpack.c.bf16 %v1064, %v1062
        %v1115 = vpack.c.bf16 %v1065, %v1063
        %v1116 = vpack.c.bf16 %v1068, %v1066
        %v1117 = vpack.c.bf16 %v1069, %v1067
        %v1118 = vpack.c.bf16 %v1072, %v1070
        %v1119 = vpack.c.bf16 %v1073, %v1071
        %v1120 = vpack.c.bf16 %v1076, %v1074
        %v1121 = vpack.c.bf16 %v1077, %v1075
        %v1122 = vpack.c.bf16 %v1080, %v1078
        %v1123 = vpack.c.bf16 %v1081, %v1079
        %v1124 = vpack.c.bf16 %v1084, %v1082
        %v1125 = vpack.c.bf16 %v1085, %v1083
        %v1126 = vpack.c.bf16 %v1088, %v1086
        %v1127 = vpack.c.bf16 %v1089, %v1087
        %v1128 = vpack.c.bf16 %v1092, %v1090
        %v1129 = vpack.c.bf16 %v1093, %v1091
        %v1130 = vpack.c.bf16 %v1096, %v1094
        %v1131 = vpack.c.bf16 %v1097, %v1095
        %v1132 = vpack.c.bf16 %v1100, %v1098
        %v1133 = vpack.c.bf16 %v1101, %v1099
        %v1134 = vld [vmem:[#allocation8] sm:$0xff]
        %v1135 = vld [vmem:[#allocation8 + $0x8] sm:$0xff]
        %v1136 = vld [vmem:[#allocation8 + $0x10] sm:$0xff]
        %v1137 = vld [vmem:[#allocation8 + $0x18] sm:$0xff]
        %v1138 = vld [vmem:[#allocation8 + $0x20] sm:$0xff]
        %v1139 = vld [vmem:[#allocation8 + $0x28] sm:$0xff]
        %v1140 = vld [vmem:[#allocation8 + $0x30] sm:$0xff]
        %v1141 = vld [vmem:[#allocation8 + $0x38] sm:$0xff]
        %v1142 = vld [vmem:[#allocation8 + $0x40] sm:$0xff]
        %v1143 = vld [vmem:[#allocation8 + $0x48] sm:$0xff]
        %v1144 = vld [vmem:[#allocation8 + $0x50] sm:$0xff]
        %v1145 = vld [vmem:[#allocation8 + $0x58] sm:$0xff]
        %v1146 = vld [vmem:[#allocation8 + $0x60] sm:$0xff]
        %v1147 = vld [vmem:[#allocation8 + $0x68] sm:$0xff]
        %v1148 = vld [vmem:[#allocation8 + $0x70] sm:$0xff]
        %v1149 = vld [vmem:[#allocation8 + $0x78] sm:$0xff]
        %v1150 = vld [vmem:[#allocation8 + $0x80] sm:$0xff]
        %v1151 = vld [vmem:[#allocation8 + $0x88] sm:$0xff]
        %v1152 = vld [vmem:[#allocation8 + $0x90] sm:$0xff]
        %v1153 = vld [vmem:[#allocation8 + $0x98] sm:$0xff]
        %v1154 = vld [vmem:[#allocation8 + $0xa0] sm:$0xff]
        %v1155 = vld [vmem:[#allocation8 + $0xa8] sm:$0xff]
        %v1156 = vld [vmem:[#allocation8 + $0xb0] sm:$0xff]
        %v1157 = vld [vmem:[#allocation8 + $0xb8] sm:$0xff]
        %v1158 = vld [vmem:[#allocation8 + $0xc0] sm:$0xff]
        %v1159 = vld [vmem:[#allocation8 + $0xc8] sm:$0xff]
        %v1160 = vld [vmem:[#allocation8 + $0xd0] sm:$0xff]
        %v1161 = vld [vmem:[#allocation8 + $0xd8] sm:$0xff]
        %v1162 = vld [vmem:[#allocation8 + $0xe0] sm:$0xff]
        %v1163 = vld [vmem:[#allocation8 + $0xe8] sm:$0xff]
        %v1164 = vld [vmem:[#allocation8 + $0xf0] sm:$0xff]
        %v1165 = vld [vmem:[#allocation8 + $0xf8] sm:$0xff]
        %v1166 = vld [vmem:[#allocation10] sm:$0x3]
        %v1168 = vlaneseq
        %v1169 = vshrl.u32 %v1168, 7
        %v1170 = vsub.s32 0, %v1169
        %v1171 = vrot.slane %v1166, %v1170
        %v1172 = vlaneseq
        %v1173 = vshrl.u32 %v1172, 7
        %v1174 = vsub.s32 1, %v1173
        %v1175 = vrot.slane %v1166, %v1174
        %v1210 = vunpack.c.l.b16 %v1134
        %v1211 = vunpack.c.h.b16 %v1134
        %v1212 = vunpack.c.l.b16 %v1135
        %v1213 = vunpack.c.h.b16 %v1135
        %v1214 = vunpack.c.l.b16 %v1136
        %v1215 = vunpack.c.h.b16 %v1136
        %v1216 = vunpack.c.l.b16 %v1137
        %v1217 = vunpack.c.h.b16 %v1137
        %v1218 = vunpack.c.l.b16 %v1138
        %v1219 = vunpack.c.h.b16 %v1138
        %v1220 = vunpack.c.l.b16 %v1139
        %v1221 = vunpack.c.h.b16 %v1139
        %v1222 = vunpack.c.l.b16 %v1140
        %v1223 = vunpack.c.h.b16 %v1140
        %v1224 = vunpack.c.l.b16 %v1141
        %v1225 = vunpack.c.h.b16 %v1141
        %v1226 = vunpack.c.l.b16 %v1142
        %v1227 = vunpack.c.h.b16 %v1142
        %v1228 = vunpack.c.l.b16 %v1143
        %v1229 = vunpack.c.h.b16 %v1143
        %v1230 = vunpack.c.l.b16 %v1144
        %v1231 = vunpack.c.h.b16 %v1144
        %v1232 = vunpack.c.l.b16 %v1145
        %v1233 = vunpack.c.h.b16 %v1145
        %v1234 = vunpack.c.l.b16 %v1146
        %v1235 = vunpack.c.h.b16 %v1146
        %v1236 = vunpack.c.l.b16 %v1147
        %v1237 = vunpack.c.h.b16 %v1147
        %v1238 = vunpack.c.l.b16 %v1148
        %v1239 = vunpack.c.h.b16 %v1148
        %v1240 = vunpack.c.l.b16 %v1149
        %v1241 = vunpack.c.h.b16 %v1149
        %v1242 = vunpack.c.l.b16 %v1150
        %v1243 = vunpack.c.h.b16 %v1150
        %v1244 = vunpack.c.l.b16 %v1151
        %v1245 = vunpack.c.h.b16 %v1151
        %v1246 = vunpack.c.l.b16 %v1152
        %v1247 = vunpack.c.h.b16 %v1152
        %v1248 = vunpack.c.l.b16 %v1153
        %v1249 = vunpack.c.h.b16 %v1153
        %v1250 = vunpack.c.l.b16 %v1154
        %v1251 = vunpack.c.h.b16 %v1154
        %v1252 = vunpack.c.l.b16 %v1155
        %v1253 = vunpack.c.h.b16 %v1155
        %v1254 = vunpack.c.l.b16 %v1156
        %v1255 = vunpack.c.h.b16 %v1156
        %v1256 = vunpack.c.l.b16 %v1157
        %v1257 = vunpack.c.h.b16 %v1157
        %v1258 = vunpack.c.l.b16 %v1158
        %v1259 = vunpack.c.h.b16 %v1158
        %v1260 = vunpack.c.l.b16 %v1159
        %v1261 = vunpack.c.h.b16 %v1159
        %v1262 = vunpack.c.l.b16 %v1160
        %v1263 = vunpack.c.h.b16 %v1160
        %v1264 = vunpack.c.l.b16 %v1161
        %v1265 = vunpack.c.h.b16 %v1161
        %v1266 = vunpack.c.l.b16 %v1162
        %v1267 = vunpack.c.h.b16 %v1162
        %v1268 = vunpack.c.l.b16 %v1163
        %v1269 = vunpack.c.h.b16 %v1163
        %v1270 = vunpack.c.l.b16 %v1164
        %v1271 = vunpack.c.h.b16 %v1164
        %v1272 = vunpack.c.l.b16 %v1165
        %v1273 = vunpack.c.h.b16 %v1165
        %v1274 = vpack.c.b16 %v1212, %v1210
        %v1275 = vpack.c.b16 %v1213, %v1211
        %v1276 = vpack.c.b16 %v1216, %v1214
        %v1277 = vpack.c.b16 %v1217, %v1215
        %v1278 = vpack.c.b16 %v1220, %v1218
        %v1279 = vpack.c.b16 %v1221, %v1219
        %v1280 = vpack.c.b16 %v1224, %v1222
        %v1281 = vpack.c.b16 %v1225, %v1223
        %v1282 = vpack.c.b16 %v1228, %v1226
        %v1283 = vpack.c.b16 %v1229, %v1227
        %v1284 = vpack.c.b16 %v1232, %v1230
        %v1285 = vpack.c.b16 %v1233, %v1231
        %v1286 = vpack.c.b16 %v1236, %v1234
        %v1287 = vpack.c.b16 %v1237, %v1235
        %v1288 = vpack.c.b16 %v1240, %v1238
        %v1289 = vpack.c.b16 %v1241, %v1239
        %v1290 = vpack.c.b16 %v1244, %v1242
        %v1291 = vpack.c.b16 %v1245, %v1243
        %v1292 = vpack.c.b16 %v1248, %v1246
        %v1293 = vpack.c.b16 %v1249, %v1247
        %v1294 = vpack.c.b16 %v1252, %v1250
        %v1295 = vpack.c.b16 %v1253, %v1251
        %v1296 = vpack.c.b16 %v1256, %v1254
        %v1297 = vpack.c.b16 %v1257, %v1255
        %v1298 = vpack.c.b16 %v1260, %v1258
        %v1299 = vpack.c.b16 %v1261, %v1259
        %v1300 = vpack.c.b16 %v1264, %v1262
        %v1301 = vpack.c.b16 %v1265, %v1263
        %v1302 = vpack.c.b16 %v1268, %v1266
        %v1303 = vpack.c.b16 %v1269, %v1267
        %v1304 = vpack.c.b16 %v1272, %v1270
        %v1305 = vpack.c.b16 %v1273, %v1271
        %1338 = vmatprep.subr.bf16.mxu0 %v1289
        %1339 = vmatpush1.bf16.msra.mxu0 %v1288
        %1340 = vmatprep.subr.bf16.mxu0 %v1287
        %1341 = vmatpush1.bf16.msra.mxu0 %v1286
        %1342 = vmatprep.subr.bf16.mxu0 %v1285
        %1343 = vmatpush1.bf16.msra.mxu0 %v1284
        %1344 = vmatprep.subr.bf16.mxu0 %v1283
        %1345 = vmatpush1.bf16.msra.mxu0 %v1282
        %1346 = vmatprep.subr.bf16.mxu0 %v1281
        %1347 = vmatpush1.bf16.msra.mxu0 %v1280
        %1348 = vmatprep.subr.bf16.mxu0 %v1279
        %1349 = vmatpush1.bf16.msra.mxu0 %v1278
        %1350 = vmatprep.subr.bf16.mxu0 %v1277
        %1351 = vmatpush1.bf16.msra.mxu0 %v1276
        %1352 = vmatprep.subr.bf16.mxu0 %v1275
        %1353 = vmatpush1.bf16.msra.mxu0 %v1274
        %1354 = vmatprep.subr.bf16.mxu0 %v1305
        %1355 = vmatpush2.bf16.msra.mxu0 %v1304
        %1356 = vmatprep.subr.bf16.mxu0 %v1303
        %1357 = vmatpush2.bf16.msra.mxu0 %v1302
        %1358 = vmatprep.subr.bf16.mxu0 %v1301
        %1359 = vmatpush2.bf16.msra.mxu0 %v1300
        %1360 = vmatprep.subr.bf16.mxu0 %v1299
        %1361 = vmatpush2.bf16.msra.mxu0 %v1298
        %1362 = vmatprep.subr.bf16.mxu0 %v1297
        %1363 = vmatpush2.bf16.msra.mxu0 %v1296
        %1364 = vmatprep.subr.bf16.mxu0 %v1295
        %1365 = vmatpush2.bf16.msra.mxu0 %v1294
        %1366 = vmatprep.subr.bf16.mxu0 %v1293
        %1367 = vmatpush2.bf16.msra.mxu0 %v1292
        %1368 = vmatprep.subr.bf16.mxu0 %v1291
        %1369 = vmatpush2.bf16.msra.mxu0 %v1290
        %1370 = vmatprep.mubr.bf16.mxu0 %v1103
        %1371 = vmatmul.mubr.bf16.gmra.mxu0 %v1102
        %v1372 = vpop.f32.mrf.mxu0
        %v1373 = vadd.f32 %v1171, %v1372
        %v1374 = vpop.f32.mrf.mxu0
        %v1375 = vadd.f32 %v1175, %v1374
        %v1376 = vpop.f32.mrf.mxu0
        %v1377 = vadd.f32 %v1171, %v1376
        %v1378 = vpop.f32.mrf.mxu0
        %v1379 = vadd.f32 %v1175, %v1378
        %1380 = vmatprep.mubr.bf16.mxu0 %v1105
        %1381 = vmatmul.mubr.bf16.gmra.mxu0 %v1104
        %v1382 = vpop.f32.mrf.mxu0
        %v1383 = vadd.f32 %v1171, %v1382
        %v1384 = vpop.f32.mrf.mxu0
        %v1385 = vadd.f32 %v1175, %v1384
        %v1386 = vpop.f32.mrf.mxu0
        %v1387 = vadd.f32 %v1171, %v1386
        %v1388 = vpop.f32.mrf.mxu0
        %v1389 = vadd.f32 %v1175, %v1388
        %1390 = vmatprep.mubr.bf16.mxu0 %v1107
        %1391 = vmatmul.mubr.bf16.gmra.mxu0 %v1106
        %v1392 = vpop.f32.mrf.mxu0
        %v1393 = vadd.f32 %v1171, %v1392
        %v1394 = vpop.f32.mrf.mxu0
        %v1395 = vadd.f32 %v1175, %v1394
        %v1396 = vpop.f32.mrf.mxu0
        %v1397 = vadd.f32 %v1171, %v1396
        %v1398 = vpop.f32.mrf.mxu0
        %v1399 = vadd.f32 %v1175, %v1398
        %1400 = vmatprep.mubr.bf16.mxu0 %v1109
        %1401 = vmatmul.mubr.bf16.gmra.mxu0 %v1108
        %v1402 = vpop.f32.mrf.mxu0
        %v1403 = vadd.f32 %v1171, %v1402
        %v1404 = vpop.f32.mrf.mxu0
        %v1405 = vadd.f32 %v1175, %v1404
        %v1406 = vpop.f32.mrf.mxu0
        %v1407 = vadd.f32 %v1171, %v1406
        %v1408 = vpop.f32.mrf.mxu0
        %v1409 = vadd.f32 %v1175, %v1408
        %1410 = vmatprep.mubr.bf16.mxu0 %v1111
        %1411 = vmatmul.mubr.bf16.gmra.mxu0 %v1110
        %v1412 = vpop.f32.mrf.mxu0
        %v1413 = vadd.f32 %v1171, %v1412
        %v1414 = vpop.f32.mrf.mxu0
        %v1415 = vadd.f32 %v1175, %v1414
        %v1416 = vpop.f32.mrf.mxu0
        %v1417 = vadd.f32 %v1171, %v1416
        %v1418 = vpop.f32.mrf.mxu0
        %v1419 = vadd.f32 %v1175, %v1418
        %1420 = vmatprep.mubr.bf16.mxu0 %v1113
        %1421 = vmatmul.mubr.bf16.gmra.mxu0 %v1112
        %v1422 = vpop.f32.mrf.mxu0
        %v1423 = vadd.f32 %v1171, %v1422
        %v1424 = vpop.f32.mrf.mxu0
        %v1425 = vadd.f32 %v1175, %v1424
        %v1426 = vpop.f32.mrf.mxu0
        %v1427 = vadd.f32 %v1171, %v1426
        %v1428 = vpop.f32.mrf.mxu0
        %v1429 = vadd.f32 %v1175, %v1428
        %1430 = vmatprep.mubr.bf16.mxu0 %v1115
        %1431 = vmatmul.mubr.bf16.gmra.mxu0 %v1114
        %v1432 = vpop.f32.mrf.mxu0
        %v1433 = vadd.f32 %v1171, %v1432
        %v1434 = vpop.f32.mrf.mxu0
        %v1435 = vadd.f32 %v1175, %v1434
        %v1436 = vpop.f32.mrf.mxu0
        %v1437 = vadd.f32 %v1171, %v1436
        %v1438 = vpop.f32.mrf.mxu0
        %v1439 = vadd.f32 %v1175, %v1438
        %1440 = vmatprep.mubr.bf16.mxu0 %v1117
        %1441 = vmatmul.mubr.bf16.gmra.mxu0 %v1116
        %v1442 = vpop.f32.mrf.mxu0
        %v1443 = vadd.f32 %v1171, %v1442
        %v1444 = vpop.f32.mrf.mxu0
        %v1445 = vadd.f32 %v1175, %v1444
        %v1446 = vpop.f32.mrf.mxu0
        %v1447 = vadd.f32 %v1171, %v1446
        %v1448 = vpop.f32.mrf.mxu0
        %v1449 = vadd.f32 %v1175, %v1448
        %1450 = vmatprep.mubr.bf16.mxu0 %v1119
        %1451 = vmatmul.mubr.bf16.gmra.mxu0 %v1118
        %v1452 = vpop.f32.mrf.mxu0
        %v1453 = vadd.f32 %v1171, %v1452
        %v1454 = vpop.f32.mrf.mxu0
        %v1455 = vadd.f32 %v1175, %v1454
        %v1456 = vpop.f32.mrf.mxu0
        %v1457 = vadd.f32 %v1171, %v1456
        %v1458 = vpop.f32.mrf.mxu0
        %v1459 = vadd.f32 %v1175, %v1458
        %1460 = vmatprep.mubr.bf16.mxu0 %v1121
        %1461 = vmatmul.mubr.bf16.gmra.mxu0 %v1120
        %v1462 = vpop.f32.mrf.mxu0
        %v1463 = vadd.f32 %v1171, %v1462
        %v1464 = vpop.f32.mrf.mxu0
        %v1465 = vadd.f32 %v1175, %v1464
        %v1466 = vpop.f32.mrf.mxu0
        %v1467 = vadd.f32 %v1171, %v1466
        %v1468 = vpop.f32.mrf.mxu0
        %v1469 = vadd.f32 %v1175, %v1468
        %1470 = vmatprep.mubr.bf16.mxu0 %v1123
        %1471 = vmatmul.mubr.bf16.gmra.mxu0 %v1122
        %v1472 = vpop.f32.mrf.mxu0
        %v1473 = vadd.f32 %v1171, %v1472
        %v1474 = vpop.f32.mrf.mxu0
        %v1475 = vadd.f32 %v1175, %v1474
        %v1476 = vpop.f32.mrf.mxu0
        %v1477 = vadd.f32 %v1171, %v1476
        %v1478 = vpop.f32.mrf.mxu0
        %v1479 = vadd.f32 %v1175, %v1478
        %1480 = vmatprep.mubr.bf16.mxu0 %v1125
        %1481 = vmatmul.mubr.bf16.gmra.mxu0 %v1124
        %v1482 = vpop.f32.mrf.mxu0
        %v1483 = vadd.f32 %v1171, %v1482
        %v1484 = vpop.f32.mrf.mxu0
        %v1485 = vadd.f32 %v1175, %v1484
        %v1486 = vpop.f32.mrf.mxu0
        %v1487 = vadd.f32 %v1171, %v1486
        %v1488 = vpop.f32.mrf.mxu0
        %v1489 = vadd.f32 %v1175, %v1488
        %1490 = vmatprep.mubr.bf16.mxu0 %v1127
        %1491 = vmatmul.mubr.bf16.gmra.mxu0 %v1126
        %v1492 = vpop.f32.mrf.mxu0
        %v1493 = vadd.f32 %v1171, %v1492
        %v1494 = vpop.f32.mrf.mxu0
        %v1495 = vadd.f32 %v1175, %v1494
        %v1496 = vpop.f32.mrf.mxu0
        %v1497 = vadd.f32 %v1171, %v1496
        %v1498 = vpop.f32.mrf.mxu0
        %v1499 = vadd.f32 %v1175, %v1498
        %1500 = vmatprep.mubr.bf16.mxu0 %v1129
        %1501 = vmatmul.mubr.bf16.gmra.mxu0 %v1128
        %v1502 = vpop.f32.mrf.mxu0
        %v1503 = vadd.f32 %v1171, %v1502
        %v1504 = vpop.f32.mrf.mxu0
        %v1505 = vadd.f32 %v1175, %v1504
        %v1506 = vpop.f32.mrf.mxu0
        %v1507 = vadd.f32 %v1171, %v1506
        %v1508 = vpop.f32.mrf.mxu0
        %v1509 = vadd.f32 %v1175, %v1508
        %1510 = vmatprep.mubr.bf16.mxu0 %v1131
        %1511 = vmatmul.mubr.bf16.gmra.mxu0 %v1130
        %v1512 = vpop.f32.mrf.mxu0
        %v1513 = vadd.f32 %v1171, %v1512
        %v1514 = vpop.f32.mrf.mxu0
        %v1515 = vadd.f32 %v1175, %v1514
        %v1516 = vpop.f32.mrf.mxu0
        %v1517 = vadd.f32 %v1171, %v1516
        %v1518 = vpop.f32.mrf.mxu0
        %v1519 = vadd.f32 %v1175, %v1518
        %1520 = vmatprep.mubr.bf16.mxu0 %v1133
        %1521 = vmatmul.mubr.bf16.gmra.mxu0 %v1132
        %v1522 = vpop.f32.mrf.mxu0
        %v1523 = vadd.f32 %v1171, %v1522
        %v1524 = vpop.f32.mrf.mxu0
        %v1525 = vadd.f32 %v1175, %v1524
        %v1526 = vpop.f32.mrf.mxu0
        %v1527 = vadd.f32 %v1171, %v1526
        %v1528 = vpop.f32.mrf.mxu0
        %v1529 = vadd.f32 %v1175, %v1528
        %1530 = vdwg.mxu0
        %v1531 = vmax.f32 %v1373, 0.0
        %v1532 = vmax.f32 %v1375, 0.0
        %v1533 = vmax.f32 %v1377, 0.0
        %v1534 = vmax.f32 %v1379, 0.0
        %v1535 = vmax.f32 %v1383, 0.0
        %v1536 = vmax.f32 %v1385, 0.0
        %v1537 = vmax.f32 %v1387, 0.0
        %v1538 = vmax.f32 %v1389, 0.0
        %v1539 = vmax.f32 %v1393, 0.0
        %v1540 = vmax.f32 %v1395, 0.0
        %v1541 = vmax.f32 %v1397, 0.0
        %v1542 = vmax.f32 %v1399, 0.0
        %v1543 = vmax.f32 %v1403, 0.0
        %v1544 = vmax.f32 %v1405, 0.0
        %v1545 = vmax.f32 %v1407, 0.0
        %v1546 = vmax.f32 %v1409, 0.0
        %v1547 = vmax.f32 %v1413, 0.0
        %v1548 = vmax.f32 %v1415, 0.0
        %v1549 = vmax.f32 %v1417, 0.0
        %v1550 = vmax.f32 %v1419, 0.0
        %v1551 = vmax.f32 %v1423, 0.0
        %v1552 = vmax.f32 %v1425, 0.0
        %v1553 = vmax.f32 %v1427, 0.0
        %v1554 = vmax.f32 %v1429, 0.0
        %v1555 = vmax.f32 %v1433, 0.0
        %v1556 = vmax.f32 %v1435, 0.0
        %v1557 = vmax.f32 %v1437, 0.0
        %v1558 = vmax.f32 %v1439, 0.0
        %v1559 = vmax.f32 %v1443, 0.0
        %v1560 = vmax.f32 %v1445, 0.0
        %v1561 = vmax.f32 %v1447, 0.0
        %v1562 = vmax.f32 %v1449, 0.0
        %v1563 = vmax.f32 %v1453, 0.0
        %v1564 = vmax.f32 %v1455, 0.0
        %v1565 = vmax.f32 %v1457, 0.0
        %v1566 = vmax.f32 %v1459, 0.0
        %v1567 = vmax.f32 %v1463, 0.0
        %v1568 = vmax.f32 %v1465, 0.0
        %v1569 = vmax.f32 %v1467, 0.0
        %v1570 = vmax.f32 %v1469, 0.0
        %v1571 = vmax.f32 %v1473, 0.0
        %v1572 = vmax.f32 %v1475, 0.0
        %v1573 = vmax.f32 %v1477, 0.0
        %v1574 = vmax.f32 %v1479, 0.0
        %v1575 = vmax.f32 %v1483, 0.0
        %v1576 = vmax.f32 %v1485, 0.0
        %v1577 = vmax.f32 %v1487, 0.0
        %v1578 = vmax.f32 %v1489, 0.0
        %v1579 = vmax.f32 %v1493, 0.0
        %v1580 = vmax.f32 %v1495, 0.0
        %v1581 = vmax.f32 %v1497, 0.0
        %v1582 = vmax.f32 %v1499, 0.0
        %v1583 = vmax.f32 %v1503, 0.0
        %v1584 = vmax.f32 %v1505, 0.0
        %v1585 = vmax.f32 %v1507, 0.0
        %v1586 = vmax.f32 %v1509, 0.0
        %v1587 = vmax.f32 %v1513, 0.0
        %v1588 = vmax.f32 %v1515, 0.0
        %v1589 = vmax.f32 %v1517, 0.0
        %v1590 = vmax.f32 %v1519, 0.0
        %v1591 = vmax.f32 %v1523, 0.0
        %v1592 = vmax.f32 %v1525, 0.0
        %v1593 = vmax.f32 %v1527, 0.0
        %v1594 = vmax.f32 %v1529, 0.0
        %v1595 = vpack.c.bf16 %v1533, %v1531
        %v1596 = vpack.c.bf16 %v1534, %v1532
        %v1597 = vpack.c.bf16 %v1537, %v1535
        %v1598 = vpack.c.bf16 %v1538, %v1536
        %v1599 = vpack.c.bf16 %v1541, %v1539
        %v1600 = vpack.c.bf16 %v1542, %v1540
        %v1601 = vpack.c.bf16 %v1545, %v1543
        %v1602 = vpack.c.bf16 %v1546, %v1544
        %v1603 = vpack.c.bf16 %v1549, %v1547
        %v1604 = vpack.c.bf16 %v1550, %v1548
        %v1605 = vpack.c.bf16 %v1553, %v1551
        %v1606 = vpack.c.bf16 %v1554, %v1552
        %v1607 = vpack.c.bf16 %v1557, %v1555
        %v1608 = vpack.c.bf16 %v1558, %v1556
        %v1609 = vpack.c.bf16 %v1561, %v1559
        %v1610 = vpack.c.bf16 %v1562, %v1560
        %v1611 = vpack.c.bf16 %v1565, %v1563
        %v1612 = vpack.c.bf16 %v1566, %v1564
        %v1613 = vpack.c.bf16 %v1569, %v1567
        %v1614 = vpack.c.bf16 %v1570, %v1568
        %v1615 = vpack.c.bf16 %v1573, %v1571
        %v1616 = vpack.c.bf16 %v1574, %v1572
        %v1617 = vpack.c.bf16 %v1577, %v1575
        %v1618 = vpack.c.bf16 %v1578, %v1576
        %v1619 = vpack.c.bf16 %v1581, %v1579
        %v1620 = vpack.c.bf16 %v1582, %v1580
        %v1621 = vpack.c.bf16 %v1585, %v1583
        %v1622 = vpack.c.bf16 %v1586, %v1584
        %v1623 = vpack.c.bf16 %v1589, %v1587
        %v1624 = vpack.c.bf16 %v1590, %v1588
        %v1625 = vpack.c.bf16 %v1593, %v1591
        %v1626 = vpack.c.bf16 %v1594, %v1592
        %s1627 = scalar_lea.vmem [#allocation8], 256
        %v1628 = vld [vmem:[%s1627] sm:$0xff]
        %v1629 = vld [vmem:[%s1627 + $0x8] sm:$0xff]
        %v1630 = vld [vmem:[%s1627 + $0x10] sm:$0xff]
        %v1631 = vld [vmem:[%s1627 + $0x18] sm:$0xff]
        %v1632 = vld [vmem:[%s1627 + $0x20] sm:$0xff]
        %v1633 = vld [vmem:[%s1627 + $0x28] sm:$0xff]
        %v1634 = vld [vmem:[%s1627 + $0x30] sm:$0xff]
        %v1635 = vld [vmem:[%s1627 + $0x38] sm:$0xff]
        %v1636 = vld [vmem:[%s1627 + $0x40] sm:$0xff]
        %v1637 = vld [vmem:[%s1627 + $0x48] sm:$0xff]
        %v1638 = vld [vmem:[%s1627 + $0x50] sm:$0xff]
        %v1639 = vld [vmem:[%s1627 + $0x58] sm:$0xff]
        %v1640 = vld [vmem:[%s1627 + $0x60] sm:$0xff]
        %v1641 = vld [vmem:[%s1627 + $0x68] sm:$0xff]
        %v1642 = vld [vmem:[%s1627 + $0x70] sm:$0xff]
        %v1643 = vld [vmem:[%s1627 + $0x78] sm:$0xff]
        %v1644 = vld [vmem:[%s1627 + $0x80] sm:$0xff]
        %v1645 = vld [vmem:[%s1627 + $0x88] sm:$0xff]
        %v1646 = vld [vmem:[%s1627 + $0x90] sm:$0xff]
        %v1647 = vld [vmem:[%s1627 + $0x98] sm:$0xff]
        %v1648 = vld [vmem:[%s1627 + $0xa0] sm:$0xff]
        %v1649 = vld [vmem:[%s1627 + $0xa8] sm:$0xff]
        %v1650 = vld [vmem:[%s1627 + $0xb0] sm:$0xff]
        %v1651 = vld [vmem:[%s1627 + $0xb8] sm:$0xff]
        %v1652 = vld [vmem:[%s1627 + $0xc0] sm:$0xff]
        %v1653 = vld [vmem:[%s1627 + $0xc8] sm:$0xff]
        %v1654 = vld [vmem:[%s1627 + $0xd0] sm:$0xff]
        %v1655 = vld [vmem:[%s1627 + $0xd8] sm:$0xff]
        %v1656 = vld [vmem:[%s1627 + $0xe0] sm:$0xff]
        %v1657 = vld [vmem:[%s1627 + $0xe8] sm:$0xff]
        %v1658 = vld [vmem:[%s1627 + $0xf0] sm:$0xff]
        %v1659 = vld [vmem:[%s1627 + $0xf8] sm:$0xff]
        %s1660 = scalar_lea.vmem [#allocation10], 2
        %v1661 = vld [vmem:[%s1660] sm:$0x3]
        %v1663 = vlaneseq
        %v1664 = vshrl.u32 %v1663, 7
        %v1665 = vsub.s32 0, %v1664
        %v1666 = vrot.slane %v1661, %v1665
        %v1667 = vlaneseq
        %v1668 = vshrl.u32 %v1667, 7
        %v1669 = vsub.s32 1, %v1668
        %v1670 = vrot.slane %v1661, %v1669
        %v1705 = vunpack.c.l.b16 %v1628
        %v1706 = vunpack.c.h.b16 %v1628
        %v1707 = vunpack.c.l.b16 %v1629
        %v1708 = vunpack.c.h.b16 %v1629
        %v1709 = vunpack.c.l.b16 %v1630
        %v1710 = vunpack.c.h.b16 %v1630
        %v1711 = vunpack.c.l.b16 %v1631
        %v1712 = vunpack.c.h.b16 %v1631
        %v1713 = vunpack.c.l.b16 %v1632
        %v1714 = vunpack.c.h.b16 %v1632
        %v1715 = vunpack.c.l.b16 %v1633
        %v1716 = vunpack.c.h.b16 %v1633
        %v1717 = vunpack.c.l.b16 %v1634
        %v1718 = vunpack.c.h.b16 %v1634
        %v1719 = vunpack.c.l.b16 %v1635
        %v1720 = vunpack.c.h.b16 %v1635
        %v1721 = vunpack.c.l.b16 %v1636
        %v1722 = vunpack.c.h.b16 %v1636
        %v1723 = vunpack.c.l.b16 %v1637
        %v1724 = vunpack.c.h.b16 %v1637
        %v1725 = vunpack.c.l.b16 %v1638
        %v1726 = vunpack.c.h.b16 %v1638
        %v1727 = vunpack.c.l.b16 %v1639
        %v1728 = vunpack.c.h.b16 %v1639
        %v1729 = vunpack.c.l.b16 %v1640
        %v1730 = vunpack.c.h.b16 %v1640
        %v1731 = vunpack.c.l.b16 %v1641
        %v1732 = vunpack.c.h.b16 %v1641
        %v1733 = vunpack.c.l.b16 %v1642
        %v1734 = vunpack.c.h.b16 %v1642
        %v1735 = vunpack.c.l.b16 %v1643
        %v1736 = vunpack.c.h.b16 %v1643
        %v1737 = vunpack.c.l.b16 %v1644
        %v1738 = vunpack.c.h.b16 %v1644
        %v1739 = vunpack.c.l.b16 %v1645
        %v1740 = vunpack.c.h.b16 %v1645
        %v1741 = vunpack.c.l.b16 %v1646
        %v1742 = vunpack.c.h.b16 %v1646
        %v1743 = vunpack.c.l.b16 %v1647
        %v1744 = vunpack.c.h.b16 %v1647
        %v1745 = vunpack.c.l.b16 %v1648
        %v1746 = vunpack.c.h.b16 %v1648
        %v1747 = vunpack.c.l.b16 %v1649
        %v1748 = vunpack.c.h.b16 %v1649
        %v1749 = vunpack.c.l.b16 %v1650
        %v1750 = vunpack.c.h.b16 %v1650
        %v1751 = vunpack.c.l.b16 %v1651
        %v1752 = vunpack.c.h.b16 %v1651
        %v1753 = vunpack.c.l.b16 %v1652
        %v1754 = vunpack.c.h.b16 %v1652
        %v1755 = vunpack.c.l.b16 %v1653
        %v1756 = vunpack.c.h.b16 %v1653
        %v1757 = vunpack.c.l.b16 %v1654
        %v1758 = vunpack.c.h.b16 %v1654
        %v1759 = vunpack.c.l.b16 %v1655
        %v1760 = vunpack.c.h.b16 %v1655
        %v1761 = vunpack.c.l.b16 %v1656
        %v1762 = vunpack.c.h.b16 %v1656
        %v1763 = vunpack.c.l.b16 %v1657
        %v1764 = vunpack.c.h.b16 %v1657
        %v1765 = vunpack.c.l.b16 %v1658
        %v1766 = vunpack.c.h.b16 %v1658
        %v1767 = vunpack.c.l.b16 %v1659
        %v1768 = vunpack.c.h.b16 %v1659
        %v1769 = vpack.c.b16 %v1707, %v1705
        %v1770 = vpack.c.b16 %v1708, %v1706
        %v1771 = vpack.c.b16 %v1711, %v1709
        %v1772 = vpack.c.b16 %v1712, %v1710
        %v1773 = vpack.c.b16 %v1715, %v1713
        %v1774 = vpack.c.b16 %v1716, %v1714
        %v1775 = vpack.c.b16 %v1719, %v1717
        %v1776 = vpack.c.b16 %v1720, %v1718
        %v1777 = vpack.c.b16 %v1723, %v1721
        %v1778 = vpack.c.b16 %v1724, %v1722
        %v1779 = vpack.c.b16 %v1727, %v1725
        %v1780 = vpack.c.b16 %v1728, %v1726
        %v1781 = vpack.c.b16 %v1731, %v1729
        %v1782 = vpack.c.b16 %v1732, %v1730
        %v1783 = vpack.c.b16 %v1735, %v1733
        %v1784 = vpack.c.b16 %v1736, %v1734
        %v1785 = vpack.c.b16 %v1739, %v1737
        %v1786 = vpack.c.b16 %v1740, %v1738
        %v1787 = vpack.c.b16 %v1743, %v1741
        %v1788 = vpack.c.b16 %v1744, %v1742
        %v1789 = vpack.c.b16 %v1747, %v1745
        %v1790 = vpack.c.b16 %v1748, %v1746
        %v1791 = vpack.c.b16 %v1751, %v1749
        %v1792 = vpack.c.b16 %v1752, %v1750
        %v1793 = vpack.c.b16 %v1755, %v1753
        %v1794 = vpack.c.b16 %v1756, %v1754
        %v1795 = vpack.c.b16 %v1759, %v1757
        %v1796 = vpack.c.b16 %v1760, %v1758
        %v1797 = vpack.c.b16 %v1763, %v1761
        %v1798 = vpack.c.b16 %v1764, %v1762
        %v1799 = vpack.c.b16 %v1767, %v1765
        %v1800 = vpack.c.b16 %v1768, %v1766
        %1833 = vmatprep.subr.bf16.mxu0 %v1784
        %1834 = vmatpush1.bf16.msra.mxu0 %v1783
        %1835 = vmatprep.subr.bf16.mxu0 %v1782
        %1836 = vmatpush1.bf16.msra.mxu0 %v1781
        %1837 = vmatprep.subr.bf16.mxu0 %v1780
        %1838 = vmatpush1.bf16.msra.mxu0 %v1779
        %1839 = vmatprep.subr.bf16.mxu0 %v1778
        %1840 = vmatpush1.bf16.msra.mxu0 %v1777
        %1841 = vmatprep.subr.bf16.mxu0 %v1776
        %1842 = vmatpush1.bf16.msra.mxu0 %v1775
        %1843 = vmatprep.subr.bf16.mxu0 %v1774
        %1844 = vmatpush1.bf16.msra.mxu0 %v1773
        %1845 = vmatprep.subr.bf16.mxu0 %v1772
        %1846 = vmatpush1.bf16.msra.mxu0 %v1771
        %1847 = vmatprep.subr.bf16.mxu0 %v1770
        %1848 = vmatpush1.bf16.msra.mxu0 %v1769
        %1849 = vmatprep.subr.bf16.mxu0 %v1800
        %1850 = vmatpush2.bf16.msra.mxu0 %v1799
        %1851 = vmatprep.subr.bf16.mxu0 %v1798
        %1852 = vmatpush2.bf16.msra.mxu0 %v1797
        %1853 = vmatprep.subr.bf16.mxu0 %v1796
        %1854 = vmatpush2.bf16.msra.mxu0 %v1795
        %1855 = vmatprep.subr.bf16.mxu0 %v1794
        %1856 = vmatpush2.bf16.msra.mxu0 %v1793
        %1857 = vmatprep.subr.bf16.mxu0 %v1792
        %1858 = vmatpush2.bf16.msra.mxu0 %v1791
        %1859 = vmatprep.subr.bf16.mxu0 %v1790
        %1860 = vmatpush2.bf16.msra.mxu0 %v1789
        %1861 = vmatprep.subr.bf16.mxu0 %v1788
        %1862 = vmatpush2.bf16.msra.mxu0 %v1787
        %1863 = vmatprep.subr.bf16.mxu0 %v1786
        %1864 = vmatpush2.bf16.msra.mxu0 %v1785
        %1865 = vmatprep.mubr.bf16.mxu0 %v1596
        %1866 = vmatmul.mubr.bf16.gmra.mxu0 %v1595
        %v1867 = vpop.f32.mrf.mxu0
        %v1868 = vadd.f32 %v1666, %v1867
        %v1869 = vpop.f32.mrf.mxu0
        %v1870 = vadd.f32 %v1670, %v1869
        %v1871 = vpop.f32.mrf.mxu0
        %v1872 = vadd.f32 %v1666, %v1871
        %v1873 = vpop.f32.mrf.mxu0
        %v1874 = vadd.f32 %v1670, %v1873
        %1875 = vmatprep.mubr.bf16.mxu0 %v1598
        %1876 = vmatmul.mubr.bf16.gmra.mxu0 %v1597
        %v1877 = vpop.f32.mrf.mxu0
        %v1878 = vadd.f32 %v1666, %v1877
        %v1879 = vpop.f32.mrf.mxu0
        %v1880 = vadd.f32 %v1670, %v1879
        %v1881 = vpop.f32.mrf.mxu0
        %v1882 = vadd.f32 %v1666, %v1881
        %v1883 = vpop.f32.mrf.mxu0
        %v1884 = vadd.f32 %v1670, %v1883
        %1885 = vmatprep.mubr.bf16.mxu0 %v1600
        %1886 = vmatmul.mubr.bf16.gmra.mxu0 %v1599
        %v1887 = vpop.f32.mrf.mxu0
        %v1888 = vadd.f32 %v1666, %v1887
        %v1889 = vpop.f32.mrf.mxu0
        %v1890 = vadd.f32 %v1670, %v1889
        %v1891 = vpop.f32.mrf.mxu0
        %v1892 = vadd.f32 %v1666, %v1891
        %v1893 = vpop.f32.mrf.mxu0
        %v1894 = vadd.f32 %v1670, %v1893
        %1895 = vmatprep.mubr.bf16.mxu0 %v1602
        %1896 = vmatmul.mubr.bf16.gmra.mxu0 %v1601
        %v1897 = vpop.f32.mrf.mxu0
        %v1898 = vadd.f32 %v1666, %v1897
        %v1899 = vpop.f32.mrf.mxu0
        %v1900 = vadd.f32 %v1670, %v1899
        %v1901 = vpop.f32.mrf.mxu0
        %v1902 = vadd.f32 %v1666, %v1901
        %v1903 = vpop.f32.mrf.mxu0
        %v1904 = vadd.f32 %v1670, %v1903
        %1905 = vmatprep.mubr.bf16.mxu0 %v1604
        %1906 = vmatmul.mubr.bf16.gmra.mxu0 %v1603
        %v1907 = vpop.f32.mrf.mxu0
        %v1908 = vadd.f32 %v1666, %v1907
        %v1909 = vpop.f32.mrf.mxu0
        %v1910 = vadd.f32 %v1670, %v1909
        %v1911 = vpop.f32.mrf.mxu0
        %v1912 = vadd.f32 %v1666, %v1911
        %v1913 = vpop.f32.mrf.mxu0
        %v1914 = vadd.f32 %v1670, %v1913
        %1915 = vmatprep.mubr.bf16.mxu0 %v1606
        %1916 = vmatmul.mubr.bf16.gmra.mxu0 %v1605
        %v1917 = vpop.f32.mrf.mxu0
        %v1918 = vadd.f32 %v1666, %v1917
        %v1919 = vpop.f32.mrf.mxu0
        %v1920 = vadd.f32 %v1670, %v1919
        %v1921 = vpop.f32.mrf.mxu0
        %v1922 = vadd.f32 %v1666, %v1921
        %v1923 = vpop.f32.mrf.mxu0
        %v1924 = vadd.f32 %v1670, %v1923
        %1925 = vmatprep.mubr.bf16.mxu0 %v1608
        %1926 = vmatmul.mubr.bf16.gmra.mxu0 %v1607
        %v1927 = vpop.f32.mrf.mxu0
        %v1928 = vadd.f32 %v1666, %v1927
        %v1929 = vpop.f32.mrf.mxu0
        %v1930 = vadd.f32 %v1670, %v1929
        %v1931 = vpop.f32.mrf.mxu0
        %v1932 = vadd.f32 %v1666, %v1931
        %v1933 = vpop.f32.mrf.mxu0
        %v1934 = vadd.f32 %v1670, %v1933
        %1935 = vmatprep.mubr.bf16.mxu0 %v1610
        %1936 = vmatmul.mubr.bf16.gmra.mxu0 %v1609
        %v1937 = vpop.f32.mrf.mxu0
        %v1938 = vadd.f32 %v1666, %v1937
        %v1939 = vpop.f32.mrf.mxu0
        %v1940 = vadd.f32 %v1670, %v1939
        %v1941 = vpop.f32.mrf.mxu0
        %v1942 = vadd.f32 %v1666, %v1941
        %v1943 = vpop.f32.mrf.mxu0
        %v1944 = vadd.f32 %v1670, %v1943
        %1945 = vmatprep.mubr.bf16.mxu0 %v1612
        %1946 = vmatmul.mubr.bf16.gmra.mxu0 %v1611
        %v1947 = vpop.f32.mrf.mxu0
        %v1948 = vadd.f32 %v1666, %v1947
        %v1949 = vpop.f32.mrf.mxu0
        %v1950 = vadd.f32 %v1670, %v1949
        %v1951 = vpop.f32.mrf.mxu0
        %v1952 = vadd.f32 %v1666, %v1951
        %v1953 = vpop.f32.mrf.mxu0
        %v1954 = vadd.f32 %v1670, %v1953
        %1955 = vmatprep.mubr.bf16.mxu0 %v1614
        %1956 = vmatmul.mubr.bf16.gmra.mxu0 %v1613
        %v1957 = vpop.f32.mrf.mxu0
        %v1958 = vadd.f32 %v1666, %v1957
        %v1959 = vpop.f32.mrf.mxu0
        %v1960 = vadd.f32 %v1670, %v1959
        %v1961 = vpop.f32.mrf.mxu0
        %v1962 = vadd.f32 %v1666, %v1961
        %v1963 = vpop.f32.mrf.mxu0
        %v1964 = vadd.f32 %v1670, %v1963
        %1965 = vmatprep.mubr.bf16.mxu0 %v1616
        %1966 = vmatmul.mubr.bf16.gmra.mxu0 %v1615
        %v1967 = vpop.f32.mrf.mxu0
        %v1968 = vadd.f32 %v1666, %v1967
        %v1969 = vpop.f32.mrf.mxu0
        %v1970 = vadd.f32 %v1670, %v1969
        %v1971 = vpop.f32.mrf.mxu0
        %v1972 = vadd.f32 %v1666, %v1971
        %v1973 = vpop.f32.mrf.mxu0
        %v1974 = vadd.f32 %v1670, %v1973
        %1975 = vmatprep.mubr.bf16.mxu0 %v1618
        %1976 = vmatmul.mubr.bf16.gmra.mxu0 %v1617
        %v1977 = vpop.f32.mrf.mxu0
        %v1978 = vadd.f32 %v1666, %v1977
        %v1979 = vpop.f32.mrf.mxu0
        %v1980 = vadd.f32 %v1670, %v1979
        %v1981 = vpop.f32.mrf.mxu0
        %v1982 = vadd.f32 %v1666, %v1981
        %v1983 = vpop.f32.mrf.mxu0
        %v1984 = vadd.f32 %v1670, %v1983
        %1985 = vmatprep.mubr.bf16.mxu0 %v1620
        %1986 = vmatmul.mubr.bf16.gmra.mxu0 %v1619
        %v1987 = vpop.f32.mrf.mxu0
        %v1988 = vadd.f32 %v1666, %v1987
        %v1989 = vpop.f32.mrf.mxu0
        %v1990 = vadd.f32 %v1670, %v1989
        %v1991 = vpop.f32.mrf.mxu0
        %v1992 = vadd.f32 %v1666, %v1991
        %v1993 = vpop.f32.mrf.mxu0
        %v1994 = vadd.f32 %v1670, %v1993
        %1995 = vmatprep.mubr.bf16.mxu0 %v1622
        %1996 = vmatmul.mubr.bf16.gmra.mxu0 %v1621
        %v1997 = vpop.f32.mrf.mxu0
        %v1998 = vadd.f32 %v1666, %v1997
        %v1999 = vpop.f32.mrf.mxu0
        %v2000 = vadd.f32 %v1670, %v1999
        %v2001 = vpop.f32.mrf.mxu0
        %v2002 = vadd.f32 %v1666, %v2001
        %v2003 = vpop.f32.mrf.mxu0
        %v2004 = vadd.f32 %v1670, %v2003
        %2005 = vmatprep.mubr.bf16.mxu0 %v1624
        %2006 = vmatmul.mubr.bf16.gmra.mxu0 %v1623
        %v2007 = vpop.f32.mrf.mxu0
        %v2008 = vadd.f32 %v1666, %v2007
        %v2009 = vpop.f32.mrf.mxu0
        %v2010 = vadd.f32 %v1670, %v2009
        %v2011 = vpop.f32.mrf.mxu0
        %v2012 = vadd.f32 %v1666, %v2011
        %v2013 = vpop.f32.mrf.mxu0
        %v2014 = vadd.f32 %v1670, %v2013
        %2015 = vmatprep.mubr.bf16.mxu0 %v1626
        %2016 = vmatmul.mubr.bf16.gmra.mxu0 %v1625
        %v2017 = vpop.f32.mrf.mxu0
        %v2018 = vadd.f32 %v1666, %v2017
        %v2019 = vpop.f32.mrf.mxu0
        %v2020 = vadd.f32 %v1670, %v2019
        %v2021 = vpop.f32.mrf.mxu0
        %v2022 = vadd.f32 %v1666, %v2021
        %v2023 = vpop.f32.mrf.mxu0
        %v2024 = vadd.f32 %v1670, %v2023
        %2025 = vdwg.mxu0
        %v2026 = vmax.f32 %v1868, 0.0
        %v2027 = vmax.f32 %v1870, 0.0
        %v2028 = vmax.f32 %v1872, 0.0
        %v2029 = vmax.f32 %v1874, 0.0
        %v2030 = vmax.f32 %v1878, 0.0
        %v2031 = vmax.f32 %v1880, 0.0
        %v2032 = vmax.f32 %v1882, 0.0
        %v2033 = vmax.f32 %v1884, 0.0
        %v2034 = vmax.f32 %v1888, 0.0
        %v2035 = vmax.f32 %v1890, 0.0
        %v2036 = vmax.f32 %v1892, 0.0
        %v2037 = vmax.f32 %v1894, 0.0
        %v2038 = vmax.f32 %v1898, 0.0
        %v2039 = vmax.f32 %v1900, 0.0
        %v2040 = vmax.f32 %v1902, 0.0
        %v2041 = vmax.f32 %v1904, 0.0
        %v2042 = vmax.f32 %v1908, 0.0
        %v2043 = vmax.f32 %v1910, 0.0
        %v2044 = vmax.f32 %v1912, 0.0
        %v2045 = vmax.f32 %v1914, 0.0
        %v2046 = vmax.f32 %v1918, 0.0
        %v2047 = vmax.f32 %v1920, 0.0
        %v2048 = vmax.f32 %v1922, 0.0
        %v2049 = vmax.f32 %v1924, 0.0
        %v2050 = vmax.f32 %v1928, 0.0
        %v2051 = vmax.f32 %v1930, 0.0
        %v2052 = vmax.f32 %v1932, 0.0
        %v2053 = vmax.f32 %v1934, 0.0
        %v2054 = vmax.f32 %v1938, 0.0
        %v2055 = vmax.f32 %v1940, 0.0
        %v2056 = vmax.f32 %v1942, 0.0
        %v2057 = vmax.f32 %v1944, 0.0
        %v2058 = vmax.f32 %v1948, 0.0
        %v2059 = vmax.f32 %v1950, 0.0
        %v2060 = vmax.f32 %v1952, 0.0
        %v2061 = vmax.f32 %v1954, 0.0
        %v2062 = vmax.f32 %v1958, 0.0
        %v2063 = vmax.f32 %v1960, 0.0
        %v2064 = vmax.f32 %v1962, 0.0
        %v2065 = vmax.f32 %v1964, 0.0
        %v2066 = vmax.f32 %v1968, 0.0
        %v2067 = vmax.f32 %v1970, 0.0
        %v2068 = vmax.f32 %v1972, 0.0
        %v2069 = vmax.f32 %v1974, 0.0
        %v2070 = vmax.f32 %v1978, 0.0
        %v2071 = vmax.f32 %v1980, 0.0
        %v2072 = vmax.f32 %v1982, 0.0
        %v2073 = vmax.f32 %v1984, 0.0
        %v2074 = vmax.f32 %v1988, 0.0
        %v2075 = vmax.f32 %v1990, 0.0
        %v2076 = vmax.f32 %v1992, 0.0
        %v2077 = vmax.f32 %v1994, 0.0
        %v2078 = vmax.f32 %v1998, 0.0
        %v2079 = vmax.f32 %v2000, 0.0
        %v2080 = vmax.f32 %v2002, 0.0
        %v2081 = vmax.f32 %v2004, 0.0
        %v2082 = vmax.f32 %v2008, 0.0
        %v2083 = vmax.f32 %v2010, 0.0
        %v2084 = vmax.f32 %v2012, 0.0
        %v2085 = vmax.f32 %v2014, 0.0
        %v2086 = vmax.f32 %v2018, 0.0
        %v2087 = vmax.f32 %v2020, 0.0
        %v2088 = vmax.f32 %v2022, 0.0
        %v2089 = vmax.f32 %v2024, 0.0
        %v2090 = vpack.c.bf16 %v2028, %v2026
        %v2091 = vpack.c.bf16 %v2029, %v2027
        %v2092 = vpack.c.bf16 %v2032, %v2030
        %v2093 = vpack.c.bf16 %v2033, %v2031
        %v2094 = vpack.c.bf16 %v2036, %v2034
        %v2095 = vpack.c.bf16 %v2037, %v2035
        %v2096 = vpack.c.bf16 %v2040, %v2038
        %v2097 = vpack.c.bf16 %v2041, %v2039
        %v2098 = vpack.c.bf16 %v2044, %v2042
        %v2099 = vpack.c.bf16 %v2045, %v2043
        %v2100 = vpack.c.bf16 %v2048, %v2046
        %v2101 = vpack.c.bf16 %v2049, %v2047
        %v2102 = vpack.c.bf16 %v2052, %v2050
        %v2103 = vpack.c.bf16 %v2053, %v2051
        %v2104 = vpack.c.bf16 %v2056, %v2054
        %v2105 = vpack.c.bf16 %v2057, %v2055
        %v2106 = vpack.c.bf16 %v2060, %v2058
        %v2107 = vpack.c.bf16 %v2061, %v2059
        %v2108 = vpack.c.bf16 %v2064, %v2062
        %v2109 = vpack.c.bf16 %v2065, %v2063
        %v2110 = vpack.c.bf16 %v2068, %v2066
        %v2111 = vpack.c.bf16 %v2069, %v2067
        %v2112 = vpack.c.bf16 %v2072, %v2070
        %v2113 = vpack.c.bf16 %v2073, %v2071
        %v2114 = vpack.c.bf16 %v2076, %v2074
        %v2115 = vpack.c.bf16 %v2077, %v2075
        %v2116 = vpack.c.bf16 %v2080, %v2078
        %v2117 = vpack.c.bf16 %v2081, %v2079
        %v2118 = vpack.c.bf16 %v2084, %v2082
        %v2119 = vpack.c.bf16 %v2085, %v2083
        %v2120 = vpack.c.bf16 %v2088, %v2086
        %v2121 = vpack.c.bf16 %v2089, %v2087
        %s2122 = scalar_lea.vmem [#allocation8], 512
        %v2123 = vld [vmem:[%s2122] sm:$0xff]
        %v2124 = vld [vmem:[%s2122 + $0x8] sm:$0xff]
        %v2125 = vld [vmem:[%s2122 + $0x10] sm:$0xff]
        %v2126 = vld [vmem:[%s2122 + $0x18] sm:$0xff]
        %v2127 = vld [vmem:[%s2122 + $0x20] sm:$0xff]
        %v2128 = vld [vmem:[%s2122 + $0x28] sm:$0xff]
        %v2129 = vld [vmem:[%s2122 + $0x30] sm:$0xff]
        %v2130 = vld [vmem:[%s2122 + $0x38] sm:$0xff]
        %v2131 = vld [vmem:[%s2122 + $0x40] sm:$0xff]
        %v2132 = vld [vmem:[%s2122 + $0x48] sm:$0xff]
        %v2133 = vld [vmem:[%s2122 + $0x50] sm:$0xff]
        %v2134 = vld [vmem:[%s2122 + $0x58] sm:$0xff]
        %v2135 = vld [vmem:[%s2122 + $0x60] sm:$0xff]
        %v2136 = vld [vmem:[%s2122 + $0x68] sm:$0xff]
        %v2137 = vld [vmem:[%s2122 + $0x70] sm:$0xff]
        %v2138 = vld [vmem:[%s2122 + $0x78] sm:$0xff]
        %v2139 = vld [vmem:[%s2122 + $0x80] sm:$0xff]
        %v2140 = vld [vmem:[%s2122 + $0x88] sm:$0xff]
        %v2141 = vld [vmem:[%s2122 + $0x90] sm:$0xff]
        %v2142 = vld [vmem:[%s2122 + $0x98] sm:$0xff]
        %v2143 = vld [vmem:[%s2122 + $0xa0] sm:$0xff]
        %v2144 = vld [vmem:[%s2122 + $0xa8] sm:$0xff]
        %v2145 = vld [vmem:[%s2122 + $0xb0] sm:$0xff]
        %v2146 = vld [vmem:[%s2122 + $0xb8] sm:$0xff]
        %v2147 = vld [vmem:[%s2122 + $0xc0] sm:$0xff]
        %v2148 = vld [vmem:[%s2122 + $0xc8] sm:$0xff]
        %v2149 = vld [vmem:[%s2122 + $0xd0] sm:$0xff]
        %v2150 = vld [vmem:[%s2122 + $0xd8] sm:$0xff]
        %v2151 = vld [vmem:[%s2122 + $0xe0] sm:$0xff]
        %v2152 = vld [vmem:[%s2122 + $0xe8] sm:$0xff]
        %v2153 = vld [vmem:[%s2122 + $0xf0] sm:$0xff]
        %v2154 = vld [vmem:[%s2122 + $0xf8] sm:$0xff]
        %s2155 = scalar_lea.vmem [#allocation10], 4
        %v2156 = vld [vmem:[%s2155] sm:$0x3]
        %v2158 = vlaneseq
        %v2159 = vshrl.u32 %v2158, 7
        %v2160 = vsub.s32 0, %v2159
        %v2161 = vrot.slane %v2156, %v2160
        %v2162 = vlaneseq
        %v2163 = vshrl.u32 %v2162, 7
        %v2164 = vsub.s32 1, %v2163
        %v2165 = vrot.slane %v2156, %v2164
        %v2200 = vunpack.c.l.b16 %v2123
        %v2201 = vunpack.c.h.b16 %v2123
        %v2202 = vunpack.c.l.b16 %v2124
        %v2203 = vunpack.c.h.b16 %v2124
        %v2204 = vunpack.c.l.b16 %v2125
        %v2205 = vunpack.c.h.b16 %v2125
        %v2206 = vunpack.c.l.b16 %v2126
        %v2207 = vunpack.c.h.b16 %v2126
        %v2208 = vunpack.c.l.b16 %v2127
        %v2209 = vunpack.c.h.b16 %v2127
        %v2210 = vunpack.c.l.b16 %v2128
        %v2211 = vunpack.c.h.b16 %v2128
        %v2212 = vunpack.c.l.b16 %v2129
        %v2213 = vunpack.c.h.b16 %v2129
        %v2214 = vunpack.c.l.b16 %v2130
        %v2215 = vunpack.c.h.b16 %v2130
        %v2216 = vunpack.c.l.b16 %v2131
        %v2217 = vunpack.c.h.b16 %v2131
        %v2218 = vunpack.c.l.b16 %v2132
        %v2219 = vunpack.c.h.b16 %v2132
        %v2220 = vunpack.c.l.b16 %v2133
        %v2221 = vunpack.c.h.b16 %v2133
        %v2222 = vunpack.c.l.b16 %v2134
        %v2223 = vunpack.c.h.b16 %v2134
        %v2224 = vunpack.c.l.b16 %v2135
        %v2225 = vunpack.c.h.b16 %v2135
        %v2226 = vunpack.c.l.b16 %v2136
        %v2227 = vunpack.c.h.b16 %v2136
        %v2228 = vunpack.c.l.b16 %v2137
        %v2229 = vunpack.c.h.b16 %v2137
        %v2230 = vunpack.c.l.b16 %v2138
        %v2231 = vunpack.c.h.b16 %v2138
        %v2232 = vunpack.c.l.b16 %v2139
        %v2233 = vunpack.c.h.b16 %v2139
        %v2234 = vunpack.c.l.b16 %v2140
        %v2235 = vunpack.c.h.b16 %v2140
        %v2236 = vunpack.c.l.b16 %v2141
        %v2237 = vunpack.c.h.b16 %v2141
        %v2238 = vunpack.c.l.b16 %v2142
        %v2239 = vunpack.c.h.b16 %v2142
        %v2240 = vunpack.c.l.b16 %v2143
        %v2241 = vunpack.c.h.b16 %v2143
        %v2242 = vunpack.c.l.b16 %v2144
        %v2243 = vunpack.c.h.b16 %v2144
        %v2244 = vunpack.c.l.b16 %v2145
        %v2245 = vunpack.c.h.b16 %v2145
        %v2246 = vunpack.c.l.b16 %v2146
        %v2247 = vunpack.c.h.b16 %v2146
        %v2248 = vunpack.c.l.b16 %v2147
        %v2249 = vunpack.c.h.b16 %v2147
        %v2250 = vunpack.c.l.b16 %v2148
        %v2251 = vunpack.c.h.b16 %v2148
        %v2252 = vunpack.c.l.b16 %v2149
        %v2253 = vunpack.c.h.b16 %v2149
        %v2254 = vunpack.c.l.b16 %v2150
        %v2255 = vunpack.c.h.b16 %v2150
        %v2256 = vunpack.c.l.b16 %v2151
        %v2257 = vunpack.c.h.b16 %v2151
        %v2258 = vunpack.c.l.b16 %v2152
        %v2259 = vunpack.c.h.b16 %v2152
        %v2260 = vunpack.c.l.b16 %v2153
        %v2261 = vunpack.c.h.b16 %v2153
        %v2262 = vunpack.c.l.b16 %v2154
        %v2263 = vunpack.c.h.b16 %v2154
        %v2264 = vpack.c.b16 %v2202, %v2200
        %v2265 = vpack.c.b16 %v2203, %v2201
        %v2266 = vpack.c.b16 %v2206, %v2204
        %v2267 = vpack.c.b16 %v2207, %v2205
        %v2268 = vpack.c.b16 %v2210, %v2208
        %v2269 = vpack.c.b16 %v2211, %v2209
        %v2270 = vpack.c.b16 %v2214, %v2212
        %v2271 = vpack.c.b16 %v2215, %v2213
        %v2272 = vpack.c.b16 %v2218, %v2216
        %v2273 = vpack.c.b16 %v2219, %v2217
        %v2274 = vpack.c.b16 %v2222, %v2220
        %v2275 = vpack.c.b16 %v2223, %v2221
        %v2276 = vpack.c.b16 %v2226, %v2224
        %v2277 = vpack.c.b16 %v2227, %v2225
        %v2278 = vpack.c.b16 %v2230, %v2228
        %v2279 = vpack.c.b16 %v2231, %v2229
        %v2280 = vpack.c.b16 %v2234, %v2232
        %v2281 = vpack.c.b16 %v2235, %v2233
        %v2282 = vpack.c.b16 %v2238, %v2236
        %v2283 = vpack.c.b16 %v2239, %v2237
        %v2284 = vpack.c.b16 %v2242, %v2240
        %v2285 = vpack.c.b16 %v2243, %v2241
        %v2286 = vpack.c.b16 %v2246, %v2244
        %v2287 = vpack.c.b16 %v2247, %v2245
        %v2288 = vpack.c.b16 %v2250, %v2248
        %v2289 = vpack.c.b16 %v2251, %v2249
        %v2290 = vpack.c.b16 %v2254, %v2252
        %v2291 = vpack.c.b16 %v2255, %v2253
        %v2292 = vpack.c.b16 %v2258, %v2256
        %v2293 = vpack.c.b16 %v2259, %v2257
        %v2294 = vpack.c.b16 %v2262, %v2260
        %v2295 = vpack.c.b16 %v2263, %v2261
        %2328 = vmatprep.subr.bf16.mxu0 %v2279
        %2329 = vmatpush1.bf16.msra.mxu0 %v2278
        %2330 = vmatprep.subr.bf16.mxu0 %v2277
        %2331 = vmatpush1.bf16.msra.mxu0 %v2276
        %2332 = vmatprep.subr.bf16.mxu0 %v2275
        %2333 = vmatpush1.bf16.msra.mxu0 %v2274
        %2334 = vmatprep.subr.bf16.mxu0 %v2273
        %2335 = vmatpush1.bf16.msra.mxu0 %v2272
        %2336 = vmatprep.subr.bf16.mxu0 %v2271
        %2337 = vmatpush1.bf16.msra.mxu0 %v2270
        %2338 = vmatprep.subr.bf16.mxu0 %v2269
        %2339 = vmatpush1.bf16.msra.mxu0 %v2268
        %2340 = vmatprep.subr.bf16.mxu0 %v2267
        %2341 = vmatpush1.bf16.msra.mxu0 %v2266
        %2342 = vmatprep.subr.bf16.mxu0 %v2265
        %2343 = vmatpush1.bf16.msra.mxu0 %v2264
        %2344 = vmatprep.subr.bf16.mxu0 %v2295
        %2345 = vmatpush2.bf16.msra.mxu0 %v2294
        %2346 = vmatprep.subr.bf16.mxu0 %v2293
        %2347 = vmatpush2.bf16.msra.mxu0 %v2292
        %2348 = vmatprep.subr.bf16.mxu0 %v2291
        %2349 = vmatpush2.bf16.msra.mxu0 %v2290
        %2350 = vmatprep.subr.bf16.mxu0 %v2289
        %2351 = vmatpush2.bf16.msra.mxu0 %v2288
        %2352 = vmatprep.subr.bf16.mxu0 %v2287
        %2353 = vmatpush2.bf16.msra.mxu0 %v2286
        %2354 = vmatprep.subr.bf16.mxu0 %v2285
        %2355 = vmatpush2.bf16.msra.mxu0 %v2284
        %2356 = vmatprep.subr.bf16.mxu0 %v2283
        %2357 = vmatpush2.bf16.msra.mxu0 %v2282
        %2358 = vmatprep.subr.bf16.mxu0 %v2281
        %2359 = vmatpush2.bf16.msra.mxu0 %v2280
        %2360 = vmatprep.mubr.bf16.mxu0 %v2091
        %2361 = vmatmul.mubr.bf16.gmra.mxu0 %v2090
        %v2362 = vpop.f32.mrf.mxu0
        %v2363 = vadd.f32 %v2161, %v2362
        %v2364 = vpop.f32.mrf.mxu0
        %v2365 = vadd.f32 %v2165, %v2364
        %v2366 = vpop.f32.mrf.mxu0
        %v2367 = vadd.f32 %v2161, %v2366
        %v2368 = vpop.f32.mrf.mxu0
        %v2369 = vadd.f32 %v2165, %v2368
        %2370 = vmatprep.mubr.bf16.mxu0 %v2093
        %2371 = vmatmul.mubr.bf16.gmra.mxu0 %v2092
        %v2372 = vpop.f32.mrf.mxu0
        %v2373 = vadd.f32 %v2161, %v2372
        %v2374 = vpop.f32.mrf.mxu0
        %v2375 = vadd.f32 %v2165, %v2374
        %v2376 = vpop.f32.mrf.mxu0
        %v2377 = vadd.f32 %v2161, %v2376
        %v2378 = vpop.f32.mrf.mxu0
        %v2379 = vadd.f32 %v2165, %v2378
        %2380 = vmatprep.mubr.bf16.mxu0 %v2095
        %2381 = vmatmul.mubr.bf16.gmra.mxu0 %v2094
        %v2382 = vpop.f32.mrf.mxu0
        %v2383 = vadd.f32 %v2161, %v2382
        %v2384 = vpop.f32.mrf.mxu0
        %v2385 = vadd.f32 %v2165, %v2384
        %v2386 = vpop.f32.mrf.mxu0
        %v2387 = vadd.f32 %v2161, %v2386
        %v2388 = vpop.f32.mrf.mxu0
        %v2389 = vadd.f32 %v2165, %v2388
        %2390 = vmatprep.mubr.bf16.mxu0 %v2097
        %2391 = vmatmul.mubr.bf16.gmra.mxu0 %v2096
        %v2392 = vpop.f32.mrf.mxu0
        %v2393 = vadd.f32 %v2161, %v2392
        %v2394 = vpop.f32.mrf.mxu0
        %v2395 = vadd.f32 %v2165, %v2394
        %v2396 = vpop.f32.mrf.mxu0
        %v2397 = vadd.f32 %v2161, %v2396
        %v2398 = vpop.f32.mrf.mxu0
        %v2399 = vadd.f32 %v2165, %v2398
        %2400 = vmatprep.mubr.bf16.mxu0 %v2099
        %2401 = vmatmul.mubr.bf16.gmra.mxu0 %v2098
        %v2402 = vpop.f32.mrf.mxu0
        %v2403 = vadd.f32 %v2161, %v2402
        %v2404 = vpop.f32.mrf.mxu0
        %v2405 = vadd.f32 %v2165, %v2404
        %v2406 = vpop.f32.mrf.mxu0
        %v2407 = vadd.f32 %v2161, %v2406
        %v2408 = vpop.f32.mrf.mxu0
        %v2409 = vadd.f32 %v2165, %v2408
        %2410 = vmatprep.mubr.bf16.mxu0 %v2101
        %2411 = vmatmul.mubr.bf16.gmra.mxu0 %v2100
        %v2412 = vpop.f32.mrf.mxu0
        %v2413 = vadd.f32 %v2161, %v2412
        %v2414 = vpop.f32.mrf.mxu0
        %v2415 = vadd.f32 %v2165, %v2414
        %v2416 = vpop.f32.mrf.mxu0
        %v2417 = vadd.f32 %v2161, %v2416
        %v2418 = vpop.f32.mrf.mxu0
        %v2419 = vadd.f32 %v2165, %v2418
        %2420 = vmatprep.mubr.bf16.mxu0 %v2103
        %2421 = vmatmul.mubr.bf16.gmra.mxu0 %v2102
        %v2422 = vpop.f32.mrf.mxu0
        %v2423 = vadd.f32 %v2161, %v2422
        %v2424 = vpop.f32.mrf.mxu0
        %v2425 = vadd.f32 %v2165, %v2424
        %v2426 = vpop.f32.mrf.mxu0
        %v2427 = vadd.f32 %v2161, %v2426
        %v2428 = vpop.f32.mrf.mxu0
        %v2429 = vadd.f32 %v2165, %v2428
        %2430 = vmatprep.mubr.bf16.mxu0 %v2105
        %2431 = vmatmul.mubr.bf16.gmra.mxu0 %v2104
        %v2432 = vpop.f32.mrf.mxu0
        %v2433 = vadd.f32 %v2161, %v2432
        %v2434 = vpop.f32.mrf.mxu0
        %v2435 = vadd.f32 %v2165, %v2434
        %v2436 = vpop.f32.mrf.mxu0
        %v2437 = vadd.f32 %v2161, %v2436
        %v2438 = vpop.f32.mrf.mxu0
        %v2439 = vadd.f32 %v2165, %v2438
        %2440 = vmatprep.mubr.bf16.mxu0 %v2107
        %2441 = vmatmul.mubr.bf16.gmra.mxu0 %v2106
        %v2442 = vpop.f32.mrf.mxu0
        %v2443 = vadd.f32 %v2161, %v2442
        %v2444 = vpop.f32.mrf.mxu0
        %v2445 = vadd.f32 %v2165, %v2444
        %v2446 = vpop.f32.mrf.mxu0
        %v2447 = vadd.f32 %v2161, %v2446
        %v2448 = vpop.f32.mrf.mxu0
        %v2449 = vadd.f32 %v2165, %v2448
        %2450 = vmatprep.mubr.bf16.mxu0 %v2109
        %2451 = vmatmul.mubr.bf16.gmra.mxu0 %v2108
        %v2452 = vpop.f32.mrf.mxu0
        %v2453 = vadd.f32 %v2161, %v2452
        %v2454 = vpop.f32.mrf.mxu0
        %v2455 = vadd.f32 %v2165, %v2454
        %v2456 = vpop.f32.mrf.mxu0
        %v2457 = vadd.f32 %v2161, %v2456
        %v2458 = vpop.f32.mrf.mxu0
        %v2459 = vadd.f32 %v2165, %v2458
        %2460 = vmatprep.mubr.bf16.mxu0 %v2111
        %2461 = vmatmul.mubr.bf16.gmra.mxu0 %v2110
        %v2462 = vpop.f32.mrf.mxu0
        %v2463 = vadd.f32 %v2161, %v2462
        %v2464 = vpop.f32.mrf.mxu0
        %v2465 = vadd.f32 %v2165, %v2464
        %v2466 = vpop.f32.mrf.mxu0
        %v2467 = vadd.f32 %v2161, %v2466
        %v2468 = vpop.f32.mrf.mxu0
        %v2469 = vadd.f32 %v2165, %v2468
        %2470 = vmatprep.mubr.bf16.mxu0 %v2113
        %2471 = vmatmul.mubr.bf16.gmra.mxu0 %v2112
        %v2472 = vpop.f32.mrf.mxu0
        %v2473 = vadd.f32 %v2161, %v2472
        %v2474 = vpop.f32.mrf.mxu0
        %v2475 = vadd.f32 %v2165, %v2474
        %v2476 = vpop.f32.mrf.mxu0
        %v2477 = vadd.f32 %v2161, %v2476
        %v2478 = vpop.f32.mrf.mxu0
        %v2479 = vadd.f32 %v2165, %v2478
        %2480 = vmatprep.mubr.bf16.mxu0 %v2115
        %2481 = vmatmul.mubr.bf16.gmra.mxu0 %v2114
        %v2482 = vpop.f32.mrf.mxu0
        %v2483 = vadd.f32 %v2161, %v2482
        %v2484 = vpop.f32.mrf.mxu0
        %v2485 = vadd.f32 %v2165, %v2484
        %v2486 = vpop.f32.mrf.mxu0
        %v2487 = vadd.f32 %v2161, %v2486
        %v2488 = vpop.f32.mrf.mxu0
        %v2489 = vadd.f32 %v2165, %v2488
        %2490 = vmatprep.mubr.bf16.mxu0 %v2117
        %2491 = vmatmul.mubr.bf16.gmra.mxu0 %v2116
        %v2492 = vpop.f32.mrf.mxu0
        %v2493 = vadd.f32 %v2161, %v2492
        %v2494 = vpop.f32.mrf.mxu0
        %v2495 = vadd.f32 %v2165, %v2494
        %v2496 = vpop.f32.mrf.mxu0
        %v2497 = vadd.f32 %v2161, %v2496
        %v2498 = vpop.f32.mrf.mxu0
        %v2499 = vadd.f32 %v2165, %v2498
        %2500 = vmatprep.mubr.bf16.mxu0 %v2119
        %2501 = vmatmul.mubr.bf16.gmra.mxu0 %v2118
        %v2502 = vpop.f32.mrf.mxu0
        %v2503 = vadd.f32 %v2161, %v2502
        %v2504 = vpop.f32.mrf.mxu0
        %v2505 = vadd.f32 %v2165, %v2504
        %v2506 = vpop.f32.mrf.mxu0
        %v2507 = vadd.f32 %v2161, %v2506
        %v2508 = vpop.f32.mrf.mxu0
        %v2509 = vadd.f32 %v2165, %v2508
        %2510 = vmatprep.mubr.bf16.mxu0 %v2121
        %2511 = vmatmul.mubr.bf16.gmra.mxu0 %v2120
        %v2512 = vpop.f32.mrf.mxu0
        %v2513 = vadd.f32 %v2161, %v2512
        %v2514 = vpop.f32.mrf.mxu0
        %v2515 = vadd.f32 %v2165, %v2514
        %v2516 = vpop.f32.mrf.mxu0
        %v2517 = vadd.f32 %v2161, %v2516
        %v2518 = vpop.f32.mrf.mxu0
        %v2519 = vadd.f32 %v2165, %v2518
        %2520 = vdwg.mxu0
        %v2521 = vmax.f32 %v2363, 0.0
        %v2522 = vmax.f32 %v2365, 0.0
        %v2523 = vmax.f32 %v2367, 0.0
        %v2524 = vmax.f32 %v2369, 0.0
        %v2525 = vmax.f32 %v2373, 0.0
        %v2526 = vmax.f32 %v2375, 0.0
        %v2527 = vmax.f32 %v2377, 0.0
        %v2528 = vmax.f32 %v2379, 0.0
        %v2529 = vmax.f32 %v2383, 0.0
        %v2530 = vmax.f32 %v2385, 0.0
        %v2531 = vmax.f32 %v2387, 0.0
        %v2532 = vmax.f32 %v2389, 0.0
        %v2533 = vmax.f32 %v2393, 0.0
        %v2534 = vmax.f32 %v2395, 0.0
        %v2535 = vmax.f32 %v2397, 0.0
        %v2536 = vmax.f32 %v2399, 0.0
        %v2537 = vmax.f32 %v2403, 0.0
        %v2538 = vmax.f32 %v2405, 0.0
        %v2539 = vmax.f32 %v2407, 0.0
        %v2540 = vmax.f32 %v2409, 0.0
        %v2541 = vmax.f32 %v2413, 0.0
        %v2542 = vmax.f32 %v2415, 0.0
        %v2543 = vmax.f32 %v2417, 0.0
        %v2544 = vmax.f32 %v2419, 0.0
        %v2545 = vmax.f32 %v2423, 0.0
        %v2546 = vmax.f32 %v2425, 0.0
        %v2547 = vmax.f32 %v2427, 0.0
        %v2548 = vmax.f32 %v2429, 0.0
        %v2549 = vmax.f32 %v2433, 0.0
        %v2550 = vmax.f32 %v2435, 0.0
        %v2551 = vmax.f32 %v2437, 0.0
        %v2552 = vmax.f32 %v2439, 0.0
        %v2553 = vmax.f32 %v2443, 0.0
        %v2554 = vmax.f32 %v2445, 0.0
        %v2555 = vmax.f32 %v2447, 0.0
        %v2556 = vmax.f32 %v2449, 0.0
        %v2557 = vmax.f32 %v2453, 0.0
        %v2558 = vmax.f32 %v2455, 0.0
        %v2559 = vmax.f32 %v2457, 0.0
        %v2560 = vmax.f32 %v2459, 0.0
        %v2561 = vmax.f32 %v2463, 0.0
        %v2562 = vmax.f32 %v2465, 0.0
        %v2563 = vmax.f32 %v2467, 0.0
        %v2564 = vmax.f32 %v2469, 0.0
        %v2565 = vmax.f32 %v2473, 0.0
        %v2566 = vmax.f32 %v2475, 0.0
        %v2567 = vmax.f32 %v2477, 0.0
        %v2568 = vmax.f32 %v2479, 0.0
        %v2569 = vmax.f32 %v2483, 0.0
        %v2570 = vmax.f32 %v2485, 0.0
        %v2571 = vmax.f32 %v2487, 0.0
        %v2572 = vmax.f32 %v2489, 0.0
        %v2573 = vmax.f32 %v2493, 0.0
        %v2574 = vmax.f32 %v2495, 0.0
        %v2575 = vmax.f32 %v2497, 0.0
        %v2576 = vmax.f32 %v2499, 0.0
        %v2577 = vmax.f32 %v2503, 0.0
        %v2578 = vmax.f32 %v2505, 0.0
        %v2579 = vmax.f32 %v2507, 0.0
        %v2580 = vmax.f32 %v2509, 0.0
        %v2581 = vmax.f32 %v2513, 0.0
        %v2582 = vmax.f32 %v2515, 0.0
        %v2583 = vmax.f32 %v2517, 0.0
        %v2584 = vmax.f32 %v2519, 0.0
        %v2585 = vld [vmem:[#allocation11] sm:$0xff]
        %v2586 = vld [vmem:[#allocation11 + $0x8] sm:$0xff]
        %v2587 = vld [vmem:[#allocation11 + $0x10] sm:$0xff]
        %v2588 = vld [vmem:[#allocation11 + $0x18] sm:$0xff]
        %v2589 = vld [vmem:[#allocation11 + $0x20] sm:$0xff]
        %v2590 = vld [vmem:[#allocation11 + $0x28] sm:$0xff]
        %v2591 = vld [vmem:[#allocation11 + $0x30] sm:$0xff]
        %v2592 = vld [vmem:[#allocation11 + $0x38] sm:$0xff]
        %v2593 = vld [vmem:[#allocation11 + $0x40] sm:$0xff]
        %v2594 = vld [vmem:[#allocation11 + $0x48] sm:$0xff]
        %v2595 = vld [vmem:[#allocation11 + $0x50] sm:$0xff]
        %v2596 = vld [vmem:[#allocation11 + $0x58] sm:$0xff]
        %v2597 = vld [vmem:[#allocation11 + $0x60] sm:$0xff]
        %v2598 = vld [vmem:[#allocation11 + $0x68] sm:$0xff]
        %v2599 = vld [vmem:[#allocation11 + $0x70] sm:$0xff]
        %v2600 = vld [vmem:[#allocation11 + $0x78] sm:$0xff]
        %v2601 = vpack.c.bf16 %v2523, %v2521
        %v2602 = vpack.c.bf16 %v2524, %v2522
        %v2603 = vpack.c.bf16 %v2527, %v2525
        %v2604 = vpack.c.bf16 %v2528, %v2526
        %v2605 = vpack.c.bf16 %v2531, %v2529
        %v2606 = vpack.c.bf16 %v2532, %v2530
        %v2607 = vpack.c.bf16 %v2535, %v2533
        %v2608 = vpack.c.bf16 %v2536, %v2534
        %v2609 = vpack.c.bf16 %v2539, %v2537
        %v2610 = vpack.c.bf16 %v2540, %v2538
        %v2611 = vpack.c.bf16 %v2543, %v2541
        %v2612 = vpack.c.bf16 %v2544, %v2542
        %v2613 = vpack.c.bf16 %v2547, %v2545
        %v2614 = vpack.c.bf16 %v2548, %v2546
        %v2615 = vpack.c.bf16 %v2551, %v2549
        %v2616 = vpack.c.bf16 %v2552, %v2550
        %v2617 = vpack.c.bf16 %v2555, %v2553
        %v2618 = vpack.c.bf16 %v2556, %v2554
        %v2619 = vpack.c.bf16 %v2559, %v2557
        %v2620 = vpack.c.bf16 %v2560, %v2558
        %v2621 = vpack.c.bf16 %v2563, %v2561
        %v2622 = vpack.c.bf16 %v2564, %v2562
        %v2623 = vpack.c.bf16 %v2567, %v2565
        %v2624 = vpack.c.bf16 %v2568, %v2566
        %v2625 = vpack.c.bf16 %v2571, %v2569
        %v2626 = vpack.c.bf16 %v2572, %v2570
        %v2627 = vpack.c.bf16 %v2575, %v2573
        %v2628 = vpack.c.bf16 %v2576, %v2574
        %v2629 = vpack.c.bf16 %v2579, %v2577
        %v2630 = vpack.c.bf16 %v2580, %v2578
        %v2631 = vpack.c.bf16 %v2583, %v2581
        %v2632 = vpack.c.bf16 %v2584, %v2582
        %s2633 = scalar_lea.vmem [#allocation8], 768
        %v2634 = vld [vmem:[%s2633] sm:$0xff]
        %v2635 = vld [vmem:[%s2633 + $0x8] sm:$0xff]
        %v2636 = vld [vmem:[%s2633 + $0x10] sm:$0xff]
        %v2637 = vld [vmem:[%s2633 + $0x18] sm:$0xff]
        %v2638 = vld [vmem:[%s2633 + $0x20] sm:$0xff]
        %v2639 = vld [vmem:[%s2633 + $0x28] sm:$0xff]
        %v2640 = vld [vmem:[%s2633 + $0x30] sm:$0xff]
        %v2641 = vld [vmem:[%s2633 + $0x38] sm:$0xff]
        %v2642 = vld [vmem:[%s2633 + $0x40] sm:$0xff]
        %v2643 = vld [vmem:[%s2633 + $0x48] sm:$0xff]
        %v2644 = vld [vmem:[%s2633 + $0x50] sm:$0xff]
        %v2645 = vld [vmem:[%s2633 + $0x58] sm:$0xff]
        %v2646 = vld [vmem:[%s2633 + $0x60] sm:$0xff]
        %v2647 = vld [vmem:[%s2633 + $0x68] sm:$0xff]
        %v2648 = vld [vmem:[%s2633 + $0x70] sm:$0xff]
        %v2649 = vld [vmem:[%s2633 + $0x78] sm:$0xff]
        %v2650 = vld [vmem:[%s2633 + $0x80] sm:$0xff]
        %v2651 = vld [vmem:[%s2633 + $0x88] sm:$0xff]
        %v2652 = vld [vmem:[%s2633 + $0x90] sm:$0xff]
        %v2653 = vld [vmem:[%s2633 + $0x98] sm:$0xff]
        %v2654 = vld [vmem:[%s2633 + $0xa0] sm:$0xff]
        %v2655 = vld [vmem:[%s2633 + $0xa8] sm:$0xff]
        %v2656 = vld [vmem:[%s2633 + $0xb0] sm:$0xff]
        %v2657 = vld [vmem:[%s2633 + $0xb8] sm:$0xff]
        %v2658 = vld [vmem:[%s2633 + $0xc0] sm:$0xff]
        %v2659 = vld [vmem:[%s2633 + $0xc8] sm:$0xff]
        %v2660 = vld [vmem:[%s2633 + $0xd0] sm:$0xff]
        %v2661 = vld [vmem:[%s2633 + $0xd8] sm:$0xff]
        %v2662 = vld [vmem:[%s2633 + $0xe0] sm:$0xff]
        %v2663 = vld [vmem:[%s2633 + $0xe8] sm:$0xff]
        %v2664 = vld [vmem:[%s2633 + $0xf0] sm:$0xff]
        %v2665 = vld [vmem:[%s2633 + $0xf8] sm:$0xff]
        %v2698 = vunpack.c.l.b16 %v2634
        %v2699 = vunpack.c.h.b16 %v2634
        %v2700 = vunpack.c.l.b16 %v2635
        %v2701 = vunpack.c.h.b16 %v2635
        %v2702 = vunpack.c.l.b16 %v2636
        %v2703 = vunpack.c.h.b16 %v2636
        %v2704 = vunpack.c.l.b16 %v2637
        %v2705 = vunpack.c.h.b16 %v2637
        %v2706 = vunpack.c.l.b16 %v2638
        %v2707 = vunpack.c.h.b16 %v2638
        %v2708 = vunpack.c.l.b16 %v2639
        %v2709 = vunpack.c.h.b16 %v2639
        %v2710 = vunpack.c.l.b16 %v2640
        %v2711 = vunpack.c.h.b16 %v2640
        %v2712 = vunpack.c.l.b16 %v2641
        %v2713 = vunpack.c.h.b16 %v2641
        %v2714 = vunpack.c.l.b16 %v2642
        %v2715 = vunpack.c.h.b16 %v2642
        %v2716 = vunpack.c.l.b16 %v2643
        %v2717 = vunpack.c.h.b16 %v2643
        %v2718 = vunpack.c.l.b16 %v2644
        %v2719 = vunpack.c.h.b16 %v2644
        %v2720 = vunpack.c.l.b16 %v2645
        %v2721 = vunpack.c.h.b16 %v2645
        %v2722 = vunpack.c.l.b16 %v2646
        %v2723 = vunpack.c.h.b16 %v2646
        %v2724 = vunpack.c.l.b16 %v2647
        %v2725 = vunpack.c.h.b16 %v2647
        %v2726 = vunpack.c.l.b16 %v2648
        %v2727 = vunpack.c.h.b16 %v2648
        %v2728 = vunpack.c.l.b16 %v2649
        %v2729 = vunpack.c.h.b16 %v2649
        %v2730 = vunpack.c.l.b16 %v2650
        %v2731 = vunpack.c.h.b16 %v2650
        %v2732 = vunpack.c.l.b16 %v2651
        %v2733 = vunpack.c.h.b16 %v2651
        %v2734 = vunpack.c.l.b16 %v2652
        %v2735 = vunpack.c.h.b16 %v2652
        %v2736 = vunpack.c.l.b16 %v2653
        %v2737 = vunpack.c.h.b16 %v2653
        %v2738 = vunpack.c.l.b16 %v2654
        %v2739 = vunpack.c.h.b16 %v2654
        %v2740 = vunpack.c.l.b16 %v2655
        %v2741 = vunpack.c.h.b16 %v2655
        %v2742 = vunpack.c.l.b16 %v2656
        %v2743 = vunpack.c.h.b16 %v2656
        %v2744 = vunpack.c.l.b16 %v2657
        %v2745 = vunpack.c.h.b16 %v2657
        %v2746 = vunpack.c.l.b16 %v2658
        %v2747 = vunpack.c.h.b16 %v2658
        %v2748 = vunpack.c.l.b16 %v2659
        %v2749 = vunpack.c.h.b16 %v2659
        %v2750 = vunpack.c.l.b16 %v2660
        %v2751 = vunpack.c.h.b16 %v2660
        %v2752 = vunpack.c.l.b16 %v2661
        %v2753 = vunpack.c.h.b16 %v2661
        %v2754 = vunpack.c.l.b16 %v2662
        %v2755 = vunpack.c.h.b16 %v2662
        %v2756 = vunpack.c.l.b16 %v2663
        %v2757 = vunpack.c.h.b16 %v2663
        %v2758 = vunpack.c.l.b16 %v2664
        %v2759 = vunpack.c.h.b16 %v2664
        %v2760 = vunpack.c.l.b16 %v2665
        %v2761 = vunpack.c.h.b16 %v2665
        %v2762 = vpack.c.b16 %v2700, %v2698
        %v2763 = vpack.c.b16 %v2701, %v2699
        %v2764 = vpack.c.b16 %v2704, %v2702
        %v2765 = vpack.c.b16 %v2705, %v2703
        %v2766 = vpack.c.b16 %v2708, %v2706
        %v2767 = vpack.c.b16 %v2709, %v2707
        %v2768 = vpack.c.b16 %v2712, %v2710
        %v2769 = vpack.c.b16 %v2713, %v2711
        %v2770 = vpack.c.b16 %v2716, %v2714
        %v2771 = vpack.c.b16 %v2717, %v2715
        %v2772 = vpack.c.b16 %v2720, %v2718
        %v2773 = vpack.c.b16 %v2721, %v2719
        %v2774 = vpack.c.b16 %v2724, %v2722
        %v2775 = vpack.c.b16 %v2725, %v2723
        %v2776 = vpack.c.b16 %v2728, %v2726
        %v2777 = vpack.c.b16 %v2729, %v2727
        %v2778 = vpack.c.b16 %v2732, %v2730
        %v2779 = vpack.c.b16 %v2733, %v2731
        %v2780 = vpack.c.b16 %v2736, %v2734
        %v2781 = vpack.c.b16 %v2737, %v2735
        %v2782 = vpack.c.b16 %v2740, %v2738
        %v2783 = vpack.c.b16 %v2741, %v2739
        %v2784 = vpack.c.b16 %v2744, %v2742
        %v2785 = vpack.c.b16 %v2745, %v2743
        %v2786 = vpack.c.b16 %v2748, %v2746
        %v2787 = vpack.c.b16 %v2749, %v2747
        %v2788 = vpack.c.b16 %v2752, %v2750
        %v2789 = vpack.c.b16 %v2753, %v2751
        %v2790 = vpack.c.b16 %v2756, %v2754
        %v2791 = vpack.c.b16 %v2757, %v2755
        %v2792 = vpack.c.b16 %v2760, %v2758
        %v2793 = vpack.c.b16 %v2761, %v2759
        %2826 = vmatprep.subr.bf16.mxu0 %v2777
        %2827 = vmatpush1.bf16.msra.mxu0 %v2776
        %2828 = vmatprep.subr.bf16.mxu0 %v2775
        %2829 = vmatpush1.bf16.msra.mxu0 %v2774
        %2830 = vmatprep.subr.bf16.mxu0 %v2773
        %2831 = vmatpush1.bf16.msra.mxu0 %v2772
        %2832 = vmatprep.subr.bf16.mxu0 %v2771
        %2833 = vmatpush1.bf16.msra.mxu0 %v2770
        %2834 = vmatprep.subr.bf16.mxu0 %v2769
        %2835 = vmatpush1.bf16.msra.mxu0 %v2768
        %2836 = vmatprep.subr.bf16.mxu0 %v2767
        %2837 = vmatpush1.bf16.msra.mxu0 %v2766
        %2838 = vmatprep.subr.bf16.mxu0 %v2765
        %2839 = vmatpush1.bf16.msra.mxu0 %v2764
        %2840 = vmatprep.subr.bf16.mxu0 %v2763
        %2841 = vmatpush1.bf16.msra.mxu0 %v2762
        %2842 = vmatprep.subr.bf16.mxu0 %v2793
        %2843 = vmatpush2.bf16.msra.mxu0 %v2792
        %2844 = vmatprep.subr.bf16.mxu0 %v2791
        %2845 = vmatpush2.bf16.msra.mxu0 %v2790
        %2846 = vmatprep.subr.bf16.mxu0 %v2789
        %2847 = vmatpush2.bf16.msra.mxu0 %v2788
        %2848 = vmatprep.subr.bf16.mxu0 %v2787
        %2849 = vmatpush2.bf16.msra.mxu0 %v2786
        %2850 = vmatprep.subr.bf16.mxu0 %v2785
        %2851 = vmatpush2.bf16.msra.mxu0 %v2784
        %2852 = vmatprep.subr.bf16.mxu0 %v2783
        %2853 = vmatpush2.bf16.msra.mxu0 %v2782
        %2854 = vmatprep.subr.bf16.mxu0 %v2781
        %2855 = vmatpush2.bf16.msra.mxu0 %v2780
        %2856 = vmatprep.subr.bf16.mxu0 %v2779
        %2857 = vmatpush2.bf16.msra.mxu0 %v2778
        %2858 = vmatprep.mubr.bf16.mxu0 %v2602
        %2859 = vmatmul.mubr.bf16.gmra.mxu0 %v2601
        %v2860 = vpop.f32.mrf.mxu0
        %v2861 = vadd.f32 0.0, %v2860
        %v2862 = vpop.f32.mrf.mxu0
        %v2863 = vadd.f32 0.0, %v2862
        %v2864 = vpop.f32.mrf.mxu0
        %v2865 = vadd.f32 0.0, %v2864
        %v2866 = vpop.f32.mrf.mxu0
        %v2867 = vadd.f32 0.0, %v2866
        %2868 = vmatprep.mubr.bf16.mxu0 %v2604
        %2869 = vmatmul.mubr.bf16.gmra.mxu0 %v2603
        %v2870 = vpop.f32.mrf.mxu0
        %v2871 = vadd.f32 0.0, %v2870
        %v2872 = vpop.f32.mrf.mxu0
        %v2873 = vadd.f32 0.0, %v2872
        %v2874 = vpop.f32.mrf.mxu0
        %v2875 = vadd.f32 0.0, %v2874
        %v2876 = vpop.f32.mrf.mxu0
        %v2877 = vadd.f32 0.0, %v2876
        %2878 = vmatprep.mubr.bf16.mxu0 %v2606
        %2879 = vmatmul.mubr.bf16.gmra.mxu0 %v2605
        %v2880 = vpop.f32.mrf.mxu0
        %v2881 = vadd.f32 0.0, %v2880
        %v2882 = vpop.f32.mrf.mxu0
        %v2883 = vadd.f32 0.0, %v2882
        %v2884 = vpop.f32.mrf.mxu0
        %v2885 = vadd.f32 0.0, %v2884
        %v2886 = vpop.f32.mrf.mxu0
        %v2887 = vadd.f32 0.0, %v2886
        %2888 = vmatprep.mubr.bf16.mxu0 %v2608
        %2889 = vmatmul.mubr.bf16.gmra.mxu0 %v2607
        %v2890 = vpop.f32.mrf.mxu0
        %v2891 = vadd.f32 0.0, %v2890
        %v2892 = vpop.f32.mrf.mxu0
        %v2893 = vadd.f32 0.0, %v2892
        %v2894 = vpop.f32.mrf.mxu0
        %v2895 = vadd.f32 0.0, %v2894
        %v2896 = vpop.f32.mrf.mxu0
        %v2897 = vadd.f32 0.0, %v2896
        %2898 = vmatprep.mubr.bf16.mxu0 %v2610
        %2899 = vmatmul.mubr.bf16.gmra.mxu0 %v2609
        %v2900 = vpop.f32.mrf.mxu0
        %v2901 = vadd.f32 0.0, %v2900
        %v2902 = vpop.f32.mrf.mxu0
        %v2903 = vadd.f32 0.0, %v2902
        %v2904 = vpop.f32.mrf.mxu0
        %v2905 = vadd.f32 0.0, %v2904
        %v2906 = vpop.f32.mrf.mxu0
        %v2907 = vadd.f32 0.0, %v2906
        %2908 = vmatprep.mubr.bf16.mxu0 %v2612
        %2909 = vmatmul.mubr.bf16.gmra.mxu0 %v2611
        %v2910 = vpop.f32.mrf.mxu0
        %v2911 = vadd.f32 0.0, %v2910
        %v2912 = vpop.f32.mrf.mxu0
        %v2913 = vadd.f32 0.0, %v2912
        %v2914 = vpop.f32.mrf.mxu0
        %v2915 = vadd.f32 0.0, %v2914
        %v2916 = vpop.f32.mrf.mxu0
        %v2917 = vadd.f32 0.0, %v2916
        %2918 = vmatprep.mubr.bf16.mxu0 %v2614
        %2919 = vmatmul.mubr.bf16.gmra.mxu0 %v2613
        %v2920 = vpop.f32.mrf.mxu0
        %v2921 = vadd.f32 0.0, %v2920
        %v2922 = vpop.f32.mrf.mxu0
        %v2923 = vadd.f32 0.0, %v2922
        %v2924 = vpop.f32.mrf.mxu0
        %v2925 = vadd.f32 0.0, %v2924
        %v2926 = vpop.f32.mrf.mxu0
        %v2927 = vadd.f32 0.0, %v2926
        %2928 = vmatprep.mubr.bf16.mxu0 %v2616
        %2929 = vmatmul.mubr.bf16.gmra.mxu0 %v2615
        %v2930 = vpop.f32.mrf.mxu0
        %v2931 = vadd.f32 0.0, %v2930
        %v2932 = vpop.f32.mrf.mxu0
        %v2933 = vadd.f32 0.0, %v2932
        %v2934 = vpop.f32.mrf.mxu0
        %v2935 = vadd.f32 0.0, %v2934
        %v2936 = vpop.f32.mrf.mxu0
        %v2937 = vadd.f32 0.0, %v2936
        %2938 = vmatprep.mubr.bf16.mxu0 %v2618
        %2939 = vmatmul.mubr.bf16.gmra.mxu0 %v2617
        %v2940 = vpop.f32.mrf.mxu0
        %v2941 = vadd.f32 0.0, %v2940
        %v2942 = vpop.f32.mrf.mxu0
        %v2943 = vadd.f32 0.0, %v2942
        %v2944 = vpop.f32.mrf.mxu0
        %v2945 = vadd.f32 0.0, %v2944
        %v2946 = vpop.f32.mrf.mxu0
        %v2947 = vadd.f32 0.0, %v2946
        %2948 = vmatprep.mubr.bf16.mxu0 %v2620
        %2949 = vmatmul.mubr.bf16.gmra.mxu0 %v2619
        %v2950 = vpop.f32.mrf.mxu0
        %v2951 = vadd.f32 0.0, %v2950
        %v2952 = vpop.f32.mrf.mxu0
        %v2953 = vadd.f32 0.0, %v2952
        %v2954 = vpop.f32.mrf.mxu0
        %v2955 = vadd.f32 0.0, %v2954
        %v2956 = vpop.f32.mrf.mxu0
        %v2957 = vadd.f32 0.0, %v2956
        %2958 = vmatprep.mubr.bf16.mxu0 %v2622
        %2959 = vmatmul.mubr.bf16.gmra.mxu0 %v2621
        %v2960 = vpop.f32.mrf.mxu0
        %v2961 = vadd.f32 0.0, %v2960
        %v2962 = vpop.f32.mrf.mxu0
        %v2963 = vadd.f32 0.0, %v2962
        %v2964 = vpop.f32.mrf.mxu0
        %v2965 = vadd.f32 0.0, %v2964
        %v2966 = vpop.f32.mrf.mxu0
        %v2967 = vadd.f32 0.0, %v2966
        %2968 = vmatprep.mubr.bf16.mxu0 %v2624
        %2969 = vmatmul.mubr.bf16.gmra.mxu0 %v2623
        %v2970 = vpop.f32.mrf.mxu0
        %v2971 = vadd.f32 0.0, %v2970
        %v2972 = vpop.f32.mrf.mxu0
        %v2973 = vadd.f32 0.0, %v2972
        %v2974 = vpop.f32.mrf.mxu0
        %v2975 = vadd.f32 0.0, %v2974
        %v2976 = vpop.f32.mrf.mxu0
        %v2977 = vadd.f32 0.0, %v2976
        %2978 = vmatprep.mubr.bf16.mxu0 %v2626
        %2979 = vmatmul.mubr.bf16.gmra.mxu0 %v2625
        %v2980 = vpop.f32.mrf.mxu0
        %v2981 = vadd.f32 0.0, %v2980
        %v2982 = vpop.f32.mrf.mxu0
        %v2983 = vadd.f32 0.0, %v2982
        %v2984 = vpop.f32.mrf.mxu0
        %v2985 = vadd.f32 0.0, %v2984
        %v2986 = vpop.f32.mrf.mxu0
        %v2987 = vadd.f32 0.0, %v2986
        %2988 = vmatprep.mubr.bf16.mxu0 %v2628
        %2989 = vmatmul.mubr.bf16.gmra.mxu0 %v2627
        %v2990 = vpop.f32.mrf.mxu0
        %v2991 = vadd.f32 0.0, %v2990
        %v2992 = vpop.f32.mrf.mxu0
        %v2993 = vadd.f32 0.0, %v2992
        %v2994 = vpop.f32.mrf.mxu0
        %v2995 = vadd.f32 0.0, %v2994
        %v2996 = vpop.f32.mrf.mxu0
        %v2997 = vadd.f32 0.0, %v2996
        %2998 = vmatprep.mubr.bf16.mxu0 %v2630
        %2999 = vmatmul.mubr.bf16.gmra.mxu0 %v2629
        %v3000 = vpop.f32.mrf.mxu0
        %v3001 = vadd.f32 0.0, %v3000
        %v3002 = vpop.f32.mrf.mxu0
        %v3003 = vadd.f32 0.0, %v3002
        %v3004 = vpop.f32.mrf.mxu0
        %v3005 = vadd.f32 0.0, %v3004
        %v3006 = vpop.f32.mrf.mxu0
        %v3007 = vadd.f32 0.0, %v3006
        %3008 = vmatprep.mubr.bf16.mxu0 %v2632
        %3009 = vmatmul.mubr.bf16.gmra.mxu0 %v2631
        %v3010 = vpop.f32.mrf.mxu0
        %v3011 = vadd.f32 0.0, %v3010
        %v3012 = vpop.f32.mrf.mxu0
        %v3013 = vadd.f32 0.0, %v3012
        %v3014 = vpop.f32.mrf.mxu0
        %v3015 = vadd.f32 0.0, %v3014
        %v3016 = vpop.f32.mrf.mxu0
        %v3017 = vadd.f32 0.0, %v3016
        %3018 = vdwg.mxu0
        %v3035 = vunpack.c.l.b16 %v2585
        %v3036 = vunpack.c.h.b16 %v2585
        %v3037 = vunpack.c.l.b16 %v2586
        %v3038 = vunpack.c.h.b16 %v2586
        %v3039 = vunpack.c.l.b16 %v2587
        %v3040 = vunpack.c.h.b16 %v2587
        %v3041 = vunpack.c.l.b16 %v2588
        %v3042 = vunpack.c.h.b16 %v2588
        %v3043 = vunpack.c.l.b16 %v2589
        %v3044 = vunpack.c.h.b16 %v2589
        %v3045 = vunpack.c.l.b16 %v2590
        %v3046 = vunpack.c.h.b16 %v2590
        %v3047 = vunpack.c.l.b16 %v2591
        %v3048 = vunpack.c.h.b16 %v2591
        %v3049 = vunpack.c.l.b16 %v2592
        %v3050 = vunpack.c.h.b16 %v2592
        %v3051 = vunpack.c.l.b16 %v2593
        %v3052 = vunpack.c.h.b16 %v2593
        %v3053 = vunpack.c.l.b16 %v2594
        %v3054 = vunpack.c.h.b16 %v2594
        %v3055 = vunpack.c.l.b16 %v2595
        %v3056 = vunpack.c.h.b16 %v2595
        %v3057 = vunpack.c.l.b16 %v2596
        %v3058 = vunpack.c.h.b16 %v2596
        %v3059 = vunpack.c.l.b16 %v2597
        %v3060 = vunpack.c.h.b16 %v2597
        %v3061 = vunpack.c.l.b16 %v2598
        %v3062 = vunpack.c.h.b16 %v2598
        %v3063 = vunpack.c.l.b16 %v2599
        %v3064 = vunpack.c.h.b16 %v2599
        %v3065 = vunpack.c.l.b16 %v2600
        %v3066 = vunpack.c.h.b16 %v2600
        %v3067 = vpack.c.b16 %v3037, %v3035
        %v3068 = vpack.c.b16 %v3038, %v3036
        %v3069 = vpack.c.b16 %v3041, %v3039
        %v3070 = vpack.c.b16 %v3042, %v3040
        %v3071 = vpack.c.b16 %v3045, %v3043
        %v3072 = vpack.c.b16 %v3046, %v3044
        %v3073 = vpack.c.b16 %v3049, %v3047
        %v3074 = vpack.c.b16 %v3050, %v3048
        %v3075 = vpack.c.b16 %v3053, %v3051
        %v3076 = vpack.c.b16 %v3054, %v3052
        %v3077 = vpack.c.b16 %v3057, %v3055
        %v3078 = vpack.c.b16 %v3058, %v3056
        %v3079 = vpack.c.b16 %v3061, %v3059
        %v3080 = vpack.c.b16 %v3062, %v3060
        %v3081 = vpack.c.b16 %v3065, %v3063
        %v3082 = vpack.c.b16 %v3066, %v3064
        %3099 = vmatprep.subr.bf16.mxu0 %v3082
        %3100 = vmatpush1.bf16.msra.mxu0 %v3081
        %3101 = vmatprep.subr.bf16.mxu0 %v3080
        %3102 = vmatpush1.bf16.msra.mxu0 %v3079
        %3103 = vmatprep.subr.bf16.mxu0 %v3078
        %3104 = vmatpush1.bf16.msra.mxu0 %v3077
        %3105 = vmatprep.subr.bf16.mxu0 %v3076
        %3106 = vmatpush1.bf16.msra.mxu0 %v3075
        %3107 = vmatprep.subr.bf16.mxu0 %v3074
        %3108 = vmatpush1.bf16.msra.mxu0 %v3073
        %3109 = vmatprep.subr.bf16.mxu0 %v3072
        %3110 = vmatpush1.bf16.msra.mxu0 %v3071
        %3111 = vmatprep.subr.bf16.mxu0 %v3070
        %3112 = vmatpush1.bf16.msra.mxu0 %v3069
        %3113 = vmatprep.subr.bf16.mxu0 %v3068
        %3114 = vmatpush1.bf16.msra.mxu0 %v3067
        %3115 = vmatprep.subr.bf16.mxu0 0
        %3116 = vmatpush2.bf16.msra.mxu0 0
        %3117 = vmatprep.subr.bf16.mxu0 0
        %3118 = vmatpush2.bf16.msra.mxu0 0
        %3119 = vmatprep.subr.bf16.mxu0 0
        %3120 = vmatpush2.bf16.msra.mxu0 0
        %3121 = vmatprep.subr.bf16.mxu0 0
        %3122 = vmatpush2.bf16.msra.mxu0 0
        %3123 = vmatprep.subr.bf16.mxu0 0
        %3124 = vmatpush2.bf16.msra.mxu0 0
        %3125 = vmatprep.subr.bf16.mxu0 0
        %3126 = vmatpush2.bf16.msra.mxu0 0
        %3127 = vmatprep.subr.bf16.mxu0 0
        %3128 = vmatpush2.bf16.msra.mxu0 0
        %3129 = vmatprep.subr.bf16.mxu0 0
        %3130 = vmatpush2.bf16.msra.mxu0 0
        %3131 = vmatprep.mubr.bf16.mxu0 0
        %3132 = vmatmul.mubr.bf16.gmra.mxu0 %v733
        %v3133 = vpop.f32.mrf.mxu0
        %v3134 = vadd.f32 %v2861, %v3133
        %v3135 = vpop.f32.mrf.mxu0
        %v3136 = vadd.f32 %v2863, %v3135
        %v3137 = vpop.f32.mrf.mxu0
        %v3138 = vadd.f32 %v2865, %v3137
        %v3139 = vpop.f32.mrf.mxu0
        %v3140 = vadd.f32 %v2867, %v3139
        %3141 = vmatprep.mubr.bf16.mxu0 0
        %3142 = vmatmul.mubr.bf16.gmra.mxu0 %v734
        %v3143 = vpop.f32.mrf.mxu0
        %v3144 = vadd.f32 %v2871, %v3143
        %v3145 = vpop.f32.mrf.mxu0
        %v3146 = vadd.f32 %v2873, %v3145
        %v3147 = vpop.f32.mrf.mxu0
        %v3148 = vadd.f32 %v2875, %v3147
        %v3149 = vpop.f32.mrf.mxu0
        %v3150 = vadd.f32 %v2877, %v3149
        %3151 = vmatprep.mubr.bf16.mxu0 0
        %3152 = vmatmul.mubr.bf16.gmra.mxu0 %v735
        %v3153 = vpop.f32.mrf.mxu0
        %v3154 = vadd.f32 %v2881, %v3153
        %v3155 = vpop.f32.mrf.mxu0
        %v3156 = vadd.f32 %v2883, %v3155
        %v3157 = vpop.f32.mrf.mxu0
        %v3158 = vadd.f32 %v2885, %v3157
        %v3159 = vpop.f32.mrf.mxu0
        %v3160 = vadd.f32 %v2887, %v3159
        %3161 = vmatprep.mubr.bf16.mxu0 0
        %3162 = vmatmul.mubr.bf16.gmra.mxu0 %v736
        %v3163 = vpop.f32.mrf.mxu0
        %v3164 = vadd.f32 %v2891, %v3163
        %v3165 = vpop.f32.mrf.mxu0
        %v3166 = vadd.f32 %v2893, %v3165
        %v3167 = vpop.f32.mrf.mxu0
        %v3168 = vadd.f32 %v2895, %v3167
        %v3169 = vpop.f32.mrf.mxu0
        %v3170 = vadd.f32 %v2897, %v3169
        %3171 = vmatprep.mubr.bf16.mxu0 0
        %3172 = vmatmul.mubr.bf16.gmra.mxu0 %v737
        %v3173 = vpop.f32.mrf.mxu0
        %v3174 = vadd.f32 %v2901, %v3173
        %v3175 = vpop.f32.mrf.mxu0
        %v3176 = vadd.f32 %v2903, %v3175
        %v3177 = vpop.f32.mrf.mxu0
        %v3178 = vadd.f32 %v2905, %v3177
        %v3179 = vpop.f32.mrf.mxu0
        %v3180 = vadd.f32 %v2907, %v3179
        %3181 = vmatprep.mubr.bf16.mxu0 0
        %3182 = vmatmul.mubr.bf16.gmra.mxu0 %v738
        %v3183 = vpop.f32.mrf.mxu0
        %v3184 = vadd.f32 %v2911, %v3183
        %v3185 = vpop.f32.mrf.mxu0
        %v3186 = vadd.f32 %v2913, %v3185
        %v3187 = vpop.f32.mrf.mxu0
        %v3188 = vadd.f32 %v2915, %v3187
        %v3189 = vpop.f32.mrf.mxu0
        %v3190 = vadd.f32 %v2917, %v3189
        %3191 = vmatprep.mubr.bf16.mxu0 0
        %3192 = vmatmul.mubr.bf16.gmra.mxu0 %v739
        %v3193 = vpop.f32.mrf.mxu0
        %v3194 = vadd.f32 %v2921, %v3193
        %v3195 = vpop.f32.mrf.mxu0
        %v3196 = vadd.f32 %v2923, %v3195
        %v3197 = vpop.f32.mrf.mxu0
        %v3198 = vadd.f32 %v2925, %v3197
        %v3199 = vpop.f32.mrf.mxu0
        %v3200 = vadd.f32 %v2927, %v3199
        %3201 = vmatprep.mubr.bf16.mxu0 0
        %3202 = vmatmul.mubr.bf16.gmra.mxu0 %v740
        %v3203 = vpop.f32.mrf.mxu0
        %v3204 = vadd.f32 %v2931, %v3203
        %v3205 = vpop.f32.mrf.mxu0
        %v3206 = vadd.f32 %v2933, %v3205
        %v3207 = vpop.f32.mrf.mxu0
        %v3208 = vadd.f32 %v2935, %v3207
        %v3209 = vpop.f32.mrf.mxu0
        %v3210 = vadd.f32 %v2937, %v3209
        %3211 = vmatprep.mubr.bf16.mxu0 0
        %3212 = vmatmul.mubr.bf16.gmra.mxu0 %v741
        %v3213 = vpop.f32.mrf.mxu0
        %v3214 = vadd.f32 %v2941, %v3213
        %v3215 = vpop.f32.mrf.mxu0
        %v3216 = vadd.f32 %v2943, %v3215
        %v3217 = vpop.f32.mrf.mxu0
        %v3218 = vadd.f32 %v2945, %v3217
        %v3219 = vpop.f32.mrf.mxu0
        %v3220 = vadd.f32 %v2947, %v3219
        %3221 = vmatprep.mubr.bf16.mxu0 0
        %3222 = vmatmul.mubr.bf16.gmra.mxu0 %v742
        %v3223 = vpop.f32.mrf.mxu0
        %v3224 = vadd.f32 %v2951, %v3223
        %v3225 = vpop.f32.mrf.mxu0
        %v3226 = vadd.f32 %v2953, %v3225
        %v3227 = vpop.f32.mrf.mxu0
        %v3228 = vadd.f32 %v2955, %v3227
        %v3229 = vpop.f32.mrf.mxu0
        %v3230 = vadd.f32 %v2957, %v3229
        %3231 = vmatprep.mubr.bf16.mxu0 0
        %3232 = vmatmul.mubr.bf16.gmra.mxu0 %v743
        %v3233 = vpop.f32.mrf.mxu0
        %v3234 = vadd.f32 %v2961, %v3233
        %v3235 = vpop.f32.mrf.mxu0
        %v3236 = vadd.f32 %v2963, %v3235
        %v3237 = vpop.f32.mrf.mxu0
        %v3238 = vadd.f32 %v2965, %v3237
        %v3239 = vpop.f32.mrf.mxu0
        %v3240 = vadd.f32 %v2967, %v3239
        %3241 = vmatprep.mubr.bf16.mxu0 0
        %3242 = vmatmul.mubr.bf16.gmra.mxu0 %v744
        %v3243 = vpop.f32.mrf.mxu0
        %v3244 = vadd.f32 %v2971, %v3243
        %v3245 = vpop.f32.mrf.mxu0
        %v3246 = vadd.f32 %v2973, %v3245
        %v3247 = vpop.f32.mrf.mxu0
        %v3248 = vadd.f32 %v2975, %v3247
        %v3249 = vpop.f32.mrf.mxu0
        %v3250 = vadd.f32 %v2977, %v3249
        %3251 = vmatprep.mubr.bf16.mxu0 0
        %3252 = vmatmul.mubr.bf16.gmra.mxu0 %v745
        %v3253 = vpop.f32.mrf.mxu0
        %v3254 = vadd.f32 %v2981, %v3253
        %v3255 = vpop.f32.mrf.mxu0
        %v3256 = vadd.f32 %v2983, %v3255
        %v3257 = vpop.f32.mrf.mxu0
        %v3258 = vadd.f32 %v2985, %v3257
        %v3259 = vpop.f32.mrf.mxu0
        %v3260 = vadd.f32 %v2987, %v3259
        %3261 = vmatprep.mubr.bf16.mxu0 0
        %3262 = vmatmul.mubr.bf16.gmra.mxu0 %v746
        %v3263 = vpop.f32.mrf.mxu0
        %v3264 = vadd.f32 %v2991, %v3263
        %v3265 = vpop.f32.mrf.mxu0
        %v3266 = vadd.f32 %v2993, %v3265
        %v3267 = vpop.f32.mrf.mxu0
        %v3268 = vadd.f32 %v2995, %v3267
        %v3269 = vpop.f32.mrf.mxu0
        %v3270 = vadd.f32 %v2997, %v3269
        %3271 = vmatprep.mubr.bf16.mxu0 0
        %3272 = vmatmul.mubr.bf16.gmra.mxu0 %v747
        %v3273 = vpop.f32.mrf.mxu0
        %v3274 = vadd.f32 %v3001, %v3273
        %v3275 = vpop.f32.mrf.mxu0
        %v3276 = vadd.f32 %v3003, %v3275
        %v3277 = vpop.f32.mrf.mxu0
        %v3278 = vadd.f32 %v3005, %v3277
        %v3279 = vpop.f32.mrf.mxu0
        %v3280 = vadd.f32 %v3007, %v3279
        %3281 = vmatprep.mubr.bf16.mxu0 0
        %3282 = vmatmul.mubr.bf16.gmra.mxu0 %v748
        %v3283 = vpop.f32.mrf.mxu0
        %v3284 = vadd.f32 %v3011, %v3283
        %v3285 = vpop.f32.mrf.mxu0
        %v3286 = vadd.f32 %v3013, %v3285
        %v3287 = vpop.f32.mrf.mxu0
        %v3288 = vadd.f32 %v3015, %v3287
        %v3289 = vpop.f32.mrf.mxu0
        %v3290 = vadd.f32 %v3017, %v3289
        %3291 = vdwg.mxu0
        %s3292 = scalar_lea.vmem [#allocation10], 6
        %v3293 = vld [vmem:[%s3292] sm:$0x3]
        %v3295 = vlaneseq
        %v3296 = vshrl.u32 %v3295, 7
        %v3297 = vsub.s32 0, %v3296
        %v3298 = vrot.slane %v3293, %v3297
        %v3299 = vlaneseq
        %v3300 = vshrl.u32 %v3299, 7
        %v3301 = vsub.s32 1, %v3300
        %v3302 = vrot.slane %v3293, %v3301
        %v3305 = vadd.f32 %v3134, %v3298
        %v3306 = vadd.f32 %v3136, %v3302
        %v3307 = vadd.f32 %v3138, %v3298
        %v3308 = vadd.f32 %v3140, %v3302
        %v3309 = vadd.f32 %v3144, %v3298
        %v3310 = vadd.f32 %v3146, %v3302
        %v3311 = vadd.f32 %v3148, %v3298
        %v3312 = vadd.f32 %v3150, %v3302
        %v3313 = vadd.f32 %v3154, %v3298
        %v3314 = vadd.f32 %v3156, %v3302
        %v3315 = vadd.f32 %v3158, %v3298
        %v3316 = vadd.f32 %v3160, %v3302
        %v3317 = vadd.f32 %v3164, %v3298
        %v3318 = vadd.f32 %v3166, %v3302
        %v3319 = vadd.f32 %v3168, %v3298
        %v3320 = vadd.f32 %v3170, %v3302
        %v3321 = vadd.f32 %v3174, %v3298
        %v3322 = vadd.f32 %v3176, %v3302
        %v3323 = vadd.f32 %v3178, %v3298
        %v3324 = vadd.f32 %v3180, %v3302
        %v3325 = vadd.f32 %v3184, %v3298
        %v3326 = vadd.f32 %v3186, %v3302
        %v3327 = vadd.f32 %v3188, %v3298
        %v3328 = vadd.f32 %v3190, %v3302
        %v3329 = vadd.f32 %v3194, %v3298
        %v3330 = vadd.f32 %v3196, %v3302
        %v3331 = vadd.f32 %v3198, %v3298
        %v3332 = vadd.f32 %v3200, %v3302
        %v3333 = vadd.f32 %v3204, %v3298
        %v3334 = vadd.f32 %v3206, %v3302
        %v3335 = vadd.f32 %v3208, %v3298
        %v3336 = vadd.f32 %v3210, %v3302
        %v3337 = vadd.f32 %v3214, %v3298
        %v3338 = vadd.f32 %v3216, %v3302
        %v3339 = vadd.f32 %v3218, %v3298
        %v3340 = vadd.f32 %v3220, %v3302
        %v3341 = vadd.f32 %v3224, %v3298
        %v3342 = vadd.f32 %v3226, %v3302
        %v3343 = vadd.f32 %v3228, %v3298
        %v3344 = vadd.f32 %v3230, %v3302
        %v3345 = vadd.f32 %v3234, %v3298
        %v3346 = vadd.f32 %v3236, %v3302
        %v3347 = vadd.f32 %v3238, %v3298
        %v3348 = vadd.f32 %v3240, %v3302
        %v3349 = vadd.f32 %v3244, %v3298
        %v3350 = vadd.f32 %v3246, %v3302
        %v3351 = vadd.f32 %v3248, %v3298
        %v3352 = vadd.f32 %v3250, %v3302
        %v3353 = vadd.f32 %v3254, %v3298
        %v3354 = vadd.f32 %v3256, %v3302
        %v3355 = vadd.f32 %v3258, %v3298
        %v3356 = vadd.f32 %v3260, %v3302
        %v3357 = vadd.f32 %v3264, %v3298
        %v3358 = vadd.f32 %v3266, %v3302
        %v3359 = vadd.f32 %v3268, %v3298
        %v3360 = vadd.f32 %v3270, %v3302
        %v3361 = vadd.f32 %v3274, %v3298
        %v3362 = vadd.f32 %v3276, %v3302
        %v3363 = vadd.f32 %v3278, %v3298
        %v3364 = vadd.f32 %v3280, %v3302
        %v3365 = vadd.f32 %v3284, %v3298
        %v3366 = vadd.f32 %v3286, %v3302
        %v3367 = vadd.f32 %v3288, %v3298
        %v3368 = vadd.f32 %v3290, %v3302
        %v3369 = vmax.f32 %v3305, 0.0
        %v3370 = vmax.f32 %v3306, 0.0
        %v3371 = vmax.f32 %v3307, 0.0
        %v3372 = vmax.f32 %v3308, 0.0
        %v3373 = vmax.f32 %v3309, 0.0
        %v3374 = vmax.f32 %v3310, 0.0
        %v3375 = vmax.f32 %v3311, 0.0
        %v3376 = vmax.f32 %v3312, 0.0
        %v3377 = vmax.f32 %v3313, 0.0
        %v3378 = vmax.f32 %v3314, 0.0
        %v3379 = vmax.f32 %v3315, 0.0
        %v3380 = vmax.f32 %v3316, 0.0
        %v3381 = vmax.f32 %v3317, 0.0
        %v3382 = vmax.f32 %v3318, 0.0
        %v3383 = vmax.f32 %v3319, 0.0
        %v3384 = vmax.f32 %v3320, 0.0
        %v3385 = vmax.f32 %v3321, 0.0
        %v3386 = vmax.f32 %v3322, 0.0
        %v3387 = vmax.f32 %v3323, 0.0
        %v3388 = vmax.f32 %v3324, 0.0
        %v3389 = vmax.f32 %v3325, 0.0
        %v3390 = vmax.f32 %v3326, 0.0
        %v3391 = vmax.f32 %v3327, 0.0
        %v3392 = vmax.f32 %v3328, 0.0
        %v3393 = vmax.f32 %v3329, 0.0
        %v3394 = vmax.f32 %v3330, 0.0
        %v3395 = vmax.f32 %v3331, 0.0
        %v3396 = vmax.f32 %v3332, 0.0
        %v3397 = vmax.f32 %v3333, 0.0
        %v3398 = vmax.f32 %v3334, 0.0
        %v3399 = vmax.f32 %v3335, 0.0
        %v3400 = vmax.f32 %v3336, 0.0
        %v3401 = vmax.f32 %v3337, 0.0
        %v3402 = vmax.f32 %v3338, 0.0
        %v3403 = vmax.f32 %v3339, 0.0
        %v3404 = vmax.f32 %v3340, 0.0
        %v3405 = vmax.f32 %v3341, 0.0
        %v3406 = vmax.f32 %v3342, 0.0
        %v3407 = vmax.f32 %v3343, 0.0
        %v3408 = vmax.f32 %v3344, 0.0
        %v3409 = vmax.f32 %v3345, 0.0
        %v3410 = vmax.f32 %v3346, 0.0
        %v3411 = vmax.f32 %v3347, 0.0
        %v3412 = vmax.f32 %v3348, 0.0
        %v3413 = vmax.f32 %v3349, 0.0
        %v3414 = vmax.f32 %v3350, 0.0
        %v3415 = vmax.f32 %v3351, 0.0
        %v3416 = vmax.f32 %v3352, 0.0
        %v3417 = vmax.f32 %v3353, 0.0
        %v3418 = vmax.f32 %v3354, 0.0
        %v3419 = vmax.f32 %v3355, 0.0
        %v3420 = vmax.f32 %v3356, 0.0
        %v3421 = vmax.f32 %v3357, 0.0
        %v3422 = vmax.f32 %v3358, 0.0
        %v3423 = vmax.f32 %v3359, 0.0
        %v3424 = vmax.f32 %v3360, 0.0
        %v3425 = vmax.f32 %v3361, 0.0
        %v3426 = vmax.f32 %v3362, 0.0
        %v3427 = vmax.f32 %v3363, 0.0
        %v3428 = vmax.f32 %v3364, 0.0
        %v3429 = vmax.f32 %v3365, 0.0
        %v3430 = vmax.f32 %v3366, 0.0
        %v3431 = vmax.f32 %v3367, 0.0
        %v3432 = vmax.f32 %v3368, 0.0
        %v3433 = vpack.c.bf16 %v3371, %v3369
        %v3434 = vpack.c.bf16 %v3372, %v3370
        %v3435 = vpack.c.bf16 %v3375, %v3373
        %v3436 = vpack.c.bf16 %v3376, %v3374
        %v3437 = vpack.c.bf16 %v3379, %v3377
        %v3438 = vpack.c.bf16 %v3380, %v3378
        %v3439 = vpack.c.bf16 %v3383, %v3381
        %v3440 = vpack.c.bf16 %v3384, %v3382
        %v3441 = vpack.c.bf16 %v3387, %v3385
        %v3442 = vpack.c.bf16 %v3388, %v3386
        %v3443 = vpack.c.bf16 %v3391, %v3389
        %v3444 = vpack.c.bf16 %v3392, %v3390
        %v3445 = vpack.c.bf16 %v3395, %v3393
        %v3446 = vpack.c.bf16 %v3396, %v3394
        %v3447 = vpack.c.bf16 %v3399, %v3397
        %v3448 = vpack.c.bf16 %v3400, %v3398
        %v3449 = vpack.c.bf16 %v3403, %v3401
        %v3450 = vpack.c.bf16 %v3404, %v3402
        %v3451 = vpack.c.bf16 %v3407, %v3405
        %v3452 = vpack.c.bf16 %v3408, %v3406
        %v3453 = vpack.c.bf16 %v3411, %v3409
        %v3454 = vpack.c.bf16 %v3412, %v3410
        %v3455 = vpack.c.bf16 %v3415, %v3413
        %v3456 = vpack.c.bf16 %v3416, %v3414
        %v3457 = vpack.c.bf16 %v3419, %v3417
        %v3458 = vpack.c.bf16 %v3420, %v3418
        %v3459 = vpack.c.bf16 %v3423, %v3421
        %v3460 = vpack.c.bf16 %v3424, %v3422
        %v3461 = vpack.c.bf16 %v3427, %v3425
        %v3462 = vpack.c.bf16 %v3428, %v3426
        %v3463 = vpack.c.bf16 %v3431, %v3429
        %v3464 = vpack.c.bf16 %v3432, %v3430
        %s3465 = scalar_lea.vmem [#allocation8], 1024
        %v3466 = vld [vmem:[%s3465] sm:$0xff]
        %v3467 = vld [vmem:[%s3465 + $0x8] sm:$0xff]
        %v3468 = vld [vmem:[%s3465 + $0x10] sm:$0xff]
        %v3469 = vld [vmem:[%s3465 + $0x18] sm:$0xff]
        %v3470 = vld [vmem:[%s3465 + $0x20] sm:$0xff]
        %v3471 = vld [vmem:[%s3465 + $0x28] sm:$0xff]
        %v3472 = vld [vmem:[%s3465 + $0x30] sm:$0xff]
        %v3473 = vld [vmem:[%s3465 + $0x38] sm:$0xff]
        %v3474 = vld [vmem:[%s3465 + $0x40] sm:$0xff]
        %v3475 = vld [vmem:[%s3465 + $0x48] sm:$0xff]
        %v3476 = vld [vmem:[%s3465 + $0x50] sm:$0xff]
        %v3477 = vld [vmem:[%s3465 + $0x58] sm:$0xff]
        %v3478 = vld [vmem:[%s3465 + $0x60] sm:$0xff]
        %v3479 = vld [vmem:[%s3465 + $0x68] sm:$0xff]
        %v3480 = vld [vmem:[%s3465 + $0x70] sm:$0xff]
        %v3481 = vld [vmem:[%s3465 + $0x78] sm:$0xff]
        %v3482 = vld [vmem:[%s3465 + $0x80] sm:$0xff]
        %v3483 = vld [vmem:[%s3465 + $0x88] sm:$0xff]
        %v3484 = vld [vmem:[%s3465 + $0x90] sm:$0xff]
        %v3485 = vld [vmem:[%s3465 + $0x98] sm:$0xff]
        %v3486 = vld [vmem:[%s3465 + $0xa0] sm:$0xff]
        %v3487 = vld [vmem:[%s3465 + $0xa8] sm:$0xff]
        %v3488 = vld [vmem:[%s3465 + $0xb0] sm:$0xff]
        %v3489 = vld [vmem:[%s3465 + $0xb8] sm:$0xff]
        %v3490 = vld [vmem:[%s3465 + $0xc0] sm:$0xff]
        %v3491 = vld [vmem:[%s3465 + $0xc8] sm:$0xff]
        %v3492 = vld [vmem:[%s3465 + $0xd0] sm:$0xff]
        %v3493 = vld [vmem:[%s3465 + $0xd8] sm:$0xff]
        %v3494 = vld [vmem:[%s3465 + $0xe0] sm:$0xff]
        %v3495 = vld [vmem:[%s3465 + $0xe8] sm:$0xff]
        %v3496 = vld [vmem:[%s3465 + $0xf0] sm:$0xff]
        %v3497 = vld [vmem:[%s3465 + $0xf8] sm:$0xff]
        %s3498 = scalar_lea.vmem [#allocation10], 8
        %v3499 = vld [vmem:[%s3498] sm:$0x3]
        %v3501 = vlaneseq
        %v3502 = vshrl.u32 %v3501, 7
        %v3503 = vsub.s32 0, %v3502
        %v3504 = vrot.slane %v3499, %v3503
        %v3505 = vlaneseq
        %v3506 = vshrl.u32 %v3505, 7
        %v3507 = vsub.s32 1, %v3506
        %v3508 = vrot.slane %v3499, %v3507
        %v3543 = vunpack.c.l.b16 %v3466
        %v3544 = vunpack.c.h.b16 %v3466
        %v3545 = vunpack.c.l.b16 %v3467
        %v3546 = vunpack.c.h.b16 %v3467
        %v3547 = vunpack.c.l.b16 %v3468
        %v3548 = vunpack.c.h.b16 %v3468
        %v3549 = vunpack.c.l.b16 %v3469
        %v3550 = vunpack.c.h.b16 %v3469
        %v3551 = vunpack.c.l.b16 %v3470
        %v3552 = vunpack.c.h.b16 %v3470
        %v3553 = vunpack.c.l.b16 %v3471
        %v3554 = vunpack.c.h.b16 %v3471
        %v3555 = vunpack.c.l.b16 %v3472
        %v3556 = vunpack.c.h.b16 %v3472
        %v3557 = vunpack.c.l.b16 %v3473
        %v3558 = vunpack.c.h.b16 %v3473
        %v3559 = vunpack.c.l.b16 %v3474
        %v3560 = vunpack.c.h.b16 %v3474
        %v3561 = vunpack.c.l.b16 %v3475
        %v3562 = vunpack.c.h.b16 %v3475
        %v3563 = vunpack.c.l.b16 %v3476
        %v3564 = vunpack.c.h.b16 %v3476
        %v3565 = vunpack.c.l.b16 %v3477
        %v3566 = vunpack.c.h.b16 %v3477
        %v3567 = vunpack.c.l.b16 %v3478
        %v3568 = vunpack.c.h.b16 %v3478
        %v3569 = vunpack.c.l.b16 %v3479
        %v3570 = vunpack.c.h.b16 %v3479
        %v3571 = vunpack.c.l.b16 %v3480
        %v3572 = vunpack.c.h.b16 %v3480
        %v3573 = vunpack.c.l.b16 %v3481
        %v3574 = vunpack.c.h.b16 %v3481
        %v3575 = vunpack.c.l.b16 %v3482
        %v3576 = vunpack.c.h.b16 %v3482
        %v3577 = vunpack.c.l.b16 %v3483
        %v3578 = vunpack.c.h.b16 %v3483
        %v3579 = vunpack.c.l.b16 %v3484
        %v3580 = vunpack.c.h.b16 %v3484
        %v3581 = vunpack.c.l.b16 %v3485
        %v3582 = vunpack.c.h.b16 %v3485
        %v3583 = vunpack.c.l.b16 %v3486
        %v3584 = vunpack.c.h.b16 %v3486
        %v3585 = vunpack.c.l.b16 %v3487
        %v3586 = vunpack.c.h.b16 %v3487
        %v3587 = vunpack.c.l.b16 %v3488
        %v3588 = vunpack.c.h.b16 %v3488
        %v3589 = vunpack.c.l.b16 %v3489
        %v3590 = vunpack.c.h.b16 %v3489
        %v3591 = vunpack.c.l.b16 %v3490
        %v3592 = vunpack.c.h.b16 %v3490
        %v3593 = vunpack.c.l.b16 %v3491
        %v3594 = vunpack.c.h.b16 %v3491
        %v3595 = vunpack.c.l.b16 %v3492
        %v3596 = vunpack.c.h.b16 %v3492
        %v3597 = vunpack.c.l.b16 %v3493
        %v3598 = vunpack.c.h.b16 %v3493
        %v3599 = vunpack.c.l.b16 %v3494
        %v3600 = vunpack.c.h.b16 %v3494
        %v3601 = vunpack.c.l.b16 %v3495
        %v3602 = vunpack.c.h.b16 %v3495
        %v3603 = vunpack.c.l.b16 %v3496
        %v3604 = vunpack.c.h.b16 %v3496
        %v3605 = vunpack.c.l.b16 %v3497
        %v3606 = vunpack.c.h.b16 %v3497
        %v3607 = vpack.c.b16 %v3545, %v3543
        %v3608 = vpack.c.b16 %v3546, %v3544
        %v3609 = vpack.c.b16 %v3549, %v3547
        %v3610 = vpack.c.b16 %v3550, %v3548
        %v3611 = vpack.c.b16 %v3553, %v3551
        %v3612 = vpack.c.b16 %v3554, %v3552
        %v3613 = vpack.c.b16 %v3557, %v3555
        %v3614 = vpack.c.b16 %v3558, %v3556
        %v3615 = vpack.c.b16 %v3561, %v3559
        %v3616 = vpack.c.b16 %v3562, %v3560
        %v3617 = vpack.c.b16 %v3565, %v3563
        %v3618 = vpack.c.b16 %v3566, %v3564
        %v3619 = vpack.c.b16 %v3569, %v3567
        %v3620 = vpack.c.b16 %v3570, %v3568
        %v3621 = vpack.c.b16 %v3573, %v3571
        %v3622 = vpack.c.b16 %v3574, %v3572
        %v3623 = vpack.c.b16 %v3577, %v3575
        %v3624 = vpack.c.b16 %v3578, %v3576
        %v3625 = vpack.c.b16 %v3581, %v3579
        %v3626 = vpack.c.b16 %v3582, %v3580
        %v3627 = vpack.c.b16 %v3585, %v3583
        %v3628 = vpack.c.b16 %v3586, %v3584
        %v3629 = vpack.c.b16 %v3589, %v3587
        %v3630 = vpack.c.b16 %v3590, %v3588
        %v3631 = vpack.c.b16 %v3593, %v3591
        %v3632 = vpack.c.b16 %v3594, %v3592
        %v3633 = vpack.c.b16 %v3597, %v3595
        %v3634 = vpack.c.b16 %v3598, %v3596
        %v3635 = vpack.c.b16 %v3601, %v3599
        %v3636 = vpack.c.b16 %v3602, %v3600
        %v3637 = vpack.c.b16 %v3605, %v3603
        %v3638 = vpack.c.b16 %v3606, %v3604
        %3671 = vmatprep.subr.bf16.mxu0 %v3622
        %3672 = vmatpush1.bf16.msra.mxu0 %v3621
        %3673 = vmatprep.subr.bf16.mxu0 %v3620
        %3674 = vmatpush1.bf16.msra.mxu0 %v3619
        %3675 = vmatprep.subr.bf16.mxu0 %v3618
        %3676 = vmatpush1.bf16.msra.mxu0 %v3617
        %3677 = vmatprep.subr.bf16.mxu0 %v3616
        %3678 = vmatpush1.bf16.msra.mxu0 %v3615
        %3679 = vmatprep.subr.bf16.mxu0 %v3614
        %3680 = vmatpush1.bf16.msra.mxu0 %v3613
        %3681 = vmatprep.subr.bf16.mxu0 %v3612
        %3682 = vmatpush1.bf16.msra.mxu0 %v3611
        %3683 = vmatprep.subr.bf16.mxu0 %v3610
        %3684 = vmatpush1.bf16.msra.mxu0 %v3609
        %3685 = vmatprep.subr.bf16.mxu0 %v3608
        %3686 = vmatpush1.bf16.msra.mxu0 %v3607
        %3687 = vmatprep.subr.bf16.mxu0 %v3638
        %3688 = vmatpush2.bf16.msra.mxu0 %v3637
        %3689 = vmatprep.subr.bf16.mxu0 %v3636
        %3690 = vmatpush2.bf16.msra.mxu0 %v3635
        %3691 = vmatprep.subr.bf16.mxu0 %v3634
        %3692 = vmatpush2.bf16.msra.mxu0 %v3633
        %3693 = vmatprep.subr.bf16.mxu0 %v3632
        %3694 = vmatpush2.bf16.msra.mxu0 %v3631
        %3695 = vmatprep.subr.bf16.mxu0 %v3630
        %3696 = vmatpush2.bf16.msra.mxu0 %v3629
        %3697 = vmatprep.subr.bf16.mxu0 %v3628
        %3698 = vmatpush2.bf16.msra.mxu0 %v3627
        %3699 = vmatprep.subr.bf16.mxu0 %v3626
        %3700 = vmatpush2.bf16.msra.mxu0 %v3625
        %3701 = vmatprep.subr.bf16.mxu0 %v3624
        %3702 = vmatpush2.bf16.msra.mxu0 %v3623
        %3703 = vmatprep.mubr.bf16.mxu0 %v3434
        %3704 = vmatmul.mubr.bf16.gmra.mxu0 %v3433
        %v3705 = vpop.f32.mrf.mxu0
        %v3706 = vadd.f32 %v3504, %v3705
        %v3707 = vpop.f32.mrf.mxu0
        %v3708 = vadd.f32 %v3508, %v3707
        %v3709 = vpop.f32.mrf.mxu0
        %v3710 = vadd.f32 %v3504, %v3709
        %v3711 = vpop.f32.mrf.mxu0
        %v3712 = vadd.f32 %v3508, %v3711
        %3713 = vmatprep.mubr.bf16.mxu0 %v3436
        %3714 = vmatmul.mubr.bf16.gmra.mxu0 %v3435
        %v3715 = vpop.f32.mrf.mxu0
        %v3716 = vadd.f32 %v3504, %v3715
        %v3717 = vpop.f32.mrf.mxu0
        %v3718 = vadd.f32 %v3508, %v3717
        %v3719 = vpop.f32.mrf.mxu0
        %v3720 = vadd.f32 %v3504, %v3719
        %v3721 = vpop.f32.mrf.mxu0
        %v3722 = vadd.f32 %v3508, %v3721
        %3723 = vmatprep.mubr.bf16.mxu0 %v3438
        %3724 = vmatmul.mubr.bf16.gmra.mxu0 %v3437
        %v3725 = vpop.f32.mrf.mxu0
        %v3726 = vadd.f32 %v3504, %v3725
        %v3727 = vpop.f32.mrf.mxu0
        %v3728 = vadd.f32 %v3508, %v3727
        %v3729 = vpop.f32.mrf.mxu0
        %v3730 = vadd.f32 %v3504, %v3729
        %v3731 = vpop.f32.mrf.mxu0
        %v3732 = vadd.f32 %v3508, %v3731
        %3733 = vmatprep.mubr.bf16.mxu0 %v3440
        %3734 = vmatmul.mubr.bf16.gmra.mxu0 %v3439
        %v3735 = vpop.f32.mrf.mxu0
        %v3736 = vadd.f32 %v3504, %v3735
        %v3737 = vpop.f32.mrf.mxu0
        %v3738 = vadd.f32 %v3508, %v3737
        %v3739 = vpop.f32.mrf.mxu0
        %v3740 = vadd.f32 %v3504, %v3739
        %v3741 = vpop.f32.mrf.mxu0
        %v3742 = vadd.f32 %v3508, %v3741
        %3743 = vmatprep.mubr.bf16.mxu0 %v3442
        %3744 = vmatmul.mubr.bf16.gmra.mxu0 %v3441
        %v3745 = vpop.f32.mrf.mxu0
        %v3746 = vadd.f32 %v3504, %v3745
        %v3747 = vpop.f32.mrf.mxu0
        %v3748 = vadd.f32 %v3508, %v3747
        %v3749 = vpop.f32.mrf.mxu0
        %v3750 = vadd.f32 %v3504, %v3749
        %v3751 = vpop.f32.mrf.mxu0
        %v3752 = vadd.f32 %v3508, %v3751
        %3753 = vmatprep.mubr.bf16.mxu0 %v3444
        %3754 = vmatmul.mubr.bf16.gmra.mxu0 %v3443
        %v3755 = vpop.f32.mrf.mxu0
        %v3756 = vadd.f32 %v3504, %v3755
        %v3757 = vpop.f32.mrf.mxu0
        %v3758 = vadd.f32 %v3508, %v3757
        %v3759 = vpop.f32.mrf.mxu0
        %v3760 = vadd.f32 %v3504, %v3759
        %v3761 = vpop.f32.mrf.mxu0
        %v3762 = vadd.f32 %v3508, %v3761
        %3763 = vmatprep.mubr.bf16.mxu0 %v3446
        %3764 = vmatmul.mubr.bf16.gmra.mxu0 %v3445
        %v3765 = vpop.f32.mrf.mxu0
        %v3766 = vadd.f32 %v3504, %v3765
        %v3767 = vpop.f32.mrf.mxu0
        %v3768 = vadd.f32 %v3508, %v3767
        %v3769 = vpop.f32.mrf.mxu0
        %v3770 = vadd.f32 %v3504, %v3769
        %v3771 = vpop.f32.mrf.mxu0
        %v3772 = vadd.f32 %v3508, %v3771
        %3773 = vmatprep.mubr.bf16.mxu0 %v3448
        %3774 = vmatmul.mubr.bf16.gmra.mxu0 %v3447
        %v3775 = vpop.f32.mrf.mxu0
        %v3776 = vadd.f32 %v3504, %v3775
        %v3777 = vpop.f32.mrf.mxu0
        %v3778 = vadd.f32 %v3508, %v3777
        %v3779 = vpop.f32.mrf.mxu0
        %v3780 = vadd.f32 %v3504, %v3779
        %v3781 = vpop.f32.mrf.mxu0
        %v3782 = vadd.f32 %v3508, %v3781
        %3783 = vmatprep.mubr.bf16.mxu0 %v3450
        %3784 = vmatmul.mubr.bf16.gmra.mxu0 %v3449
        %v3785 = vpop.f32.mrf.mxu0
        %v3786 = vadd.f32 %v3504, %v3785
        %v3787 = vpop.f32.mrf.mxu0
        %v3788 = vadd.f32 %v3508, %v3787
        %v3789 = vpop.f32.mrf.mxu0
        %v3790 = vadd.f32 %v3504, %v3789
        %v3791 = vpop.f32.mrf.mxu0
        %v3792 = vadd.f32 %v3508, %v3791
        %3793 = vmatprep.mubr.bf16.mxu0 %v3452
        %3794 = vmatmul.mubr.bf16.gmra.mxu0 %v3451
        %v3795 = vpop.f32.mrf.mxu0
        %v3796 = vadd.f32 %v3504, %v3795
        %v3797 = vpop.f32.mrf.mxu0
        %v3798 = vadd.f32 %v3508, %v3797
        %v3799 = vpop.f32.mrf.mxu0
        %v3800 = vadd.f32 %v3504, %v3799
        %v3801 = vpop.f32.mrf.mxu0
        %v3802 = vadd.f32 %v3508, %v3801
        %3803 = vmatprep.mubr.bf16.mxu0 %v3454
        %3804 = vmatmul.mubr.bf16.gmra.mxu0 %v3453
        %v3805 = vpop.f32.mrf.mxu0
        %v3806 = vadd.f32 %v3504, %v3805
        %v3807 = vpop.f32.mrf.mxu0
        %v3808 = vadd.f32 %v3508, %v3807
        %v3809 = vpop.f32.mrf.mxu0
        %v3810 = vadd.f32 %v3504, %v3809
        %v3811 = vpop.f32.mrf.mxu0
        %v3812 = vadd.f32 %v3508, %v3811
        %3813 = vmatprep.mubr.bf16.mxu0 %v3456
        %3814 = vmatmul.mubr.bf16.gmra.mxu0 %v3455
        %v3815 = vpop.f32.mrf.mxu0
        %v3816 = vadd.f32 %v3504, %v3815
        %v3817 = vpop.f32.mrf.mxu0
        %v3818 = vadd.f32 %v3508, %v3817
        %v3819 = vpop.f32.mrf.mxu0
        %v3820 = vadd.f32 %v3504, %v3819
        %v3821 = vpop.f32.mrf.mxu0
        %v3822 = vadd.f32 %v3508, %v3821
        %3823 = vmatprep.mubr.bf16.mxu0 %v3458
        %3824 = vmatmul.mubr.bf16.gmra.mxu0 %v3457
        %v3825 = vpop.f32.mrf.mxu0
        %v3826 = vadd.f32 %v3504, %v3825
        %v3827 = vpop.f32.mrf.mxu0
        %v3828 = vadd.f32 %v3508, %v3827
        %v3829 = vpop.f32.mrf.mxu0
        %v3830 = vadd.f32 %v3504, %v3829
        %v3831 = vpop.f32.mrf.mxu0
        %v3832 = vadd.f32 %v3508, %v3831
        %3833 = vmatprep.mubr.bf16.mxu0 %v3460
        %3834 = vmatmul.mubr.bf16.gmra.mxu0 %v3459
        %v3835 = vpop.f32.mrf.mxu0
        %v3836 = vadd.f32 %v3504, %v3835
        %v3837 = vpop.f32.mrf.mxu0
        %v3838 = vadd.f32 %v3508, %v3837
        %v3839 = vpop.f32.mrf.mxu0
        %v3840 = vadd.f32 %v3504, %v3839
        %v3841 = vpop.f32.mrf.mxu0
        %v3842 = vadd.f32 %v3508, %v3841
        %3843 = vmatprep.mubr.bf16.mxu0 %v3462
        %3844 = vmatmul.mubr.bf16.gmra.mxu0 %v3461
        %v3845 = vpop.f32.mrf.mxu0
        %v3846 = vadd.f32 %v3504, %v3845
        %v3847 = vpop.f32.mrf.mxu0
        %v3848 = vadd.f32 %v3508, %v3847
        %v3849 = vpop.f32.mrf.mxu0
        %v3850 = vadd.f32 %v3504, %v3849
        %v3851 = vpop.f32.mrf.mxu0
        %v3852 = vadd.f32 %v3508, %v3851
        %3853 = vmatprep.mubr.bf16.mxu0 %v3464
        %3854 = vmatmul.mubr.bf16.gmra.mxu0 %v3463
        %v3855 = vpop.f32.mrf.mxu0
        %v3856 = vadd.f32 %v3504, %v3855
        %v3857 = vpop.f32.mrf.mxu0
        %v3858 = vadd.f32 %v3508, %v3857
        %v3859 = vpop.f32.mrf.mxu0
        %v3860 = vadd.f32 %v3504, %v3859
        %v3861 = vpop.f32.mrf.mxu0
        %v3862 = vadd.f32 %v3508, %v3861
        %3863 = vdwg.mxu0
        %v3864 = vmax.f32 %v3706, 0.0
        %v3865 = vmax.f32 %v3708, 0.0
        %v3866 = vmax.f32 %v3710, 0.0
        %v3867 = vmax.f32 %v3712, 0.0
        %v3868 = vmax.f32 %v3716, 0.0
        %v3869 = vmax.f32 %v3718, 0.0
        %v3870 = vmax.f32 %v3720, 0.0
        %v3871 = vmax.f32 %v3722, 0.0
        %v3872 = vmax.f32 %v3726, 0.0
        %v3873 = vmax.f32 %v3728, 0.0
        %v3874 = vmax.f32 %v3730, 0.0
        %v3875 = vmax.f32 %v3732, 0.0
        %v3876 = vmax.f32 %v3736, 0.0
        %v3877 = vmax.f32 %v3738, 0.0
        %v3878 = vmax.f32 %v3740, 0.0
        %v3879 = vmax.f32 %v3742, 0.0
        %v3880 = vmax.f32 %v3746, 0.0
        %v3881 = vmax.f32 %v3748, 0.0
        %v3882 = vmax.f32 %v3750, 0.0
        %v3883 = vmax.f32 %v3752, 0.0
        %v3884 = vmax.f32 %v3756, 0.0
        %v3885 = vmax.f32 %v3758, 0.0
        %v3886 = vmax.f32 %v3760, 0.0
        %v3887 = vmax.f32 %v3762, 0.0
        %v3888 = vmax.f32 %v3766, 0.0
        %v3889 = vmax.f32 %v3768, 0.0
        %v3890 = vmax.f32 %v3770, 0.0
        %v3891 = vmax.f32 %v3772, 0.0
        %v3892 = vmax.f32 %v3776, 0.0
        %v3893 = vmax.f32 %v3778, 0.0
        %v3894 = vmax.f32 %v3780, 0.0
        %v3895 = vmax.f32 %v3782, 0.0
        %v3896 = vmax.f32 %v3786, 0.0
        %v3897 = vmax.f32 %v3788, 0.0
        %v3898 = vmax.f32 %v3790, 0.0
        %v3899 = vmax.f32 %v3792, 0.0
        %v3900 = vmax.f32 %v3796, 0.0
        %v3901 = vmax.f32 %v3798, 0.0
        %v3902 = vmax.f32 %v3800, 0.0
        %v3903 = vmax.f32 %v3802, 0.0
        %v3904 = vmax.f32 %v3806, 0.0
        %v3905 = vmax.f32 %v3808, 0.0
        %v3906 = vmax.f32 %v3810, 0.0
        %v3907 = vmax.f32 %v3812, 0.0
        %v3908 = vmax.f32 %v3816, 0.0
        %v3909 = vmax.f32 %v3818, 0.0
        %v3910 = vmax.f32 %v3820, 0.0
        %v3911 = vmax.f32 %v3822, 0.0
        %v3912 = vmax.f32 %v3826, 0.0
        %v3913 = vmax.f32 %v3828, 0.0
        %v3914 = vmax.f32 %v3830, 0.0
        %v3915 = vmax.f32 %v3832, 0.0
        %v3916 = vmax.f32 %v3836, 0.0
        %v3917 = vmax.f32 %v3838, 0.0
        %v3918 = vmax.f32 %v3840, 0.0
        %v3919 = vmax.f32 %v3842, 0.0
        %v3920 = vmax.f32 %v3846, 0.0
        %v3921 = vmax.f32 %v3848, 0.0
        %v3922 = vmax.f32 %v3850, 0.0
        %v3923 = vmax.f32 %v3852, 0.0
        %v3924 = vmax.f32 %v3856, 0.0
        %v3925 = vmax.f32 %v3858, 0.0
        %v3926 = vmax.f32 %v3860, 0.0
        %v3927 = vmax.f32 %v3862, 0.0
        %v3928 = vpack.c.bf16 %v3866, %v3864
        %v3929 = vpack.c.bf16 %v3867, %v3865
        %v3930 = vpack.c.bf16 %v3870, %v3868
        %v3931 = vpack.c.bf16 %v3871, %v3869
        %v3932 = vpack.c.bf16 %v3874, %v3872
        %v3933 = vpack.c.bf16 %v3875, %v3873
        %v3934 = vpack.c.bf16 %v3878, %v3876
        %v3935 = vpack.c.bf16 %v3879, %v3877
        %v3936 = vpack.c.bf16 %v3882, %v3880
        %v3937 = vpack.c.bf16 %v3883, %v3881
        %v3938 = vpack.c.bf16 %v3886, %v3884
        %v3939 = vpack.c.bf16 %v3887, %v3885
        %v3940 = vpack.c.bf16 %v3890, %v3888
        %v3941 = vpack.c.bf16 %v3891, %v3889
        %v3942 = vpack.c.bf16 %v3894, %v3892
        %v3943 = vpack.c.bf16 %v3895, %v3893
        %v3944 = vpack.c.bf16 %v3898, %v3896
        %v3945 = vpack.c.bf16 %v3899, %v3897
        %v3946 = vpack.c.bf16 %v3902, %v3900
        %v3947 = vpack.c.bf16 %v3903, %v3901
        %v3948 = vpack.c.bf16 %v3906, %v3904
        %v3949 = vpack.c.bf16 %v3907, %v3905
        %v3950 = vpack.c.bf16 %v3910, %v3908
        %v3951 = vpack.c.bf16 %v3911, %v3909
        %v3952 = vpack.c.bf16 %v3914, %v3912
        %v3953 = vpack.c.bf16 %v3915, %v3913
        %v3954 = vpack.c.bf16 %v3918, %v3916
        %v3955 = vpack.c.bf16 %v3919, %v3917
        %v3956 = vpack.c.bf16 %v3922, %v3920
        %v3957 = vpack.c.bf16 %v3923, %v3921
        %v3958 = vpack.c.bf16 %v3926, %v3924
        %v3959 = vpack.c.bf16 %v3927, %v3925
        %s3960 = scalar_lea.vmem [#allocation8], 1280
        %v3961 = vld [vmem:[%s3960] sm:$0xff]
        %v3962 = vld [vmem:[%s3960 + $0x8] sm:$0xff]
        %v3963 = vld [vmem:[%s3960 + $0x10] sm:$0xff]
        %v3964 = vld [vmem:[%s3960 + $0x18] sm:$0xff]
        %v3965 = vld [vmem:[%s3960 + $0x20] sm:$0xff]
        %v3966 = vld [vmem:[%s3960 + $0x28] sm:$0xff]
        %v3967 = vld [vmem:[%s3960 + $0x30] sm:$0xff]
        %v3968 = vld [vmem:[%s3960 + $0x38] sm:$0xff]
        %v3969 = vld [vmem:[%s3960 + $0x40] sm:$0xff]
        %v3970 = vld [vmem:[%s3960 + $0x48] sm:$0xff]
        %v3971 = vld [vmem:[%s3960 + $0x50] sm:$0xff]
        %v3972 = vld [vmem:[%s3960 + $0x58] sm:$0xff]
        %v3973 = vld [vmem:[%s3960 + $0x60] sm:$0xff]
        %v3974 = vld [vmem:[%s3960 + $0x68] sm:$0xff]
        %v3975 = vld [vmem:[%s3960 + $0x70] sm:$0xff]
        %v3976 = vld [vmem:[%s3960 + $0x78] sm:$0xff]
        %v3977 = vld [vmem:[%s3960 + $0x80] sm:$0xff]
        %v3978 = vld [vmem:[%s3960 + $0x88] sm:$0xff]
        %v3979 = vld [vmem:[%s3960 + $0x90] sm:$0xff]
        %v3980 = vld [vmem:[%s3960 + $0x98] sm:$0xff]
        %v3981 = vld [vmem:[%s3960 + $0xa0] sm:$0xff]
        %v3982 = vld [vmem:[%s3960 + $0xa8] sm:$0xff]
        %v3983 = vld [vmem:[%s3960 + $0xb0] sm:$0xff]
        %v3984 = vld [vmem:[%s3960 + $0xb8] sm:$0xff]
        %v3985 = vld [vmem:[%s3960 + $0xc0] sm:$0xff]
        %v3986 = vld [vmem:[%s3960 + $0xc8] sm:$0xff]
        %v3987 = vld [vmem:[%s3960 + $0xd0] sm:$0xff]
        %v3988 = vld [vmem:[%s3960 + $0xd8] sm:$0xff]
        %v3989 = vld [vmem:[%s3960 + $0xe0] sm:$0xff]
        %v3990 = vld [vmem:[%s3960 + $0xe8] sm:$0xff]
        %v3991 = vld [vmem:[%s3960 + $0xf0] sm:$0xff]
        %v3992 = vld [vmem:[%s3960 + $0xf8] sm:$0xff]
        %s3993 = scalar_lea.vmem [#allocation10], 10
        %v3994 = vld [vmem:[%s3993] sm:$0x3]
        %v3996 = vlaneseq
        %v3997 = vshrl.u32 %v3996, 7
        %v3998 = vsub.s32 0, %v3997
        %v3999 = vrot.slane %v3994, %v3998
        %v4000 = vlaneseq
        %v4001 = vshrl.u32 %v4000, 7
        %v4002 = vsub.s32 1, %v4001
        %v4003 = vrot.slane %v3994, %v4002
        %v4038 = vunpack.c.l.b16 %v3961
        %v4039 = vunpack.c.h.b16 %v3961
        %v4040 = vunpack.c.l.b16 %v3962
        %v4041 = vunpack.c.h.b16 %v3962
        %v4042 = vunpack.c.l.b16 %v3963
        %v4043 = vunpack.c.h.b16 %v3963
        %v4044 = vunpack.c.l.b16 %v3964
        %v4045 = vunpack.c.h.b16 %v3964
        %v4046 = vunpack.c.l.b16 %v3965
        %v4047 = vunpack.c.h.b16 %v3965
        %v4048 = vunpack.c.l.b16 %v3966
        %v4049 = vunpack.c.h.b16 %v3966
        %v4050 = vunpack.c.l.b16 %v3967
        %v4051 = vunpack.c.h.b16 %v3967
        %v4052 = vunpack.c.l.b16 %v3968
        %v4053 = vunpack.c.h.b16 %v3968
        %v4054 = vunpack.c.l.b16 %v3969
        %v4055 = vunpack.c.h.b16 %v3969
        %v4056 = vunpack.c.l.b16 %v3970
        %v4057 = vunpack.c.h.b16 %v3970
        %v4058 = vunpack.c.l.b16 %v3971
        %v4059 = vunpack.c.h.b16 %v3971
        %v4060 = vunpack.c.l.b16 %v3972
        %v4061 = vunpack.c.h.b16 %v3972
        %v4062 = vunpack.c.l.b16 %v3973
        %v4063 = vunpack.c.h.b16 %v3973
        %v4064 = vunpack.c.l.b16 %v3974
        %v4065 = vunpack.c.h.b16 %v3974
        %v4066 = vunpack.c.l.b16 %v3975
        %v4067 = vunpack.c.h.b16 %v3975
        %v4068 = vunpack.c.l.b16 %v3976
        %v4069 = vunpack.c.h.b16 %v3976
        %v4070 = vunpack.c.l.b16 %v3977
        %v4071 = vunpack.c.h.b16 %v3977
        %v4072 = vunpack.c.l.b16 %v3978
        %v4073 = vunpack.c.h.b16 %v3978
        %v4074 = vunpack.c.l.b16 %v3979
        %v4075 = vunpack.c.h.b16 %v3979
        %v4076 = vunpack.c.l.b16 %v3980
        %v4077 = vunpack.c.h.b16 %v3980
        %v4078 = vunpack.c.l.b16 %v3981
        %v4079 = vunpack.c.h.b16 %v3981
        %v4080 = vunpack.c.l.b16 %v3982
        %v4081 = vunpack.c.h.b16 %v3982
        %v4082 = vunpack.c.l.b16 %v3983
        %v4083 = vunpack.c.h.b16 %v3983
        %v4084 = vunpack.c.l.b16 %v3984
        %v4085 = vunpack.c.h.b16 %v3984
        %v4086 = vunpack.c.l.b16 %v3985
        %v4087 = vunpack.c.h.b16 %v3985
        %v4088 = vunpack.c.l.b16 %v3986
        %v4089 = vunpack.c.h.b16 %v3986
        %v4090 = vunpack.c.l.b16 %v3987
        %v4091 = vunpack.c.h.b16 %v3987
        %v4092 = vunpack.c.l.b16 %v3988
        %v4093 = vunpack.c.h.b16 %v3988
        %v4094 = vunpack.c.l.b16 %v3989
        %v4095 = vunpack.c.h.b16 %v3989
        %v4096 = vunpack.c.l.b16 %v3990
        %v4097 = vunpack.c.h.b16 %v3990
        %v4098 = vunpack.c.l.b16 %v3991
        %v4099 = vunpack.c.h.b16 %v3991
        %v4100 = vunpack.c.l.b16 %v3992
        %v4101 = vunpack.c.h.b16 %v3992
        %v4102 = vpack.c.b16 %v4040, %v4038
        %v4103 = vpack.c.b16 %v4041, %v4039
        %v4104 = vpack.c.b16 %v4044, %v4042
        %v4105 = vpack.c.b16 %v4045, %v4043
        %v4106 = vpack.c.b16 %v4048, %v4046
        %v4107 = vpack.c.b16 %v4049, %v4047
        %v4108 = vpack.c.b16 %v4052, %v4050
        %v4109 = vpack.c.b16 %v4053, %v4051
        %v4110 = vpack.c.b16 %v4056, %v4054
        %v4111 = vpack.c.b16 %v4057, %v4055
        %v4112 = vpack.c.b16 %v4060, %v4058
        %v4113 = vpack.c.b16 %v4061, %v4059
        %v4114 = vpack.c.b16 %v4064, %v4062
        %v4115 = vpack.c.b16 %v4065, %v4063
        %v4116 = vpack.c.b16 %v4068, %v4066
        %v4117 = vpack.c.b16 %v4069, %v4067
        %v4118 = vpack.c.b16 %v4072, %v4070
        %v4119 = vpack.c.b16 %v4073, %v4071
        %v4120 = vpack.c.b16 %v4076, %v4074
        %v4121 = vpack.c.b16 %v4077, %v4075
        %v4122 = vpack.c.b16 %v4080, %v4078
        %v4123 = vpack.c.b16 %v4081, %v4079
        %v4124 = vpack.c.b16 %v4084, %v4082
        %v4125 = vpack.c.b16 %v4085, %v4083
        %v4126 = vpack.c.b16 %v4088, %v4086
        %v4127 = vpack.c.b16 %v4089, %v4087
        %v4128 = vpack.c.b16 %v4092, %v4090
        %v4129 = vpack.c.b16 %v4093, %v4091
        %v4130 = vpack.c.b16 %v4096, %v4094
        %v4131 = vpack.c.b16 %v4097, %v4095
        %v4132 = vpack.c.b16 %v4100, %v4098
        %v4133 = vpack.c.b16 %v4101, %v4099
        %4166 = vmatprep.subr.bf16.mxu0 %v4117
        %4167 = vmatpush1.bf16.msra.mxu0 %v4116
        %4168 = vmatprep.subr.bf16.mxu0 %v4115
        %4169 = vmatpush1.bf16.msra.mxu0 %v4114
        %4170 = vmatprep.subr.bf16.mxu0 %v4113
        %4171 = vmatpush1.bf16.msra.mxu0 %v4112
        %4172 = vmatprep.subr.bf16.mxu0 %v4111
        %4173 = vmatpush1.bf16.msra.mxu0 %v4110
        %4174 = vmatprep.subr.bf16.mxu0 %v4109
        %4175 = vmatpush1.bf16.msra.mxu0 %v4108
        %4176 = vmatprep.subr.bf16.mxu0 %v4107
        %4177 = vmatpush1.bf16.msra.mxu0 %v4106
        %4178 = vmatprep.subr.bf16.mxu0 %v4105
        %4179 = vmatpush1.bf16.msra.mxu0 %v4104
        %4180 = vmatprep.subr.bf16.mxu0 %v4103
        %4181 = vmatpush1.bf16.msra.mxu0 %v4102
        %4182 = vmatprep.subr.bf16.mxu0 %v4133
        %4183 = vmatpush2.bf16.msra.mxu0 %v4132
        %4184 = vmatprep.subr.bf16.mxu0 %v4131
        %4185 = vmatpush2.bf16.msra.mxu0 %v4130
        %4186 = vmatprep.subr.bf16.mxu0 %v4129
        %4187 = vmatpush2.bf16.msra.mxu0 %v4128
        %4188 = vmatprep.subr.bf16.mxu0 %v4127
        %4189 = vmatpush2.bf16.msra.mxu0 %v4126
        %4190 = vmatprep.subr.bf16.mxu0 %v4125
        %4191 = vmatpush2.bf16.msra.mxu0 %v4124
        %4192 = vmatprep.subr.bf16.mxu0 %v4123
        %4193 = vmatpush2.bf16.msra.mxu0 %v4122
        %4194 = vmatprep.subr.bf16.mxu0 %v4121
        %4195 = vmatpush2.bf16.msra.mxu0 %v4120
        %4196 = vmatprep.subr.bf16.mxu0 %v4119
        %4197 = vmatpush2.bf16.msra.mxu0 %v4118
        %4198 = vmatprep.mubr.bf16.mxu0 %v3929
        %4199 = vmatmul.mubr.bf16.gmra.mxu0 %v3928
        %v4200 = vpop.f32.mrf.mxu0
        %v4201 = vadd.f32 %v3999, %v4200
        %v4202 = vpop.f32.mrf.mxu0
        %v4203 = vadd.f32 %v4003, %v4202
        %v4204 = vpop.f32.mrf.mxu0
        %v4205 = vadd.f32 %v3999, %v4204
        %v4206 = vpop.f32.mrf.mxu0
        %v4207 = vadd.f32 %v4003, %v4206
        %4208 = vmatprep.mubr.bf16.mxu0 %v3931
        %4209 = vmatmul.mubr.bf16.gmra.mxu0 %v3930
        %v4210 = vpop.f32.mrf.mxu0
        %v4211 = vadd.f32 %v3999, %v4210
        %v4212 = vpop.f32.mrf.mxu0
        %v4213 = vadd.f32 %v4003, %v4212
        %v4214 = vpop.f32.mrf.mxu0
        %v4215 = vadd.f32 %v3999, %v4214
        %v4216 = vpop.f32.mrf.mxu0
        %v4217 = vadd.f32 %v4003, %v4216
        %4218 = vmatprep.mubr.bf16.mxu0 %v3933
        %4219 = vmatmul.mubr.bf16.gmra.mxu0 %v3932
        %v4220 = vpop.f32.mrf.mxu0
        %v4221 = vadd.f32 %v3999, %v4220
        %v4222 = vpop.f32.mrf.mxu0
        %v4223 = vadd.f32 %v4003, %v4222
        %v4224 = vpop.f32.mrf.mxu0
        %v4225 = vadd.f32 %v3999, %v4224
        %v4226 = vpop.f32.mrf.mxu0
        %v4227 = vadd.f32 %v4003, %v4226
        %4228 = vmatprep.mubr.bf16.mxu0 %v3935
        %4229 = vmatmul.mubr.bf16.gmra.mxu0 %v3934
        %v4230 = vpop.f32.mrf.mxu0
        %v4231 = vadd.f32 %v3999, %v4230
        %v4232 = vpop.f32.mrf.mxu0
        %v4233 = vadd.f32 %v4003, %v4232
        %v4234 = vpop.f32.mrf.mxu0
        %v4235 = vadd.f32 %v3999, %v4234
        %v4236 = vpop.f32.mrf.mxu0
        %v4237 = vadd.f32 %v4003, %v4236
        %4238 = vmatprep.mubr.bf16.mxu0 %v3937
        %4239 = vmatmul.mubr.bf16.gmra.mxu0 %v3936
        %v4240 = vpop.f32.mrf.mxu0
        %v4241 = vadd.f32 %v3999, %v4240
        %v4242 = vpop.f32.mrf.mxu0
        %v4243 = vadd.f32 %v4003, %v4242
        %v4244 = vpop.f32.mrf.mxu0
        %v4245 = vadd.f32 %v3999, %v4244
        %v4246 = vpop.f32.mrf.mxu0
        %v4247 = vadd.f32 %v4003, %v4246
        %4248 = vmatprep.mubr.bf16.mxu0 %v3939
        %4249 = vmatmul.mubr.bf16.gmra.mxu0 %v3938
        %v4250 = vpop.f32.mrf.mxu0
        %v4251 = vadd.f32 %v3999, %v4250
        %v4252 = vpop.f32.mrf.mxu0
        %v4253 = vadd.f32 %v4003, %v4252
        %v4254 = vpop.f32.mrf.mxu0
        %v4255 = vadd.f32 %v3999, %v4254
        %v4256 = vpop.f32.mrf.mxu0
        %v4257 = vadd.f32 %v4003, %v4256
        %4258 = vmatprep.mubr.bf16.mxu0 %v3941
        %4259 = vmatmul.mubr.bf16.gmra.mxu0 %v3940
        %v4260 = vpop.f32.mrf.mxu0
        %v4261 = vadd.f32 %v3999, %v4260
        %v4262 = vpop.f32.mrf.mxu0
        %v4263 = vadd.f32 %v4003, %v4262
        %v4264 = vpop.f32.mrf.mxu0
        %v4265 = vadd.f32 %v3999, %v4264
        %v4266 = vpop.f32.mrf.mxu0
        %v4267 = vadd.f32 %v4003, %v4266
        %4268 = vmatprep.mubr.bf16.mxu0 %v3943
        %4269 = vmatmul.mubr.bf16.gmra.mxu0 %v3942
        %v4270 = vpop.f32.mrf.mxu0
        %v4271 = vadd.f32 %v3999, %v4270
        %v4272 = vpop.f32.mrf.mxu0
        %v4273 = vadd.f32 %v4003, %v4272
        %v4274 = vpop.f32.mrf.mxu0
        %v4275 = vadd.f32 %v3999, %v4274
        %v4276 = vpop.f32.mrf.mxu0
        %v4277 = vadd.f32 %v4003, %v4276
        %4278 = vmatprep.mubr.bf16.mxu0 %v3945
        %4279 = vmatmul.mubr.bf16.gmra.mxu0 %v3944
        %v4280 = vpop.f32.mrf.mxu0
        %v4281 = vadd.f32 %v3999, %v4280
        %v4282 = vpop.f32.mrf.mxu0
        %v4283 = vadd.f32 %v4003, %v4282
        %v4284 = vpop.f32.mrf.mxu0
        %v4285 = vadd.f32 %v3999, %v4284
        %v4286 = vpop.f32.mrf.mxu0
        %v4287 = vadd.f32 %v4003, %v4286
        %4288 = vmatprep.mubr.bf16.mxu0 %v3947
        %4289 = vmatmul.mubr.bf16.gmra.mxu0 %v3946
        %v4290 = vpop.f32.mrf.mxu0
        %v4291 = vadd.f32 %v3999, %v4290
        %v4292 = vpop.f32.mrf.mxu0
        %v4293 = vadd.f32 %v4003, %v4292
        %v4294 = vpop.f32.mrf.mxu0
        %v4295 = vadd.f32 %v3999, %v4294
        %v4296 = vpop.f32.mrf.mxu0
        %v4297 = vadd.f32 %v4003, %v4296
        %4298 = vmatprep.mubr.bf16.mxu0 %v3949
        %4299 = vmatmul.mubr.bf16.gmra.mxu0 %v3948
        %v4300 = vpop.f32.mrf.mxu0
        %v4301 = vadd.f32 %v3999, %v4300
        %v4302 = vpop.f32.mrf.mxu0
        %v4303 = vadd.f32 %v4003, %v4302
        %v4304 = vpop.f32.mrf.mxu0
        %v4305 = vadd.f32 %v3999, %v4304
        %v4306 = vpop.f32.mrf.mxu0
        %v4307 = vadd.f32 %v4003, %v4306
        %4308 = vmatprep.mubr.bf16.mxu0 %v3951
        %4309 = vmatmul.mubr.bf16.gmra.mxu0 %v3950
        %v4310 = vpop.f32.mrf.mxu0
        %v4311 = vadd.f32 %v3999, %v4310
        %v4312 = vpop.f32.mrf.mxu0
        %v4313 = vadd.f32 %v4003, %v4312
        %v4314 = vpop.f32.mrf.mxu0
        %v4315 = vadd.f32 %v3999, %v4314
        %v4316 = vpop.f32.mrf.mxu0
        %v4317 = vadd.f32 %v4003, %v4316
        %4318 = vmatprep.mubr.bf16.mxu0 %v3953
        %4319 = vmatmul.mubr.bf16.gmra.mxu0 %v3952
        %v4320 = vpop.f32.mrf.mxu0
        %v4321 = vadd.f32 %v3999, %v4320
        %v4322 = vpop.f32.mrf.mxu0
        %v4323 = vadd.f32 %v4003, %v4322
        %v4324 = vpop.f32.mrf.mxu0
        %v4325 = vadd.f32 %v3999, %v4324
        %v4326 = vpop.f32.mrf.mxu0
        %v4327 = vadd.f32 %v4003, %v4326
        %4328 = vmatprep.mubr.bf16.mxu0 %v3955
        %4329 = vmatmul.mubr.bf16.gmra.mxu0 %v3954
        %v4330 = vpop.f32.mrf.mxu0
        %v4331 = vadd.f32 %v3999, %v4330
        %v4332 = vpop.f32.mrf.mxu0
        %v4333 = vadd.f32 %v4003, %v4332
        %v4334 = vpop.f32.mrf.mxu0
        %v4335 = vadd.f32 %v3999, %v4334
        %v4336 = vpop.f32.mrf.mxu0
        %v4337 = vadd.f32 %v4003, %v4336
        %4338 = vmatprep.mubr.bf16.mxu0 %v3957
        %4339 = vmatmul.mubr.bf16.gmra.mxu0 %v3956
        %v4340 = vpop.f32.mrf.mxu0
        %v4341 = vadd.f32 %v3999, %v4340
        %v4342 = vpop.f32.mrf.mxu0
        %v4343 = vadd.f32 %v4003, %v4342
        %v4344 = vpop.f32.mrf.mxu0
        %v4345 = vadd.f32 %v3999, %v4344
        %v4346 = vpop.f32.mrf.mxu0
        %v4347 = vadd.f32 %v4003, %v4346
        %4348 = vmatprep.mubr.bf16.mxu0 %v3959
        %4349 = vmatmul.mubr.bf16.gmra.mxu0 %v3958
        %v4350 = vpop.f32.mrf.mxu0
        %v4351 = vadd.f32 %v3999, %v4350
        %v4352 = vpop.f32.mrf.mxu0
        %v4353 = vadd.f32 %v4003, %v4352
        %v4354 = vpop.f32.mrf.mxu0
        %v4355 = vadd.f32 %v3999, %v4354
        %v4356 = vpop.f32.mrf.mxu0
        %v4357 = vadd.f32 %v4003, %v4356
        %4358 = vdwg.mxu0
        %v4359 = vmax.f32 %v4201, 0.0
        %v4360 = vmax.f32 %v4203, 0.0
        %v4361 = vmax.f32 %v4205, 0.0
        %v4362 = vmax.f32 %v4207, 0.0
        %v4363 = vmax.f32 %v4211, 0.0
        %v4364 = vmax.f32 %v4213, 0.0
        %v4365 = vmax.f32 %v4215, 0.0
        %v4366 = vmax.f32 %v4217, 0.0
        %v4367 = vmax.f32 %v4221, 0.0
        %v4368 = vmax.f32 %v4223, 0.0
        %v4369 = vmax.f32 %v4225, 0.0
        %v4370 = vmax.f32 %v4227, 0.0
        %v4371 = vmax.f32 %v4231, 0.0
        %v4372 = vmax.f32 %v4233, 0.0
        %v4373 = vmax.f32 %v4235, 0.0
        %v4374 = vmax.f32 %v4237, 0.0
        %v4375 = vmax.f32 %v4241, 0.0
        %v4376 = vmax.f32 %v4243, 0.0
        %v4377 = vmax.f32 %v4245, 0.0
        %v4378 = vmax.f32 %v4247, 0.0
        %v4379 = vmax.f32 %v4251, 0.0
        %v4380 = vmax.f32 %v4253, 0.0
        %v4381 = vmax.f32 %v4255, 0.0
        %v4382 = vmax.f32 %v4257, 0.0
        %v4383 = vmax.f32 %v4261, 0.0
        %v4384 = vmax.f32 %v4263, 0.0
        %v4385 = vmax.f32 %v4265, 0.0
        %v4386 = vmax.f32 %v4267, 0.0
        %v4387 = vmax.f32 %v4271, 0.0
        %v4388 = vmax.f32 %v4273, 0.0
        %v4389 = vmax.f32 %v4275, 0.0
        %v4390 = vmax.f32 %v4277, 0.0
        %v4391 = vmax.f32 %v4281, 0.0
        %v4392 = vmax.f32 %v4283, 0.0
        %v4393 = vmax.f32 %v4285, 0.0
        %v4394 = vmax.f32 %v4287, 0.0
        %v4395 = vmax.f32 %v4291, 0.0
        %v4396 = vmax.f32 %v4293, 0.0
        %v4397 = vmax.f32 %v4295, 0.0
        %v4398 = vmax.f32 %v4297, 0.0
        %v4399 = vmax.f32 %v4301, 0.0
        %v4400 = vmax.f32 %v4303, 0.0
        %v4401 = vmax.f32 %v4305, 0.0
        %v4402 = vmax.f32 %v4307, 0.0
        %v4403 = vmax.f32 %v4311, 0.0
        %v4404 = vmax.f32 %v4313, 0.0
        %v4405 = vmax.f32 %v4315, 0.0
        %v4406 = vmax.f32 %v4317, 0.0
        %v4407 = vmax.f32 %v4321, 0.0
        %v4408 = vmax.f32 %v4323, 0.0
        %v4409 = vmax.f32 %v4325, 0.0
        %v4410 = vmax.f32 %v4327, 0.0
        %v4411 = vmax.f32 %v4331, 0.0
        %v4412 = vmax.f32 %v4333, 0.0
        %v4413 = vmax.f32 %v4335, 0.0
        %v4414 = vmax.f32 %v4337, 0.0
        %v4415 = vmax.f32 %v4341, 0.0
        %v4416 = vmax.f32 %v4343, 0.0
        %v4417 = vmax.f32 %v4345, 0.0
        %v4418 = vmax.f32 %v4347, 0.0
        %v4419 = vmax.f32 %v4351, 0.0
        %v4420 = vmax.f32 %v4353, 0.0
        %v4421 = vmax.f32 %v4355, 0.0
        %v4422 = vmax.f32 %v4357, 0.0
        %v4423 = vpack.c.bf16 %v4361, %v4359
        %v4424 = vpack.c.bf16 %v4362, %v4360
        %v4425 = vpack.c.bf16 %v4365, %v4363
        %v4426 = vpack.c.bf16 %v4366, %v4364
        %v4427 = vpack.c.bf16 %v4369, %v4367
        %v4428 = vpack.c.bf16 %v4370, %v4368
        %v4429 = vpack.c.bf16 %v4373, %v4371
        %v4430 = vpack.c.bf16 %v4374, %v4372
        %v4431 = vpack.c.bf16 %v4377, %v4375
        %v4432 = vpack.c.bf16 %v4378, %v4376
        %v4433 = vpack.c.bf16 %v4381, %v4379
        %v4434 = vpack.c.bf16 %v4382, %v4380
        %v4435 = vpack.c.bf16 %v4385, %v4383
        %v4436 = vpack.c.bf16 %v4386, %v4384
        %v4437 = vpack.c.bf16 %v4389, %v4387
        %v4438 = vpack.c.bf16 %v4390, %v4388
        %v4439 = vpack.c.bf16 %v4393, %v4391
        %v4440 = vpack.c.bf16 %v4394, %v4392
        %v4441 = vpack.c.bf16 %v4397, %v4395
        %v4442 = vpack.c.bf16 %v4398, %v4396
        %v4443 = vpack.c.bf16 %v4401, %v4399
        %v4444 = vpack.c.bf16 %v4402, %v4400
        %v4445 = vpack.c.bf16 %v4405, %v4403
        %v4446 = vpack.c.bf16 %v4406, %v4404
        %v4447 = vpack.c.bf16 %v4409, %v4407
        %v4448 = vpack.c.bf16 %v4410, %v4408
        %v4449 = vpack.c.bf16 %v4413, %v4411
        %v4450 = vpack.c.bf16 %v4414, %v4412
        %v4451 = vpack.c.bf16 %v4417, %v4415
        %v4452 = vpack.c.bf16 %v4418, %v4416
        %v4453 = vpack.c.bf16 %v4421, %v4419
        %v4454 = vpack.c.bf16 %v4422, %v4420
        %s4455 = scalar_lea.vmem [#allocation8], 1536
        %v4456 = vld [vmem:[%s4455] sm:$0xff]
        %v4457 = vld [vmem:[%s4455 + $0x8] sm:$0xff]
        %v4458 = vld [vmem:[%s4455 + $0x10] sm:$0xff]
        %v4459 = vld [vmem:[%s4455 + $0x18] sm:$0xff]
        %v4460 = vld [vmem:[%s4455 + $0x20] sm:$0xff]
        %v4461 = vld [vmem:[%s4455 + $0x28] sm:$0xff]
        %v4462 = vld [vmem:[%s4455 + $0x30] sm:$0xff]
        %v4463 = vld [vmem:[%s4455 + $0x38] sm:$0xff]
        %v4464 = vld [vmem:[%s4455 + $0x40] sm:$0xff]
        %v4465 = vld [vmem:[%s4455 + $0x48] sm:$0xff]
        %v4466 = vld [vmem:[%s4455 + $0x50] sm:$0xff]
        %v4467 = vld [vmem:[%s4455 + $0x58] sm:$0xff]
        %v4468 = vld [vmem:[%s4455 + $0x60] sm:$0xff]
        %v4469 = vld [vmem:[%s4455 + $0x68] sm:$0xff]
        %v4470 = vld [vmem:[%s4455 + $0x70] sm:$0xff]
        %v4471 = vld [vmem:[%s4455 + $0x78] sm:$0xff]
        %v4472 = vld [vmem:[%s4455 + $0x80] sm:$0xff]
        %v4473 = vld [vmem:[%s4455 + $0x88] sm:$0xff]
        %v4474 = vld [vmem:[%s4455 + $0x90] sm:$0xff]
        %v4475 = vld [vmem:[%s4455 + $0x98] sm:$0xff]
        %v4476 = vld [vmem:[%s4455 + $0xa0] sm:$0xff]
        %v4477 = vld [vmem:[%s4455 + $0xa8] sm:$0xff]
        %v4478 = vld [vmem:[%s4455 + $0xb0] sm:$0xff]
        %v4479 = vld [vmem:[%s4455 + $0xb8] sm:$0xff]
        %v4480 = vld [vmem:[%s4455 + $0xc0] sm:$0xff]
        %v4481 = vld [vmem:[%s4455 + $0xc8] sm:$0xff]
        %v4482 = vld [vmem:[%s4455 + $0xd0] sm:$0xff]
        %v4483 = vld [vmem:[%s4455 + $0xd8] sm:$0xff]
        %v4484 = vld [vmem:[%s4455 + $0xe0] sm:$0xff]
        %v4485 = vld [vmem:[%s4455 + $0xe8] sm:$0xff]
        %v4486 = vld [vmem:[%s4455 + $0xf0] sm:$0xff]
        %v4487 = vld [vmem:[%s4455 + $0xf8] sm:$0xff]
        %s4488 = scalar_lea.vmem [#allocation10], 12
        %v4489 = vld [vmem:[%s4488] sm:$0x3]
        %v4491 = vlaneseq
        %v4492 = vshrl.u32 %v4491, 7
        %v4493 = vsub.s32 0, %v4492
        %v4494 = vrot.slane %v4489, %v4493
        %v4495 = vlaneseq
        %v4496 = vshrl.u32 %v4495, 7
        %v4497 = vsub.s32 1, %v4496
        %v4498 = vrot.slane %v4489, %v4497
        %v4533 = vunpack.c.l.b16 %v4456
        %v4534 = vunpack.c.h.b16 %v4456
        %v4535 = vunpack.c.l.b16 %v4457
        %v4536 = vunpack.c.h.b16 %v4457
        %v4537 = vunpack.c.l.b16 %v4458
        %v4538 = vunpack.c.h.b16 %v4458
        %v4539 = vunpack.c.l.b16 %v4459
        %v4540 = vunpack.c.h.b16 %v4459
        %v4541 = vunpack.c.l.b16 %v4460
        %v4542 = vunpack.c.h.b16 %v4460
        %v4543 = vunpack.c.l.b16 %v4461
        %v4544 = vunpack.c.h.b16 %v4461
        %v4545 = vunpack.c.l.b16 %v4462
        %v4546 = vunpack.c.h.b16 %v4462
        %v4547 = vunpack.c.l.b16 %v4463
        %v4548 = vunpack.c.h.b16 %v4463
        %v4549 = vunpack.c.l.b16 %v4464
        %v4550 = vunpack.c.h.b16 %v4464
        %v4551 = vunpack.c.l.b16 %v4465
        %v4552 = vunpack.c.h.b16 %v4465
        %v4553 = vunpack.c.l.b16 %v4466
        %v4554 = vunpack.c.h.b16 %v4466
        %v4555 = vunpack.c.l.b16 %v4467
        %v4556 = vunpack.c.h.b16 %v4467
        %v4557 = vunpack.c.l.b16 %v4468
        %v4558 = vunpack.c.h.b16 %v4468
        %v4559 = vunpack.c.l.b16 %v4469
        %v4560 = vunpack.c.h.b16 %v4469
        %v4561 = vunpack.c.l.b16 %v4470
        %v4562 = vunpack.c.h.b16 %v4470
        %v4563 = vunpack.c.l.b16 %v4471
        %v4564 = vunpack.c.h.b16 %v4471
        %v4565 = vunpack.c.l.b16 %v4472
        %v4566 = vunpack.c.h.b16 %v4472
        %v4567 = vunpack.c.l.b16 %v4473
        %v4568 = vunpack.c.h.b16 %v4473
        %v4569 = vunpack.c.l.b16 %v4474
        %v4570 = vunpack.c.h.b16 %v4474
        %v4571 = vunpack.c.l.b16 %v4475
        %v4572 = vunpack.c.h.b16 %v4475
        %v4573 = vunpack.c.l.b16 %v4476
        %v4574 = vunpack.c.h.b16 %v4476
        %v4575 = vunpack.c.l.b16 %v4477
        %v4576 = vunpack.c.h.b16 %v4477
        %v4577 = vunpack.c.l.b16 %v4478
        %v4578 = vunpack.c.h.b16 %v4478
        %v4579 = vunpack.c.l.b16 %v4479
        %v4580 = vunpack.c.h.b16 %v4479
        %v4581 = vunpack.c.l.b16 %v4480
        %v4582 = vunpack.c.h.b16 %v4480
        %v4583 = vunpack.c.l.b16 %v4481
        %v4584 = vunpack.c.h.b16 %v4481
        %v4585 = vunpack.c.l.b16 %v4482
        %v4586 = vunpack.c.h.b16 %v4482
        %v4587 = vunpack.c.l.b16 %v4483
        %v4588 = vunpack.c.h.b16 %v4483
        %v4589 = vunpack.c.l.b16 %v4484
        %v4590 = vunpack.c.h.b16 %v4484
        %v4591 = vunpack.c.l.b16 %v4485
        %v4592 = vunpack.c.h.b16 %v4485
        %v4593 = vunpack.c.l.b16 %v4486
        %v4594 = vunpack.c.h.b16 %v4486
        %v4595 = vunpack.c.l.b16 %v4487
        %v4596 = vunpack.c.h.b16 %v4487
        %v4597 = vpack.c.b16 %v4535, %v4533
        %v4598 = vpack.c.b16 %v4536, %v4534
        %v4599 = vpack.c.b16 %v4539, %v4537
        %v4600 = vpack.c.b16 %v4540, %v4538
        %v4601 = vpack.c.b16 %v4543, %v4541
        %v4602 = vpack.c.b16 %v4544, %v4542
        %v4603 = vpack.c.b16 %v4547, %v4545
        %v4604 = vpack.c.b16 %v4548, %v4546
        %v4605 = vpack.c.b16 %v4551, %v4549
        %v4606 = vpack.c.b16 %v4552, %v4550
        %v4607 = vpack.c.b16 %v4555, %v4553
        %v4608 = vpack.c.b16 %v4556, %v4554
        %v4609 = vpack.c.b16 %v4559, %v4557
        %v4610 = vpack.c.b16 %v4560, %v4558
        %v4611 = vpack.c.b16 %v4563, %v4561
        %v4612 = vpack.c.b16 %v4564, %v4562
        %v4613 = vpack.c.b16 %v4567, %v4565
        %v4614 = vpack.c.b16 %v4568, %v4566
        %v4615 = vpack.c.b16 %v4571, %v4569
        %v4616 = vpack.c.b16 %v4572, %v4570
        %v4617 = vpack.c.b16 %v4575, %v4573
        %v4618 = vpack.c.b16 %v4576, %v4574
        %v4619 = vpack.c.b16 %v4579, %v4577
        %v4620 = vpack.c.b16 %v4580, %v4578
        %v4621 = vpack.c.b16 %v4583, %v4581
        %v4622 = vpack.c.b16 %v4584, %v4582
        %v4623 = vpack.c.b16 %v4587, %v4585
        %v4624 = vpack.c.b16 %v4588, %v4586
        %v4625 = vpack.c.b16 %v4591, %v4589
        %v4626 = vpack.c.b16 %v4592, %v4590
        %v4627 = vpack.c.b16 %v4595, %v4593
        %v4628 = vpack.c.b16 %v4596, %v4594
        %4661 = vmatprep.subr.bf16.mxu0 %v4612
        %4662 = vmatpush1.bf16.msra.mxu0 %v4611
        %4663 = vmatprep.subr.bf16.mxu0 %v4610
        %4664 = vmatpush1.bf16.msra.mxu0 %v4609
        %4665 = vmatprep.subr.bf16.mxu0 %v4608
        %4666 = vmatpush1.bf16.msra.mxu0 %v4607
        %4667 = vmatprep.subr.bf16.mxu0 %v4606
        %4668 = vmatpush1.bf16.msra.mxu0 %v4605
        %4669 = vmatprep.subr.bf16.mxu0 %v4604
        %4670 = vmatpush1.bf16.msra.mxu0 %v4603
        %4671 = vmatprep.subr.bf16.mxu0 %v4602
        %4672 = vmatpush1.bf16.msra.mxu0 %v4601
        %4673 = vmatprep.subr.bf16.mxu0 %v4600
        %4674 = vmatpush1.bf16.msra.mxu0 %v4599
        %4675 = vmatprep.subr.bf16.mxu0 %v4598
        %4676 = vmatpush1.bf16.msra.mxu0 %v4597
        %4677 = vmatprep.subr.bf16.mxu0 %v4628
        %4678 = vmatpush2.bf16.msra.mxu0 %v4627
        %4679 = vmatprep.subr.bf16.mxu0 %v4626
        %4680 = vmatpush2.bf16.msra.mxu0 %v4625
        %4681 = vmatprep.subr.bf16.mxu0 %v4624
        %4682 = vmatpush2.bf16.msra.mxu0 %v4623
        %4683 = vmatprep.subr.bf16.mxu0 %v4622
        %4684 = vmatpush2.bf16.msra.mxu0 %v4621
        %4685 = vmatprep.subr.bf16.mxu0 %v4620
        %4686 = vmatpush2.bf16.msra.mxu0 %v4619
        %4687 = vmatprep.subr.bf16.mxu0 %v4618
        %4688 = vmatpush2.bf16.msra.mxu0 %v4617
        %4689 = vmatprep.subr.bf16.mxu0 %v4616
        %4690 = vmatpush2.bf16.msra.mxu0 %v4615
        %4691 = vmatprep.subr.bf16.mxu0 %v4614
        %4692 = vmatpush2.bf16.msra.mxu0 %v4613
        %4693 = vmatprep.mubr.bf16.mxu0 %v4424
        %4694 = vmatmul.mubr.bf16.gmra.mxu0 %v4423
        %v4695 = vpop.f32.mrf.mxu0
        %v4696 = vadd.f32 %v4494, %v4695
        %v4697 = vpop.f32.mrf.mxu0
        %v4698 = vadd.f32 %v4498, %v4697
        %v4699 = vpop.f32.mrf.mxu0
        %v4700 = vadd.f32 %v4494, %v4699
        %v4701 = vpop.f32.mrf.mxu0
        %v4702 = vadd.f32 %v4498, %v4701
        %4703 = vmatprep.mubr.bf16.mxu0 %v4426
        %4704 = vmatmul.mubr.bf16.gmra.mxu0 %v4425
        %v4705 = vpop.f32.mrf.mxu0
        %v4706 = vadd.f32 %v4494, %v4705
        %v4707 = vpop.f32.mrf.mxu0
        %v4708 = vadd.f32 %v4498, %v4707
        %v4709 = vpop.f32.mrf.mxu0
        %v4710 = vadd.f32 %v4494, %v4709
        %v4711 = vpop.f32.mrf.mxu0
        %v4712 = vadd.f32 %v4498, %v4711
        %4713 = vmatprep.mubr.bf16.mxu0 %v4428
        %4714 = vmatmul.mubr.bf16.gmra.mxu0 %v4427
        %v4715 = vpop.f32.mrf.mxu0
        %v4716 = vadd.f32 %v4494, %v4715
        %v4717 = vpop.f32.mrf.mxu0
        %v4718 = vadd.f32 %v4498, %v4717
        %v4719 = vpop.f32.mrf.mxu0
        %v4720 = vadd.f32 %v4494, %v4719
        %v4721 = vpop.f32.mrf.mxu0
        %v4722 = vadd.f32 %v4498, %v4721
        %4723 = vmatprep.mubr.bf16.mxu0 %v4430
        %4724 = vmatmul.mubr.bf16.gmra.mxu0 %v4429
        %v4725 = vpop.f32.mrf.mxu0
        %v4726 = vadd.f32 %v4494, %v4725
        %v4727 = vpop.f32.mrf.mxu0
        %v4728 = vadd.f32 %v4498, %v4727
        %v4729 = vpop.f32.mrf.mxu0
        %v4730 = vadd.f32 %v4494, %v4729
        %v4731 = vpop.f32.mrf.mxu0
        %v4732 = vadd.f32 %v4498, %v4731
        %4733 = vmatprep.mubr.bf16.mxu0 %v4432
        %4734 = vmatmul.mubr.bf16.gmra.mxu0 %v4431
        %v4735 = vpop.f32.mrf.mxu0
        %v4736 = vadd.f32 %v4494, %v4735
        %v4737 = vpop.f32.mrf.mxu0
        %v4738 = vadd.f32 %v4498, %v4737
        %v4739 = vpop.f32.mrf.mxu0
        %v4740 = vadd.f32 %v4494, %v4739
        %v4741 = vpop.f32.mrf.mxu0
        %v4742 = vadd.f32 %v4498, %v4741
        %4743 = vmatprep.mubr.bf16.mxu0 %v4434
        %4744 = vmatmul.mubr.bf16.gmra.mxu0 %v4433
        %v4745 = vpop.f32.mrf.mxu0
        %v4746 = vadd.f32 %v4494, %v4745
        %v4747 = vpop.f32.mrf.mxu0
        %v4748 = vadd.f32 %v4498, %v4747
        %v4749 = vpop.f32.mrf.mxu0
        %v4750 = vadd.f32 %v4494, %v4749
        %v4751 = vpop.f32.mrf.mxu0
        %v4752 = vadd.f32 %v4498, %v4751
        %4753 = vmatprep.mubr.bf16.mxu0 %v4436
        %4754 = vmatmul.mubr.bf16.gmra.mxu0 %v4435
        %v4755 = vpop.f32.mrf.mxu0
        %v4756 = vadd.f32 %v4494, %v4755
        %v4757 = vpop.f32.mrf.mxu0
        %v4758 = vadd.f32 %v4498, %v4757
        %v4759 = vpop.f32.mrf.mxu0
        %v4760 = vadd.f32 %v4494, %v4759
        %v4761 = vpop.f32.mrf.mxu0
        %v4762 = vadd.f32 %v4498, %v4761
        %4763 = vmatprep.mubr.bf16.mxu0 %v4438
        %4764 = vmatmul.mubr.bf16.gmra.mxu0 %v4437
        %v4765 = vpop.f32.mrf.mxu0
        %v4766 = vadd.f32 %v4494, %v4765
        %v4767 = vpop.f32.mrf.mxu0
        %v4768 = vadd.f32 %v4498, %v4767
        %v4769 = vpop.f32.mrf.mxu0
        %v4770 = vadd.f32 %v4494, %v4769
        %v4771 = vpop.f32.mrf.mxu0
        %v4772 = vadd.f32 %v4498, %v4771
        %4773 = vmatprep.mubr.bf16.mxu0 %v4440
        %4774 = vmatmul.mubr.bf16.gmra.mxu0 %v4439
        %v4775 = vpop.f32.mrf.mxu0
        %v4776 = vadd.f32 %v4494, %v4775
        %v4777 = vpop.f32.mrf.mxu0
        %v4778 = vadd.f32 %v4498, %v4777
        %v4779 = vpop.f32.mrf.mxu0
        %v4780 = vadd.f32 %v4494, %v4779
        %v4781 = vpop.f32.mrf.mxu0
        %v4782 = vadd.f32 %v4498, %v4781
        %4783 = vmatprep.mubr.bf16.mxu0 %v4442
        %4784 = vmatmul.mubr.bf16.gmra.mxu0 %v4441
        %v4785 = vpop.f32.mrf.mxu0
        %v4786 = vadd.f32 %v4494, %v4785
        %v4787 = vpop.f32.mrf.mxu0
        %v4788 = vadd.f32 %v4498, %v4787
        %v4789 = vpop.f32.mrf.mxu0
        %v4790 = vadd.f32 %v4494, %v4789
        %v4791 = vpop.f32.mrf.mxu0
        %v4792 = vadd.f32 %v4498, %v4791
        %4793 = vmatprep.mubr.bf16.mxu0 %v4444
        %4794 = vmatmul.mubr.bf16.gmra.mxu0 %v4443
        %v4795 = vpop.f32.mrf.mxu0
        %v4796 = vadd.f32 %v4494, %v4795
        %v4797 = vpop.f32.mrf.mxu0
        %v4798 = vadd.f32 %v4498, %v4797
        %v4799 = vpop.f32.mrf.mxu0
        %v4800 = vadd.f32 %v4494, %v4799
        %v4801 = vpop.f32.mrf.mxu0
        %v4802 = vadd.f32 %v4498, %v4801
        %4803 = vmatprep.mubr.bf16.mxu0 %v4446
        %4804 = vmatmul.mubr.bf16.gmra.mxu0 %v4445
        %v4805 = vpop.f32.mrf.mxu0
        %v4806 = vadd.f32 %v4494, %v4805
        %v4807 = vpop.f32.mrf.mxu0
        %v4808 = vadd.f32 %v4498, %v4807
        %v4809 = vpop.f32.mrf.mxu0
        %v4810 = vadd.f32 %v4494, %v4809
        %v4811 = vpop.f32.mrf.mxu0
        %v4812 = vadd.f32 %v4498, %v4811
        %4813 = vmatprep.mubr.bf16.mxu0 %v4448
        %4814 = vmatmul.mubr.bf16.gmra.mxu0 %v4447
        %v4815 = vpop.f32.mrf.mxu0
        %v4816 = vadd.f32 %v4494, %v4815
        %v4817 = vpop.f32.mrf.mxu0
        %v4818 = vadd.f32 %v4498, %v4817
        %v4819 = vpop.f32.mrf.mxu0
        %v4820 = vadd.f32 %v4494, %v4819
        %v4821 = vpop.f32.mrf.mxu0
        %v4822 = vadd.f32 %v4498, %v4821
        %4823 = vmatprep.mubr.bf16.mxu0 %v4450
        %4824 = vmatmul.mubr.bf16.gmra.mxu0 %v4449
        %v4825 = vpop.f32.mrf.mxu0
        %v4826 = vadd.f32 %v4494, %v4825
        %v4827 = vpop.f32.mrf.mxu0
        %v4828 = vadd.f32 %v4498, %v4827
        %v4829 = vpop.f32.mrf.mxu0
        %v4830 = vadd.f32 %v4494, %v4829
        %v4831 = vpop.f32.mrf.mxu0
        %v4832 = vadd.f32 %v4498, %v4831
        %4833 = vmatprep.mubr.bf16.mxu0 %v4452
        %4834 = vmatmul.mubr.bf16.gmra.mxu0 %v4451
        %v4835 = vpop.f32.mrf.mxu0
        %v4836 = vadd.f32 %v4494, %v4835
        %v4837 = vpop.f32.mrf.mxu0
        %v4838 = vadd.f32 %v4498, %v4837
        %v4839 = vpop.f32.mrf.mxu0
        %v4840 = vadd.f32 %v4494, %v4839
        %v4841 = vpop.f32.mrf.mxu0
        %v4842 = vadd.f32 %v4498, %v4841
        %4843 = vmatprep.mubr.bf16.mxu0 %v4454
        %4844 = vmatmul.mubr.bf16.gmra.mxu0 %v4453
        %v4845 = vpop.f32.mrf.mxu0
        %v4846 = vadd.f32 %v4494, %v4845
        %v4847 = vpop.f32.mrf.mxu0
        %v4848 = vadd.f32 %v4498, %v4847
        %v4849 = vpop.f32.mrf.mxu0
        %v4850 = vadd.f32 %v4494, %v4849
        %v4851 = vpop.f32.mrf.mxu0
        %v4852 = vadd.f32 %v4498, %v4851
        %4853 = vdwg.mxu0
        %v4854 = vmax.f32 %v4696, 0.0
        %v4855 = vmax.f32 %v4698, 0.0
        %v4856 = vmax.f32 %v4700, 0.0
        %v4857 = vmax.f32 %v4702, 0.0
        %v4858 = vmax.f32 %v4706, 0.0
        %v4859 = vmax.f32 %v4708, 0.0
        %v4860 = vmax.f32 %v4710, 0.0
        %v4861 = vmax.f32 %v4712, 0.0
        %v4862 = vmax.f32 %v4716, 0.0
        %v4863 = vmax.f32 %v4718, 0.0
        %v4864 = vmax.f32 %v4720, 0.0
        %v4865 = vmax.f32 %v4722, 0.0
        %v4866 = vmax.f32 %v4726, 0.0
        %v4867 = vmax.f32 %v4728, 0.0
        %v4868 = vmax.f32 %v4730, 0.0
        %v4869 = vmax.f32 %v4732, 0.0
        %v4870 = vmax.f32 %v4736, 0.0
        %v4871 = vmax.f32 %v4738, 0.0
        %v4872 = vmax.f32 %v4740, 0.0
        %v4873 = vmax.f32 %v4742, 0.0
        %v4874 = vmax.f32 %v4746, 0.0
        %v4875 = vmax.f32 %v4748, 0.0
        %v4876 = vmax.f32 %v4750, 0.0
        %v4877 = vmax.f32 %v4752, 0.0
        %v4878 = vmax.f32 %v4756, 0.0
        %v4879 = vmax.f32 %v4758, 0.0
        %v4880 = vmax.f32 %v4760, 0.0
        %v4881 = vmax.f32 %v4762, 0.0
        %v4882 = vmax.f32 %v4766, 0.0
        %v4883 = vmax.f32 %v4768, 0.0
        %v4884 = vmax.f32 %v4770, 0.0
        %v4885 = vmax.f32 %v4772, 0.0
        %v4886 = vmax.f32 %v4776, 0.0
        %v4887 = vmax.f32 %v4778, 0.0
        %v4888 = vmax.f32 %v4780, 0.0
        %v4889 = vmax.f32 %v4782, 0.0
        %v4890 = vmax.f32 %v4786, 0.0
        %v4891 = vmax.f32 %v4788, 0.0
        %v4892 = vmax.f32 %v4790, 0.0
        %v4893 = vmax.f32 %v4792, 0.0
        %v4894 = vmax.f32 %v4796, 0.0
        %v4895 = vmax.f32 %v4798, 0.0
        %v4896 = vmax.f32 %v4800, 0.0
        %v4897 = vmax.f32 %v4802, 0.0
        %v4898 = vmax.f32 %v4806, 0.0
        %v4899 = vmax.f32 %v4808, 0.0
        %v4900 = vmax.f32 %v4810, 0.0
        %v4901 = vmax.f32 %v4812, 0.0
        %v4902 = vmax.f32 %v4816, 0.0
        %v4903 = vmax.f32 %v4818, 0.0
        %v4904 = vmax.f32 %v4820, 0.0
        %v4905 = vmax.f32 %v4822, 0.0
        %v4906 = vmax.f32 %v4826, 0.0
        %v4907 = vmax.f32 %v4828, 0.0
        %v4908 = vmax.f32 %v4830, 0.0
        %v4909 = vmax.f32 %v4832, 0.0
        %v4910 = vmax.f32 %v4836, 0.0
        %v4911 = vmax.f32 %v4838, 0.0
        %v4912 = vmax.f32 %v4840, 0.0
        %v4913 = vmax.f32 %v4842, 0.0
        %v4914 = vmax.f32 %v4846, 0.0
        %v4915 = vmax.f32 %v4848, 0.0
        %v4916 = vmax.f32 %v4850, 0.0
        %v4917 = vmax.f32 %v4852, 0.0
        %v4918 = vand.u32 2147483647, %v4696
        %v4919 = vand.u32 2147483647, %v4698
        %v4920 = vand.u32 2147483647, %v4700
        %v4921 = vand.u32 2147483647, %v4702
        %v4922 = vand.u32 2147483647, %v4706
        %v4923 = vand.u32 2147483647, %v4708
        %v4924 = vand.u32 2147483647, %v4710
        %v4925 = vand.u32 2147483647, %v4712
        %v4926 = vand.u32 2147483647, %v4716
        %v4927 = vand.u32 2147483647, %v4718
        %v4928 = vand.u32 2147483647, %v4720
        %v4929 = vand.u32 2147483647, %v4722
        %v4930 = vand.u32 2147483647, %v4726
        %v4931 = vand.u32 2147483647, %v4728
        %v4932 = vand.u32 2147483647, %v4730
        %v4933 = vand.u32 2147483647, %v4732
        %v4934 = vand.u32 2147483647, %v4736
        %v4935 = vand.u32 2147483647, %v4738
        %v4936 = vand.u32 2147483647, %v4740
        %v4937 = vand.u32 2147483647, %v4742
        %v4938 = vand.u32 2147483647, %v4746
        %v4939 = vand.u32 2147483647, %v4748
        %v4940 = vand.u32 2147483647, %v4750
        %v4941 = vand.u32 2147483647, %v4752
        %v4942 = vand.u32 2147483647, %v4756
        %v4943 = vand.u32 2147483647, %v4758
        %v4944 = vand.u32 2147483647, %v4760
        %v4945 = vand.u32 2147483647, %v4762
        %v4946 = vand.u32 2147483647, %v4766
        %v4947 = vand.u32 2147483647, %v4768
        %v4948 = vand.u32 2147483647, %v4770
        %v4949 = vand.u32 2147483647, %v4772
        %v4950 = vand.u32 2147483647, %v4776
        %v4951 = vand.u32 2147483647, %v4778
        %v4952 = vand.u32 2147483647, %v4780
        %v4953 = vand.u32 2147483647, %v4782
        %v4954 = vand.u32 2147483647, %v4786
        %v4955 = vand.u32 2147483647, %v4788
        %v4956 = vand.u32 2147483647, %v4790
        %v4957 = vand.u32 2147483647, %v4792
        %v4958 = vand.u32 2147483647, %v4796
        %v4959 = vand.u32 2147483647, %v4798
        %v4960 = vand.u32 2147483647, %v4800
        %v4961 = vand.u32 2147483647, %v4802
        %v4962 = vand.u32 2147483647, %v4806
        %v4963 = vand.u32 2147483647, %v4808
        %v4964 = vand.u32 2147483647, %v4810
        %v4965 = vand.u32 2147483647, %v4812
        %v4966 = vand.u32 2147483647, %v4816
        %v4967 = vand.u32 2147483647, %v4818
        %v4968 = vand.u32 2147483647, %v4820
        %v4969 = vand.u32 2147483647, %v4822
        %v4970 = vand.u32 2147483647, %v4826
        %v4971 = vand.u32 2147483647, %v4828
        %v4972 = vand.u32 2147483647, %v4830
        %v4973 = vand.u32 2147483647, %v4832
        %v4974 = vand.u32 2147483647, %v4836
        %v4975 = vand.u32 2147483647, %v4838
        %v4976 = vand.u32 2147483647, %v4840
        %v4977 = vand.u32 2147483647, %v4842
        %v4978 = vand.u32 2147483647, %v4846
        %v4979 = vand.u32 2147483647, %v4848
        %v4980 = vand.u32 2147483647, %v4850
        %v4981 = vand.u32 2147483647, %v4852
        %v4982 = vsub.f32 0.0, %v4918
        %v4983 = vsub.f32 0.0, %v4919
        %v4984 = vsub.f32 0.0, %v4920
        %v4985 = vsub.f32 0.0, %v4921
        %v4986 = vsub.f32 0.0, %v4922
        %v4987 = vsub.f32 0.0, %v4923
        %v4988 = vsub.f32 0.0, %v4924
        %v4989 = vsub.f32 0.0, %v4925
        %v4990 = vsub.f32 0.0, %v4926
        %v4991 = vsub.f32 0.0, %v4927
        %v4992 = vsub.f32 0.0, %v4928
        %v4993 = vsub.f32 0.0, %v4929
        %v4994 = vsub.f32 0.0, %v4930
        %v4995 = vsub.f32 0.0, %v4931
        %v4996 = vsub.f32 0.0, %v4932
        %v4997 = vsub.f32 0.0, %v4933
        %v4998 = vsub.f32 0.0, %v4934
        %v4999 = vsub.f32 0.0, %v4935
        %v5000 = vsub.f32 0.0, %v4936
        %v5001 = vsub.f32 0.0, %v4937
        %v5002 = vsub.f32 0.0, %v4938
        %v5003 = vsub.f32 0.0, %v4939
        %v5004 = vsub.f32 0.0, %v4940
        %v5005 = vsub.f32 0.0, %v4941
        %v5006 = vsub.f32 0.0, %v4942
        %v5007 = vsub.f32 0.0, %v4943
        %v5008 = vsub.f32 0.0, %v4944
        %v5009 = vsub.f32 0.0, %v4945
        %v5010 = vsub.f32 0.0, %v4946
        %v5011 = vsub.f32 0.0, %v4947
        %v5012 = vsub.f32 0.0, %v4948
        %v5013 = vsub.f32 0.0, %v4949
        %v5014 = vsub.f32 0.0, %v4950
        %v5015 = vsub.f32 0.0, %v4951
        %v5016 = vsub.f32 0.0, %v4952
        %v5017 = vsub.f32 0.0, %v4953
        %v5018 = vsub.f32 0.0, %v4954
        %v5019 = vsub.f32 0.0, %v4955
        %v5020 = vsub.f32 0.0, %v4956
        %v5021 = vsub.f32 0.0, %v4957
        %v5022 = vsub.f32 0.0, %v4958
        %v5023 = vsub.f32 0.0, %v4959
        %v5024 = vsub.f32 0.0, %v4960
        %v5025 = vsub.f32 0.0, %v4961
        %v5026 = vsub.f32 0.0, %v4962
        %v5027 = vsub.f32 0.0, %v4963
        %v5028 = vsub.f32 0.0, %v4964
        %v5029 = vsub.f32 0.0, %v4965
        %v5030 = vsub.f32 0.0, %v4966
        %v5031 = vsub.f32 0.0, %v4967
        %v5032 = vsub.f32 0.0, %v4968
        %v5033 = vsub.f32 0.0, %v4969
        %v5034 = vsub.f32 0.0, %v4970
        %v5035 = vsub.f32 0.0, %v4971
        %v5036 = vsub.f32 0.0, %v4972
        %v5037 = vsub.f32 0.0, %v4973
        %v5038 = vsub.f32 0.0, %v4974
        %v5039 = vsub.f32 0.0, %v4975
        %v5040 = vsub.f32 0.0, %v4976
        %v5041 = vsub.f32 0.0, %v4977
        %v5042 = vsub.f32 0.0, %v4978
        %v5043 = vsub.f32 0.0, %v4979
        %v5044 = vsub.f32 0.0, %v4980
        %v5045 = vsub.f32 0.0, %v4981
        %v5046 = vmul.f32 %v4982, 1.442695
        %v5047 = vpow.pop %v5046
        %v5048 = vmul.f32 %v4983, 1.442695
        %v5049 = vpow.pop %v5048
        %v5050 = vmul.f32 %v4984, 1.442695
        %v5051 = vpow.pop %v5050
        %v5052 = vmul.f32 %v4985, 1.442695
        %v5053 = vpow.pop %v5052
        %v5054 = vmul.f32 %v4986, 1.442695
        %v5055 = vpow.pop %v5054
        %v5056 = vmul.f32 %v4987, 1.442695
        %v5057 = vpow.pop %v5056
        %v5058 = vmul.f32 %v4988, 1.442695
        %v5059 = vpow.pop %v5058
        %v5060 = vmul.f32 %v4989, 1.442695
        %v5061 = vpow.pop %v5060
        %v5062 = vmul.f32 %v4990, 1.442695
        %v5063 = vpow.pop %v5062
        %v5064 = vmul.f32 %v4991, 1.442695
        %v5065 = vpow.pop %v5064
        %v5066 = vmul.f32 %v4992, 1.442695
        %v5067 = vpow.pop %v5066
        %v5068 = vmul.f32 %v4993, 1.442695
        %v5069 = vpow.pop %v5068
        %v5070 = vmul.f32 %v4994, 1.442695
        %v5071 = vpow.pop %v5070
        %v5072 = vmul.f32 %v4995, 1.442695
        %v5073 = vpow.pop %v5072
        %v5074 = vmul.f32 %v4996, 1.442695
        %v5075 = vpow.pop %v5074
        %v5076 = vmul.f32 %v4997, 1.442695
        %v5077 = vpow.pop %v5076
        %v5078 = vmul.f32 %v4998, 1.442695
        %v5079 = vpow.pop %v5078
        %v5080 = vmul.f32 %v4999, 1.442695
        %v5081 = vpow.pop %v5080
        %v5082 = vmul.f32 %v5000, 1.442695
        %v5083 = vpow.pop %v5082
        %v5084 = vmul.f32 %v5001, 1.442695
        %v5085 = vpow.pop %v5084
        %v5086 = vmul.f32 %v5002, 1.442695
        %v5087 = vpow.pop %v5086
        %v5088 = vmul.f32 %v5003, 1.442695
        %v5089 = vpow.pop %v5088
        %v5090 = vmul.f32 %v5004, 1.442695
        %v5091 = vpow.pop %v5090
        %v5092 = vmul.f32 %v5005, 1.442695
        %v5093 = vpow.pop %v5092
        %v5094 = vmul.f32 %v5006, 1.442695
        %v5095 = vpow.pop %v5094
        %v5096 = vmul.f32 %v5007, 1.442695
        %v5097 = vpow.pop %v5096
        %v5098 = vmul.f32 %v5008, 1.442695
        %v5099 = vpow.pop %v5098
        %v5100 = vmul.f32 %v5009, 1.442695
        %v5101 = vpow.pop %v5100
        %v5102 = vmul.f32 %v5010, 1.442695
        %v5103 = vpow.pop %v5102
        %v5104 = vmul.f32 %v5011, 1.442695
        %v5105 = vpow.pop %v5104
        %v5106 = vmul.f32 %v5012, 1.442695
        %v5107 = vpow.pop %v5106
        %v5108 = vmul.f32 %v5013, 1.442695
        %v5109 = vpow.pop %v5108
        %v5110 = vmul.f32 %v5014, 1.442695
        %v5111 = vpow.pop %v5110
        %v5112 = vmul.f32 %v5015, 1.442695
        %v5113 = vpow.pop %v5112
        %v5114 = vmul.f32 %v5016, 1.442695
        %v5115 = vpow.pop %v5114
        %v5116 = vmul.f32 %v5017, 1.442695
        %v5117 = vpow.pop %v5116
        %v5118 = vmul.f32 %v5018, 1.442695
        %v5119 = vpow.pop %v5118
        %v5120 = vmul.f32 %v5019, 1.442695
        %v5121 = vpow.pop %v5120
        %v5122 = vmul.f32 %v5020, 1.442695
        %v5123 = vpow.pop %v5122
        %v5124 = vmul.f32 %v5021, 1.442695
        %v5125 = vpow.pop %v5124
        %v5126 = vmul.f32 %v5022, 1.442695
        %v5127 = vpow.pop %v5126
        %v5128 = vmul.f32 %v5023, 1.442695
        %v5129 = vpow.pop %v5128
        %v5130 = vmul.f32 %v5024, 1.442695
        %v5131 = vpow.pop %v5130
        %v5132 = vmul.f32 %v5025, 1.442695
        %v5133 = vpow.pop %v5132
        %v5134 = vmul.f32 %v5026, 1.442695
        %v5135 = vpow.pop %v5134
        %v5136 = vmul.f32 %v5027, 1.442695
        %v5137 = vpow.pop %v5136
        %v5138 = vmul.f32 %v5028, 1.442695
        %v5139 = vpow.pop %v5138
        %v5140 = vmul.f32 %v5029, 1.442695
        %v5141 = vpow.pop %v5140
        %v5142 = vmul.f32 %v5030, 1.442695
        %v5143 = vpow.pop %v5142
        %v5144 = vmul.f32 %v5031, 1.442695
        %v5145 = vpow.pop %v5144
        %v5146 = vmul.f32 %v5032, 1.442695
        %v5147 = vpow.pop %v5146
        %v5148 = vmul.f32 %v5033, 1.442695
        %v5149 = vpow.pop %v5148
        %v5150 = vmul.f32 %v5034, 1.442695
        %v5151 = vpow.pop %v5150
        %v5152 = vmul.f32 %v5035, 1.442695
        %v5153 = vpow.pop %v5152
        %v5154 = vmul.f32 %v5036, 1.442695
        %v5155 = vpow.pop %v5154
        %v5156 = vmul.f32 %v5037, 1.442695
        %v5157 = vpow.pop %v5156
        %v5158 = vmul.f32 %v5038, 1.442695
        %v5159 = vpow.pop %v5158
        %v5160 = vmul.f32 %v5039, 1.442695
        %v5161 = vpow.pop %v5160
        %v5162 = vmul.f32 %v5040, 1.442695
        %v5163 = vpow.pop %v5162
        %v5164 = vmul.f32 %v5041, 1.442695
        %v5165 = vpow.pop %v5164
        %v5166 = vmul.f32 %v5042, 1.442695
        %v5167 = vpow.pop %v5166
        %v5168 = vmul.f32 %v5043, 1.442695
        %v5169 = vpow.pop %v5168
        %v5170 = vmul.f32 %v5044, 1.442695
        %v5171 = vpow.pop %v5170
        %v5172 = vmul.f32 %v5045, 1.442695
        %v5173 = vpow.pop %v5172
        %v5174 = vadd.f32 %v5047, 1.0
        %v5175 = vlog2.pop %v5174
        %v5176 = vmul.f32 %v5175, 0.6931472
        %v5177 = vmul.f32 -0.5, %v5047
        %v5178 = vadd.f32 %v5177, 1.0
        %v5179 = vmul.f32 %v5178, %v5047
        %v5180 = vand.u32 2147483647, %v5047
        %vm5181 = vcmp.lt.f32.partialorder %v5180, 0.0004427343
        %v5182 = vsel %vm5181, %v5179, %v5176
        %v5183 = vadd.f32 %v5049, 1.0
        %v5184 = vlog2.pop %v5183
        %v5185 = vmul.f32 %v5184, 0.6931472
        %v5186 = vmul.f32 -0.5, %v5049
        %v5187 = vadd.f32 %v5186, 1.0
        %v5188 = vmul.f32 %v5187, %v5049
        %v5189 = vand.u32 2147483647, %v5049
        %vm5190 = vcmp.lt.f32.partialorder %v5189, 0.0004427343
        %v5191 = vsel %vm5190, %v5188, %v5185
        %v5192 = vadd.f32 %v5051, 1.0
        %v5193 = vlog2.pop %v5192
        %v5194 = vmul.f32 %v5193, 0.6931472
        %v5195 = vmul.f32 -0.5, %v5051
        %v5196 = vadd.f32 %v5195, 1.0
        %v5197 = vmul.f32 %v5196, %v5051
        %v5198 = vand.u32 2147483647, %v5051
        %vm5199 = vcmp.lt.f32.partialorder %v5198, 0.0004427343
        %v5200 = vsel %vm5199, %v5197, %v5194
        %v5201 = vadd.f32 %v5053, 1.0
        %v5202 = vlog2.pop %v5201
        %v5203 = vmul.f32 %v5202, 0.6931472
        %v5204 = vmul.f32 -0.5, %v5053
        %v5205 = vadd.f32 %v5204, 1.0
        %v5206 = vmul.f32 %v5205, %v5053
        %v5207 = vand.u32 2147483647, %v5053
        %vm5208 = vcmp.lt.f32.partialorder %v5207, 0.0004427343
        %v5209 = vsel %vm5208, %v5206, %v5203
        %v5210 = vadd.f32 %v5055, 1.0
        %v5211 = vlog2.pop %v5210
        %v5212 = vmul.f32 %v5211, 0.6931472
        %v5213 = vmul.f32 -0.5, %v5055
        %v5214 = vadd.f32 %v5213, 1.0
        %v5215 = vmul.f32 %v5214, %v5055
        %v5216 = vand.u32 2147483647, %v5055
        %vm5217 = vcmp.lt.f32.partialorder %v5216, 0.0004427343
        %v5218 = vsel %vm5217, %v5215, %v5212
        %v5219 = vadd.f32 %v5057, 1.0
        %v5220 = vlog2.pop %v5219
        %v5221 = vmul.f32 %v5220, 0.6931472
        %v5222 = vmul.f32 -0.5, %v5057
        %v5223 = vadd.f32 %v5222, 1.0
        %v5224 = vmul.f32 %v5223, %v5057
        %v5225 = vand.u32 2147483647, %v5057
        %vm5226 = vcmp.lt.f32.partialorder %v5225, 0.0004427343
        %v5227 = vsel %vm5226, %v5224, %v5221
        %v5228 = vadd.f32 %v5059, 1.0
        %v5229 = vlog2.pop %v5228
        %v5230 = vmul.f32 %v5229, 0.6931472
        %v5231 = vmul.f32 -0.5, %v5059
        %v5232 = vadd.f32 %v5231, 1.0
        %v5233 = vmul.f32 %v5232, %v5059
        %v5234 = vand.u32 2147483647, %v5059
        %vm5235 = vcmp.lt.f32.partialorder %v5234, 0.0004427343
        %v5236 = vsel %vm5235, %v5233, %v5230
        %v5237 = vadd.f32 %v5061, 1.0
        %v5238 = vlog2.pop %v5237
        %v5239 = vmul.f32 %v5238, 0.6931472
        %v5240 = vmul.f32 -0.5, %v5061
        %v5241 = vadd.f32 %v5240, 1.0
        %v5242 = vmul.f32 %v5241, %v5061
        %v5243 = vand.u32 2147483647, %v5061
        %vm5244 = vcmp.lt.f32.partialorder %v5243, 0.0004427343
        %v5245 = vsel %vm5244, %v5242, %v5239
        %v5246 = vadd.f32 %v5063, 1.0
        %v5247 = vlog2.pop %v5246
        %v5248 = vmul.f32 %v5247, 0.6931472
        %v5249 = vmul.f32 -0.5, %v5063
        %v5250 = vadd.f32 %v5249, 1.0
        %v5251 = vmul.f32 %v5250, %v5063
        %v5252 = vand.u32 2147483647, %v5063
        %vm5253 = vcmp.lt.f32.partialorder %v5252, 0.0004427343
        %v5254 = vsel %vm5253, %v5251, %v5248
        %v5255 = vadd.f32 %v5065, 1.0
        %v5256 = vlog2.pop %v5255
        %v5257 = vmul.f32 %v5256, 0.6931472
        %v5258 = vmul.f32 -0.5, %v5065
        %v5259 = vadd.f32 %v5258, 1.0
        %v5260 = vmul.f32 %v5259, %v5065
        %v5261 = vand.u32 2147483647, %v5065
        %vm5262 = vcmp.lt.f32.partialorder %v5261, 0.0004427343
        %v5263 = vsel %vm5262, %v5260, %v5257
        %v5264 = vadd.f32 %v5067, 1.0
        %v5265 = vlog2.pop %v5264
        %v5266 = vmul.f32 %v5265, 0.6931472
        %v5267 = vmul.f32 -0.5, %v5067
        %v5268 = vadd.f32 %v5267, 1.0
        %v5269 = vmul.f32 %v5268, %v5067
        %v5270 = vand.u32 2147483647, %v5067
        %vm5271 = vcmp.lt.f32.partialorder %v5270, 0.0004427343
        %v5272 = vsel %vm5271, %v5269, %v5266
        %v5273 = vadd.f32 %v5069, 1.0
        %v5274 = vlog2.pop %v5273
        %v5275 = vmul.f32 %v5274, 0.6931472
        %v5276 = vmul.f32 -0.5, %v5069
        %v5277 = vadd.f32 %v5276, 1.0
        %v5278 = vmul.f32 %v5277, %v5069
        %v5279 = vand.u32 2147483647, %v5069
        %vm5280 = vcmp.lt.f32.partialorder %v5279, 0.0004427343
        %v5281 = vsel %vm5280, %v5278, %v5275
        %v5282 = vadd.f32 %v5071, 1.0
        %v5283 = vlog2.pop %v5282
        %v5284 = vmul.f32 %v5283, 0.6931472
        %v5285 = vmul.f32 -0.5, %v5071
        %v5286 = vadd.f32 %v5285, 1.0
        %v5287 = vmul.f32 %v5286, %v5071
        %v5288 = vand.u32 2147483647, %v5071
        %vm5289 = vcmp.lt.f32.partialorder %v5288, 0.0004427343
        %v5290 = vsel %vm5289, %v5287, %v5284
        %v5291 = vadd.f32 %v5073, 1.0
        %v5292 = vlog2.pop %v5291
        %v5293 = vmul.f32 %v5292, 0.6931472
        %v5294 = vmul.f32 -0.5, %v5073
        %v5295 = vadd.f32 %v5294, 1.0
        %v5296 = vmul.f32 %v5295, %v5073
        %v5297 = vand.u32 2147483647, %v5073
        %vm5298 = vcmp.lt.f32.partialorder %v5297, 0.0004427343
        %v5299 = vsel %vm5298, %v5296, %v5293
        %v5300 = vadd.f32 %v5075, 1.0
        %v5301 = vlog2.pop %v5300
        %v5302 = vmul.f32 %v5301, 0.6931472
        %v5303 = vmul.f32 -0.5, %v5075
        %v5304 = vadd.f32 %v5303, 1.0
        %v5305 = vmul.f32 %v5304, %v5075
        %v5306 = vand.u32 2147483647, %v5075
        %vm5307 = vcmp.lt.f32.partialorder %v5306, 0.0004427343
        %v5308 = vsel %vm5307, %v5305, %v5302
        %v5309 = vadd.f32 %v5077, 1.0
        %v5310 = vlog2.pop %v5309
        %v5311 = vmul.f32 %v5310, 0.6931472
        %v5312 = vmul.f32 -0.5, %v5077
        %v5313 = vadd.f32 %v5312, 1.0
        %v5314 = vmul.f32 %v5313, %v5077
        %v5315 = vand.u32 2147483647, %v5077
        %vm5316 = vcmp.lt.f32.partialorder %v5315, 0.0004427343
        %v5317 = vsel %vm5316, %v5314, %v5311
        %v5318 = vadd.f32 %v5079, 1.0
        %v5319 = vlog2.pop %v5318
        %v5320 = vmul.f32 %v5319, 0.6931472
        %v5321 = vmul.f32 -0.5, %v5079
        %v5322 = vadd.f32 %v5321, 1.0
        %v5323 = vmul.f32 %v5322, %v5079
        %v5324 = vand.u32 2147483647, %v5079
        %vm5325 = vcmp.lt.f32.partialorder %v5324, 0.0004427343
        %v5326 = vsel %vm5325, %v5323, %v5320
        %v5327 = vadd.f32 %v5081, 1.0
        %v5328 = vlog2.pop %v5327
        %v5329 = vmul.f32 %v5328, 0.6931472
        %v5330 = vmul.f32 -0.5, %v5081
        %v5331 = vadd.f32 %v5330, 1.0
        %v5332 = vmul.f32 %v5331, %v5081
        %v5333 = vand.u32 2147483647, %v5081
        %vm5334 = vcmp.lt.f32.partialorder %v5333, 0.0004427343
        %v5335 = vsel %vm5334, %v5332, %v5329
        %v5336 = vadd.f32 %v5083, 1.0
        %v5337 = vlog2.pop %v5336
        %v5338 = vmul.f32 %v5337, 0.6931472
        %v5339 = vmul.f32 -0.5, %v5083
        %v5340 = vadd.f32 %v5339, 1.0
        %v5341 = vmul.f32 %v5340, %v5083
        %v5342 = vand.u32 2147483647, %v5083
        %vm5343 = vcmp.lt.f32.partialorder %v5342, 0.0004427343
        %v5344 = vsel %vm5343, %v5341, %v5338
        %v5345 = vadd.f32 %v5085, 1.0
        %v5346 = vlog2.pop %v5345
        %v5347 = vmul.f32 %v5346, 0.6931472
        %v5348 = vmul.f32 -0.5, %v5085
        %v5349 = vadd.f32 %v5348, 1.0
        %v5350 = vmul.f32 %v5349, %v5085
        %v5351 = vand.u32 2147483647, %v5085
        %vm5352 = vcmp.lt.f32.partialorder %v5351, 0.0004427343
        %v5353 = vsel %vm5352, %v5350, %v5347
        %v5354 = vadd.f32 %v5087, 1.0
        %v5355 = vlog2.pop %v5354
        %v5356 = vmul.f32 %v5355, 0.6931472
        %v5357 = vmul.f32 -0.5, %v5087
        %v5358 = vadd.f32 %v5357, 1.0
        %v5359 = vmul.f32 %v5358, %v5087
        %v5360 = vand.u32 2147483647, %v5087
        %vm5361 = vcmp.lt.f32.partialorder %v5360, 0.0004427343
        %v5362 = vsel %vm5361, %v5359, %v5356
        %v5363 = vadd.f32 %v5089, 1.0
        %v5364 = vlog2.pop %v5363
        %v5365 = vmul.f32 %v5364, 0.6931472
        %v5366 = vmul.f32 -0.5, %v5089
        %v5367 = vadd.f32 %v5366, 1.0
        %v5368 = vmul.f32 %v5367, %v5089
        %v5369 = vand.u32 2147483647, %v5089
        %vm5370 = vcmp.lt.f32.partialorder %v5369, 0.0004427343
        %v5371 = vsel %vm5370, %v5368, %v5365
        %v5372 = vadd.f32 %v5091, 1.0
        %v5373 = vlog2.pop %v5372
        %v5374 = vmul.f32 %v5373, 0.6931472
        %v5375 = vmul.f32 -0.5, %v5091
        %v5376 = vadd.f32 %v5375, 1.0
        %v5377 = vmul.f32 %v5376, %v5091
        %v5378 = vand.u32 2147483647, %v5091
        %vm5379 = vcmp.lt.f32.partialorder %v5378, 0.0004427343
        %v5380 = vsel %vm5379, %v5377, %v5374
        %v5381 = vadd.f32 %v5093, 1.0
        %v5382 = vlog2.pop %v5381
        %v5383 = vmul.f32 %v5382, 0.6931472
        %v5384 = vmul.f32 -0.5, %v5093
        %v5385 = vadd.f32 %v5384, 1.0
        %v5386 = vmul.f32 %v5385, %v5093
        %v5387 = vand.u32 2147483647, %v5093
        %vm5388 = vcmp.lt.f32.partialorder %v5387, 0.0004427343
        %v5389 = vsel %vm5388, %v5386, %v5383
        %v5390 = vadd.f32 %v5095, 1.0
        %v5391 = vlog2.pop %v5390
        %v5392 = vmul.f32 %v5391, 0.6931472
        %v5393 = vmul.f32 -0.5, %v5095
        %v5394 = vadd.f32 %v5393, 1.0
        %v5395 = vmul.f32 %v5394, %v5095
        %v5396 = vand.u32 2147483647, %v5095
        %vm5397 = vcmp.lt.f32.partialorder %v5396, 0.0004427343
        %v5398 = vsel %vm5397, %v5395, %v5392
        %v5399 = vadd.f32 %v5097, 1.0
        %v5400 = vlog2.pop %v5399
        %v5401 = vmul.f32 %v5400, 0.6931472
        %v5402 = vmul.f32 -0.5, %v5097
        %v5403 = vadd.f32 %v5402, 1.0
        %v5404 = vmul.f32 %v5403, %v5097
        %v5405 = vand.u32 2147483647, %v5097
        %vm5406 = vcmp.lt.f32.partialorder %v5405, 0.0004427343
        %v5407 = vsel %vm5406, %v5404, %v5401
        %v5408 = vadd.f32 %v5099, 1.0
        %v5409 = vlog2.pop %v5408
        %v5410 = vmul.f32 %v5409, 0.6931472
        %v5411 = vmul.f32 -0.5, %v5099
        %v5412 = vadd.f32 %v5411, 1.0
        %v5413 = vmul.f32 %v5412, %v5099
        %v5414 = vand.u32 2147483647, %v5099
        %vm5415 = vcmp.lt.f32.partialorder %v5414, 0.0004427343
        %v5416 = vsel %vm5415, %v5413, %v5410
        %v5417 = vadd.f32 %v5101, 1.0
        %v5418 = vlog2.pop %v5417
        %v5419 = vmul.f32 %v5418, 0.6931472
        %v5420 = vmul.f32 -0.5, %v5101
        %v5421 = vadd.f32 %v5420, 1.0
        %v5422 = vmul.f32 %v5421, %v5101
        %v5423 = vand.u32 2147483647, %v5101
        %vm5424 = vcmp.lt.f32.partialorder %v5423, 0.0004427343
        %v5425 = vsel %vm5424, %v5422, %v5419
        %v5426 = vadd.f32 %v5103, 1.0
        %v5427 = vlog2.pop %v5426
        %v5428 = vmul.f32 %v5427, 0.6931472
        %v5429 = vmul.f32 -0.5, %v5103
        %v5430 = vadd.f32 %v5429, 1.0
        %v5431 = vmul.f32 %v5430, %v5103
        %v5432 = vand.u32 2147483647, %v5103
        %vm5433 = vcmp.lt.f32.partialorder %v5432, 0.0004427343
        %v5434 = vsel %vm5433, %v5431, %v5428
        %v5435 = vadd.f32 %v5105, 1.0
        %v5436 = vlog2.pop %v5435
        %v5437 = vmul.f32 %v5436, 0.6931472
        %v5438 = vmul.f32 -0.5, %v5105
        %v5439 = vadd.f32 %v5438, 1.0
        %v5440 = vmul.f32 %v5439, %v5105
        %v5441 = vand.u32 2147483647, %v5105
        %vm5442 = vcmp.lt.f32.partialorder %v5441, 0.0004427343
        %v5443 = vsel %vm5442, %v5440, %v5437
        %v5444 = vadd.f32 %v5107, 1.0
        %v5445 = vlog2.pop %v5444
        %v5446 = vmul.f32 %v5445, 0.6931472
        %v5447 = vmul.f32 -0.5, %v5107
        %v5448 = vadd.f32 %v5447, 1.0
        %v5449 = vmul.f32 %v5448, %v5107
        %v5450 = vand.u32 2147483647, %v5107
        %vm5451 = vcmp.lt.f32.partialorder %v5450, 0.0004427343
        %v5452 = vsel %vm5451, %v5449, %v5446
        %v5453 = vadd.f32 %v5109, 1.0
        %v5454 = vlog2.pop %v5453
        %v5455 = vmul.f32 %v5454, 0.6931472
        %v5456 = vmul.f32 -0.5, %v5109
        %v5457 = vadd.f32 %v5456, 1.0
        %v5458 = vmul.f32 %v5457, %v5109
        %v5459 = vand.u32 2147483647, %v5109
        %vm5460 = vcmp.lt.f32.partialorder %v5459, 0.0004427343
        %v5461 = vsel %vm5460, %v5458, %v5455
        %v5462 = vadd.f32 %v5111, 1.0
        %v5463 = vlog2.pop %v5462
        %v5464 = vmul.f32 %v5463, 0.6931472
        %v5465 = vmul.f32 -0.5, %v5111
        %v5466 = vadd.f32 %v5465, 1.0
        %v5467 = vmul.f32 %v5466, %v5111
        %v5468 = vand.u32 2147483647, %v5111
        %vm5469 = vcmp.lt.f32.partialorder %v5468, 0.0004427343
        %v5470 = vsel %vm5469, %v5467, %v5464
        %v5471 = vadd.f32 %v5113, 1.0
        %v5472 = vlog2.pop %v5471
        %v5473 = vmul.f32 %v5472, 0.6931472
        %v5474 = vmul.f32 -0.5, %v5113
        %v5475 = vadd.f32 %v5474, 1.0
        %v5476 = vmul.f32 %v5475, %v5113
        %v5477 = vand.u32 2147483647, %v5113
        %vm5478 = vcmp.lt.f32.partialorder %v5477, 0.0004427343
        %v5479 = vsel %vm5478, %v5476, %v5473
        %v5480 = vadd.f32 %v5115, 1.0
        %v5481 = vlog2.pop %v5480
        %v5482 = vmul.f32 %v5481, 0.6931472
        %v5483 = vmul.f32 -0.5, %v5115
        %v5484 = vadd.f32 %v5483, 1.0
        %v5485 = vmul.f32 %v5484, %v5115
        %v5486 = vand.u32 2147483647, %v5115
        %vm5487 = vcmp.lt.f32.partialorder %v5486, 0.0004427343
        %v5488 = vsel %vm5487, %v5485, %v5482
        %v5489 = vadd.f32 %v5117, 1.0
        %v5490 = vlog2.pop %v5489
        %v5491 = vmul.f32 %v5490, 0.6931472
        %v5492 = vmul.f32 -0.5, %v5117
        %v5493 = vadd.f32 %v5492, 1.0
        %v5494 = vmul.f32 %v5493, %v5117
        %v5495 = vand.u32 2147483647, %v5117
        %vm5496 = vcmp.lt.f32.partialorder %v5495, 0.0004427343
        %v5497 = vsel %vm5496, %v5494, %v5491
        %v5498 = vadd.f32 %v5119, 1.0
        %v5499 = vlog2.pop %v5498
        %v5500 = vmul.f32 %v5499, 0.6931472
        %v5501 = vmul.f32 -0.5, %v5119
        %v5502 = vadd.f32 %v5501, 1.0
        %v5503 = vmul.f32 %v5502, %v5119
        %v5504 = vand.u32 2147483647, %v5119
        %vm5505 = vcmp.lt.f32.partialorder %v5504, 0.0004427343
        %v5506 = vsel %vm5505, %v5503, %v5500
        %v5507 = vadd.f32 %v5121, 1.0
        %v5508 = vlog2.pop %v5507
        %v5509 = vmul.f32 %v5508, 0.6931472
        %v5510 = vmul.f32 -0.5, %v5121
        %v5511 = vadd.f32 %v5510, 1.0
        %v5512 = vmul.f32 %v5511, %v5121
        %v5513 = vand.u32 2147483647, %v5121
        %vm5514 = vcmp.lt.f32.partialorder %v5513, 0.0004427343
        %v5515 = vsel %vm5514, %v5512, %v5509
        %v5516 = vadd.f32 %v5123, 1.0
        %v5517 = vlog2.pop %v5516
        %v5518 = vmul.f32 %v5517, 0.6931472
        %v5519 = vmul.f32 -0.5, %v5123
        %v5520 = vadd.f32 %v5519, 1.0
        %v5521 = vmul.f32 %v5520, %v5123
        %v5522 = vand.u32 2147483647, %v5123
        %vm5523 = vcmp.lt.f32.partialorder %v5522, 0.0004427343
        %v5524 = vsel %vm5523, %v5521, %v5518
        %v5525 = vadd.f32 %v5125, 1.0
        %v5526 = vlog2.pop %v5525
        %v5527 = vmul.f32 %v5526, 0.6931472
        %v5528 = vmul.f32 -0.5, %v5125
        %v5529 = vadd.f32 %v5528, 1.0
        %v5530 = vmul.f32 %v5529, %v5125
        %v5531 = vand.u32 2147483647, %v5125
        %vm5532 = vcmp.lt.f32.partialorder %v5531, 0.0004427343
        %v5533 = vsel %vm5532, %v5530, %v5527
        %v5534 = vadd.f32 %v5127, 1.0
        %v5535 = vlog2.pop %v5534
        %v5536 = vmul.f32 %v5535, 0.6931472
        %v5537 = vmul.f32 -0.5, %v5127
        %v5538 = vadd.f32 %v5537, 1.0
        %v5539 = vmul.f32 %v5538, %v5127
        %v5540 = vand.u32 2147483647, %v5127
        %vm5541 = vcmp.lt.f32.partialorder %v5540, 0.0004427343
        %v5542 = vsel %vm5541, %v5539, %v5536
        %v5543 = vadd.f32 %v5129, 1.0
        %v5544 = vlog2.pop %v5543
        %v5545 = vmul.f32 %v5544, 0.6931472
        %v5546 = vmul.f32 -0.5, %v5129
        %v5547 = vadd.f32 %v5546, 1.0
        %v5548 = vmul.f32 %v5547, %v5129
        %v5549 = vand.u32 2147483647, %v5129
        %vm5550 = vcmp.lt.f32.partialorder %v5549, 0.0004427343
        %v5551 = vsel %vm5550, %v5548, %v5545
        %v5552 = vadd.f32 %v5131, 1.0
        %v5553 = vlog2.pop %v5552
        %v5554 = vmul.f32 %v5553, 0.6931472
        %v5555 = vmul.f32 -0.5, %v5131
        %v5556 = vadd.f32 %v5555, 1.0
        %v5557 = vmul.f32 %v5556, %v5131
        %v5558 = vand.u32 2147483647, %v5131
        %vm5559 = vcmp.lt.f32.partialorder %v5558, 0.0004427343
        %v5560 = vsel %vm5559, %v5557, %v5554
        %v5561 = vadd.f32 %v5133, 1.0
        %v5562 = vlog2.pop %v5561
        %v5563 = vmul.f32 %v5562, 0.6931472
        %v5564 = vmul.f32 -0.5, %v5133
        %v5565 = vadd.f32 %v5564, 1.0
        %v5566 = vmul.f32 %v5565, %v5133
        %v5567 = vand.u32 2147483647, %v5133
        %vm5568 = vcmp.lt.f32.partialorder %v5567, 0.0004427343
        %v5569 = vsel %vm5568, %v5566, %v5563
        %v5570 = vadd.f32 %v5135, 1.0
        %v5571 = vlog2.pop %v5570
        %v5572 = vmul.f32 %v5571, 0.6931472
        %v5573 = vmul.f32 -0.5, %v5135
        %v5574 = vadd.f32 %v5573, 1.0
        %v5575 = vmul.f32 %v5574, %v5135
        %v5576 = vand.u32 2147483647, %v5135
        %vm5577 = vcmp.lt.f32.partialorder %v5576, 0.0004427343
        %v5578 = vsel %vm5577, %v5575, %v5572
        %v5579 = vadd.f32 %v5137, 1.0
        %v5580 = vlog2.pop %v5579
        %v5581 = vmul.f32 %v5580, 0.6931472
        %v5582 = vmul.f32 -0.5, %v5137
        %v5583 = vadd.f32 %v5582, 1.0
        %v5584 = vmul.f32 %v5583, %v5137
        %v5585 = vand.u32 2147483647, %v5137
        %vm5586 = vcmp.lt.f32.partialorder %v5585, 0.0004427343
        %v5587 = vsel %vm5586, %v5584, %v5581
        %v5588 = vadd.f32 %v5139, 1.0
        %v5589 = vlog2.pop %v5588
        %v5590 = vmul.f32 %v5589, 0.6931472
        %v5591 = vmul.f32 -0.5, %v5139
        %v5592 = vadd.f32 %v5591, 1.0
        %v5593 = vmul.f32 %v5592, %v5139
        %v5594 = vand.u32 2147483647, %v5139
        %vm5595 = vcmp.lt.f32.partialorder %v5594, 0.0004427343
        %v5596 = vsel %vm5595, %v5593, %v5590
        %v5597 = vadd.f32 %v5141, 1.0
        %v5598 = vlog2.pop %v5597
        %v5599 = vmul.f32 %v5598, 0.6931472
        %v5600 = vmul.f32 -0.5, %v5141
        %v5601 = vadd.f32 %v5600, 1.0
        %v5602 = vmul.f32 %v5601, %v5141
        %v5603 = vand.u32 2147483647, %v5141
        %vm5604 = vcmp.lt.f32.partialorder %v5603, 0.0004427343
        %v5605 = vsel %vm5604, %v5602, %v5599
        %v5606 = vadd.f32 %v5143, 1.0
        %v5607 = vlog2.pop %v5606
        %v5608 = vmul.f32 %v5607, 0.6931472
        %v5609 = vmul.f32 -0.5, %v5143
        %v5610 = vadd.f32 %v5609, 1.0
        %v5611 = vmul.f32 %v5610, %v5143
        %v5612 = vand.u32 2147483647, %v5143
        %vm5613 = vcmp.lt.f32.partialorder %v5612, 0.0004427343
        %v5614 = vsel %vm5613, %v5611, %v5608
        %v5615 = vadd.f32 %v5145, 1.0
        %v5616 = vlog2.pop %v5615
        %v5617 = vmul.f32 %v5616, 0.6931472
        %v5618 = vmul.f32 -0.5, %v5145
        %v5619 = vadd.f32 %v5618, 1.0
        %v5620 = vmul.f32 %v5619, %v5145
        %v5621 = vand.u32 2147483647, %v5145
        %vm5622 = vcmp.lt.f32.partialorder %v5621, 0.0004427343
        %v5623 = vsel %vm5622, %v5620, %v5617
        %v5624 = vadd.f32 %v5147, 1.0
        %v5625 = vlog2.pop %v5624
        %v5626 = vmul.f32 %v5625, 0.6931472
        %v5627 = vmul.f32 -0.5, %v5147
        %v5628 = vadd.f32 %v5627, 1.0
        %v5629 = vmul.f32 %v5628, %v5147
        %v5630 = vand.u32 2147483647, %v5147
        %vm5631 = vcmp.lt.f32.partialorder %v5630, 0.0004427343
        %v5632 = vsel %vm5631, %v5629, %v5626
        %v5633 = vadd.f32 %v5149, 1.0
        %v5634 = vlog2.pop %v5633
        %v5635 = vmul.f32 %v5634, 0.6931472
        %v5636 = vmul.f32 -0.5, %v5149
        %v5637 = vadd.f32 %v5636, 1.0
        %v5638 = vmul.f32 %v5637, %v5149
        %v5639 = vand.u32 2147483647, %v5149
        %vm5640 = vcmp.lt.f32.partialorder %v5639, 0.0004427343
        %v5641 = vsel %vm5640, %v5638, %v5635
        %v5642 = vadd.f32 %v5151, 1.0
        %v5643 = vlog2.pop %v5642
        %v5644 = vmul.f32 %v5643, 0.6931472
        %v5645 = vmul.f32 -0.5, %v5151
        %v5646 = vadd.f32 %v5645, 1.0
        %v5647 = vmul.f32 %v5646, %v5151
        %v5648 = vand.u32 2147483647, %v5151
        %vm5649 = vcmp.lt.f32.partialorder %v5648, 0.0004427343
        %v5650 = vsel %vm5649, %v5647, %v5644
        %v5651 = vadd.f32 %v5153, 1.0
        %v5652 = vlog2.pop %v5651
        %v5653 = vmul.f32 %v5652, 0.6931472
        %v5654 = vmul.f32 -0.5, %v5153
        %v5655 = vadd.f32 %v5654, 1.0
        %v5656 = vmul.f32 %v5655, %v5153
        %v5657 = vand.u32 2147483647, %v5153
        %vm5658 = vcmp.lt.f32.partialorder %v5657, 0.0004427343
        %v5659 = vsel %vm5658, %v5656, %v5653
        %v5660 = vadd.f32 %v5155, 1.0
        %v5661 = vlog2.pop %v5660
        %v5662 = vmul.f32 %v5661, 0.6931472
        %v5663 = vmul.f32 -0.5, %v5155
        %v5664 = vadd.f32 %v5663, 1.0
        %v5665 = vmul.f32 %v5664, %v5155
        %v5666 = vand.u32 2147483647, %v5155
        %vm5667 = vcmp.lt.f32.partialorder %v5666, 0.0004427343
        %v5668 = vsel %vm5667, %v5665, %v5662
        %v5669 = vadd.f32 %v5157, 1.0
        %v5670 = vlog2.pop %v5669
        %v5671 = vmul.f32 %v5670, 0.6931472
        %v5672 = vmul.f32 -0.5, %v5157
        %v5673 = vadd.f32 %v5672, 1.0
        %v5674 = vmul.f32 %v5673, %v5157
        %v5675 = vand.u32 2147483647, %v5157
        %vm5676 = vcmp.lt.f32.partialorder %v5675, 0.0004427343
        %v5677 = vsel %vm5676, %v5674, %v5671
        %v5678 = vadd.f32 %v5159, 1.0
        %v5679 = vlog2.pop %v5678
        %v5680 = vmul.f32 %v5679, 0.6931472
        %v5681 = vmul.f32 -0.5, %v5159
        %v5682 = vadd.f32 %v5681, 1.0
        %v5683 = vmul.f32 %v5682, %v5159
        %v5684 = vand.u32 2147483647, %v5159
        %vm5685 = vcmp.lt.f32.partialorder %v5684, 0.0004427343
        %v5686 = vsel %vm5685, %v5683, %v5680
        %v5687 = vadd.f32 %v5161, 1.0
        %v5688 = vlog2.pop %v5687
        %v5689 = vmul.f32 %v5688, 0.6931472
        %v5690 = vmul.f32 -0.5, %v5161
        %v5691 = vadd.f32 %v5690, 1.0
        %v5692 = vmul.f32 %v5691, %v5161
        %v5693 = vand.u32 2147483647, %v5161
        %vm5694 = vcmp.lt.f32.partialorder %v5693, 0.0004427343
        %v5695 = vsel %vm5694, %v5692, %v5689
        %v5696 = vadd.f32 %v5163, 1.0
        %v5697 = vlog2.pop %v5696
        %v5698 = vmul.f32 %v5697, 0.6931472
        %v5699 = vmul.f32 -0.5, %v5163
        %v5700 = vadd.f32 %v5699, 1.0
        %v5701 = vmul.f32 %v5700, %v5163
        %v5702 = vand.u32 2147483647, %v5163
        %vm5703 = vcmp.lt.f32.partialorder %v5702, 0.0004427343
        %v5704 = vsel %vm5703, %v5701, %v5698
        %v5705 = vadd.f32 %v5165, 1.0
        %v5706 = vlog2.pop %v5705
        %v5707 = vmul.f32 %v5706, 0.6931472
        %v5708 = vmul.f32 -0.5, %v5165
        %v5709 = vadd.f32 %v5708, 1.0
        %v5710 = vmul.f32 %v5709, %v5165
        %v5711 = vand.u32 2147483647, %v5165
        %vm5712 = vcmp.lt.f32.partialorder %v5711, 0.0004427343
        %v5713 = vsel %vm5712, %v5710, %v5707
        %v5714 = vadd.f32 %v5167, 1.0
        %v5715 = vlog2.pop %v5714
        %v5716 = vmul.f32 %v5715, 0.6931472
        %v5717 = vmul.f32 -0.5, %v5167
        %v5718 = vadd.f32 %v5717, 1.0
        %v5719 = vmul.f32 %v5718, %v5167
        %v5720 = vand.u32 2147483647, %v5167
        %vm5721 = vcmp.lt.f32.partialorder %v5720, 0.0004427343
        %v5722 = vsel %vm5721, %v5719, %v5716
        %v5723 = vadd.f32 %v5169, 1.0
        %v5724 = vlog2.pop %v5723
        %v5725 = vmul.f32 %v5724, 0.6931472
        %v5726 = vmul.f32 -0.5, %v5169
        %v5727 = vadd.f32 %v5726, 1.0
        %v5728 = vmul.f32 %v5727, %v5169
        %v5729 = vand.u32 2147483647, %v5169
        %vm5730 = vcmp.lt.f32.partialorder %v5729, 0.0004427343
        %v5731 = vsel %vm5730, %v5728, %v5725
        %v5732 = vadd.f32 %v5171, 1.0
        %v5733 = vlog2.pop %v5732
        %v5734 = vmul.f32 %v5733, 0.6931472
        %v5735 = vmul.f32 -0.5, %v5171
        %v5736 = vadd.f32 %v5735, 1.0
        %v5737 = vmul.f32 %v5736, %v5171
        %v5738 = vand.u32 2147483647, %v5171
        %vm5739 = vcmp.lt.f32.partialorder %v5738, 0.0004427343
        %v5740 = vsel %vm5739, %v5737, %v5734
        %v5741 = vadd.f32 %v5173, 1.0
        %v5742 = vlog2.pop %v5741
        %v5743 = vmul.f32 %v5742, 0.6931472
        %v5744 = vmul.f32 -0.5, %v5173
        %v5745 = vadd.f32 %v5744, 1.0
        %v5746 = vmul.f32 %v5745, %v5173
        %v5747 = vand.u32 2147483647, %v5173
        %vm5748 = vcmp.lt.f32.partialorder %v5747, 0.0004427343
        %v5749 = vsel %vm5748, %v5746, %v5743
        %v5750 = vadd.f32 %v4854, %v5182
        %v5751 = vadd.f32 %v4855, %v5191
        %v5752 = vadd.f32 %v4856, %v5200
        %v5753 = vadd.f32 %v4857, %v5209
        %v5754 = vadd.f32 %v4858, %v5218
        %v5755 = vadd.f32 %v4859, %v5227
        %v5756 = vadd.f32 %v4860, %v5236
        %v5757 = vadd.f32 %v4861, %v5245
        %v5758 = vadd.f32 %v4862, %v5254
        %v5759 = vadd.f32 %v4863, %v5263
        %v5760 = vadd.f32 %v4864, %v5272
        %v5761 = vadd.f32 %v4865, %v5281
        %v5762 = vadd.f32 %v4866, %v5290
        %v5763 = vadd.f32 %v4867, %v5299
        %v5764 = vadd.f32 %v4868, %v5308
        %v5765 = vadd.f32 %v4869, %v5317
        %v5766 = vadd.f32 %v4870, %v5326
        %v5767 = vadd.f32 %v4871, %v5335
        %v5768 = vadd.f32 %v4872, %v5344
        %v5769 = vadd.f32 %v4873, %v5353
        %v5770 = vadd.f32 %v4874, %v5362
        %v5771 = vadd.f32 %v4875, %v5371
        %v5772 = vadd.f32 %v4876, %v5380
        %v5773 = vadd.f32 %v4877, %v5389
        %v5774 = vadd.f32 %v4878, %v5398
        %v5775 = vadd.f32 %v4879, %v5407
        %v5776 = vadd.f32 %v4880, %v5416
        %v5777 = vadd.f32 %v4881, %v5425
        %v5778 = vadd.f32 %v4882, %v5434
        %v5779 = vadd.f32 %v4883, %v5443
        %v5780 = vadd.f32 %v4884, %v5452
        %v5781 = vadd.f32 %v4885, %v5461
        %v5782 = vadd.f32 %v4886, %v5470
        %v5783 = vadd.f32 %v4887, %v5479
        %v5784 = vadd.f32 %v4888, %v5488
        %v5785 = vadd.f32 %v4889, %v5497
        %v5786 = vadd.f32 %v4890, %v5506
        %v5787 = vadd.f32 %v4891, %v5515
        %v5788 = vadd.f32 %v4892, %v5524
        %v5789 = vadd.f32 %v4893, %v5533
        %v5790 = vadd.f32 %v4894, %v5542
        %v5791 = vadd.f32 %v4895, %v5551
        %v5792 = vadd.f32 %v4896, %v5560
        %v5793 = vadd.f32 %v4897, %v5569
        %v5794 = vadd.f32 %v4898, %v5578
        %v5795 = vadd.f32 %v4899, %v5587
        %v5796 = vadd.f32 %v4900, %v5596
        %v5797 = vadd.f32 %v4901, %v5605
        %v5798 = vadd.f32 %v4902, %v5614
        %v5799 = vadd.f32 %v4903, %v5623
        %v5800 = vadd.f32 %v4904, %v5632
        %v5801 = vadd.f32 %v4905, %v5641
        %v5802 = vadd.f32 %v4906, %v5650
        %v5803 = vadd.f32 %v4907, %v5659
        %v5804 = vadd.f32 %v4908, %v5668
        %v5805 = vadd.f32 %v4909, %v5677
        %v5806 = vadd.f32 %v4910, %v5686
        %v5807 = vadd.f32 %v4911, %v5695
        %v5808 = vadd.f32 %v4912, %v5704
        %v5809 = vadd.f32 %v4913, %v5713
        %v5810 = vadd.f32 %v4914, %v5722
        %v5811 = vadd.f32 %v4915, %v5731
        %v5812 = vadd.f32 %v4916, %v5740
        %v5813 = vadd.f32 %v4917, %v5749
        %v5814 = vpack.c.bf16 %v5752, %v5750
        %v5815 = vpack.c.bf16 %v5753, %v5751
        %v5816 = vpack.c.bf16 %v5756, %v5754
        %v5817 = vpack.c.bf16 %v5757, %v5755
        %v5818 = vpack.c.bf16 %v5760, %v5758
        %v5819 = vpack.c.bf16 %v5761, %v5759
        %v5820 = vpack.c.bf16 %v5764, %v5762
        %v5821 = vpack.c.bf16 %v5765, %v5763
        %v5822 = vpack.c.bf16 %v5768, %v5766
        %v5823 = vpack.c.bf16 %v5769, %v5767
        %v5824 = vpack.c.bf16 %v5772, %v5770
        %v5825 = vpack.c.bf16 %v5773, %v5771
        %v5826 = vpack.c.bf16 %v5776, %v5774
        %v5827 = vpack.c.bf16 %v5777, %v5775
        %v5828 = vpack.c.bf16 %v5780, %v5778
        %v5829 = vpack.c.bf16 %v5781, %v5779
        %v5830 = vpack.c.bf16 %v5784, %v5782
        %v5831 = vpack.c.bf16 %v5785, %v5783
        %v5832 = vpack.c.bf16 %v5788, %v5786
        %v5833 = vpack.c.bf16 %v5789, %v5787
        %v5834 = vpack.c.bf16 %v5792, %v5790
        %v5835 = vpack.c.bf16 %v5793, %v5791
        %v5836 = vpack.c.bf16 %v5796, %v5794
        %v5837 = vpack.c.bf16 %v5797, %v5795
        %v5838 = vpack.c.bf16 %v5800, %v5798
        %v5839 = vpack.c.bf16 %v5801, %v5799
        %v5840 = vpack.c.bf16 %v5804, %v5802
        %v5841 = vpack.c.bf16 %v5805, %v5803
        %v5842 = vpack.c.bf16 %v5808, %v5806
        %v5843 = vpack.c.bf16 %v5809, %v5807
        %v5844 = vpack.c.bf16 %v5812, %v5810
        %v5845 = vpack.c.bf16 %v5813, %v5811
        %v5846 = vld [vmem:[#allocation13] sm:$0xf]
        %v5847 = vld [vmem:[#allocation13 + $0x4] sm:$0xf]
        %v5848 = vld [vmem:[#allocation13 + $0x8] sm:$0xf]
        %v5849 = vld [vmem:[#allocation13 + $0xc] sm:$0xf]
        %v5850 = vld [vmem:[#allocation13 + $0x10] sm:$0xf]
        %v5851 = vld [vmem:[#allocation13 + $0x14] sm:$0xf]
        %v5852 = vld [vmem:[#allocation13 + $0x18] sm:$0xf]
        %v5853 = vld [vmem:[#allocation13 + $0x1c] sm:$0xf]
        %v5854 = vld [vmem:[#allocation13 + $0x20] sm:$0xf]
        %v5855 = vld [vmem:[#allocation13 + $0x24] sm:$0xf]
        %v5856 = vld [vmem:[#allocation13 + $0x28] sm:$0xf]
        %v5857 = vld [vmem:[#allocation13 + $0x2c] sm:$0xf]
        %v5858 = vld [vmem:[#allocation13 + $0x30] sm:$0xf]
        %v5859 = vld [vmem:[#allocation13 + $0x34] sm:$0xf]
        %v5860 = vld [vmem:[#allocation13 + $0x38] sm:$0xf]
        %v5861 = vld [vmem:[#allocation13 + $0x3c] sm:$0xf]
        %v5862 = vld [vmem:[#allocation13 + $0x40] sm:$0xf]
        %v5863 = vld [vmem:[#allocation13 + $0x44] sm:$0xf]
        %v5864 = vld [vmem:[#allocation13 + $0x48] sm:$0xf]
        %v5865 = vld [vmem:[#allocation13 + $0x4c] sm:$0xf]
        %v5866 = vld [vmem:[#allocation13 + $0x50] sm:$0xf]
        %v5867 = vld [vmem:[#allocation13 + $0x54] sm:$0xf]
        %v5868 = vld [vmem:[#allocation13 + $0x58] sm:$0xf]
        %v5869 = vld [vmem:[#allocation13 + $0x5c] sm:$0xf]
        %v5870 = vld [vmem:[#allocation13 + $0x60] sm:$0xf]
        %v5871 = vld [vmem:[#allocation13 + $0x64] sm:$0xf]
        %v5872 = vld [vmem:[#allocation13 + $0x68] sm:$0xf]
        %v5873 = vld [vmem:[#allocation13 + $0x6c] sm:$0xf]
        %v5874 = vld [vmem:[#allocation13 + $0x70] sm:$0xf]
        %v5875 = vld [vmem:[#allocation13 + $0x74] sm:$0xf]
        %v5876 = vld [vmem:[#allocation13 + $0x78] sm:$0xf]
        %v5877 = vld [vmem:[#allocation13 + $0x7c] sm:$0xf]
        %v5878 = vld [vmem:[#allocation14] sm:$0xf]
        %v5879 = vld [vmem:[#allocation14 + $0x4] sm:$0xf]
        %v5880 = vld [vmem:[#allocation14 + $0x8] sm:$0xf]
        %v5881 = vld [vmem:[#allocation14 + $0xc] sm:$0xf]
        %v5882 = vld [vmem:[#allocation14 + $0x10] sm:$0xf]
        %v5883 = vld [vmem:[#allocation14 + $0x14] sm:$0xf]
        %v5884 = vld [vmem:[#allocation14 + $0x18] sm:$0xf]
        %v5885 = vld [vmem:[#allocation14 + $0x1c] sm:$0xf]
        %v5886 = vld [vmem:[#allocation14 + $0x20] sm:$0xf]
        %v5887 = vld [vmem:[#allocation14 + $0x24] sm:$0xf]
        %v5888 = vld [vmem:[#allocation14 + $0x28] sm:$0xf]
        %v5889 = vld [vmem:[#allocation14 + $0x2c] sm:$0xf]
        %v5890 = vld [vmem:[#allocation14 + $0x30] sm:$0xf]
        %v5891 = vld [vmem:[#allocation14 + $0x34] sm:$0xf]
        %v5892 = vld [vmem:[#allocation14 + $0x38] sm:$0xf]
        %v5893 = vld [vmem:[#allocation14 + $0x3c] sm:$0xf]
        %v5926 = vunpack.c.l.b16 %v609
        %v5927 = vunpack.c.l.b16 %v610
        %v5928 = vunpack.c.l.b16 %v611
        %v5929 = vunpack.c.l.b16 %v612
        %v5930 = vunpack.c.l.b16 %v613
        %v5931 = vunpack.c.l.b16 %v614
        %v5932 = vunpack.c.l.b16 %v615
        %v5933 = vunpack.c.l.b16 %v616
        %v5934 = vunpack.c.l.b16 %v617
        %v5935 = vunpack.c.l.b16 %v618
        %v5936 = vunpack.c.l.b16 %v619
        %v5937 = vunpack.c.l.b16 %v620
        %v5938 = vunpack.c.l.b16 %v621
        %v5939 = vunpack.c.l.b16 %v622
        %v5940 = vunpack.c.l.b16 %v623
        %v5941 = vunpack.c.l.b16 %v624
        %v5942 = vunpack.c.l.b16 %v625
        %v5943 = vunpack.c.l.b16 %v626
        %v5944 = vunpack.c.l.b16 %v627
        %v5945 = vunpack.c.l.b16 %v628
        %v5946 = vunpack.c.l.b16 %v629
        %v5947 = vunpack.c.l.b16 %v630
        %v5948 = vunpack.c.l.b16 %v631
        %v5949 = vunpack.c.l.b16 %v632
        %v5950 = vunpack.c.l.b16 %v633
        %v5951 = vunpack.c.l.b16 %v634
        %v5952 = vunpack.c.l.b16 %v635
        %v5953 = vunpack.c.l.b16 %v636
        %v5954 = vunpack.c.l.b16 %v637
        %v5955 = vunpack.c.l.b16 %v638
        %v5956 = vunpack.c.l.b16 %v639
        %v5957 = vunpack.c.l.b16 %v640
        %v5958 = vpack.c.b16 %v5927, %v5926
        %v5959 = vpack.c.b16 %v5929, %v5928
        %v5960 = vpack.c.b16 %v5931, %v5930
        %v5961 = vpack.c.b16 %v5933, %v5932
        %v5962 = vpack.c.b16 %v5935, %v5934
        %v5963 = vpack.c.b16 %v5937, %v5936
        %v5964 = vpack.c.b16 %v5939, %v5938
        %v5965 = vpack.c.b16 %v5941, %v5940
        %v5966 = vpack.c.b16 %v5943, %v5942
        %v5967 = vpack.c.b16 %v5945, %v5944
        %v5968 = vpack.c.b16 %v5947, %v5946
        %v5969 = vpack.c.b16 %v5949, %v5948
        %v5970 = vpack.c.b16 %v5951, %v5950
        %v5971 = vpack.c.b16 %v5953, %v5952
        %v5972 = vpack.c.b16 %v5955, %v5954
        %v5973 = vpack.c.b16 %v5957, %v5956
        %v6006 = vunpack.c.l.b16 %v5878
        %v6007 = vunpack.c.l.b16 %v5879
        %v6008 = vunpack.c.l.b16 %v5880
        %v6009 = vunpack.c.l.b16 %v5881
        %v6010 = vunpack.c.l.b16 %v5882
        %v6011 = vunpack.c.l.b16 %v5883
        %v6012 = vunpack.c.l.b16 %v5884
        %v6013 = vunpack.c.l.b16 %v5885
        %v6014 = vunpack.c.l.b16 %v5886
        %v6015 = vunpack.c.l.b16 %v5887
        %v6016 = vunpack.c.l.b16 %v5888
        %v6017 = vunpack.c.l.b16 %v5889
        %v6018 = vunpack.c.l.b16 %v5890
        %v6019 = vunpack.c.l.b16 %v5891
        %v6020 = vunpack.c.l.b16 %v5892
        %v6021 = vunpack.c.l.b16 %v5893
        %v6022 = vpack.c.b16 %v6007, %v6006
        %v6023 = vpack.c.b16 %v6009, %v6008
        %v6024 = vpack.c.b16 %v6011, %v6010
        %v6025 = vpack.c.b16 %v6013, %v6012
        %v6026 = vpack.c.b16 %v6015, %v6014
        %v6027 = vpack.c.b16 %v6017, %v6016
        %v6028 = vpack.c.b16 %v6019, %v6018
        %v6029 = vpack.c.b16 %v6021, %v6020
        %6038 = vmatprep.subr.bf16.mxu0 0
        %6039 = vmatpush1.bf16.msra.mxu0 %v6029
        %6040 = vmatprep.subr.bf16.mxu0 0
        %6041 = vmatpush1.bf16.msra.mxu0 %v6028
        %6042 = vmatprep.subr.bf16.mxu0 0
        %6043 = vmatpush1.bf16.msra.mxu0 %v6027
        %6044 = vmatprep.subr.bf16.mxu0 0
        %6045 = vmatpush1.bf16.msra.mxu0 %v6026
        %6046 = vmatprep.subr.bf16.mxu0 0
        %6047 = vmatpush1.bf16.msra.mxu0 %v6025
        %6048 = vmatprep.subr.bf16.mxu0 0
        %6049 = vmatpush1.bf16.msra.mxu0 %v6024
        %6050 = vmatprep.subr.bf16.mxu0 0
        %6051 = vmatpush1.bf16.msra.mxu0 %v6023
        %6052 = vmatprep.subr.bf16.mxu0 0
        %6053 = vmatpush1.bf16.msra.mxu0 %v6022
        %6054 = vmatprep.subr.bf16.mxu0 0
        %6055 = vmatpush2.bf16.msra.mxu0 0
        %6056 = vmatprep.subr.bf16.mxu0 0
        %6057 = vmatpush2.bf16.msra.mxu0 0
        %6058 = vmatprep.subr.bf16.mxu0 0
        %6059 = vmatpush2.bf16.msra.mxu0 0
        %6060 = vmatprep.subr.bf16.mxu0 0
        %6061 = vmatpush2.bf16.msra.mxu0 0
        %6062 = vmatprep.subr.bf16.mxu0 0
        %6063 = vmatpush2.bf16.msra.mxu0 0
        %6064 = vmatprep.subr.bf16.mxu0 0
        %6065 = vmatpush2.bf16.msra.mxu0 0
        %6066 = vmatprep.subr.bf16.mxu0 0
        %6067 = vmatpush2.bf16.msra.mxu0 0
        %6068 = vmatprep.subr.bf16.mxu0 0
        %6069 = vmatpush2.bf16.msra.mxu0 0
        %6070 = vmatprep.mubr.bf16.mxu0 0
        %6071 = vmatmul.mubr.bf16.gmra.mxu0 %v5958
        %v6072 = vpop.f32.mrf.mxu0
        %v6073 = vadd.f32 0.0, %v6072
        %v6074 = vpop.f32.mrf.mxu0
        %v6075 = vpop.f32.mrf.mxu0
        %v6076 = vadd.f32 0.0, %v6075
        %v6077 = vpop.f32.mrf.mxu0
        %6078 = vmatprep.mubr.bf16.mxu0 0
        %6079 = vmatmul.mubr.bf16.gmra.mxu0 %v5959
        %v6080 = vpop.f32.mrf.mxu0
        %v6081 = vadd.f32 0.0, %v6080
        %v6082 = vpop.f32.mrf.mxu0
        %v6083 = vpop.f32.mrf.mxu0
        %v6084 = vadd.f32 0.0, %v6083
        %v6085 = vpop.f32.mrf.mxu0
        %6086 = vmatprep.mubr.bf16.mxu0 0
        %6087 = vmatmul.mubr.bf16.gmra.mxu0 %v5960
        %v6088 = vpop.f32.mrf.mxu0
        %v6089 = vadd.f32 0.0, %v6088
        %v6090 = vpop.f32.mrf.mxu0
        %v6091 = vpop.f32.mrf.mxu0
        %v6092 = vadd.f32 0.0, %v6091
        %v6093 = vpop.f32.mrf.mxu0
        %6094 = vmatprep.mubr.bf16.mxu0 0
        %6095 = vmatmul.mubr.bf16.gmra.mxu0 %v5961
        %v6096 = vpop.f32.mrf.mxu0
        %v6097 = vadd.f32 0.0, %v6096
        %v6098 = vpop.f32.mrf.mxu0
        %v6099 = vpop.f32.mrf.mxu0
        %v6100 = vadd.f32 0.0, %v6099
        %v6101 = vpop.f32.mrf.mxu0
        %6102 = vmatprep.mubr.bf16.mxu0 0
        %6103 = vmatmul.mubr.bf16.gmra.mxu0 %v5962
        %v6104 = vpop.f32.mrf.mxu0
        %v6105 = vadd.f32 0.0, %v6104
        %v6106 = vpop.f32.mrf.mxu0
        %v6107 = vpop.f32.mrf.mxu0
        %v6108 = vadd.f32 0.0, %v6107
        %v6109 = vpop.f32.mrf.mxu0
        %6110 = vmatprep.mubr.bf16.mxu0 0
        %6111 = vmatmul.mubr.bf16.gmra.mxu0 %v5963
        %v6112 = vpop.f32.mrf.mxu0
        %v6113 = vadd.f32 0.0, %v6112
        %v6114 = vpop.f32.mrf.mxu0
        %v6115 = vpop.f32.mrf.mxu0
        %v6116 = vadd.f32 0.0, %v6115
        %v6117 = vpop.f32.mrf.mxu0
        %6118 = vmatprep.mubr.bf16.mxu0 0
        %6119 = vmatmul.mubr.bf16.gmra.mxu0 %v5964
        %v6120 = vpop.f32.mrf.mxu0
        %v6121 = vadd.f32 0.0, %v6120
        %v6122 = vpop.f32.mrf.mxu0
        %v6123 = vpop.f32.mrf.mxu0
        %v6124 = vadd.f32 0.0, %v6123
        %v6125 = vpop.f32.mrf.mxu0
        %6126 = vmatprep.mubr.bf16.mxu0 0
        %6127 = vmatmul.mubr.bf16.gmra.mxu0 %v5965
        %v6128 = vpop.f32.mrf.mxu0
        %v6129 = vadd.f32 0.0, %v6128
        %v6130 = vpop.f32.mrf.mxu0
        %v6131 = vpop.f32.mrf.mxu0
        %v6132 = vadd.f32 0.0, %v6131
        %v6133 = vpop.f32.mrf.mxu0
        %6134 = vmatprep.mubr.bf16.mxu0 0
        %6135 = vmatmul.mubr.bf16.gmra.mxu0 %v5966
        %v6136 = vpop.f32.mrf.mxu0
        %v6137 = vadd.f32 0.0, %v6136
        %v6138 = vpop.f32.mrf.mxu0
        %v6139 = vpop.f32.mrf.mxu0
        %v6140 = vadd.f32 0.0, %v6139
        %v6141 = vpop.f32.mrf.mxu0
        %6142 = vmatprep.mubr.bf16.mxu0 0
        %6143 = vmatmul.mubr.bf16.gmra.mxu0 %v5967
        %v6144 = vpop.f32.mrf.mxu0
        %v6145 = vadd.f32 0.0, %v6144
        %v6146 = vpop.f32.mrf.mxu0
        %v6147 = vpop.f32.mrf.mxu0
        %v6148 = vadd.f32 0.0, %v6147
        %v6149 = vpop.f32.mrf.mxu0
        %6150 = vmatprep.mubr.bf16.mxu0 0
        %6151 = vmatmul.mubr.bf16.gmra.mxu0 %v5968
        %v6152 = vpop.f32.mrf.mxu0
        %v6153 = vadd.f32 0.0, %v6152
        %v6154 = vpop.f32.mrf.mxu0
        %v6155 = vpop.f32.mrf.mxu0
        %v6156 = vadd.f32 0.0, %v6155
        %v6157 = vpop.f32.mrf.mxu0
        %6158 = vmatprep.mubr.bf16.mxu0 0
        %6159 = vmatmul.mubr.bf16.gmra.mxu0 %v5969
        %v6160 = vpop.f32.mrf.mxu0
        %v6161 = vadd.f32 0.0, %v6160
        %v6162 = vpop.f32.mrf.mxu0
        %v6163 = vpop.f32.mrf.mxu0
        %v6164 = vadd.f32 0.0, %v6163
        %v6165 = vpop.f32.mrf.mxu0
        %6166 = vmatprep.mubr.bf16.mxu0 0
        %6167 = vmatmul.mubr.bf16.gmra.mxu0 %v5970
        %v6168 = vpop.f32.mrf.mxu0
        %v6169 = vadd.f32 0.0, %v6168
        %v6170 = vpop.f32.mrf.mxu0
        %v6171 = vpop.f32.mrf.mxu0
        %v6172 = vadd.f32 0.0, %v6171
        %v6173 = vpop.f32.mrf.mxu0
        %6174 = vmatprep.mubr.bf16.mxu0 0
        %6175 = vmatmul.mubr.bf16.gmra.mxu0 %v5971
        %v6176 = vpop.f32.mrf.mxu0
        %v6177 = vadd.f32 0.0, %v6176
        %v6178 = vpop.f32.mrf.mxu0
        %v6179 = vpop.f32.mrf.mxu0
        %v6180 = vadd.f32 0.0, %v6179
        %v6181 = vpop.f32.mrf.mxu0
        %6182 = vmatprep.mubr.bf16.mxu0 0
        %6183 = vmatmul.mubr.bf16.gmra.mxu0 %v5972
        %v6184 = vpop.f32.mrf.mxu0
        %v6185 = vadd.f32 0.0, %v6184
        %v6186 = vpop.f32.mrf.mxu0
        %v6187 = vpop.f32.mrf.mxu0
        %v6188 = vadd.f32 0.0, %v6187
        %v6189 = vpop.f32.mrf.mxu0
        %6190 = vmatprep.mubr.bf16.mxu0 0
        %6191 = vmatmul.mubr.bf16.gmra.mxu0 %v5973
        %v6192 = vpop.f32.mrf.mxu0
        %v6193 = vadd.f32 0.0, %v6192
        %v6194 = vpop.f32.mrf.mxu0
        %v6195 = vpop.f32.mrf.mxu0
        %v6196 = vadd.f32 0.0, %v6195
        %v6197 = vpop.f32.mrf.mxu0
        %6198 = vdwg.mxu0
        %v6231 = vunpack.c.l.b16 %v5846
        %v6232 = vunpack.c.l.b16 %v5847
        %v6233 = vunpack.c.l.b16 %v5848
        %v6234 = vunpack.c.l.b16 %v5849
        %v6235 = vunpack.c.l.b16 %v5850
        %v6236 = vunpack.c.l.b16 %v5851
        %v6237 = vunpack.c.l.b16 %v5852
        %v6238 = vunpack.c.l.b16 %v5853
        %v6239 = vunpack.c.l.b16 %v5854
        %v6240 = vunpack.c.l.b16 %v5855
        %v6241 = vunpack.c.l.b16 %v5856
        %v6242 = vunpack.c.l.b16 %v5857
        %v6243 = vunpack.c.l.b16 %v5858
        %v6244 = vunpack.c.l.b16 %v5859
        %v6245 = vunpack.c.l.b16 %v5860
        %v6246 = vunpack.c.l.b16 %v5861
        %v6247 = vunpack.c.l.b16 %v5862
        %v6248 = vunpack.c.l.b16 %v5863
        %v6249 = vunpack.c.l.b16 %v5864
        %v6250 = vunpack.c.l.b16 %v5865
        %v6251 = vunpack.c.l.b16 %v5866
        %v6252 = vunpack.c.l.b16 %v5867
        %v6253 = vunpack.c.l.b16 %v5868
        %v6254 = vunpack.c.l.b16 %v5869
        %v6255 = vunpack.c.l.b16 %v5870
        %v6256 = vunpack.c.l.b16 %v5871
        %v6257 = vunpack.c.l.b16 %v5872
        %v6258 = vunpack.c.l.b16 %v5873
        %v6259 = vunpack.c.l.b16 %v5874
        %v6260 = vunpack.c.l.b16 %v5875
        %v6261 = vunpack.c.l.b16 %v5876
        %v6262 = vunpack.c.l.b16 %v5877
        %v6263 = vpack.c.b16 %v6232, %v6231
        %v6264 = vpack.c.b16 %v6234, %v6233
        %v6265 = vpack.c.b16 %v6236, %v6235
        %v6266 = vpack.c.b16 %v6238, %v6237
        %v6267 = vpack.c.b16 %v6240, %v6239
        %v6268 = vpack.c.b16 %v6242, %v6241
        %v6269 = vpack.c.b16 %v6244, %v6243
        %v6270 = vpack.c.b16 %v6246, %v6245
        %v6271 = vpack.c.b16 %v6248, %v6247
        %v6272 = vpack.c.b16 %v6250, %v6249
        %v6273 = vpack.c.b16 %v6252, %v6251
        %v6274 = vpack.c.b16 %v6254, %v6253
        %v6275 = vpack.c.b16 %v6256, %v6255
        %v6276 = vpack.c.b16 %v6258, %v6257
        %v6277 = vpack.c.b16 %v6260, %v6259
        %v6278 = vpack.c.b16 %v6262, %v6261
        %6295 = vmatprep.subr.bf16.mxu0 0
        %6296 = vmatpush1.bf16.msra.mxu0 %v6270
        %6297 = vmatprep.subr.bf16.mxu0 0
        %6298 = vmatpush1.bf16.msra.mxu0 %v6269
        %6299 = vmatprep.subr.bf16.mxu0 0
        %6300 = vmatpush1.bf16.msra.mxu0 %v6268
        %6301 = vmatprep.subr.bf16.mxu0 0
        %6302 = vmatpush1.bf16.msra.mxu0 %v6267
        %6303 = vmatprep.subr.bf16.mxu0 0
        %6304 = vmatpush1.bf16.msra.mxu0 %v6266
        %6305 = vmatprep.subr.bf16.mxu0 0
        %6306 = vmatpush1.bf16.msra.mxu0 %v6265
        %6307 = vmatprep.subr.bf16.mxu0 0
        %6308 = vmatpush1.bf16.msra.mxu0 %v6264
        %6309 = vmatprep.subr.bf16.mxu0 0
        %6310 = vmatpush1.bf16.msra.mxu0 %v6263
        %6311 = vmatprep.subr.bf16.mxu0 0
        %6312 = vmatpush2.bf16.msra.mxu0 %v6278
        %6313 = vmatprep.subr.bf16.mxu0 0
        %6314 = vmatpush2.bf16.msra.mxu0 %v6277
        %6315 = vmatprep.subr.bf16.mxu0 0
        %6316 = vmatpush2.bf16.msra.mxu0 %v6276
        %6317 = vmatprep.subr.bf16.mxu0 0
        %6318 = vmatpush2.bf16.msra.mxu0 %v6275
        %6319 = vmatprep.subr.bf16.mxu0 0
        %6320 = vmatpush2.bf16.msra.mxu0 %v6274
        %6321 = vmatprep.subr.bf16.mxu0 0
        %6322 = vmatpush2.bf16.msra.mxu0 %v6273
        %6323 = vmatprep.subr.bf16.mxu0 0
        %6324 = vmatpush2.bf16.msra.mxu0 %v6272
        %6325 = vmatprep.subr.bf16.mxu0 0
        %6326 = vmatpush2.bf16.msra.mxu0 %v6271
        %6327 = vmatprep.mubr.bf16.mxu0 %v5815
        %6328 = vmatmul.mubr.bf16.gmra.mxu0 %v5814
        %v6329 = vpop.f32.mrf.mxu0
        %v6330 = vadd.f32 %v6073, %v6329
        %v6331 = vpop.f32.mrf.mxu0
        %v6332 = vpop.f32.mrf.mxu0
        %v6333 = vadd.f32 %v6076, %v6332
        %v6334 = vpop.f32.mrf.mxu0
        %6335 = vmatprep.mubr.bf16.mxu0 %v5817
        %6336 = vmatmul.mubr.bf16.gmra.mxu0 %v5816
        %v6337 = vpop.f32.mrf.mxu0
        %v6338 = vadd.f32 %v6081, %v6337
        %v6339 = vpop.f32.mrf.mxu0
        %v6340 = vpop.f32.mrf.mxu0
        %v6341 = vadd.f32 %v6084, %v6340
        %v6342 = vpop.f32.mrf.mxu0
        %6343 = vmatprep.mubr.bf16.mxu0 %v5819
        %6344 = vmatmul.mubr.bf16.gmra.mxu0 %v5818
        %v6345 = vpop.f32.mrf.mxu0
        %v6346 = vadd.f32 %v6089, %v6345
        %v6347 = vpop.f32.mrf.mxu0
        %v6348 = vpop.f32.mrf.mxu0
        %v6349 = vadd.f32 %v6092, %v6348
        %v6350 = vpop.f32.mrf.mxu0
        %6351 = vmatprep.mubr.bf16.mxu0 %v5821
        %6352 = vmatmul.mubr.bf16.gmra.mxu0 %v5820
        %v6353 = vpop.f32.mrf.mxu0
        %v6354 = vadd.f32 %v6097, %v6353
        %v6355 = vpop.f32.mrf.mxu0
        %v6356 = vpop.f32.mrf.mxu0
        %v6357 = vadd.f32 %v6100, %v6356
        %v6358 = vpop.f32.mrf.mxu0
        %6359 = vmatprep.mubr.bf16.mxu0 %v5823
        %6360 = vmatmul.mubr.bf16.gmra.mxu0 %v5822
        %v6361 = vpop.f32.mrf.mxu0
        %v6362 = vadd.f32 %v6105, %v6361
        %v6363 = vpop.f32.mrf.mxu0
        %v6364 = vpop.f32.mrf.mxu0
        %v6365 = vadd.f32 %v6108, %v6364
        %v6366 = vpop.f32.mrf.mxu0
        %6367 = vmatprep.mubr.bf16.mxu0 %v5825
        %6368 = vmatmul.mubr.bf16.gmra.mxu0 %v5824
        %v6369 = vpop.f32.mrf.mxu0
        %v6370 = vadd.f32 %v6113, %v6369
        %v6371 = vpop.f32.mrf.mxu0
        %v6372 = vpop.f32.mrf.mxu0
        %v6373 = vadd.f32 %v6116, %v6372
        %v6374 = vpop.f32.mrf.mxu0
        %6375 = vmatprep.mubr.bf16.mxu0 %v5827
        %6376 = vmatmul.mubr.bf16.gmra.mxu0 %v5826
        %v6377 = vpop.f32.mrf.mxu0
        %v6378 = vadd.f32 %v6121, %v6377
        %v6379 = vpop.f32.mrf.mxu0
        %v6380 = vpop.f32.mrf.mxu0
        %v6381 = vadd.f32 %v6124, %v6380
        %v6382 = vpop.f32.mrf.mxu0
        %6383 = vmatprep.mubr.bf16.mxu0 %v5829
        %6384 = vmatmul.mubr.bf16.gmra.mxu0 %v5828
        %v6385 = vpop.f32.mrf.mxu0
        %v6386 = vadd.f32 %v6129, %v6385
        %v6387 = vpop.f32.mrf.mxu0
        %v6388 = vpop.f32.mrf.mxu0
        %v6389 = vadd.f32 %v6132, %v6388
        %v6390 = vpop.f32.mrf.mxu0
        %6391 = vmatprep.mubr.bf16.mxu0 %v5831
        %6392 = vmatmul.mubr.bf16.gmra.mxu0 %v5830
        %v6393 = vpop.f32.mrf.mxu0
        %v6394 = vadd.f32 %v6137, %v6393
        %v6395 = vpop.f32.mrf.mxu0
        %v6396 = vpop.f32.mrf.mxu0
        %v6397 = vadd.f32 %v6140, %v6396
        %v6398 = vpop.f32.mrf.mxu0
        %6399 = vmatprep.mubr.bf16.mxu0 %v5833
        %6400 = vmatmul.mubr.bf16.gmra.mxu0 %v5832
        %v6401 = vpop.f32.mrf.mxu0
        %v6402 = vadd.f32 %v6145, %v6401
        %v6403 = vpop.f32.mrf.mxu0
        %v6404 = vpop.f32.mrf.mxu0
        %v6405 = vadd.f32 %v6148, %v6404
        %v6406 = vpop.f32.mrf.mxu0
        %6407 = vmatprep.mubr.bf16.mxu0 %v5835
        %6408 = vmatmul.mubr.bf16.gmra.mxu0 %v5834
        %v6409 = vpop.f32.mrf.mxu0
        %v6410 = vadd.f32 %v6153, %v6409
        %v6411 = vpop.f32.mrf.mxu0
        %v6412 = vpop.f32.mrf.mxu0
        %v6413 = vadd.f32 %v6156, %v6412
        %v6414 = vpop.f32.mrf.mxu0
        %6415 = vmatprep.mubr.bf16.mxu0 %v5837
        %6416 = vmatmul.mubr.bf16.gmra.mxu0 %v5836
        %v6417 = vpop.f32.mrf.mxu0
        %v6418 = vadd.f32 %v6161, %v6417
        %v6419 = vpop.f32.mrf.mxu0
        %v6420 = vpop.f32.mrf.mxu0
        %v6421 = vadd.f32 %v6164, %v6420
        %v6422 = vpop.f32.mrf.mxu0
        %6423 = vmatprep.mubr.bf16.mxu0 %v5839
        %6424 = vmatmul.mubr.bf16.gmra.mxu0 %v5838
        %v6425 = vpop.f32.mrf.mxu0
        %v6426 = vadd.f32 %v6169, %v6425
        %v6427 = vpop.f32.mrf.mxu0
        %v6428 = vpop.f32.mrf.mxu0
        %v6429 = vadd.f32 %v6172, %v6428
        %v6430 = vpop.f32.mrf.mxu0
        %6431 = vmatprep.mubr.bf16.mxu0 %v5841
        %6432 = vmatmul.mubr.bf16.gmra.mxu0 %v5840
        %v6433 = vpop.f32.mrf.mxu0
        %v6434 = vadd.f32 %v6177, %v6433
        %v6435 = vpop.f32.mrf.mxu0
        %v6436 = vpop.f32.mrf.mxu0
        %v6437 = vadd.f32 %v6180, %v6436
        %v6438 = vpop.f32.mrf.mxu0
        %6439 = vmatprep.mubr.bf16.mxu0 %v5843
        %6440 = vmatmul.mubr.bf16.gmra.mxu0 %v5842
        %v6441 = vpop.f32.mrf.mxu0
        %v6442 = vadd.f32 %v6185, %v6441
        %v6443 = vpop.f32.mrf.mxu0
        %v6444 = vpop.f32.mrf.mxu0
        %v6445 = vadd.f32 %v6188, %v6444
        %v6446 = vpop.f32.mrf.mxu0
        %6447 = vmatprep.mubr.bf16.mxu0 %v5845
        %6448 = vmatmul.mubr.bf16.gmra.mxu0 %v5844
        %v6449 = vpop.f32.mrf.mxu0
        %v6450 = vadd.f32 %v6193, %v6449
        %v6451 = vpop.f32.mrf.mxu0
        %v6452 = vpop.f32.mrf.mxu0
        %v6453 = vadd.f32 %v6196, %v6452
        %v6454 = vpop.f32.mrf.mxu0
        %6455 = vdwg.mxu0
        %v6456 = vld [vmem:[%s9] sm:$0x1]
        %v6458 = vlaneseq
        %v6459 = vshrl.u32 %v6458, 7
        %v6460 = vsub.s32 0, %v6459
        %v6461 = vrot.slane %v6456, %v6460
        %v6463 = vadd.f32 %v6330, %v6461
        %v6464 = vadd.f32 %v6333, %v6461
        %v6465 = vadd.f32 %v6338, %v6461
        %v6466 = vadd.f32 %v6341, %v6461
        %v6467 = vadd.f32 %v6346, %v6461
        %v6468 = vadd.f32 %v6349, %v6461
        %v6469 = vadd.f32 %v6354, %v6461
        %v6470 = vadd.f32 %v6357, %v6461
        %v6471 = vadd.f32 %v6362, %v6461
        %v6472 = vadd.f32 %v6365, %v6461
        %v6473 = vadd.f32 %v6370, %v6461
        %v6474 = vadd.f32 %v6373, %v6461
        %v6475 = vadd.f32 %v6378, %v6461
        %v6476 = vadd.f32 %v6381, %v6461
        %v6477 = vadd.f32 %v6386, %v6461
        %v6478 = vadd.f32 %v6389, %v6461
        %v6479 = vadd.f32 %v6394, %v6461
        %v6480 = vadd.f32 %v6397, %v6461
        %v6481 = vadd.f32 %v6402, %v6461
        %v6482 = vadd.f32 %v6405, %v6461
        %v6483 = vadd.f32 %v6410, %v6461
        %v6484 = vadd.f32 %v6413, %v6461
        %v6485 = vadd.f32 %v6418, %v6461
        %v6486 = vadd.f32 %v6421, %v6461
        %v6487 = vadd.f32 %v6426, %v6461
        %v6488 = vadd.f32 %v6429, %v6461
        %v6489 = vadd.f32 %v6434, %v6461
        %v6490 = vadd.f32 %v6437, %v6461
        %v6491 = vadd.f32 %v6442, %v6461
        %v6492 = vadd.f32 %v6445, %v6461
        %v6493 = vadd.f32 %v6450, %v6461
        %v6494 = vadd.f32 %v6453, %v6461
        %v6495 = vmax.f32 %v6463, 0.0
        %v6496 = vmax.f32 %v6464, 0.0
        %v6497 = vmax.f32 %v6465, 0.0
        %v6498 = vmax.f32 %v6466, 0.0
        %v6499 = vmax.f32 %v6467, 0.0
        %v6500 = vmax.f32 %v6468, 0.0
        %v6501 = vmax.f32 %v6469, 0.0
        %v6502 = vmax.f32 %v6470, 0.0
        %v6503 = vmax.f32 %v6471, 0.0
        %v6504 = vmax.f32 %v6472, 0.0
        %v6505 = vmax.f32 %v6473, 0.0
        %v6506 = vmax.f32 %v6474, 0.0
        %v6507 = vmax.f32 %v6475, 0.0
        %v6508 = vmax.f32 %v6476, 0.0
        %v6509 = vmax.f32 %v6477, 0.0
        %v6510 = vmax.f32 %v6478, 0.0
        %v6511 = vmax.f32 %v6479, 0.0
        %v6512 = vmax.f32 %v6480, 0.0
        %v6513 = vmax.f32 %v6481, 0.0
        %v6514 = vmax.f32 %v6482, 0.0
        %v6515 = vmax.f32 %v6483, 0.0
        %v6516 = vmax.f32 %v6484, 0.0
        %v6517 = vmax.f32 %v6485, 0.0
        %v6518 = vmax.f32 %v6486, 0.0
        %v6519 = vmax.f32 %v6487, 0.0
        %v6520 = vmax.f32 %v6488, 0.0
        %v6521 = vmax.f32 %v6489, 0.0
        %v6522 = vmax.f32 %v6490, 0.0
        %v6523 = vmax.f32 %v6491, 0.0
        %v6524 = vmax.f32 %v6492, 0.0
        %v6525 = vmax.f32 %v6493, 0.0
        %v6526 = vmax.f32 %v6494, 0.0
        %v6527 = vpack.c.bf16 %v6496, %v6495
        %v6528 = vpack.c.bf16 %v6498, %v6497
        %v6529 = vpack.c.bf16 %v6500, %v6499
        %v6530 = vpack.c.bf16 %v6502, %v6501
        %v6531 = vpack.c.bf16 %v6504, %v6503
        %v6532 = vpack.c.bf16 %v6506, %v6505
        %v6533 = vpack.c.bf16 %v6508, %v6507
        %v6534 = vpack.c.bf16 %v6510, %v6509
        %v6535 = vpack.c.bf16 %v6512, %v6511
        %v6536 = vpack.c.bf16 %v6514, %v6513
        %v6537 = vpack.c.bf16 %v6516, %v6515
        %v6538 = vpack.c.bf16 %v6518, %v6517
        %v6539 = vpack.c.bf16 %v6520, %v6519
        %v6540 = vpack.c.bf16 %v6522, %v6521
        %v6541 = vpack.c.bf16 %v6524, %v6523
        %v6542 = vpack.c.bf16 %v6526, %v6525
        %v6543 = vld [vmem:[#allocation16] sm:$0xf]
        %v6544 = vld [vmem:[#allocation16 + $0x4] sm:$0xf]
        %v6545 = vld [vmem:[#allocation16 + $0x8] sm:$0xf]
        %v6546 = vld [vmem:[#allocation16 + $0xc] sm:$0xf]
        %v6547 = vld [vmem:[#allocation16 + $0x10] sm:$0xf]
        %v6548 = vld [vmem:[#allocation16 + $0x14] sm:$0xf]
        %v6549 = vld [vmem:[#allocation16 + $0x18] sm:$0xf]
        %v6550 = vld [vmem:[#allocation16 + $0x1c] sm:$0xf]
        %v6551 = vld [vmem:[#allocation16 + $0x20] sm:$0xf]
        %v6552 = vld [vmem:[#allocation16 + $0x24] sm:$0xf]
        %v6553 = vld [vmem:[#allocation16 + $0x28] sm:$0xf]
        %v6554 = vld [vmem:[#allocation16 + $0x2c] sm:$0xf]
        %v6555 = vld [vmem:[#allocation16 + $0x30] sm:$0xf]
        %v6556 = vld [vmem:[#allocation16 + $0x34] sm:$0xf]
        %v6557 = vld [vmem:[#allocation16 + $0x38] sm:$0xf]
        %v6558 = vld [vmem:[#allocation16 + $0x3c] sm:$0xf]
        %v6559 = vld [vmem:[%s11] sm:$0x1]
        %v6561 = vlaneseq
        %v6562 = vshrl.u32 %v6561, 7
        %v6563 = vsub.s32 0, %v6562
        %v6564 = vrot.slane %v6559, %v6563
        %v6582 = vunpack.c.l.b16 %v6543
        %v6583 = vunpack.c.l.b16 %v6544
        %v6584 = vunpack.c.l.b16 %v6545
        %v6585 = vunpack.c.l.b16 %v6546
        %v6586 = vunpack.c.l.b16 %v6547
        %v6587 = vunpack.c.l.b16 %v6548
        %v6588 = vunpack.c.l.b16 %v6549
        %v6589 = vunpack.c.l.b16 %v6550
        %v6590 = vunpack.c.l.b16 %v6551
        %v6591 = vunpack.c.l.b16 %v6552
        %v6592 = vunpack.c.l.b16 %v6553
        %v6593 = vunpack.c.l.b16 %v6554
        %v6594 = vunpack.c.l.b16 %v6555
        %v6595 = vunpack.c.l.b16 %v6556
        %v6596 = vunpack.c.l.b16 %v6557
        %v6597 = vunpack.c.l.b16 %v6558
        %v6598 = vpack.c.b16 %v6583, %v6582
        %v6599 = vpack.c.b16 %v6585, %v6584
        %v6600 = vpack.c.b16 %v6587, %v6586
        %v6601 = vpack.c.b16 %v6589, %v6588
        %v6602 = vpack.c.b16 %v6591, %v6590
        %v6603 = vpack.c.b16 %v6593, %v6592
        %v6604 = vpack.c.b16 %v6595, %v6594
        %v6605 = vpack.c.b16 %v6597, %v6596
        %6614 = vmatprep.subr.bf16.mxu0 0
        %6615 = vmatpush1.bf16.msra.mxu0 %v6605
        %6616 = vmatprep.subr.bf16.mxu0 0
        %6617 = vmatpush1.bf16.msra.mxu0 %v6604
        %6618 = vmatprep.subr.bf16.mxu0 0
        %6619 = vmatpush1.bf16.msra.mxu0 %v6603
        %6620 = vmatprep.subr.bf16.mxu0 0
        %6621 = vmatpush1.bf16.msra.mxu0 %v6602
        %6622 = vmatprep.subr.bf16.mxu0 0
        %6623 = vmatpush1.bf16.msra.mxu0 %v6601
        %6624 = vmatprep.subr.bf16.mxu0 0
        %6625 = vmatpush1.bf16.msra.mxu0 %v6600
        %6626 = vmatprep.subr.bf16.mxu0 0
        %6627 = vmatpush1.bf16.msra.mxu0 %v6599
        %6628 = vmatprep.subr.bf16.mxu0 0
        %6629 = vmatpush1.bf16.msra.mxu0 %v6598
        %6630 = vmatprep.subr.bf16.mxu0 0
        %6631 = vmatpush2.bf16.msra.mxu0 0
        %6632 = vmatprep.subr.bf16.mxu0 0
        %6633 = vmatpush2.bf16.msra.mxu0 0
        %6634 = vmatprep.subr.bf16.mxu0 0
        %6635 = vmatpush2.bf16.msra.mxu0 0
        %6636 = vmatprep.subr.bf16.mxu0 0
        %6637 = vmatpush2.bf16.msra.mxu0 0
        %6638 = vmatprep.subr.bf16.mxu0 0
        %6639 = vmatpush2.bf16.msra.mxu0 0
        %6640 = vmatprep.subr.bf16.mxu0 0
        %6641 = vmatpush2.bf16.msra.mxu0 0
        %6642 = vmatprep.subr.bf16.mxu0 0
        %6643 = vmatpush2.bf16.msra.mxu0 0
        %6644 = vmatprep.subr.bf16.mxu0 0
        %6645 = vmatpush2.bf16.msra.mxu0 0
        %6646 = vmatprep.mubr.bf16.mxu0 0
        %6647 = vmatmul.mubr.bf16.gmra.mxu0 %v6527
        %v6648 = vpop.f32.mrf.mxu0
        %v6649 = vadd.f32 %v6564, %v6648
        %v6650 = vpop.f32.mrf.mxu0
        %v6651 = vpop.f32.mrf.mxu0
        %v6652 = vadd.f32 %v6564, %v6651
        %v6653 = vpop.f32.mrf.mxu0
        %6654 = vmatprep.mubr.bf16.mxu0 0
        %6655 = vmatmul.mubr.bf16.gmra.mxu0 %v6528
        %v6656 = vpop.f32.mrf.mxu0
        %v6657 = vadd.f32 %v6564, %v6656
        %v6658 = vpop.f32.mrf.mxu0
        %v6659 = vpop.f32.mrf.mxu0
        %v6660 = vadd.f32 %v6564, %v6659
        %v6661 = vpop.f32.mrf.mxu0
        %6662 = vmatprep.mubr.bf16.mxu0 0
        %6663 = vmatmul.mubr.bf16.gmra.mxu0 %v6529
        %v6664 = vpop.f32.mrf.mxu0
        %v6665 = vadd.f32 %v6564, %v6664
        %v6666 = vpop.f32.mrf.mxu0
        %v6667 = vpop.f32.mrf.mxu0
        %v6668 = vadd.f32 %v6564, %v6667
        %v6669 = vpop.f32.mrf.mxu0
        %6670 = vmatprep.mubr.bf16.mxu0 0
        %6671 = vmatmul.mubr.bf16.gmra.mxu0 %v6530
        %v6672 = vpop.f32.mrf.mxu0
        %v6673 = vadd.f32 %v6564, %v6672
        %v6674 = vpop.f32.mrf.mxu0
        %v6675 = vpop.f32.mrf.mxu0
        %v6676 = vadd.f32 %v6564, %v6675
        %v6677 = vpop.f32.mrf.mxu0
        %6678 = vmatprep.mubr.bf16.mxu0 0
        %6679 = vmatmul.mubr.bf16.gmra.mxu0 %v6531
        %v6680 = vpop.f32.mrf.mxu0
        %v6681 = vadd.f32 %v6564, %v6680
        %v6682 = vpop.f32.mrf.mxu0
        %v6683 = vpop.f32.mrf.mxu0
        %v6684 = vadd.f32 %v6564, %v6683
        %v6685 = vpop.f32.mrf.mxu0
        %6686 = vmatprep.mubr.bf16.mxu0 0
        %6687 = vmatmul.mubr.bf16.gmra.mxu0 %v6532
        %v6688 = vpop.f32.mrf.mxu0
        %v6689 = vadd.f32 %v6564, %v6688
        %v6690 = vpop.f32.mrf.mxu0
        %v6691 = vpop.f32.mrf.mxu0
        %v6692 = vadd.f32 %v6564, %v6691
        %v6693 = vpop.f32.mrf.mxu0
        %6694 = vmatprep.mubr.bf16.mxu0 0
        %6695 = vmatmul.mubr.bf16.gmra.mxu0 %v6533
        %v6696 = vpop.f32.mrf.mxu0
        %v6697 = vadd.f32 %v6564, %v6696
        %v6698 = vpop.f32.mrf.mxu0
        %v6699 = vpop.f32.mrf.mxu0
        %v6700 = vadd.f32 %v6564, %v6699
        %v6701 = vpop.f32.mrf.mxu0
        %6702 = vmatprep.mubr.bf16.mxu0 0
        %6703 = vmatmul.mubr.bf16.gmra.mxu0 %v6534
        %v6704 = vpop.f32.mrf.mxu0
        %v6705 = vadd.f32 %v6564, %v6704
        %v6706 = vpop.f32.mrf.mxu0
        %v6707 = vpop.f32.mrf.mxu0
        %v6708 = vadd.f32 %v6564, %v6707
        %v6709 = vpop.f32.mrf.mxu0
        %6710 = vmatprep.mubr.bf16.mxu0 0
        %6711 = vmatmul.mubr.bf16.gmra.mxu0 %v6535
        %v6712 = vpop.f32.mrf.mxu0
        %v6713 = vadd.f32 %v6564, %v6712
        %v6714 = vpop.f32.mrf.mxu0
        %v6715 = vpop.f32.mrf.mxu0
        %v6716 = vadd.f32 %v6564, %v6715
        %v6717 = vpop.f32.mrf.mxu0
        %6718 = vmatprep.mubr.bf16.mxu0 0
        %6719 = vmatmul.mubr.bf16.gmra.mxu0 %v6536
        %v6720 = vpop.f32.mrf.mxu0
        %v6721 = vadd.f32 %v6564, %v6720
        %v6722 = vpop.f32.mrf.mxu0
        %v6723 = vpop.f32.mrf.mxu0
        %v6724 = vadd.f32 %v6564, %v6723
        %v6725 = vpop.f32.mrf.mxu0
        %6726 = vmatprep.mubr.bf16.mxu0 0
        %6727 = vmatmul.mubr.bf16.gmra.mxu0 %v6537
        %v6728 = vpop.f32.mrf.mxu0
        %v6729 = vadd.f32 %v6564, %v6728
        %v6730 = vpop.f32.mrf.mxu0
        %v6731 = vpop.f32.mrf.mxu0
        %v6732 = vadd.f32 %v6564, %v6731
        %v6733 = vpop.f32.mrf.mxu0
        %6734 = vmatprep.mubr.bf16.mxu0 0
        %6735 = vmatmul.mubr.bf16.gmra.mxu0 %v6538
        %v6736 = vpop.f32.mrf.mxu0
        %v6737 = vadd.f32 %v6564, %v6736
        %v6738 = vpop.f32.mrf.mxu0
        %v6739 = vpop.f32.mrf.mxu0
        %v6740 = vadd.f32 %v6564, %v6739
        %v6741 = vpop.f32.mrf.mxu0
        %6742 = vmatprep.mubr.bf16.mxu0 0
        %6743 = vmatmul.mubr.bf16.gmra.mxu0 %v6539
        %v6744 = vpop.f32.mrf.mxu0
        %v6745 = vadd.f32 %v6564, %v6744
        %v6746 = vpop.f32.mrf.mxu0
        %v6747 = vpop.f32.mrf.mxu0
        %v6748 = vadd.f32 %v6564, %v6747
        %v6749 = vpop.f32.mrf.mxu0
        %6750 = vmatprep.mubr.bf16.mxu0 0
        %6751 = vmatmul.mubr.bf16.gmra.mxu0 %v6540
        %v6752 = vpop.f32.mrf.mxu0
        %v6753 = vadd.f32 %v6564, %v6752
        %v6754 = vpop.f32.mrf.mxu0
        %v6755 = vpop.f32.mrf.mxu0
        %v6756 = vadd.f32 %v6564, %v6755
        %v6757 = vpop.f32.mrf.mxu0
        %6758 = vmatprep.mubr.bf16.mxu0 0
        %6759 = vmatmul.mubr.bf16.gmra.mxu0 %v6541
        %v6760 = vpop.f32.mrf.mxu0
        %v6761 = vadd.f32 %v6564, %v6760
        %v6762 = vpop.f32.mrf.mxu0
        %v6763 = vpop.f32.mrf.mxu0
        %v6764 = vadd.f32 %v6564, %v6763
        %v6765 = vpop.f32.mrf.mxu0
        %6766 = vmatprep.mubr.bf16.mxu0 0
        %6767 = vmatmul.mubr.bf16.gmra.mxu0 %v6542
        %v6768 = vpop.f32.mrf.mxu0
        %v6769 = vadd.f32 %v6564, %v6768
        %v6770 = vpop.f32.mrf.mxu0
        %v6771 = vpop.f32.mrf.mxu0
        %v6772 = vadd.f32 %v6564, %v6771
        %v6773 = vpop.f32.mrf.mxu0
        %6774 = vdwg.mxu0
        %v6775 = vmul.f32 %v6649, 0.5
        %v6776 = vmul.f32 %v6652, 0.5
        %v6777 = vmul.f32 %v6657, 0.5
        %v6778 = vmul.f32 %v6660, 0.5
        %v6779 = vmul.f32 %v6665, 0.5
        %v6780 = vmul.f32 %v6668, 0.5
        %v6781 = vmul.f32 %v6673, 0.5
        %v6782 = vmul.f32 %v6676, 0.5
        %v6783 = vmul.f32 %v6681, 0.5
        %v6784 = vmul.f32 %v6684, 0.5
        %v6785 = vmul.f32 %v6689, 0.5
        %v6786 = vmul.f32 %v6692, 0.5
        %v6787 = vmul.f32 %v6697, 0.5
        %v6788 = vmul.f32 %v6700, 0.5
        %v6789 = vmul.f32 %v6705, 0.5
        %v6790 = vmul.f32 %v6708, 0.5
        %v6791 = vmul.f32 %v6713, 0.5
        %v6792 = vmul.f32 %v6716, 0.5
        %v6793 = vmul.f32 %v6721, 0.5
        %v6794 = vmul.f32 %v6724, 0.5
        %v6795 = vmul.f32 %v6729, 0.5
        %v6796 = vmul.f32 %v6732, 0.5
        %v6797 = vmul.f32 %v6737, 0.5
        %v6798 = vmul.f32 %v6740, 0.5
        %v6799 = vmul.f32 %v6745, 0.5
        %v6800 = vmul.f32 %v6748, 0.5
        %v6801 = vmul.f32 %v6753, 0.5
        %v6802 = vmul.f32 %v6756, 0.5
        %v6803 = vmul.f32 %v6761, 0.5
        %v6804 = vmul.f32 %v6764, 0.5
        %v6805 = vmul.f32 %v6769, 0.5
        %v6806 = vmul.f32 %v6772, 0.5
        %v6807 = vtanh.pop %v6775
        %v6808 = vtanh.pop %v6776
        %v6809 = vtanh.pop %v6777
        %v6810 = vtanh.pop %v6778
        %v6811 = vtanh.pop %v6779
        %v6812 = vtanh.pop %v6780
        %v6813 = vtanh.pop %v6781
        %v6814 = vtanh.pop %v6782
        %v6815 = vtanh.pop %v6783
        %v6816 = vtanh.pop %v6784
        %v6817 = vtanh.pop %v6785
        %v6818 = vtanh.pop %v6786
        %v6819 = vtanh.pop %v6787
        %v6820 = vtanh.pop %v6788
        %v6821 = vtanh.pop %v6789
        %v6822 = vtanh.pop %v6790
        %v6823 = vtanh.pop %v6791
        %v6824 = vtanh.pop %v6792
        %v6825 = vtanh.pop %v6793
        %v6826 = vtanh.pop %v6794
        %v6827 = vtanh.pop %v6795
        %v6828 = vtanh.pop %v6796
        %v6829 = vtanh.pop %v6797
        %v6830 = vtanh.pop %v6798
        %v6831 = vtanh.pop %v6799
        %v6832 = vtanh.pop %v6800
        %v6833 = vtanh.pop %v6801
        %v6834 = vtanh.pop %v6802
        %v6835 = vtanh.pop %v6803
        %v6836 = vtanh.pop %v6804
        %v6837 = vtanh.pop %v6805
        %v6838 = vtanh.pop %v6806
        %v6839 = vadd.f32 %v6807, 1.0
        %v6840 = vadd.f32 %v6808, 1.0
        %v6841 = vadd.f32 %v6809, 1.0
        %v6842 = vadd.f32 %v6810, 1.0
        %v6843 = vadd.f32 %v6811, 1.0
        %v6844 = vadd.f32 %v6812, 1.0
        %v6845 = vadd.f32 %v6813, 1.0
        %v6846 = vadd.f32 %v6814, 1.0
        %v6847 = vadd.f32 %v6815, 1.0
        %v6848 = vadd.f32 %v6816, 1.0
        %v6849 = vadd.f32 %v6817, 1.0
        %v6850 = vadd.f32 %v6818, 1.0
        %v6851 = vadd.f32 %v6819, 1.0
        %v6852 = vadd.f32 %v6820, 1.0
        %v6853 = vadd.f32 %v6821, 1.0
        %v6854 = vadd.f32 %v6822, 1.0
        %v6855 = vadd.f32 %v6823, 1.0
        %v6856 = vadd.f32 %v6824, 1.0
        %v6857 = vadd.f32 %v6825, 1.0
        %v6858 = vadd.f32 %v6826, 1.0
        %v6859 = vadd.f32 %v6827, 1.0
        %v6860 = vadd.f32 %v6828, 1.0
        %v6861 = vadd.f32 %v6829, 1.0
        %v6862 = vadd.f32 %v6830, 1.0
        %v6863 = vadd.f32 %v6831, 1.0
        %v6864 = vadd.f32 %v6832, 1.0
        %v6865 = vadd.f32 %v6833, 1.0
        %v6866 = vadd.f32 %v6834, 1.0
        %v6867 = vadd.f32 %v6835, 1.0
        %v6868 = vadd.f32 %v6836, 1.0
        %v6869 = vadd.f32 %v6837, 1.0
        %v6870 = vadd.f32 %v6838, 1.0
        %v6871 = vmul.f32 %v6839, 0.5
        %v6872 = vmul.f32 %v6840, 0.5
        %v6873 = vmul.f32 %v6841, 0.5
        %v6874 = vmul.f32 %v6842, 0.5
        %v6875 = vmul.f32 %v6843, 0.5
        %v6876 = vmul.f32 %v6844, 0.5
        %v6877 = vmul.f32 %v6845, 0.5
        %v6878 = vmul.f32 %v6846, 0.5
        %v6879 = vmul.f32 %v6847, 0.5
        %v6880 = vmul.f32 %v6848, 0.5
        %v6881 = vmul.f32 %v6849, 0.5
        %v6882 = vmul.f32 %v6850, 0.5
        %v6883 = vmul.f32 %v6851, 0.5
        %v6884 = vmul.f32 %v6852, 0.5
        %v6885 = vmul.f32 %v6853, 0.5
        %v6886 = vmul.f32 %v6854, 0.5
        %v6887 = vmul.f32 %v6855, 0.5
        %v6888 = vmul.f32 %v6856, 0.5
        %v6889 = vmul.f32 %v6857, 0.5
        %v6890 = vmul.f32 %v6858, 0.5
        %v6891 = vmul.f32 %v6859, 0.5
        %v6892 = vmul.f32 %v6860, 0.5
        %v6893 = vmul.f32 %v6861, 0.5
        %v6894 = vmul.f32 %v6862, 0.5
        %v6895 = vmul.f32 %v6863, 0.5
        %v6896 = vmul.f32 %v6864, 0.5
        %v6897 = vmul.f32 %v6865, 0.5
        %v6898 = vmul.f32 %v6866, 0.5
        %v6899 = vmul.f32 %v6867, 0.5
        %v6900 = vmul.f32 %v6868, 0.5
        %v6901 = vmul.f32 %v6869, 0.5
        %v6902 = vmul.f32 %v6870, 0.5
        %6903 = vst [vmem:[%s572] sm:$0xff] %v6871
        %6904 = vst [vmem:[%s572 + $0x8] sm:$0xff] %v6872
        %6905 = vst [vmem:[%s572 + $0x10] sm:$0xff] %v6873
        %6906 = vst [vmem:[%s572 + $0x18] sm:$0xff] %v6874
        %6907 = vst [vmem:[%s572 + $0x20] sm:$0xff] %v6875
        %6908 = vst [vmem:[%s572 + $0x28] sm:$0xff] %v6876
        %6909 = vst [vmem:[%s572 + $0x30] sm:$0xff] %v6877
        %6910 = vst [vmem:[%s572 + $0x38] sm:$0xff] %v6878
        %6911 = vst [vmem:[%s572 + $0x40] sm:$0xff] %v6879
        %6912 = vst [vmem:[%s572 + $0x48] sm:$0xff] %v6880
        %6913 = vst [vmem:[%s572 + $0x50] sm:$0xff] %v6881
        %6914 = vst [vmem:[%s572 + $0x58] sm:$0xff] %v6882
        %6915 = vst [vmem:[%s572 + $0x60] sm:$0xff] %v6883
        %6916 = vst [vmem:[%s572 + $0x68] sm:$0xff] %v6884
        %6917 = vst [vmem:[%s572 + $0x70] sm:$0xff] %v6885
        %6918 = vst [vmem:[%s572 + $0x78] sm:$0xff] %v6886
        %6919 = vst [vmem:[%s572 + $0x80] sm:$0xff] %v6887
        %6920 = vst [vmem:[%s572 + $0x88] sm:$0xff] %v6888
        %6921 = vst [vmem:[%s572 + $0x90] sm:$0xff] %v6889
        %6922 = vst [vmem:[%s572 + $0x98] sm:$0xff] %v6890
        %6923 = vst [vmem:[%s572 + $0xa0] sm:$0xff] %v6891
        %6924 = vst [vmem:[%s572 + $0xa8] sm:$0xff] %v6892
        %6925 = vst [vmem:[%s572 + $0xb0] sm:$0xff] %v6893
        %6926 = vst [vmem:[%s572 + $0xb8] sm:$0xff] %v6894
        %6927 = vst [vmem:[%s572 + $0xc0] sm:$0xff] %v6895
        %6928 = vst [vmem:[%s572 + $0xc8] sm:$0xff] %v6896
        %6929 = vst [vmem:[%s572 + $0xd0] sm:$0xff] %v6897
        %6930 = vst [vmem:[%s572 + $0xd8] sm:$0xff] %v6898
        %6931 = vst [vmem:[%s572 + $0xe0] sm:$0xff] %v6899
        %6932 = vst [vmem:[%s572 + $0xe8] sm:$0xff] %v6900
        %6933 = vst [vmem:[%s572 + $0xf0] sm:$0xff] %v6901
        %6934 = vst [vmem:[%s572 + $0xf8] sm:$0xff] %v6902
        %s6935 = sand.u32 %s305, 1
        %s6936 = scalar_lea.sflag [#allocation4], %s6935
        %s6937 = sand.u32 %s305, 1
        %s6938 = smul.addr %s6937, 256
        %s6939 = scalar_lea.vmem [#allocation17], %s6938
        // Predicated region
        $region105: #{tpu_custom_call.1} parent=67 // pred_check
          %p6940 = pneg %p315
        $region106: #{tpu_custom_call.1} parent=67 // pred_check_branch
          %6942 = sbr.rel (%p6940) target = $region108
        $region107: #{tpu_custom_call.1} parent=67 // pred_region
          %s6943 = smul.u32 32, %s35
          %s6945 = ssub.s32 4096, 4096
          %6946 = vsyncadd %s6936, %s6945
          %s6947 = smul.addr %s6943, 128
          %s6948 = scalar_lea.hbm %s12, %s6947
          %s6949 = sshll.u32 %s6939, 4
          %s6950 = int_to_ptr.vmem [resolvable:$true] %s6949
          %6955 = dma.vmem_to_hbm [thread:$0]  %s6950, 4096, %s6948, %s6936, 128, 128, 8
        $region108: #{tpu_custom_call.1} parent=67 // pred_fallthru
          _
      $region68: #{tpu_custom_call.1} parent=5 // pred_fallthru
        _
      %p6956 = scmp.le.s32.totalorder 2, %s30
      // Predicated region
      $region109: #{tpu_custom_call.1} parent=5 // pred_check
        %p6957 = pneg %p6956
      $region110: #{tpu_custom_call.1} parent=5 // pred_check_branch
        %6959 = sbr.rel (%p6957) target = $region112
      $region111: #{tpu_custom_call.1} parent=5 // pred_region
        %s6960 = ssub.s32 %s30, 2
        // Predicated region
        $region113: #{tpu_custom_call.1} parent=111 // pred_check
          %p6961 = pneg %p321
        $region114: #{tpu_custom_call.1} parent=111 // pred_check_branch
          %6963 = sbr.rel (%p6961) target = $region116
        $region115: #{tpu_custom_call.1} parent=111 // pred_region
          %s6964 = sand.u32 %s306, 1
          %s6965 = scalar_lea.sflag [#allocation4], %s6964
          %s6966 = sand.u32 %s306, 1
          %s6967 = smul.addr %s6966, 256
          %s6968 = scalar_lea.vmem [#allocation17], %s6967
          %6969 = dma.done %s6965, 4096
        $region116: #{tpu_custom_call.1} parent=111 // pred_fallthru
          _
      $region112: #{tpu_custom_call.1} parent=5 // pred_fallthru
        _
    $region6: #{tpu_custom_call.1} parent=1 // loop_footer
      %s34 = sadd.s32 1, %s30
    $region7: #{tpu_custom_call.1} parent=1 // loop_footer_branch
      %29 = sbr.rel target = $region3
    $region8: #{tpu_custom_call.1} parent=1 // loop_exit
      _
    %6970 = vsyncpa [#allocation3], 1
    %s6971 = scalar_lea.sflag [#allocation3], 1
    %6972 = vsyncpa %s6971, 1
    %6973 = vsyncpa [#allocation6], 1
    %s6974 = scalar_lea.sflag [#allocation6], 1
    %6975 = vsyncpa %s6974, 1
    %6976 = vsyncpa [#allocation9], 1
    %6977 = vsyncpa [#allocation12], 1
    %6978 = vsyncpa [#allocation15], 1
    %6979 = vsyncpa [#allocation4], 1
    %s6980 = scalar_lea.sflag [#allocation4], 1
    %6981 = vsyncpa %s6980, 1

</llo_original>
